<compile_context>
chip_gen: v7x
topology: tpu7x:2x2x1
jax: 0.10.0
libtpu: 0.0.40
codegen_flags: <defaults>
</compile_context>

<pallas_src>
import functools

import jax
import jax.numpy as jnp
from jax.experimental import pallas as pl
from jax.experimental.pallas import tpu as pltpu


def _shift_rows(x, off):
    """result[r] = x[(r + off) % n] along axis 0 (wrapped rows are zeroed by the caller)."""
    n = x.shape[0]
    k = off % n
    if k == 0:
        return x
    return jnp.concatenate([x[k:], x[:k]], axis=0)


def _gn_silu_conv3x3_kernel(*refs, H, W, eps, count, add_res, project):
    """GroupNorm -> SiLU -> 3x3 conv (pad=1) [-> +residual, optionally via 1x1 projection].

    Block shapes (one grid step == one batch image):
      x_ref  (1, HW, C)    g_ref/be_ref (1, C)    m_ref (C, G)   channel->group 0/1
      w_ref  (9*C, Cout) bf16, tap-major          b_ref (1, Cout)
      mk_ref (HW, 9)       per-tap zero-padding mask
      [res_ref (1, HW, Cres)]  [rw_ref (Cres, Cout) bf16]  [rb_ref (1, Cout)]
      o_ref  (1, HW, Cout)
    """
    if add_res and project:
        (x_ref, g_ref, be_ref, m_ref, w_ref, b_ref, mk_ref,
         res_ref, rw_ref, rb_ref, o_ref) = refs
    elif add_res:
        (x_ref, g_ref, be_ref, m_ref, w_ref, b_ref, mk_ref,
         res_ref, o_ref) = refs
    else:
        x_ref, g_ref, be_ref, m_ref, w_ref, b_ref, mk_ref, o_ref = refs

    x = x_ref[0].astype(jnp.float32)                      # (HW, C)
    m = m_ref[...]                                        # (C, G)

    # ---- GroupNorm (two-pass: mean, then centered variance) + affine + SiLU ----
    contract_g = (((1,), (1,)), ((), ()))                 # contract over the G axis
    s = jnp.sum(x, axis=0, keepdims=True)                                   # (1, C)
    mean_g = jnp.dot(s, m, preferred_element_type=jnp.float32) / count      # (1, G)
    mean_c = jax.lax.dot_general(mean_g, m, contract_g,
                                 preferred_element_type=jnp.float32)        # (1, C)
    d = x - mean_c
    ssd = jnp.sum(d * d, axis=0, keepdims=True)                             # (1, C)
    var_g = jnp.dot(ssd, m, preferred_element_type=jnp.float32) / count     # (1, G)
    var_c = jax.lax.dot_general(var_g, m, contract_g,
                                preferred_element_type=jnp.float32)         # (1, C)
    inv = jax.lax.rsqrt(var_c + eps)
    a = d * (inv * g_ref[...]) + be_ref[...]
    a = a * jax.nn.sigmoid(a)                             # SiLU (EUP), f32

    # ---- 3x3 conv: im2col via sublane shifts + boundary mask, one bf16 MXU matmul ----
    mask = mk_ref[...]                                    # (HW, 9)
    cols = []
    t = 0
    for dy in (-1, 0, 1):
        for dx in (-1, 0, 1):
            shifted = _shift_rows(a, dy * W + dx)         # pixel (y+dy, x+dx), wrapped
            if dy == 0 and dx == 0:
                col = shifted
            else:
                col = shifted * mask[:, t:t + 1]          # zero taps outside the image
            cols.append(col.astype(jnp.bfloat16))
            t += 1
    patches = jnp.concatenate(cols, axis=-1)              # (HW, 9*C) bf16
    acc = jnp.dot(patches, w_ref[...], preferred_element_type=jnp.float32)  # (HW, Cout)
    acc = acc + b_ref[...]

    # ---- fused residual (optionally through the 1x1 projection) ----
    if add_res:
        res = res_ref[0]
        if project:
            acc = acc + jnp.dot(res.astype(jnp.bfloat16), rw_ref[...],
                                preferred_element_type=jnp.float32) + rb_ref[...]
        else:
            acc = acc + res.astype(jnp.float32)

    o_ref[0] = acc.astype(o_ref.dtype)


def _tap_mask(H, W):
    """(HW, 9) f32: 1 where tap (dy, dx) lands inside the image, else 0 (tap-major)."""
    yy = jnp.arange(H * W) // W
    xx = jnp.arange(H * W) % W
    cols = []
    for dy in (-1, 0, 1):
        for dx in (-1, 0, 1):
            ok = (yy + dy >= 0) & (yy + dy < H) & (xx + dx >= 0) & (xx + dx < W)
            cols.append(ok)
    return jnp.stack(cols, axis=-1).astype(jnp.float32)


def gn_silu_conv3x3(x2, gamma, beta, num_groups, w_hwio, bias, *, H, W,
                    residual=None, res_w=None, res_b=None,
                    out_dtype=jnp.float32, eps=1e-5):
    """Fused GroupNorm+SiLU+Conv3x3(+residual) on (B, H*W, C) NHWC slabs."""
    B, HW, C = x2.shape
    assert HW == H * W and C % num_groups == 0
    Cout = w_hwio.shape[-1]
    cg = C // num_groups

    member = (jnp.arange(C)[:, None] // cg
              == jnp.arange(num_groups)[None, :]).astype(jnp.float32)      # (C, G)
    gamma2 = gamma.reshape(1, C).astype(jnp.float32)
    beta2 = beta.reshape(1, C).astype(jnp.float32)
    w2 = w_hwio.reshape(9 * C, Cout).astype(jnp.bfloat16)                  # tap-major
    b2 = bias.reshape(1, Cout).astype(jnp.float32)
    mask = _tap_mask(H, W)

    add_res = residual is not None
    project = res_w is not None

    args = [x2, gamma2, beta2, member, w2, b2, mask]
    in_specs = [
        pl.BlockSpec((1, HW, C), lambda b: (b, 0, 0)),
        pl.BlockSpec((1, C), lambda b: (0, 0)),
        pl.BlockSpec((1, C), lambda b: (0, 0)),
        pl.BlockSpec((C, num_groups), lambda b: (0, 0)),
        pl.BlockSpec((9 * C, Cout), lambda b: (0, 0)),
        pl.BlockSpec((1, Cout), lambda b: (0, 0)),
        pl.BlockSpec((HW, 9), lambda b: (0, 0)),
    ]
    if add_res:
        Cres = residual.shape[-1]
        args.append(residual)
        in_specs.append(pl.BlockSpec((1, HW, Cres), lambda b: (b, 0, 0)))
        if project:
            args.append(res_w.astype(jnp.bfloat16))
            args.append(res_b.reshape(1, Cout).astype(jnp.float32))
            in_specs.append(pl.BlockSpec((Cres, Cout), lambda b: (0, 0)))
            in_specs.append(pl.BlockSpec((1, Cout), lambda b: (0, 0)))

    kernel = functools.partial(
        _gn_silu_conv3x3_kernel, H=H, W=W, eps=eps,
        count=float(HW * cg), add_res=add_res, project=project)

    # TODO(synk): for real VAE decoder resolutions add a row-tile grid axis (with a
    # 1-row halo and a separate GN-stats pass) so blocks fit v7x's 64 MiB VMEM, and
    # fold W into the lane dim when Cout < 128 for fully lane-dense stores.
    return pl.pallas_call(
        kernel,
        grid=(B,),
        in_specs=in_specs,
        out_specs=pl.BlockSpec((1, HW, Cout), lambda b: (b, 0, 0)),
        out_shape=jax.ShapeDtypeStruct((B, HW, Cout), out_dtype),
        compiler_params=pltpu.CompilerParams(
            dimension_semantics=("parallel",),
            vmem_limit_bytes=48 * 1024 * 1024),
    )(*args)


def vae_residual_block(x_nchw, params, num_groups):
    # NCHW <-> NHWC only at the module boundary (a full decoder would stay NHWC).
    x = jnp.transpose(x_nchw, (0, 2, 3, 1))
    B, H, W, Cin = x.shape
    Cout = params["conv1_w"].shape[-1]
    x2 = x.reshape(B, H * W, Cin)

    # GN1 + SiLU + conv1  (bf16 intermediate halves HBM traffic)
    h = gn_silu_conv3x3(x2, params["gn1_g"], params["gn1_b"], num_groups,
                        params["conv1_w"], params["conv1_b"], H=H, W=W,
                        out_dtype=jnp.bfloat16)

    # GN2 + SiLU + conv2 + residual add (1x1 projection fused when Cin != Cout)
    if Cin == Cout:
        res_w = res_b = None
    else:
        res_w, res_b = params["res_w"], params["res_b"]
    out2 = gn_silu_conv3x3(h, params["gn2_g"], params["gn2_b"], num_groups,
                           params["conv2_w"], params["conv2_b"], H=H, W=W,
                           residual=x2, res_w=res_w, res_b=res_b,
                           out_dtype=x_nchw.dtype)

    out = out2.reshape(B, H, W, Cout)
    return jnp.transpose(out, (0, 3, 1, 2))


# ----------------------------------------------------------------------------
# Pure-JAX f32 reference (correctness check only)
# ----------------------------------------------------------------------------
def _reference(x, params, num_groups):
    def gn(v, g, b):
        B, C, H, W = v.shape
        vr = v.reshape(B, num_groups, C // num_groups, H, W)
        mean = vr.mean(axis=(2, 3, 4), keepdims=True)
        var = vr.var(axis=(2, 3, 4), keepdims=True)
        vn = ((vr - mean) / jnp.sqrt(var + 1e-5)).reshape(B, C, H, W)
        return vn * g[None, :, None, None] + b[None, :, None, None]

    def silu(v):
        return v * jax.nn.sigmoid(v)

    def conv(v, w_hwio, b):
        y = jax.lax.conv_general_dilated(
            v, w_hwio, (1, 1), "SAME",
            dimension_numbers=("NCHW", "HWIO", "NCHW"))
        return y + b[None, :, None, None]

    Cin = x.shape[1]
    Cout = params["conv1_w"].shape[-1]
    h = conv(silu(gn(x, params["gn1_g"], params["gn1_b"])), params["conv1_w"], params["conv1_b"])
    h = conv(silu(gn(h, params["gn2_g"], params["gn2_b"])), params["conv2_w"], params["conv2_b"])
    if Cin == Cout:
        res = x
    else:
        res = conv(x, params["res_w"].reshape(1, 1, Cin, Cout), params["res_b"])
    return h + res


if __name__ == "__main__":
    B, Cin, Cout, H, W = 2, 32, 64, 16, 16
    num_groups = 32

    ks = jax.random.split(jax.random.PRNGKey(0), 11)
    params = {
        "gn1_g": 1.0 + 0.1 * jax.random.normal(ks[0], (Cin,), jnp.float32),
        "gn1_b": 0.1 * jax.random.normal(ks[1], (Cin,), jnp.float32),
        "conv1_w": 0.05 * jax.random.normal(ks[2], (3, 3, Cin, Cout), jnp.float32),
        "conv1_b": 0.05 * jax.random.normal(ks[3], (Cout,), jnp.float32),
        "gn2_g": 1.0 + 0.1 * jax.random.normal(ks[4], (Cout,), jnp.float32),
        "gn2_b": 0.1 * jax.random.normal(ks[5], (Cout,), jnp.float32),
        "conv2_w": 0.05 * jax.random.normal(ks[6], (3, 3, Cout, Cout), jnp.float32),
        "conv2_b": 0.05 * jax.random.normal(ks[7], (Cout,), jnp.float32),
        "res_w": 0.05 * jax.random.normal(ks[8], (Cin, Cout), jnp.float32),
        "res_b": 0.05 * jax.random.normal(ks[9], (Cout,), jnp.float32),
    }
    x = jax.random.normal(ks[10], (B, Cin, H, W), jnp.float32)

    out = jax.jit(functools.partial(vae_residual_block, num_groups=num_groups))(x, params)
    out = jax.block_until_ready(out)

    ref = _reference(x, params, num_groups)
    assert out.shape == (B, Cout, H, W), out.shape
    max_err = float(jnp.max(jnp.abs(out - ref)))
    # bf16 matmul operands + bf16 inter-conv intermediate -> relaxed tolerance vs f32 ref
    assert jnp.allclose(out, ref, atol=5e-2, rtol=2e-2), max_err

    print("KERNEL_OK")
</pallas_src>

<mosaic_0001>
module attributes {stable_mosaic.version = 11 : i64} {
  func.func @_gn_silu_conv3x3_kernel(%arg0: i32, %arg1: memref<1x256x32xf32, #tpu.memory_space<vmem>>, %arg2: memref<1x32xf32, #tpu.memory_space<vmem>>, %arg3: memref<1x32xf32, #tpu.memory_space<vmem>>, %arg4: memref<32x32xf32, #tpu.memory_space<vmem>>, %arg5: memref<288x64xbf16, #tpu.memory_space<vmem>>, %arg6: memref<1x64xf32, #tpu.memory_space<vmem>>, %arg7: memref<256x9xf32, #tpu.memory_space<vmem>>, %arg8: memref<1x256x64xbf16, #tpu.memory_space<vmem>>) attributes {dimension_semantics = [#tpu.dimension_semantics<parallel>], iteration_bounds = array<i64: 2>, scalar_prefetch = 0 : i64, scratch_operands = 0 : i64, tpu.core_type = #tpu.core_type<tc>, window_params = [{transform_indices = @transform_0, window_bounds = array<i64: 1, 256, 32>}, {pipeline_mode = #tpu.pipeline_mode<synchronous>, transform_indices = @transform_1, window_bounds = array<i64: 1, 32>}, {pipeline_mode = #tpu.pipeline_mode<synchronous>, transform_indices = @transform_2, window_bounds = array<i64: 1, 32>}, {pipeline_mode = #tpu.pipeline_mode<synchronous>, transform_indices = @transform_3, window_bounds = array<i64: 32, 32>}, {pipeline_mode = #tpu.pipeline_mode<synchronous>, transform_indices = @transform_4, window_bounds = array<i64: 288, 64>}, {pipeline_mode = #tpu.pipeline_mode<synchronous>, transform_indices = @transform_5, window_bounds = array<i64: 1, 64>}, {pipeline_mode = #tpu.pipeline_mode<synchronous>, transform_indices = @transform_6, window_bounds = array<i64: 256, 9>}, {transform_indices = @transform_7, window_bounds = array<i64: 1, 256, 64>}]} {
    %c0 = arith.constant 0 : index
    %c0_0 = arith.constant 0 : index
    %c0_1 = arith.constant 0 : index
    %0 = vector.load %arg1[%c0, %c0_0, %c0_1] : memref<1x256x32xf32, #tpu.memory_space<vmem>>, vector<1x256x32xf32>
    %1 = vector.shape_cast %0 : vector<1x256x32xf32> to vector<256x32xf32>
    %c0_2 = arith.constant 0 : index
    %c0_3 = arith.constant 0 : index
    %2 = vector.load %arg4[%c0_2, %c0_3] : memref<32x32xf32, #tpu.memory_space<vmem>>, vector<32x32xf32>
    %cst = arith.constant dense<0.000000e+00> : vector<32xf32>
    %3 = vector.multi_reduction <add>, %1, %cst [0] : vector<256x32xf32> to vector<32xf32>
    %4 = vector.shape_cast %3 : vector<32xf32> to vector<1x32xf32>
    %cst_4 = arith.constant dense<0.000000e+00> : vector<1x32xf32>
    %5 = tpu.matmul %4, %2, %cst_4 {dimension_numbers = #tpu.dot_dimension_numbers<[1], [0], [0], [1], [0, 0, 1, 1], [], []>} : vector<1x32xf32>, vector<32x32xf32>, vector<1x32xf32> -> vector<1x32xf32>
    %cst_5 = arith.constant 2.560000e+02 : f32
    %6 = vector.broadcast %cst_5 : f32 to vector<1x32xf32>
    %7 = arith.divf %5, %6 : vector<1x32xf32>
    %cst_6 = arith.constant dense<0.000000e+00> : vector<1x32xf32>
    %8 = tpu.matmul %7, %2, %cst_6 {dimension_numbers = #tpu.dot_dimension_numbers<[1], [1], [0], [0], [0, 0, 1, 0], [], []>} : vector<1x32xf32>, vector<32x32xf32>, vector<1x32xf32> -> vector<1x32xf32>
    %9 = vector.broadcast %8 : vector<1x32xf32> to vector<256x32xf32>
    %10 = arith.subf %1, %9 : vector<256x32xf32>
    %11 = arith.mulf %10, %10 : vector<256x32xf32>
    %cst_7 = arith.constant dense<0.000000e+00> : vector<32xf32>
    %12 = vector.multi_reduction <add>, %11, %cst_7 [0] : vector<256x32xf32> to vector<32xf32>
    %13 = vector.shape_cast %12 : vector<32xf32> to vector<1x32xf32>
    %cst_8 = arith.constant dense<0.000000e+00> : vector<1x32xf32>
    %14 = tpu.matmul %13, %2, %cst_8 {dimension_numbers = #tpu.dot_dimension_numbers<[1], [0], [0], [1], [0, 0, 1, 1], [], []>} : vector<1x32xf32>, vector<32x32xf32>, vector<1x32xf32> -> vector<1x32xf32>
    %cst_9 = arith.constant 2.560000e+02 : f32
    %15 = vector.broadcast %cst_9 : f32 to vector<1x32xf32>
    %16 = arith.divf %14, %15 : vector<1x32xf32>
    %cst_10 = arith.constant dense<0.000000e+00> : vector<1x32xf32>
    %17 = tpu.matmul %16, %2, %cst_10 {dimension_numbers = #tpu.dot_dimension_numbers<[1], [1], [0], [0], [0, 0, 1, 0], [], []>} : vector<1x32xf32>, vector<32x32xf32>, vector<1x32xf32> -> vector<1x32xf32>
    %cst_11 = arith.constant 9.99999974E-6 : f32
    %18 = vector.broadcast %cst_11 : f32 to vector<1x32xf32>
    %19 = arith.addf %17, %18 : vector<1x32xf32>
    %20 = math.rsqrt %19 : vector<1x32xf32>
    %c0_12 = arith.constant 0 : index
    %c0_13 = arith.constant 0 : index
    %21 = vector.load %arg2[%c0_12, %c0_13] : memref<1x32xf32, #tpu.memory_space<vmem>>, vector<1x32xf32>
    %22 = arith.mulf %20, %21 : vector<1x32xf32>
    %23 = vector.broadcast %22 : vector<1x32xf32> to vector<256x32xf32>
    %24 = arith.mulf %10, %23 : vector<256x32xf32>
    %c0_14 = arith.constant 0 : index
    %c0_15 = arith.constant 0 : index
    %25 = vector.load %arg3[%c0_14, %c0_15] : memref<1x32xf32, #tpu.memory_space<vmem>>, vector<1x32xf32>
    %26 = vector.broadcast %25 : vector<1x32xf32> to vector<256x32xf32>
    %27 = arith.addf %24, %26 : vector<256x32xf32>
    %28 = arith.negf %27 : vector<256x32xf32>
    %29 = math.exp %28 : vector<256x32xf32>
    %cst_16 = arith.constant 1.000000e+00 : f32
    %30 = vector.broadcast %cst_16 : f32 to vector<256x32xf32>
    %31 = arith.addf %30, %29 : vector<256x32xf32>
    %32 = arith.divf %30, %31 : vector<256x32xf32>
    %33 = arith.mulf %27, %32 : vector<256x32xf32>
    %c0_17 = arith.constant 0 : index
    %c0_18 = arith.constant 0 : index
    %34 = vector.load %arg7[%c0_17, %c0_18] : memref<256x9xf32, #tpu.memory_space<vmem>>, vector<256x9xf32>
    %35 = vector.extract_strided_slice %33 {offsets = [239, 0], sizes = [17, 32], strides = [1, 1]} : vector<256x32xf32> to vector<17x32xf32>
    %36 = vector.extract_strided_slice %33 {offsets = [0, 0], sizes = [239, 32], strides = [1, 1]} : vector<256x32xf32> to vector<239x32xf32>
    %37 = tpu.concatenate %35, %36 in 0 : vector<17x32xf32>, vector<239x32xf32> -> vector<256x32xf32>
    %38 = vector.extract_strided_slice %34 {offsets = [0, 0], sizes = [256, 1], strides = [1, 1]} : vector<256x9xf32> to vector<256x1xf32>
    %39 = vector.broadcast %38 : vector<256x1xf32> to vector<256x32xf32>
    %40 = arith.mulf %37, %39 : vector<256x32xf32>
    %41 = arith.truncf %40 : vector<256x32xf32> to vector<256x32xbf16>
    %42 = vector.extract_strided_slice %33 {offsets = [240, 0], sizes = [16, 32], strides = [1, 1]} : vector<256x32xf32> to vector<16x32xf32>
    %43 = vector.extract_strided_slice %33 {offsets = [0, 0], sizes = [240, 32], strides = [1, 1]} : vector<256x32xf32> to vector<240x32xf32>
    %44 = tpu.concatenate %42, %43 in 0 : vector<16x32xf32>, vector<240x32xf32> -> vector<256x32xf32>
    %45 = vector.extract_strided_slice %34 {offsets = [0, 1], sizes = [256, 1], strides = [1, 1]} : vector<256x9xf32> to vector<256x1xf32>
    %46 = vector.broadcast %45 : vector<256x1xf32> to vector<256x32xf32>
    %47 = arith.mulf %44, %46 : vector<256x32xf32>
    %48 = arith.truncf %47 : vector<256x32xf32> to vector<256x32xbf16>
    %49 = vector.extract_strided_slice %33 {offsets = [241, 0], sizes = [15, 32], strides = [1, 1]} : vector<256x32xf32> to vector<15x32xf32>
    %50 = vector.extract_strided_slice %33 {offsets = [0, 0], sizes = [241, 32], strides = [1, 1]} : vector<256x32xf32> to vector<241x32xf32>
    %51 = tpu.concatenate %49, %50 in 0 : vector<15x32xf32>, vector<241x32xf32> -> vector<256x32xf32>
    %52 = vector.extract_strided_slice %34 {offsets = [0, 2], sizes = [256, 1], strides = [1, 1]} : vector<256x9xf32> to vector<256x1xf32>
    %53 = vector.broadcast %52 : vector<256x1xf32> to vector<256x32xf32>
    %54 = arith.mulf %51, %53 : vector<256x32xf32>
    %55 = arith.truncf %54 : vector<256x32xf32> to vector<256x32xbf16>
    %56 = vector.extract_strided_slice %33 {offsets = [255, 0], sizes = [1, 32], strides = [1, 1]} : vector<256x32xf32> to vector<1x32xf32>
    %57 = vector.extract_strided_slice %33 {offsets = [0, 0], sizes = [255, 32], strides = [1, 1]} : vector<256x32xf32> to vector<255x32xf32>
    %58 = tpu.concatenate %56, %57 in 0 : vector<1x32xf32>, vector<255x32xf32> -> vector<256x32xf32>
    %59 = vector.extract_strided_slice %34 {offsets = [0, 3], sizes = [256, 1], strides = [1, 1]} : vector<256x9xf32> to vector<256x1xf32>
    %60 = vector.broadcast %59 : vector<256x1xf32> to vector<256x32xf32>
    %61 = arith.mulf %58, %60 : vector<256x32xf32>
    %62 = arith.truncf %61 : vector<256x32xf32> to vector<256x32xbf16>
    %63 = arith.truncf %33 : vector<256x32xf32> to vector<256x32xbf16>
    %64 = vector.extract_strided_slice %33 {offsets = [1, 0], sizes = [255, 32], strides = [1, 1]} : vector<256x32xf32> to vector<255x32xf32>
    %65 = vector.extract_strided_slice %33 {offsets = [0, 0], sizes = [1, 32], strides = [1, 1]} : vector<256x32xf32> to vector<1x32xf32>
    %66 = tpu.concatenate %64, %65 in 0 : vector<255x32xf32>, vector<1x32xf32> -> vector<256x32xf32>
    %67 = vector.extract_strided_slice %34 {offsets = [0, 5], sizes = [256, 1], strides = [1, 1]} : vector<256x9xf32> to vector<256x1xf32>
    %68 = vector.broadcast %67 : vector<256x1xf32> to vector<256x32xf32>
    %69 = arith.mulf %66, %68 : vector<256x32xf32>
    %70 = arith.truncf %69 : vector<256x32xf32> to vector<256x32xbf16>
    %71 = vector.extract_strided_slice %33 {offsets = [15, 0], sizes = [241, 32], strides = [1, 1]} : vector<256x32xf32> to vector<241x32xf32>
    %72 = vector.extract_strided_slice %33 {offsets = [0, 0], sizes = [15, 32], strides = [1, 1]} : vector<256x32xf32> to vector<15x32xf32>
    %73 = tpu.concatenate %71, %72 in 0 : vector<241x32xf32>, vector<15x32xf32> -> vector<256x32xf32>
    %74 = vector.extract_strided_slice %34 {offsets = [0, 6], sizes = [256, 1], strides = [1, 1]} : vector<256x9xf32> to vector<256x1xf32>
    %75 = vector.broadcast %74 : vector<256x1xf32> to vector<256x32xf32>
    %76 = arith.mulf %73, %75 : vector<256x32xf32>
    %77 = arith.truncf %76 : vector<256x32xf32> to vector<256x32xbf16>
    %78 = vector.extract_strided_slice %33 {offsets = [16, 0], sizes = [240, 32], strides = [1, 1]} : vector<256x32xf32> to vector<240x32xf32>
    %79 = vector.extract_strided_slice %33 {offsets = [0, 0], sizes = [16, 32], strides = [1, 1]} : vector<256x32xf32> to vector<16x32xf32>
    %80 = tpu.concatenate %78, %79 in 0 : vector<240x32xf32>, vector<16x32xf32> -> vector<256x32xf32>
    %81 = vector.extract_strided_slice %34 {offsets = [0, 7], sizes = [256, 1], strides = [1, 1]} : vector<256x9xf32> to vector<256x1xf32>
    %82 = vector.broadcast %81 : vector<256x1xf32> to vector<256x32xf32>
    %83 = arith.mulf %80, %82 : vector<256x32xf32>
    %84 = arith.truncf %83 : vector<256x32xf32> to vector<256x32xbf16>
    %85 = vector.extract_strided_slice %33 {offsets = [17, 0], sizes = [239, 32], strides = [1, 1]} : vector<256x32xf32> to vector<239x32xf32>
    %86 = vector.extract_strided_slice %33 {offsets = [0, 0], sizes = [17, 32], strides = [1, 1]} : vector<256x32xf32> to vector<17x32xf32>
    %87 = tpu.concatenate %85, %86 in 0 : vector<239x32xf32>, vector<17x32xf32> -> vector<256x32xf32>
    %88 = vector.extract_strided_slice %34 {offsets = [0, 8], sizes = [256, 1], strides = [1, 1]} : vector<256x9xf32> to vector<256x1xf32>
    %89 = vector.broadcast %88 : vector<256x1xf32> to vector<256x32xf32>
    %90 = arith.mulf %87, %89 : vector<256x32xf32>
    %91 = arith.truncf %90 : vector<256x32xf32> to vector<256x32xbf16>
    %92 = tpu.concatenate %41, %48, %55, %62, %63, %70, %77, %84, %91 in 1 : vector<256x32xbf16>, vector<256x32xbf16>, vector<256x32xbf16>, vector<256x32xbf16>, vector<256x32xbf16>, vector<256x32xbf16>, vector<256x32xbf16>, vector<256x32xbf16>, vector<256x32xbf16> -> vector<256x288xbf16>
    %c0_19 = arith.constant 0 : index
    %c0_20 = arith.constant 0 : index
    %93 = vector.load %arg5[%c0_19, %c0_20] : memref<288x64xbf16, #tpu.memory_space<vmem>>, vector<288x64xbf16>
    %cst_21 = arith.constant dense<0.000000e+00> : vector<256x64xf32>
    %94 = tpu.matmul %92, %93, %cst_21 {dimension_numbers = #tpu.dot_dimension_numbers<[1], [0], [0], [1], [0, 0, 1, 1], [], []>} : vector<256x288xbf16>, vector<288x64xbf16>, vector<256x64xf32> -> vector<256x64xf32>
    %c0_22 = arith.constant 0 : index
    %c0_23 = arith.constant 0 : index
    %95 = vector.load %arg6[%c0_22, %c0_23] : memref<1x64xf32, #tpu.memory_space<vmem>>, vector<1x64xf32>
    %96 = vector.broadcast %95 : vector<1x64xf32> to vector<256x64xf32>
    %97 = arith.addf %94, %96 : vector<256x64xf32>
    %98 = arith.truncf %97 : vector<256x64xf32> to vector<256x64xbf16>
    %c0_24 = arith.constant 0 : index
    %c0_25 = arith.constant 0 : index
    %c0_26 = arith.constant 0 : index
    %99 = vector.load %arg8[%c0_24, %c0_25, %c0_26] : memref<1x256x64xbf16, #tpu.memory_space<vmem>>, vector<1x256x64xbf16>
    %100 = vector.shape_cast %99 : vector<1x256x64xbf16> to vector<256x64xbf16>
    %101 = vector.shape_cast %98 : vector<256x64xbf16> to vector<1x256x64xbf16>
    tpu.vector_store %arg8[%c0_24, %c0_25, %c0_26], %101 {strides = array<i32>} : memref<1x256x64xbf16, #tpu.memory_space<vmem>>, vector<1x256x64xbf16>,
    return
  }
  func.func @transform_0(%arg0: i32) -> (i32, i32, i32) {
    %c0_i32 = arith.constant 0 : i32
    %c0_i32_0 = arith.constant 0 : i32
    %c0_i32_1 = arith.constant 0 : i32
    return %arg0, %c0_i32, %c0_i32_0 : i32, i32, i32
  }
  func.func @transform_1(%arg0: i32) -> (i32, i32) {
    %c0_i32 = arith.constant 0 : i32
    %c0_i32_0 = arith.constant 0 : i32
    %c0_i32_1 = arith.constant 0 : i32
    return %c0_i32, %c0_i32_0 : i32, i32
  }
  func.func @transform_2(%arg0: i32) -> (i32, i32) {
    %c0_i32 = arith.constant 0 : i32
    %c0_i32_0 = arith.constant 0 : i32
    %c0_i32_1 = arith.constant 0 : i32
    return %c0_i32, %c0_i32_0 : i32, i32
  }
  func.func @transform_3(%arg0: i32) -> (i32, i32) {
    %c0_i32 = arith.constant 0 : i32
    %c0_i32_0 = arith.constant 0 : i32
    %c0_i32_1 = arith.constant 0 : i32
    return %c0_i32, %c0_i32_0 : i32, i32
  }
  func.func @transform_4(%arg0: i32) -> (i32, i32) {
    %c0_i32 = arith.constant 0 : i32
    %c0_i32_0 = arith.constant 0 : i32
    %c0_i32_1 = arith.constant 0 : i32
    return %c0_i32, %c0_i32_0 : i32, i32
  }
  func.func @transform_5(%arg0: i32) -> (i32, i32) {
    %c0_i32 = arith.constant 0 : i32
    %c0_i32_0 = arith.constant 0 : i32
    %c0_i32_1 = arith.constant 0 : i32
    return %c0_i32, %c0_i32_0 : i32, i32
  }
  func.func @transform_6(%arg0: i32) -> (i32, i32) {
    %c0_i32 = arith.constant 0 : i32
    %c0_i32_0 = arith.constant 0 : i32
    %c0_i32_1 = arith.constant 0 : i32
    return %c0_i32, %c0_i32_0 : i32, i32
  }
  func.func @transform_7(%arg0: i32) -> (i32, i32, i32) {
    %c0_i32 = arith.constant 0 : i32
    %c0_i32_0 = arith.constant 0 : i32
    %c0_i32_1 = arith.constant 0 : i32
    return %arg0, %c0_i32, %c0_i32_0 : i32, i32, i32
  }
}

module attributes {stable_mosaic.version = 11 : i64} {
  func.func @_gn_silu_conv3x3_kernel(%arg0: i32, %arg1: memref<1x256x64xbf16, #tpu.memory_space<vmem>>, %arg2: memref<1x64xf32, #tpu.memory_space<vmem>>, %arg3: memref<1x64xf32, #tpu.memory_space<vmem>>, %arg4: memref<64x32xf32, #tpu.memory_space<vmem>>, %arg5: memref<576x64xbf16, #tpu.memory_space<vmem>>, %arg6: memref<1x64xf32, #tpu.memory_space<vmem>>, %arg7: memref<256x9xf32, #tpu.memory_space<vmem>>, %arg8: memref<1x256x32xf32, #tpu.memory_space<vmem>>, %arg9: memref<32x64xbf16, #tpu.memory_space<vmem>>, %arg10: memref<1x64xf32, #tpu.memory_space<vmem>>, %arg11: memref<1x256x64xf32, #tpu.memory_space<vmem>>) attributes {dimension_semantics = [#tpu.dimension_semantics<parallel>], iteration_bounds = array<i64: 2>, scalar_prefetch = 0 : i64, scratch_operands = 0 : i64, tpu.core_type = #tpu.core_type<tc>, window_params = [{transform_indices = @transform_0, window_bounds = array<i64: 1, 256, 64>}, {pipeline_mode = #tpu.pipeline_mode<synchronous>, transform_indices = @transform_1, window_bounds = array<i64: 1, 64>}, {pipeline_mode = #tpu.pipeline_mode<synchronous>, transform_indices = @transform_2, window_bounds = array<i64: 1, 64>}, {pipeline_mode = #tpu.pipeline_mode<synchronous>, transform_indices = @transform_3, window_bounds = array<i64: 64, 32>}, {pipeline_mode = #tpu.pipeline_mode<synchronous>, transform_indices = @transform_4, window_bounds = array<i64: 576, 64>}, {pipeline_mode = #tpu.pipeline_mode<synchronous>, transform_indices = @transform_5, window_bounds = array<i64: 1, 64>}, {pipeline_mode = #tpu.pipeline_mode<synchronous>, transform_indices = @transform_6, window_bounds = array<i64: 256, 9>}, {transform_indices = @transform_7, window_bounds = array<i64: 1, 256, 32>}, {pipeline_mode = #tpu.pipeline_mode<synchronous>, transform_indices = @transform_8, window_bounds = array<i64: 32, 64>}, {pipeline_mode = #tpu.pipeline_mode<synchronous>, transform_indices = @transform_9, window_bounds = array<i64: 1, 64>}, {transform_indices = @transform_10, window_bounds = array<i64: 1, 256, 64>}]} {
    %c0 = arith.constant 0 : index
    %c0_0 = arith.constant 0 : index
    %c0_1 = arith.constant 0 : index
    %0 = vector.load %arg1[%c0, %c0_0, %c0_1] : memref<1x256x64xbf16, #tpu.memory_space<vmem>>, vector<1x256x64xbf16>
    %1 = vector.shape_cast %0 : vector<1x256x64xbf16> to vector<256x64xbf16>
    %2 = arith.extf %1 : vector<256x64xbf16> to vector<256x64xf32>
    %c0_2 = arith.constant 0 : index
    %c0_3 = arith.constant 0 : index
    %3 = vector.load %arg4[%c0_2, %c0_3] : memref<64x32xf32, #tpu.memory_space<vmem>>, vector<64x32xf32>
    %cst = arith.constant dense<0.000000e+00> : vector<64xf32>
    %4 = vector.multi_reduction <add>, %2, %cst [0] : vector<256x64xf32> to vector<64xf32>
    %5 = vector.shape_cast %4 : vector<64xf32> to vector<1x64xf32>
    %cst_4 = arith.constant dense<0.000000e+00> : vector<1x32xf32>
    %6 = tpu.matmul %5, %3, %cst_4 {dimension_numbers = #tpu.dot_dimension_numbers<[1], [0], [0], [1], [0, 0, 1, 1], [], []>} : vector<1x64xf32>, vector<64x32xf32>, vector<1x32xf32> -> vector<1x32xf32>
    %cst_5 = arith.constant 5.120000e+02 : f32
    %7 = vector.broadcast %cst_5 : f32 to vector<1x32xf32>
    %8 = arith.divf %6, %7 : vector<1x32xf32>
    %cst_6 = arith.constant dense<0.000000e+00> : vector<1x64xf32>
    %9 = tpu.matmul %8, %3, %cst_6 {dimension_numbers = #tpu.dot_dimension_numbers<[1], [1], [0], [0], [0, 0, 1, 0], [], []>} : vector<1x32xf32>, vector<64x32xf32>, vector<1x64xf32> -> vector<1x64xf32>
    %10 = vector.broadcast %9 : vector<1x64xf32> to vector<256x64xf32>
    %11 = arith.subf %2, %10 : vector<256x64xf32>
    %12 = arith.mulf %11, %11 : vector<256x64xf32>
    %cst_7 = arith.constant dense<0.000000e+00> : vector<64xf32>
    %13 = vector.multi_reduction <add>, %12, %cst_7 [0] : vector<256x64xf32> to vector<64xf32>
    %14 = vector.shape_cast %13 : vector<64xf32> to vector<1x64xf32>
    %cst_8 = arith.constant dense<0.000000e+00> : vector<1x32xf32>
    %15 = tpu.matmul %14, %3, %cst_8 {dimension_numbers = #tpu.dot_dimension_numbers<[1], [0], [0], [1], [0, 0, 1, 1], [], []>} : vector<1x64xf32>, vector<64x32xf32>, vector<1x32xf32> -> vector<1x32xf32>
    %cst_9 = arith.constant 5.120000e+02 : f32
    %16 = vector.broadcast %cst_9 : f32 to vector<1x32xf32>
    %17 = arith.divf %15, %16 : vector<1x32xf32>
    %cst_10 = arith.constant dense<0.000000e+00> : vector<1x64xf32>
    %18 = tpu.matmul %17, %3, %cst_10 {dimension_numbers = #tpu.dot_dimension_numbers<[1], [1], [0], [0], [0, 0, 1, 0], [], []>} : vector<1x32xf32>, vector<64x32xf32>, vector<1x64xf32> -> vector<1x64xf32>
    %cst_11 = arith.constant 9.99999974E-6 : f32
    %19 = vector.broadcast %cst_11 : f32 to vector<1x64xf32>
    %20 = arith.addf %18, %19 : vector<1x64xf32>
    %21 = math.rsqrt %20 : vector<1x64xf32>
    %c0_12 = arith.constant 0 : index
    %c0_13 = arith.constant 0 : index
    %22 = vector.load %arg2[%c0_12, %c0_13] : memref<1x64xf32, #tpu.memory_space<vmem>>, vector<1x64xf32>
    %23 = arith.mulf %21, %22 : vector<1x64xf32>
    %24 = vector.broadcast %23 : vector<1x64xf32> to vector<256x64xf32>
    %25 = arith.mulf %11, %24 : vector<256x64xf32>
    %c0_14 = arith.constant 0 : index
    %c0_15 = arith.constant 0 : index
    %26 = vector.load %arg3[%c0_14, %c0_15] : memref<1x64xf32, #tpu.memory_space<vmem>>, vector<1x64xf32>
    %27 = vector.broadcast %26 : vector<1x64xf32> to vector<256x64xf32>
    %28 = arith.addf %25, %27 : vector<256x64xf32>
    %29 = arith.negf %28 : vector<256x64xf32>
    %30 = math.exp %29 : vector<256x64xf32>
    %cst_16 = arith.constant 1.000000e+00 : f32
    %31 = vector.broadcast %cst_16 : f32 to vector<256x64xf32>
    %32 = arith.addf %31, %30 : vector<256x64xf32>
    %33 = arith.divf %31, %32 : vector<256x64xf32>
    %34 = arith.mulf %28, %33 : vector<256x64xf32>
    %c0_17 = arith.constant 0 : index
    %c0_18 = arith.constant 0 : index
    %35 = vector.load %arg7[%c0_17, %c0_18] : memref<256x9xf32, #tpu.memory_space<vmem>>, vector<256x9xf32>
    %36 = vector.extract_strided_slice %34 {offsets = [239, 0], sizes = [17, 64], strides = [1, 1]} : vector<256x64xf32> to vector<17x64xf32>
    %37 = vector.extract_strided_slice %34 {offsets = [0, 0], sizes = [239, 64], strides = [1, 1]} : vector<256x64xf32> to vector<239x64xf32>
    %38 = tpu.concatenate %36, %37 in 0 : vector<17x64xf32>, vector<239x64xf32> -> vector<256x64xf32>
    %39 = vector.extract_strided_slice %35 {offsets = [0, 0], sizes = [256, 1], strides = [1, 1]} : vector<256x9xf32> to vector<256x1xf32>
    %40 = vector.broadcast %39 : vector<256x1xf32> to vector<256x64xf32>
    %41 = arith.mulf %38, %40 : vector<256x64xf32>
    %42 = arith.truncf %41 : vector<256x64xf32> to vector<256x64xbf16>
    %43 = vector.extract_strided_slice %34 {offsets = [240, 0], sizes = [16, 64], strides = [1, 1]} : vector<256x64xf32> to vector<16x64xf32>
    %44 = vector.extract_strided_slice %34 {offsets = [0, 0], sizes = [240, 64], strides = [1, 1]} : vector<256x64xf32> to vector<240x64xf32>
    %45 = tpu.concatenate %43, %44 in 0 : vector<16x64xf32>, vector<240x64xf32> -> vector<256x64xf32>
    %46 = vector.extract_strided_slice %35 {offsets = [0, 1], sizes = [256, 1], strides = [1, 1]} : vector<256x9xf32> to vector<256x1xf32>
    %47 = vector.broadcast %46 : vector<256x1xf32> to vector<256x64xf32>
    %48 = arith.mulf %45, %47 : vector<256x64xf32>
    %49 = arith.truncf %48 : vector<256x64xf32> to vector<256x64xbf16>
    %50 = vector.extract_strided_slice %34 {offsets = [241, 0], sizes = [15, 64], strides = [1, 1]} : vector<256x64xf32> to vector<15x64xf32>
    %51 = vector.extract_strided_slice %34 {offsets = [0, 0], sizes = [241, 64], strides = [1, 1]} : vector<256x64xf32> to vector<241x64xf32>
    %52 = tpu.concatenate %50, %51 in 0 : vector<15x64xf32>, vector<241x64xf32> -> vector<256x64xf32>
    %53 = vector.extract_strided_slice %35 {offsets = [0, 2], sizes = [256, 1], strides = [1, 1]} : vector<256x9xf32> to vector<256x1xf32>
    %54 = vector.broadcast %53 : vector<256x1xf32> to vector<256x64xf32>
    %55 = arith.mulf %52, %54 : vector<256x64xf32>
    %56 = arith.truncf %55 : vector<256x64xf32> to vector<256x64xbf16>
    %57 = vector.extract_strided_slice %34 {offsets = [255, 0], sizes = [1, 64], strides = [1, 1]} : vector<256x64xf32> to vector<1x64xf32>
    %58 = vector.extract_strided_slice %34 {offsets = [0, 0], sizes = [255, 64], strides = [1, 1]} : vector<256x64xf32> to vector<255x64xf32>
    %59 = tpu.concatenate %57, %58 in 0 : vector<1x64xf32>, vector<255x64xf32> -> vector<256x64xf32>
    %60 = vector.extract_strided_slice %35 {offsets = [0, 3], sizes = [256, 1], strides = [1, 1]} : vector<256x9xf32> to vector<256x1xf32>
    %61 = vector.broadcast %60 : vector<256x1xf32> to vector<256x64xf32>
    %62 = arith.mulf %59, %61 : vector<256x64xf32>
    %63 = arith.truncf %62 : vector<256x64xf32> to vector<256x64xbf16>
    %64 = arith.truncf %34 : vector<256x64xf32> to vector<256x64xbf16>
    %65 = vector.extract_strided_slice %34 {offsets = [1, 0], sizes = [255, 64], strides = [1, 1]} : vector<256x64xf32> to vector<255x64xf32>
    %66 = vector.extract_strided_slice %34 {offsets = [0, 0], sizes = [1, 64], strides = [1, 1]} : vector<256x64xf32> to vector<1x64xf32>
    %67 = tpu.concatenate %65, %66 in 0 : vector<255x64xf32>, vector<1x64xf32> -> vector<256x64xf32>
    %68 = vector.extract_strided_slice %35 {offsets = [0, 5], sizes = [256, 1], strides = [1, 1]} : vector<256x9xf32> to vector<256x1xf32>
    %69 = vector.broadcast %68 : vector<256x1xf32> to vector<256x64xf32>
    %70 = arith.mulf %67, %69 : vector<256x64xf32>
    %71 = arith.truncf %70 : vector<256x64xf32> to vector<256x64xbf16>
    %72 = vector.extract_strided_slice %34 {offsets = [15, 0], sizes = [241, 64], strides = [1, 1]} : vector<256x64xf32> to vector<241x64xf32>
    %73 = vector.extract_strided_slice %34 {offsets = [0, 0], sizes = [15, 64], strides = [1, 1]} : vector<256x64xf32> to vector<15x64xf32>
    %74 = tpu.concatenate %72, %73 in 0 : vector<241x64xf32>, vector<15x64xf32> -> vector<256x64xf32>
    %75 = vector.extract_strided_slice %35 {offsets = [0, 6], sizes = [256, 1], strides = [1, 1]} : vector<256x9xf32> to vector<256x1xf32>
    %76 = vector.broadcast %75 : vector<256x1xf32> to vector<256x64xf32>
    %77 = arith.mulf %74, %76 : vector<256x64xf32>
    %78 = arith.truncf %77 : vector<256x64xf32> to vector<256x64xbf16>
    %79 = vector.extract_strided_slice %34 {offsets = [16, 0], sizes = [240, 64], strides = [1, 1]} : vector<256x64xf32> to vector<240x64xf32>
    %80 = vector.extract_strided_slice %34 {offsets = [0, 0], sizes = [16, 64], strides = [1, 1]} : vector<256x64xf32> to vector<16x64xf32>
    %81 = tpu.concatenate %79, %80 in 0 : vector<240x64xf32>, vector<16x64xf32> -> vector<256x64xf32>
    %82 = vector.extract_strided_slice %35 {offsets = [0, 7], sizes = [256, 1], strides = [1, 1]} : vector<256x9xf32> to vector<256x1xf32>
    %83 = vector.broadcast %82 : vector<256x1xf32> to vector<256x64xf32>
    %84 = arith.mulf %81, %83 : vector<256x64xf32>
    %85 = arith.truncf %84 : vector<256x64xf32> to vector<256x64xbf16>
    %86 = vector.extract_strided_slice %34 {offsets = [17, 0], sizes = [239, 64], strides = [1, 1]} : vector<256x64xf32> to vector<239x64xf32>
    %87 = vector.extract_strided_slice %34 {offsets = [0, 0], sizes = [17, 64], strides = [1, 1]} : vector<256x64xf32> to vector<17x64xf32>
    %88 = tpu.concatenate %86, %87 in 0 : vector<239x64xf32>, vector<17x64xf32> -> vector<256x64xf32>
    %89 = vector.extract_strided_slice %35 {offsets = [0, 8], sizes = [256, 1], strides = [1, 1]} : vector<256x9xf32> to vector<256x1xf32>
    %90 = vector.broadcast %89 : vector<256x1xf32> to vector<256x64xf32>
    %91 = arith.mulf %88, %90 : vector<256x64xf32>
    %92 = arith.truncf %91 : vector<256x64xf32> to vector<256x64xbf16>
    %93 = tpu.concatenate %42, %49, %56, %63, %64, %71, %78, %85, %92 in 1 : vector<256x64xbf16>, vector<256x64xbf16>, vector<256x64xbf16>, vector<256x64xbf16>, vector<256x64xbf16>, vector<256x64xbf16>, vector<256x64xbf16>, vector<256x64xbf16>, vector<256x64xbf16> -> vector<256x576xbf16>
    %c0_19 = arith.constant 0 : index
    %c0_20 = arith.constant 0 : index
    %94 = vector.load %arg5[%c0_19, %c0_20] : memref<576x64xbf16, #tpu.memory_space<vmem>>, vector<576x64xbf16>
    %cst_21 = arith.constant dense<0.000000e+00> : vector<256x64xf32>
    %95 = tpu.matmul %93, %94, %cst_21 {dimension_numbers = #tpu.dot_dimension_numbers<[1], [0], [0], [1], [0, 0, 1, 1], [], []>} : vector<256x576xbf16>, vector<576x64xbf16>, vector<256x64xf32> -> vector<256x64xf32>
    %c0_22 = arith.constant 0 : index
    %c0_23 = arith.constant 0 : index
    %96 = vector.load %arg6[%c0_22, %c0_23] : memref<1x64xf32, #tpu.memory_space<vmem>>, vector<1x64xf32>
    %97 = vector.broadcast %96 : vector<1x64xf32> to vector<256x64xf32>
    %98 = arith.addf %95, %97 : vector<256x64xf32>
    %c0_24 = arith.constant 0 : index
    %c0_25 = arith.constant 0 : index
    %c0_26 = arith.constant 0 : index
    %99 = vector.load %arg8[%c0_24, %c0_25, %c0_26] : memref<1x256x32xf32, #tpu.memory_space<vmem>>, vector<1x256x32xf32>
    %100 = vector.shape_cast %99 : vector<1x256x32xf32> to vector<256x32xf32>
    %101 = arith.truncf %100 : vector<256x32xf32> to vector<256x32xbf16>
    %c0_27 = arith.constant 0 : index
    %c0_28 = arith.constant 0 : index
    %102 = vector.load %arg9[%c0_27, %c0_28] : memref<32x64xbf16, #tpu.memory_space<vmem>>, vector<32x64xbf16>
    %cst_29 = arith.constant dense<0.000000e+00> : vector<256x64xf32>
    %103 = tpu.matmul %101, %102, %cst_29 {dimension_numbers = #tpu.dot_dimension_numbers<[1], [0], [0], [1], [0, 0, 1, 1], [], []>} : vector<256x32xbf16>, vector<32x64xbf16>, vector<256x64xf32> -> vector<256x64xf32>
    %104 = arith.addf %98, %103 : vector<256x64xf32>
    %c0_30 = arith.constant 0 : index
    %c0_31 = arith.constant 0 : index
    %105 = vector.load %arg10[%c0_30, %c0_31] : memref<1x64xf32, #tpu.memory_space<vmem>>, vector<1x64xf32>
    %106 = vector.broadcast %105 : vector<1x64xf32> to vector<256x64xf32>
    %107 = arith.addf %104, %106 : vector<256x64xf32>
    %c0_32 = arith.constant 0 : index
    %c0_33 = arith.constant 0 : index
    %c0_34 = arith.constant 0 : index
    %108 = vector.load %arg11[%c0_32, %c0_33, %c0_34] : memref<1x256x64xf32, #tpu.memory_space<vmem>>, vector<1x256x64xf32>
    %109 = vector.shape_cast %108 : vector<1x256x64xf32> to vector<256x64xf32>
    %110 = vector.shape_cast %107 : vector<256x64xf32> to vector<1x256x64xf32>
    tpu.vector_store %arg11[%c0_32, %c0_33, %c0_34], %110 {strides = array<i32>} : memref<1x256x64xf32, #tpu.memory_space<vmem>>, vector<1x256x64xf32>,
    return
  }
  func.func @transform_0(%arg0: i32) -> (i32, i32, i32) {
    %c0_i32 = arith.constant 0 : i32
    %c0_i32_0 = arith.constant 0 : i32
    %c0_i32_1 = arith.constant 0 : i32
    return %arg0, %c0_i32, %c0_i32_0 : i32, i32, i32
  }
  func.func @transform_1(%arg0: i32) -> (i32, i32) {
    %c0_i32 = arith.constant 0 : i32
    %c0_i32_0 = arith.constant 0 : i32
    %c0_i32_1 = arith.constant 0 : i32
    return %c0_i32, %c0_i32_0 : i32, i32
  }
  func.func @transform_2(%arg0: i32) -> (i32, i32) {
    %c0_i32 = arith.constant 0 : i32
    %c0_i32_0 = arith.constant 0 : i32
    %c0_i32_1 = arith.constant 0 : i32
    return %c0_i32, %c0_i32_0 : i32, i32
  }
  func.func @transform_3(%arg0: i32) -> (i32, i32) {
    %c0_i32 = arith.constant 0 : i32
    %c0_i32_0 = arith.constant 0 : i32
    %c0_i32_1 = arith.constant 0 : i32
    return %c0_i32, %c0_i32_0 : i32, i32
  }
  func.func @transform_4(%arg0: i32) -> (i32, i32) {
    %c0_i32 = arith.constant 0 : i32
    %c0_i32_0 = arith.constant 0 : i32
    %c0_i32_1 = arith.constant 0 : i32
    return %c0_i32, %c0_i32_0 : i32, i32
  }
  func.func @transform_5(%arg0: i32) -> (i32, i32) {
    %c0_i32 = arith.constant 0 : i32
    %c0_i32_0 = arith.constant 0 : i32
    %c0_i32_1 = arith.constant 0 : i32
    return %c0_i32, %c0_i32_0 : i32, i32
  }
  func.func @transform_6(%arg0: i32) -> (i32, i32) {
    %c0_i32 = arith.constant 0 : i32
    %c0_i32_0 = arith.constant 0 : i32
    %c0_i32_1 = arith.constant 0 : i32
    return %c0_i32, %c0_i32_0 : i32, i32
  }
  func.func @transform_7(%arg0: i32) -> (i32, i32, i32) {
    %c0_i32 = arith.constant 0 : i32
    %c0_i32_0 = arith.constant 0 : i32
    %c0_i32_1 = arith.constant 0 : i32
    return %arg0, %c0_i32, %c0_i32_0 : i32, i32, i32
  }
  func.func @transform_8(%arg0: i32) -> (i32, i32) {
    %c0_i32 = arith.constant 0 : i32
    %c0_i32_0 = arith.constant 0 : i32
    %c0_i32_1 = arith.constant 0 : i32
    return %c0_i32, %c0_i32_0 : i32, i32
  }
  func.func @transform_9(%arg0: i32) -> (i32, i32) {
    %c0_i32 = arith.constant 0 : i32
    %c0_i32_0 = arith.constant 0 : i32
    %c0_i32_1 = arith.constant 0 : i32
    return %c0_i32, %c0_i32_0 : i32, i32
  }
  func.func @transform_10(%arg0: i32) -> (i32, i32, i32) {
    %c0_i32 = arith.constant 0 : i32
    %c0_i32_0 = arith.constant 0 : i32
    %c0_i32_1 = arith.constant 0 : i32
    return %arg0, %c0_i32, %c0_i32_0 : i32, i32, i32
  }
}

</mosaic_0001>

<llo_original>
// kernel: vae_residual_block.2
$region0: #{vae_residual_block.2}
  #allocation0 [shape = 'u32[]', space=smem, size = 0x4, offset = 0x4, fixed_abs, tag = 'smem constant byte address 0x4 - core index']
  #allocation1 [shape = 'u32[144,128]{1,0:T(1,128)}', space=vmem, size = 0x12000, scoped, tag = 'internal scratch']
  %s0 = inlined_call_operand.vmem [shape: f32[2,256,32], index: 0, kind: input, shape index: {}]
  %s1 = inlined_call_operand.vmem [shape: f32[1,32], index: 1, kind: input, shape index: {}]
  %s2 = inlined_call_operand.vmem [shape: f32[1,32], index: 2, kind: input, shape index: {}]
  %s3 = inlined_call_operand.vmem [shape: f32[32,32], index: 3, kind: input, shape index: {}]
  %s4 = inlined_call_operand.vmem [shape: bf16[288,64], index: 4, kind: input, shape index: {}]
  %s5 = inlined_call_operand.vmem [shape: f32[1,64], index: 5, kind: input, shape index: {}]
  %s6 = inlined_call_operand.vmem [shape: f32[256,9], index: 6, kind: input, shape index: {}]
  %s7 = inlined_call_operand.vmem [shape: bf16[2,256,64], index: 7, kind: output, shape index: {}]
  %s8 = sld [smem:[#allocation0]]
  $region61: #{vae_residual_block.2} parent=0
    _
  %s10 = ssub.s32 1, %s8
  %s11 = scalar_select 0, %s10, %s8
  loop: start=0, step=1, limit=4
  $region2: #{vae_residual_block.2} parent=0 // loop_pre_header
    _
  $region3: #{vae_residual_block.2} parent=0 // loop_header
    %s13 = sphi 0, %s17
    %p14 = scmp.ge.s32.totalorder %s13, 4
    %s23 = sphi 0, %s25
    %s26 = sphi 0, %s23
    %s27 = sphi 0, %s26
    %s43 = sphi 0, %s27
    %s47 = sphi 0, %s47
    %s49 = sphi 0, %s47
    %s50 = sphi 0, %s49
    %s64 = sphi 0, %s50
    %s68 = sphi 0, %s68
    %s70 = sphi 0, %s68
    %s71 = sphi 0, %s70
    %s85 = sphi 0, %s71
    %s89 = sphi 0, %s89
    %s91 = sphi 0, %s89
    %s92 = sphi 0, %s91
    %s106 = sphi 0, %s92
    %s110 = sphi 0, %s110
    %s112 = sphi 0, %s110
    %s113 = sphi 0, %s112
    %s127 = sphi 0, %s113
    %s131 = sphi 0, %s131
    %s133 = sphi 0, %s131
    %s134 = sphi 0, %s133
    %s148 = sphi 0, %s134
    %s152 = sphi 0, %s152
    %s154 = sphi 0, %s152
    %s155 = sphi 0, %s154
    %s169 = sphi 0, %s155
    %s175 = sphi 0, %s177
    %s178 = sphi 0, %s175
    %s179 = sphi 0, %s178
    %s195 = sphi 0, %s179
  $region4: #{vae_residual_block.2} parent=0 // loop_header_branch
    %16 = sbr.rel (%p14) target = $region8
  $region5: #{vae_residual_block.2} parent=0 // loop_body
    %s18 = ssub.s32 %s13, 1
    %s19 = ssub.s32 %s13, 2
    %s20 = sadd.s32 %s13, 1
    %s21 = ssub.s32 %s13, %s20
    %p22 = scmp.eq.s32.totalorder %s21, 0
    %s24 = sadd.s32 %s23, 1
    %s25 = scalar_select %p22, %s23, %s24
    %p28 = pneg %p22
    %p29 = scmp.eq.s32.totalorder %s13, 1
    %p30 = por %p28, %p29
    %p31 = scmp.ne.s32.totalorder %s23, %s26
    %p32 = scmp.eq.s32.totalorder %s13, 0
    %p33 = por %p31, %p32
    %p34 = scmp.ne.s32.totalorder %s23, %s26
    %p35 = scmp.eq.s32.totalorder %s18, 1
    %p36 = por %p34, %p35
    %p37 = scmp.ne.s32.totalorder %s26, %s27
    %p38 = scmp.eq.s32.totalorder %s18, 0
    %p39 = por %p37, %p38
    %p40 = scmp.ne.s32.totalorder %s26, %s27
    %p41 = scmp.eq.s32.totalorder %s19, 1
    %p42 = por %p40, %p41
    %p44 = scmp.ne.s32.totalorder %s27, %s43
    %p45 = scmp.eq.s32.totalorder %s19, 0
    %p46 = por %p44, %p45
    %s48 = sadd.s32 %s47, 1
    %p51 = scmp.eq.s32.totalorder %s13, 1
    %p52 = scmp.ne.s32.totalorder %s47, %s49
    %p53 = scmp.eq.s32.totalorder %s13, 0
    %p54 = por %p52, %p53
    %p55 = scmp.ne.s32.totalorder %s47, %s49
    %p56 = scmp.eq.s32.totalorder %s18, 1
    %p57 = por %p55, %p56
    %p58 = scmp.ne.s32.totalorder %s49, %s50
    %p59 = scmp.eq.s32.totalorder %s18, 0
    %p60 = por %p58, %p59
    %p61 = scmp.ne.s32.totalorder %s49, %s50
    %p62 = scmp.eq.s32.totalorder %s19, 1
    %p63 = por %p61, %p62
    %p65 = scmp.ne.s32.totalorder %s50, %s64
    %p66 = scmp.eq.s32.totalorder %s19, 0
    %p67 = por %p65, %p66
    %s69 = sadd.s32 %s68, 1
    %p72 = scmp.eq.s32.totalorder %s13, 1
    %p73 = scmp.ne.s32.totalorder %s68, %s70
    %p74 = scmp.eq.s32.totalorder %s13, 0
    %p75 = por %p73, %p74
    %p76 = scmp.ne.s32.totalorder %s68, %s70
    %p77 = scmp.eq.s32.totalorder %s18, 1
    %p78 = por %p76, %p77
    %p79 = scmp.ne.s32.totalorder %s70, %s71
    %p80 = scmp.eq.s32.totalorder %s18, 0
    %p81 = por %p79, %p80
    %p82 = scmp.ne.s32.totalorder %s70, %s71
    %p83 = scmp.eq.s32.totalorder %s19, 1
    %p84 = por %p82, %p83
    %p86 = scmp.ne.s32.totalorder %s71, %s85
    %p87 = scmp.eq.s32.totalorder %s19, 0
    %p88 = por %p86, %p87
    %s90 = sadd.s32 %s89, 1
    %p93 = scmp.eq.s32.totalorder %s13, 1
    %p94 = scmp.ne.s32.totalorder %s89, %s91
    %p95 = scmp.eq.s32.totalorder %s13, 0
    %p96 = por %p94, %p95
    %p97 = scmp.ne.s32.totalorder %s89, %s91
    %p98 = scmp.eq.s32.totalorder %s18, 1
    %p99 = por %p97, %p98
    %p100 = scmp.ne.s32.totalorder %s91, %s92
    %p101 = scmp.eq.s32.totalorder %s18, 0
    %p102 = por %p100, %p101
    %p103 = scmp.ne.s32.totalorder %s91, %s92
    %p104 = scmp.eq.s32.totalorder %s19, 1
    %p105 = por %p103, %p104
    %p107 = scmp.ne.s32.totalorder %s92, %s106
    %p108 = scmp.eq.s32.totalorder %s19, 0
    %p109 = por %p107, %p108
    %s111 = sadd.s32 %s110, 1
    %p114 = scmp.eq.s32.totalorder %s13, 1
    %p115 = scmp.ne.s32.totalorder %s110, %s112
    %p116 = scmp.eq.s32.totalorder %s13, 0
    %p117 = por %p115, %p116
    %p118 = scmp.ne.s32.totalorder %s110, %s112
    %p119 = scmp.eq.s32.totalorder %s18, 1
    %p120 = por %p118, %p119
    %p121 = scmp.ne.s32.totalorder %s112, %s113
    %p122 = scmp.eq.s32.totalorder %s18, 0
    %p123 = por %p121, %p122
    %p124 = scmp.ne.s32.totalorder %s112, %s113
    %p125 = scmp.eq.s32.totalorder %s19, 1
    %p126 = por %p124, %p125
    %p128 = scmp.ne.s32.totalorder %s113, %s127
    %p129 = scmp.eq.s32.totalorder %s19, 0
    %p130 = por %p128, %p129
    %s132 = sadd.s32 %s131, 1
    %p135 = scmp.eq.s32.totalorder %s13, 1
    %p136 = scmp.ne.s32.totalorder %s131, %s133
    %p137 = scmp.eq.s32.totalorder %s13, 0
    %p138 = por %p136, %p137
    %p139 = scmp.ne.s32.totalorder %s131, %s133
    %p140 = scmp.eq.s32.totalorder %s18, 1
    %p141 = por %p139, %p140
    %p142 = scmp.ne.s32.totalorder %s133, %s134
    %p143 = scmp.eq.s32.totalorder %s18, 0
    %p144 = por %p142, %p143
    %p145 = scmp.ne.s32.totalorder %s133, %s134
    %p146 = scmp.eq.s32.totalorder %s19, 1
    %p147 = por %p145, %p146
    %p149 = scmp.ne.s32.totalorder %s134, %s148
    %p150 = scmp.eq.s32.totalorder %s19, 0
    %p151 = por %p149, %p150
    %s153 = sadd.s32 %s152, 1
    %p156 = scmp.eq.s32.totalorder %s13, 1
    %p157 = scmp.ne.s32.totalorder %s152, %s154
    %p158 = scmp.eq.s32.totalorder %s13, 0
    %p159 = por %p157, %p158
    %p160 = scmp.ne.s32.totalorder %s152, %s154
    %p161 = scmp.eq.s32.totalorder %s18, 1
    %p162 = por %p160, %p161
    %p163 = scmp.ne.s32.totalorder %s154, %s155
    %p164 = scmp.eq.s32.totalorder %s18, 0
    %p165 = por %p163, %p164
    %p166 = scmp.ne.s32.totalorder %s154, %s155
    %p167 = scmp.eq.s32.totalorder %s19, 1
    %p168 = por %p166, %p167
    %p170 = scmp.ne.s32.totalorder %s155, %s169
    %p171 = scmp.eq.s32.totalorder %s19, 0
    %p172 = por %p170, %p171
    %s173 = ssub.s32 %s13, %s20
    %p174 = scmp.eq.s32.totalorder %s173, 0
    %s176 = sadd.s32 %s175, 1
    %s177 = scalar_select %p174, %s175, %s176
    %p180 = pneg %p174
    %p181 = scmp.eq.s32.totalorder %s13, 1
    %p182 = por %p180, %p181
    %p183 = scmp.ne.s32.totalorder %s175, %s178
    %p184 = scmp.eq.s32.totalorder %s13, 0
    %p185 = por %p183, %p184
    %p186 = scmp.ne.s32.totalorder %s175, %s178
    %p187 = scmp.eq.s32.totalorder %s18, 1
    %p188 = por %p186, %p187
    %p189 = scmp.ne.s32.totalorder %s178, %s179
    %p190 = scmp.eq.s32.totalorder %s18, 0
    %p191 = por %p189, %p190
    %p192 = scmp.ne.s32.totalorder %s178, %s179
    %p193 = scmp.eq.s32.totalorder %s19, 1
    %p194 = por %p192, %p193
    %p196 = scmp.ne.s32.totalorder %s179, %s195
    %p197 = scmp.eq.s32.totalorder %s19, 0
    %p198 = por %p196, %p197
    %p199 = scmp.le.s32.totalorder 1, %s13
    %p200 = scmp.lt.s32.totalorder %s13, 3
    %p201 = pnand %p199, %p200
    %p202 = pneg %p201
    // Predicated region
    $region9: #{vae_residual_block.2} parent=5 // pred_check
      _
    $region10: #{vae_residual_block.2} parent=5 // pred_check_branch
      %204 = sbr.rel (%p201) target = $region12
    $region11: #{vae_residual_block.2} parent=5 // pred_region
      %s205 = ssub.s32 %s13, 1
      // Predicated region
      $region13: #{vae_residual_block.2} parent=11 // pred_check
        %p206 = pneg %p60
      $region14: #{vae_residual_block.2} parent=11 // pred_check_branch
        %208 = sbr.rel (%p206) target = $region16
      $region15: #{vae_residual_block.2} parent=11 // pred_region
        _
      $region16: #{vae_residual_block.2} parent=11 // pred_fallthru
        _
      // Predicated region
      $region17: #{vae_residual_block.2} parent=11 // pred_check
        %p209 = pneg %p81
      $region18: #{vae_residual_block.2} parent=11 // pred_check_branch
        %211 = sbr.rel (%p209) target = $region20
      $region19: #{vae_residual_block.2} parent=11 // pred_region
        _
      $region20: #{vae_residual_block.2} parent=11 // pred_fallthru
        _
      // Predicated region
      $region21: #{vae_residual_block.2} parent=11 // pred_check
        %p212 = pneg %p102
      $region22: #{vae_residual_block.2} parent=11 // pred_check_branch
        %214 = sbr.rel (%p212) target = $region24
      $region23: #{vae_residual_block.2} parent=11 // pred_region
        _
      $region24: #{vae_residual_block.2} parent=11 // pred_fallthru
        _
      // Predicated region
      $region25: #{vae_residual_block.2} parent=11 // pred_check
        %p215 = pneg %p123
      $region26: #{vae_residual_block.2} parent=11 // pred_check_branch
        %217 = sbr.rel (%p215) target = $region28
      $region27: #{vae_residual_block.2} parent=11 // pred_region
        _
      $region28: #{vae_residual_block.2} parent=11 // pred_fallthru
        _
      // Predicated region
      $region29: #{vae_residual_block.2} parent=11 // pred_check
        %p218 = pneg %p144
      $region30: #{vae_residual_block.2} parent=11 // pred_check_branch
        %220 = sbr.rel (%p218) target = $region32
      $region31: #{vae_residual_block.2} parent=11 // pred_region
        _
      $region32: #{vae_residual_block.2} parent=11 // pred_fallthru
        _
      // Predicated region
      $region33: #{vae_residual_block.2} parent=11 // pred_check
        %p221 = pneg %p165
      $region34: #{vae_residual_block.2} parent=11 // pred_check_branch
        %223 = sbr.rel (%p221) target = $region36
      $region35: #{vae_residual_block.2} parent=11 // pred_region
        _
      $region36: #{vae_residual_block.2} parent=11 // pred_fallthru
        _
    $region12: #{vae_residual_block.2} parent=5 // pred_fallthru
      _
    %p224 = scmp.lt.s32.totalorder %s13, 2
    // Predicated region
    $region37: #{vae_residual_block.2} parent=5 // pred_check
      %p225 = pneg %p224
    $region38: #{vae_residual_block.2} parent=5 // pred_check_branch
      %227 = sbr.rel (%p225) target = $region40
    $region39: #{vae_residual_block.2} parent=5 // pred_region
      // Predicated region
      $region41: #{vae_residual_block.2} parent=39 // pred_check
        %p228 = pneg %p33
      $region42: #{vae_residual_block.2} parent=39 // pred_check_branch
        %230 = sbr.rel (%p228) target = $region44
      $region43: #{vae_residual_block.2} parent=39 // pred_region
        %p231 = scmp.lt.s32.totalorder %s13, 1
        %s232 = scalar_select %p231, %s13, 1
        %s233 = smul.addr %s232, 32
        %s234 = smul.addr %s233, 8
        %s235 = scalar_lea.vmem %s0, %s234
      $region44: #{vae_residual_block.2} parent=39 // pred_fallthru
        _
    $region40: #{vae_residual_block.2} parent=5 // pred_fallthru
      _
    %p236 = scmp.le.s32.totalorder 1, %s13
    %p237 = scmp.lt.s32.totalorder %s13, 3
    %p238 = pnand %p236, %p237
    %p239 = pneg %p238
    // Predicated region
    $region45: #{vae_residual_block.2} parent=5 // pred_check
      _
    $region46: #{vae_residual_block.2} parent=5 // pred_check_branch
      %241 = sbr.rel (%p238) target = $region48
    $region47: #{vae_residual_block.2} parent=5 // pred_region
      %s242 = ssub.s32 %s13, 1
      %p243 = scmp.lt.s32.totalorder %s18, 1
      %s244 = scalar_select %p243, %s18, 1
      %s245 = smul.addr %s244, 32
      %s246 = smul.addr %s245, 8
      %s247 = scalar_lea.vmem %s0, %s246
      %p248 = pneg %p39
      %p249 = pneg %p36
      %p250 = pneg %p60
      %p251 = pneg %p57
      %p252 = pneg %p81
      %p253 = pneg %p78
      %p254 = pneg %p102
      %p255 = pneg %p99
      %p256 = pneg %p123
      %p257 = pneg %p120
      %p258 = pneg %p144
      %p259 = pneg %p141
      %p260 = pneg %p165
      %p261 = pneg %p162
      %p262 = pneg %p191
      %p263 = pneg %p188
      %p264 = scmp.lt.s32.totalorder %s18, 1
      %s265 = scalar_select %p264, %s18, 1
      %s266 = smul.addr %s265, 32
      %s267 = smul.addr %s266, 4
      %s268 = scalar_lea.vmem %s7, %s267
      %p269 = scmp.lt.s32.totalorder %s18, 1
      %s270 = scalar_select %p269, %s18, 1
      %s271 = smul.addr %s270, 32
      %s272 = smul.addr %s271, 8
      %s273 = scalar_lea.vmem %s0, %s272
      %p274 = scmp.lt.s32.totalorder %s18, 1
      %s275 = scalar_select %p274, %s18, 1
      %s276 = smul.addr %s275, 32
      %s277 = smul.addr %s276, 4
      %s278 = scalar_lea.vmem %s7, %s277
      %v280 = vld [vmem:[%s273] sm:$0xff]
      %v281 = vld [vmem:[%s273 + $0x8] sm:$0xff]
      %v282 = vld [vmem:[%s273 + $0x10] sm:$0xff]
      %v283 = vld [vmem:[%s273 + $0x18] sm:$0xff]
      %v284 = vld [vmem:[%s273 + $0x20] sm:$0xff]
      %v285 = vld [vmem:[%s273 + $0x28] sm:$0xff]
      %v286 = vld [vmem:[%s273 + $0x30] sm:$0xff]
      %v287 = vld [vmem:[%s273 + $0x38] sm:$0xff]
      %v288 = vld [vmem:[%s273 + $0x40] sm:$0xff]
      %v289 = vld [vmem:[%s273 + $0x48] sm:$0xff]
      %v290 = vld [vmem:[%s273 + $0x50] sm:$0xff]
      %v291 = vld [vmem:[%s273 + $0x58] sm:$0xff]
      %v292 = vld [vmem:[%s273 + $0x60] sm:$0xff]
      %v293 = vld [vmem:[%s273 + $0x68] sm:$0xff]
      %v294 = vld [vmem:[%s273 + $0x70] sm:$0xff]
      %v295 = vld [vmem:[%s273 + $0x78] sm:$0xff]
      %v296 = vld [vmem:[%s273 + $0x80] sm:$0xff]
      %v297 = vld [vmem:[%s273 + $0x88] sm:$0xff]
      %v298 = vld [vmem:[%s273 + $0x90] sm:$0xff]
      %v299 = vld [vmem:[%s273 + $0x98] sm:$0xff]
      %v300 = vld [vmem:[%s273 + $0xa0] sm:$0xff]
      %v301 = vld [vmem:[%s273 + $0xa8] sm:$0xff]
      %v302 = vld [vmem:[%s273 + $0xb0] sm:$0xff]
      %v303 = vld [vmem:[%s273 + $0xb8] sm:$0xff]
      %v304 = vld [vmem:[%s273 + $0xc0] sm:$0xff]
      %v305 = vld [vmem:[%s273 + $0xc8] sm:$0xff]
      %v306 = vld [vmem:[%s273 + $0xd0] sm:$0xff]
      %v307 = vld [vmem:[%s273 + $0xd8] sm:$0xff]
      %v308 = vld [vmem:[%s273 + $0xe0] sm:$0xff]
      %v309 = vld [vmem:[%s273 + $0xe8] sm:$0xff]
      %v310 = vld [vmem:[%s273 + $0xf0] sm:$0xff]
      %v311 = vld [vmem:[%s273 + $0xf8] sm:$0xff]
      %v312 = vld [vmem:[%s3] sm:$0xff]
      %v313 = vld [vmem:[%s3 + $0x8] sm:$0xff]
      %v314 = vld [vmem:[%s3 + $0x10] sm:$0xff]
      %v315 = vld [vmem:[%s3 + $0x18] sm:$0xff]
      %vm316 = vcmask 261120
      %v317 = vsel %vm316, %v280, 0.0
      %v318 = vsel %vm316, %v281, 0.0
      %v319 = vadd.f32 %v317, %v318
      %v320 = vsel %vm316, %v282, 0.0
      %v321 = vadd.f32 %v319, %v320
      %v322 = vsel %vm316, %v283, 0.0
      %v323 = vadd.f32 %v321, %v322
      %v324 = vsel %vm316, %v284, 0.0
      %v325 = vadd.f32 %v323, %v324
      %v326 = vsel %vm316, %v285, 0.0
      %v327 = vadd.f32 %v325, %v326
      %v328 = vsel %vm316, %v286, 0.0
      %v329 = vadd.f32 %v327, %v328
      %v330 = vsel %vm316, %v287, 0.0
      %v331 = vadd.f32 %v329, %v330
      %v332 = vsel %vm316, %v288, 0.0
      %v333 = vadd.f32 %v331, %v332
      %v334 = vsel %vm316, %v289, 0.0
      %v335 = vadd.f32 %v333, %v334
      %v336 = vsel %vm316, %v290, 0.0
      %v337 = vadd.f32 %v335, %v336
      %v338 = vsel %vm316, %v291, 0.0
      %v339 = vadd.f32 %v337, %v338
      %v340 = vsel %vm316, %v292, 0.0
      %v341 = vadd.f32 %v339, %v340
      %v342 = vsel %vm316, %v293, 0.0
      %v343 = vadd.f32 %v341, %v342
      %v344 = vsel %vm316, %v294, 0.0
      %v345 = vadd.f32 %v343, %v344
      %v346 = vsel %vm316, %v295, 0.0
      %v347 = vadd.f32 %v345, %v346
      %v348 = vsel %vm316, %v296, 0.0
      %v349 = vadd.f32 %v347, %v348
      %v350 = vsel %vm316, %v297, 0.0
      %v351 = vadd.f32 %v349, %v350
      %v352 = vsel %vm316, %v298, 0.0
      %v353 = vadd.f32 %v351, %v352
      %v354 = vsel %vm316, %v299, 0.0
      %v355 = vadd.f32 %v353, %v354
      %v356 = vsel %vm316, %v300, 0.0
      %v357 = vadd.f32 %v355, %v356
      %v358 = vsel %vm316, %v301, 0.0
      %v359 = vadd.f32 %v357, %v358
      %v360 = vsel %vm316, %v302, 0.0
      %v361 = vadd.f32 %v359, %v360
      %v362 = vsel %vm316, %v303, 0.0
      %v363 = vadd.f32 %v361, %v362
      %v364 = vsel %vm316, %v304, 0.0
      %v365 = vadd.f32 %v363, %v364
      %v366 = vsel %vm316, %v305, 0.0
      %v367 = vadd.f32 %v365, %v366
      %v368 = vsel %vm316, %v306, 0.0
      %v369 = vadd.f32 %v367, %v368
      %v370 = vsel %vm316, %v307, 0.0
      %v371 = vadd.f32 %v369, %v370
      %v372 = vsel %vm316, %v308, 0.0
      %v373 = vadd.f32 %v371, %v372
      %v374 = vsel %vm316, %v309, 0.0
      %v375 = vadd.f32 %v373, %v374
      %v376 = vsel %vm316, %v310, 0.0
      %v377 = vadd.f32 %v375, %v376
      %v378 = vsel %vm316, %v311, 0.0
      %v379 = vadd.f32 %v377, %v378
      %v380 = vrot.slane %v379, 4
      %v381 = vadd.f32 %v379, %v380
      %v382 = vrot.slane %v381, 2
      %v383 = vadd.f32 %v381, %v382
      %v384 = vrot.slane %v383, 1
      %v385 = vadd.f32 %v383, %v384
      %v387 = vsel %vm316, %v385, 0
      %389 = vmatprep.subr.mxu0 0.0
      %390 = vmatpush1.msra.mxu0 %v312
      %391 = vmatprep.subr.mxu0 0.0
      %392 = vmatpush1.msra.mxu0 %v313
      %393 = vmatprep.subr.mxu0 0.0
      %394 = vmatpush1.msra.mxu0 %v314
      %395 = vmatprep.subr.mxu0 0.0
      %396 = vmatpush1.msra.mxu0 %v315
      %397 = vmatprep.subr.mxu0 0.0
      %398 = vmatpush1.msra.mxu0 0.0
      %399 = vmatprep.subr.mxu0 0.0
      %400 = vmatpush1.msra.mxu0 0.0
      %401 = vmatprep.subr.mxu0 0.0
      %402 = vmatpush1.msra.mxu0 0.0
      %403 = vmatprep.subr.mxu0 0.0
      %404 = vmatpush1.msra.mxu0 0.0
      %405 = vmatprep.subr.mxu0 0.0
      %406 = vmatpush1.msra.mxu0 0.0
      %407 = vmatprep.subr.mxu0 0.0
      %408 = vmatpush1.msra.mxu0 0.0
      %409 = vmatprep.subr.mxu0 0.0
      %410 = vmatpush1.msra.mxu0 0.0
      %411 = vmatprep.subr.mxu0 0.0
      %412 = vmatpush1.msra.mxu0 0.0
      %413 = vmatprep.subr.mxu0 0.0
      %414 = vmatpush1.msra.mxu0 0.0
      %415 = vmatprep.subr.mxu0 0.0
      %416 = vmatpush1.msra.mxu0 0.0
      %417 = vmatprep.subr.mxu0 0.0
      %418 = vmatpush1.msra.mxu0 0.0
      %419 = vmatprep.subr.mxu0 0.0
      %420 = vmatpush1.msra.mxu0 0.0
      %421 = vmatprep.subr.mxu0 0.0
      %422 = vmatpush1.msra.mxu0 0.0
      %423 = vmatprep.subr.mxu0 0.0
      %424 = vmatpush1.msra.mxu0 0.0
      %425 = vmatprep.subr.mxu0 0.0
      %426 = vmatpush1.msra.mxu0 0.0
      %427 = vmatprep.subr.mxu0 0.0
      %428 = vmatpush1.msra.mxu0 0.0
      %429 = vmatprep.subr.mxu0 0.0
      %430 = vmatpush1.msra.mxu0 0.0
      %431 = vmatprep.subr.mxu0 0.0
      %432 = vmatpush1.msra.mxu0 0.0
      %433 = vmatprep.subr.mxu0 0.0
      %434 = vmatpush1.msra.mxu0 0.0
      %435 = vmatprep.subr.mxu0 0.0
      %436 = vmatpush1.msra.mxu0 0.0
      %437 = vmatprep.subr.mxu0 0.0
      %438 = vmatpush1.msra.mxu0 0.0
      %439 = vmatprep.subr.mxu0 0.0
      %440 = vmatpush1.msra.mxu0 0.0
      %441 = vmatprep.subr.mxu0 0.0
      %442 = vmatpush1.msra.mxu0 0.0
      %443 = vmatprep.subr.mxu0 0.0
      %444 = vmatpush1.msra.mxu0 0.0
      %445 = vmatprep.subr.mxu0 0.0
      %446 = vmatpush1.msra.mxu0 0.0
      %447 = vmatprep.subr.mxu0 0.0
      %448 = vmatpush1.msra.mxu0 0.0
      %449 = vmatprep.subr.mxu0 0.0
      %450 = vmatpush1.msra.mxu0 0.0
      %451 = vmatprep.subr.mxu0 0.0
      %452 = vmatpush1.msra.mxu0 0.0
      %453 = vmatprep.mubr.f32.mxu0 0.0
      %454 = vmatmul.mubr.f32.gmra.mrb[0].mxu0 %v387
      %v455 = vpop.f32.mrb[0].mxu0
      %v456 = vadd.f32 0.0, %v455
      %v457 = vpop.f32.mrb[0].mxu0
      %458 = vdwg.mxu0
      %v459 = vrcp.pop 256.0
      %v460 = vmul.f32 %v456, %v459
      %v462 = vsel %vm316, %v460, 0
      %v465 = vsel %vm316, %v312, 0
      %v468 = vsel %vm316, %v313, 0
      %v471 = vsel %vm316, %v314, 0
      %v474 = vsel %vm316, %v315, 0
      %476 = vmatprep.subr.mxu0 0.0
      %477 = vmatpush1.xpose.msra.mxu0 %v465
      %478 = vmatprep.subr.mxu0 0.0
      %479 = vmatpush1.xpose.msra.mxu0 %v468
      %480 = vmatprep.subr.mxu0 0.0
      %481 = vmatpush1.xpose.msra.mxu0 %v471
      %482 = vmatprep.subr.mxu0 0.0
      %483 = vmatpush1.xpose.msra.mxu0 %v474
      %484 = vmatprep.subr.mxu0 0.0
      %485 = vmatpush1.xpose.msra.mxu0 0.0
      %486 = vmatprep.subr.mxu0 0.0
      %487 = vmatpush1.xpose.msra.mxu0 0.0
      %488 = vmatprep.subr.mxu0 0.0
      %489 = vmatpush1.xpose.msra.mxu0 0.0
      %490 = vmatprep.subr.mxu0 0.0
      %491 = vmatpush1.xpose.msra.mxu0 0.0
      %492 = vmatprep.subr.mxu0 0.0
      %493 = vmatpush1.xpose.msra.mxu0 0.0
      %494 = vmatprep.subr.mxu0 0.0
      %495 = vmatpush1.xpose.msra.mxu0 0.0
      %496 = vmatprep.subr.mxu0 0.0
      %497 = vmatpush1.xpose.msra.mxu0 0.0
      %498 = vmatprep.subr.mxu0 0.0
      %499 = vmatpush1.xpose.msra.mxu0 0.0
      %500 = vmatprep.subr.mxu0 0.0
      %501 = vmatpush1.xpose.msra.mxu0 0.0
      %502 = vmatprep.subr.mxu0 0.0
      %503 = vmatpush1.xpose.msra.mxu0 0.0
      %504 = vmatprep.subr.mxu0 0.0
      %505 = vmatpush1.xpose.msra.mxu0 0.0
      %506 = vmatprep.subr.mxu0 0.0
      %507 = vmatpush1.xpose.msra.mxu0 0.0
      %508 = vmatprep.subr.mxu0 0.0
      %509 = vmatpush1.xpose.msra.mxu0 0.0
      %510 = vmatprep.subr.mxu0 0.0
      %511 = vmatpush1.xpose.msra.mxu0 0.0
      %512 = vmatprep.subr.mxu0 0.0
      %513 = vmatpush1.xpose.msra.mxu0 0.0
      %514 = vmatprep.subr.mxu0 0.0
      %515 = vmatpush1.xpose.msra.mxu0 0.0
      %516 = vmatprep.subr.mxu0 0.0
      %517 = vmatpush1.xpose.msra.mxu0 0.0
      %518 = vmatprep.subr.mxu0 0.0
      %519 = vmatpush1.xpose.msra.mxu0 0.0
      %520 = vmatprep.subr.mxu0 0.0
      %521 = vmatpush1.xpose.msra.mxu0 0.0
      %522 = vmatprep.subr.mxu0 0.0
      %523 = vmatpush1.xpose.msra.mxu0 0.0
      %524 = vmatprep.subr.mxu0 0.0
      %525 = vmatpush1.xpose.msra.mxu0 0.0
      %526 = vmatprep.subr.mxu0 0.0
      %527 = vmatpush1.xpose.msra.mxu0 0.0
      %528 = vmatprep.subr.mxu0 0.0
      %529 = vmatpush1.xpose.msra.mxu0 0.0
      %530 = vmatprep.subr.mxu0 0.0
      %531 = vmatpush1.xpose.msra.mxu0 0.0
      %532 = vmatprep.subr.mxu0 0.0
      %533 = vmatpush1.xpose.msra.mxu0 0.0
      %534 = vmatprep.subr.mxu0 0.0
      %535 = vmatpush1.xpose.msra.mxu0 0.0
      %536 = vmatprep.subr.mxu0 0.0
      %537 = vmatpush1.xpose.msra.mxu0 0.0
      %538 = vmatprep.subr.mxu0 0.0
      %539 = vmatpush1.xpose.msra.mxu0 0.0
      %540 = vmatprep.mubr.f32.mxu0 0.0
      %541 = vmatmul.mubr.f32.gmra.mrb[0].mxu0 %v462
      %v542 = vpop.f32.mrb[0].mxu0
      %v543 = vadd.f32 0.0, %v542
      %v544 = vpop.f32.mrb[0].mxu0
      %545 = vdwg.mxu0
      %v546 = vlaneseq
      %v547 = vshrl.u32 %v546, 7
      %v548 = vsub.s32 0, %v547
      %v549 = vrot.slane %v543, %v548
      %v550 = vsub.f32 %v280, %v549
      %v551 = vsub.f32 %v281, %v549
      %v552 = vsub.f32 %v282, %v549
      %v553 = vsub.f32 %v283, %v549
      %v554 = vsub.f32 %v284, %v549
      %v555 = vsub.f32 %v285, %v549
      %v556 = vsub.f32 %v286, %v549
      %v557 = vsub.f32 %v287, %v549
      %v558 = vsub.f32 %v288, %v549
      %v559 = vsub.f32 %v289, %v549
      %v560 = vsub.f32 %v290, %v549
      %v561 = vsub.f32 %v291, %v549
      %v562 = vsub.f32 %v292, %v549
      %v563 = vsub.f32 %v293, %v549
      %v564 = vsub.f32 %v294, %v549
      %v565 = vsub.f32 %v295, %v549
      %v566 = vsub.f32 %v296, %v549
      %v567 = vsub.f32 %v297, %v549
      %v568 = vsub.f32 %v298, %v549
      %v569 = vsub.f32 %v299, %v549
      %v570 = vsub.f32 %v300, %v549
      %v571 = vsub.f32 %v301, %v549
      %v572 = vsub.f32 %v302, %v549
      %v573 = vsub.f32 %v303, %v549
      %v574 = vsub.f32 %v304, %v549
      %v575 = vsub.f32 %v305, %v549
      %v576 = vsub.f32 %v306, %v549
      %v577 = vsub.f32 %v307, %v549
      %v578 = vsub.f32 %v308, %v549
      %v579 = vsub.f32 %v309, %v549
      %v580 = vsub.f32 %v310, %v549
      %v581 = vsub.f32 %v311, %v549
      %v582 = vmul.f32 %v550, %v550
      %v583 = vmul.f32 %v551, %v551
      %v584 = vmul.f32 %v552, %v552
      %v585 = vmul.f32 %v553, %v553
      %v586 = vmul.f32 %v554, %v554
      %v587 = vmul.f32 %v555, %v555
      %v588 = vmul.f32 %v556, %v556
      %v589 = vmul.f32 %v557, %v557
      %v590 = vmul.f32 %v558, %v558
      %v591 = vmul.f32 %v559, %v559
      %v592 = vmul.f32 %v560, %v560
      %v593 = vmul.f32 %v561, %v561
      %v594 = vmul.f32 %v562, %v562
      %v595 = vmul.f32 %v563, %v563
      %v596 = vmul.f32 %v564, %v564
      %v597 = vmul.f32 %v565, %v565
      %v598 = vmul.f32 %v566, %v566
      %v599 = vmul.f32 %v567, %v567
      %v600 = vmul.f32 %v568, %v568
      %v601 = vmul.f32 %v569, %v569
      %v602 = vmul.f32 %v570, %v570
      %v603 = vmul.f32 %v571, %v571
      %v604 = vmul.f32 %v572, %v572
      %v605 = vmul.f32 %v573, %v573
      %v606 = vmul.f32 %v574, %v574
      %v607 = vmul.f32 %v575, %v575
      %v608 = vmul.f32 %v576, %v576
      %v609 = vmul.f32 %v577, %v577
      %v610 = vmul.f32 %v578, %v578
      %v611 = vmul.f32 %v579, %v579
      %v612 = vmul.f32 %v580, %v580
      %v613 = vmul.f32 %v581, %v581
      %v614 = vsel %vm316, %v582, 0.0
      %v615 = vsel %vm316, %v583, 0.0
      %v616 = vadd.f32 %v614, %v615
      %v617 = vsel %vm316, %v584, 0.0
      %v618 = vadd.f32 %v616, %v617
      %v619 = vsel %vm316, %v585, 0.0
      %v620 = vadd.f32 %v618, %v619
      %v621 = vsel %vm316, %v586, 0.0
      %v622 = vadd.f32 %v620, %v621
      %v623 = vsel %vm316, %v587, 0.0
      %v624 = vadd.f32 %v622, %v623
      %v625 = vsel %vm316, %v588, 0.0
      %v626 = vadd.f32 %v624, %v625
      %v627 = vsel %vm316, %v589, 0.0
      %v628 = vadd.f32 %v626, %v627
      %v629 = vsel %vm316, %v590, 0.0
      %v630 = vadd.f32 %v628, %v629
      %v631 = vsel %vm316, %v591, 0.0
      %v632 = vadd.f32 %v630, %v631
      %v633 = vsel %vm316, %v592, 0.0
      %v634 = vadd.f32 %v632, %v633
      %v635 = vsel %vm316, %v593, 0.0
      %v636 = vadd.f32 %v634, %v635
      %v637 = vsel %vm316, %v594, 0.0
      %v638 = vadd.f32 %v636, %v637
      %v639 = vsel %vm316, %v595, 0.0
      %v640 = vadd.f32 %v638, %v639
      %v641 = vsel %vm316, %v596, 0.0
      %v642 = vadd.f32 %v640, %v641
      %v643 = vsel %vm316, %v597, 0.0
      %v644 = vadd.f32 %v642, %v643
      %v645 = vsel %vm316, %v598, 0.0
      %v646 = vadd.f32 %v644, %v645
      %v647 = vsel %vm316, %v599, 0.0
      %v648 = vadd.f32 %v646, %v647
      %v649 = vsel %vm316, %v600, 0.0
      %v650 = vadd.f32 %v648, %v649
      %v651 = vsel %vm316, %v601, 0.0
      %v652 = vadd.f32 %v650, %v651
      %v653 = vsel %vm316, %v602, 0.0
      %v654 = vadd.f32 %v652, %v653
      %v655 = vsel %vm316, %v603, 0.0
      %v656 = vadd.f32 %v654, %v655
      %v657 = vsel %vm316, %v604, 0.0
      %v658 = vadd.f32 %v656, %v657
      %v659 = vsel %vm316, %v605, 0.0
      %v660 = vadd.f32 %v658, %v659
      %v661 = vsel %vm316, %v606, 0.0
      %v662 = vadd.f32 %v660, %v661
      %v663 = vsel %vm316, %v607, 0.0
      %v664 = vadd.f32 %v662, %v663
      %v665 = vsel %vm316, %v608, 0.0
      %v666 = vadd.f32 %v664, %v665
      %v667 = vsel %vm316, %v609, 0.0
      %v668 = vadd.f32 %v666, %v667
      %v669 = vsel %vm316, %v610, 0.0
      %v670 = vadd.f32 %v668, %v669
      %v671 = vsel %vm316, %v611, 0.0
      %v672 = vadd.f32 %v670, %v671
      %v673 = vsel %vm316, %v612, 0.0
      %v674 = vadd.f32 %v672, %v673
      %v675 = vsel %vm316, %v613, 0.0
      %v676 = vadd.f32 %v674, %v675
      %v677 = vrot.slane %v676, 4
      %v678 = vadd.f32 %v676, %v677
      %v679 = vrot.slane %v678, 2
      %v680 = vadd.f32 %v678, %v679
      %v681 = vrot.slane %v680, 1
      %v682 = vadd.f32 %v680, %v681
      %v684 = vsel %vm316, %v682, 0
      %686 = vmatprep.subr.mxu0 0.0
      %687 = vmatpush1.msra.mxu0 %v312
      %688 = vmatprep.subr.mxu0 0.0
      %689 = vmatpush1.msra.mxu0 %v313
      %690 = vmatprep.subr.mxu0 0.0
      %691 = vmatpush1.msra.mxu0 %v314
      %692 = vmatprep.subr.mxu0 0.0
      %693 = vmatpush1.msra.mxu0 %v315
      %694 = vmatprep.subr.mxu0 0.0
      %695 = vmatpush1.msra.mxu0 0.0
      %696 = vmatprep.subr.mxu0 0.0
      %697 = vmatpush1.msra.mxu0 0.0
      %698 = vmatprep.subr.mxu0 0.0
      %699 = vmatpush1.msra.mxu0 0.0
      %700 = vmatprep.subr.mxu0 0.0
      %701 = vmatpush1.msra.mxu0 0.0
      %702 = vmatprep.subr.mxu0 0.0
      %703 = vmatpush1.msra.mxu0 0.0
      %704 = vmatprep.subr.mxu0 0.0
      %705 = vmatpush1.msra.mxu0 0.0
      %706 = vmatprep.subr.mxu0 0.0
      %707 = vmatpush1.msra.mxu0 0.0
      %708 = vmatprep.subr.mxu0 0.0
      %709 = vmatpush1.msra.mxu0 0.0
      %710 = vmatprep.subr.mxu0 0.0
      %711 = vmatpush1.msra.mxu0 0.0
      %712 = vmatprep.subr.mxu0 0.0
      %713 = vmatpush1.msra.mxu0 0.0
      %714 = vmatprep.subr.mxu0 0.0
      %715 = vmatpush1.msra.mxu0 0.0
      %716 = vmatprep.subr.mxu0 0.0
      %717 = vmatpush1.msra.mxu0 0.0
      %718 = vmatprep.subr.mxu0 0.0
      %719 = vmatpush1.msra.mxu0 0.0
      %720 = vmatprep.subr.mxu0 0.0
      %721 = vmatpush1.msra.mxu0 0.0
      %722 = vmatprep.subr.mxu0 0.0
      %723 = vmatpush1.msra.mxu0 0.0
      %724 = vmatprep.subr.mxu0 0.0
      %725 = vmatpush1.msra.mxu0 0.0
      %726 = vmatprep.subr.mxu0 0.0
      %727 = vmatpush1.msra.mxu0 0.0
      %728 = vmatprep.subr.mxu0 0.0
      %729 = vmatpush1.msra.mxu0 0.0
      %730 = vmatprep.subr.mxu0 0.0
      %731 = vmatpush1.msra.mxu0 0.0
      %732 = vmatprep.subr.mxu0 0.0
      %733 = vmatpush1.msra.mxu0 0.0
      %734 = vmatprep.subr.mxu0 0.0
      %735 = vmatpush1.msra.mxu0 0.0
      %736 = vmatprep.subr.mxu0 0.0
      %737 = vmatpush1.msra.mxu0 0.0
      %738 = vmatprep.subr.mxu0 0.0
      %739 = vmatpush1.msra.mxu0 0.0
      %740 = vmatprep.subr.mxu0 0.0
      %741 = vmatpush1.msra.mxu0 0.0
      %742 = vmatprep.subr.mxu0 0.0
      %743 = vmatpush1.msra.mxu0 0.0
      %744 = vmatprep.subr.mxu0 0.0
      %745 = vmatpush1.msra.mxu0 0.0
      %746 = vmatprep.subr.mxu0 0.0
      %747 = vmatpush1.msra.mxu0 0.0
      %748 = vmatprep.subr.mxu0 0.0
      %749 = vmatpush1.msra.mxu0 0.0
      %750 = vmatprep.mubr.f32.mxu0 0.0
      %751 = vmatmul.mubr.f32.gmra.mrb[0].mxu0 %v684
      %v752 = vpop.f32.mrb[0].mxu0
      %v753 = vadd.f32 0.0, %v752
      %v754 = vpop.f32.mrb[0].mxu0
      %755 = vdwg.mxu0
      %v756 = vmul.f32 %v753, %v459
      %v758 = vsel %vm316, %v756, 0
      %760 = vmatprep.subr.mxu0 0.0
      %761 = vmatpush1.xpose.msra.mxu0 %v465
      %762 = vmatprep.subr.mxu0 0.0
      %763 = vmatpush1.xpose.msra.mxu0 %v468
      %764 = vmatprep.subr.mxu0 0.0
      %765 = vmatpush1.xpose.msra.mxu0 %v471
      %766 = vmatprep.subr.mxu0 0.0
      %767 = vmatpush1.xpose.msra.mxu0 %v474
      %768 = vmatprep.subr.mxu0 0.0
      %769 = vmatpush1.xpose.msra.mxu0 0.0
      %770 = vmatprep.subr.mxu0 0.0
      %771 = vmatpush1.xpose.msra.mxu0 0.0
      %772 = vmatprep.subr.mxu0 0.0
      %773 = vmatpush1.xpose.msra.mxu0 0.0
      %774 = vmatprep.subr.mxu0 0.0
      %775 = vmatpush1.xpose.msra.mxu0 0.0
      %776 = vmatprep.subr.mxu0 0.0
      %777 = vmatpush1.xpose.msra.mxu0 0.0
      %778 = vmatprep.subr.mxu0 0.0
      %779 = vmatpush1.xpose.msra.mxu0 0.0
      %780 = vmatprep.subr.mxu0 0.0
      %781 = vmatpush1.xpose.msra.mxu0 0.0
      %782 = vmatprep.subr.mxu0 0.0
      %783 = vmatpush1.xpose.msra.mxu0 0.0
      %784 = vmatprep.subr.mxu0 0.0
      %785 = vmatpush1.xpose.msra.mxu0 0.0
      %786 = vmatprep.subr.mxu0 0.0
      %787 = vmatpush1.xpose.msra.mxu0 0.0
      %788 = vmatprep.subr.mxu0 0.0
      %789 = vmatpush1.xpose.msra.mxu0 0.0
      %790 = vmatprep.subr.mxu0 0.0
      %791 = vmatpush1.xpose.msra.mxu0 0.0
      %792 = vmatprep.subr.mxu0 0.0
      %793 = vmatpush1.xpose.msra.mxu0 0.0
      %794 = vmatprep.subr.mxu0 0.0
      %795 = vmatpush1.xpose.msra.mxu0 0.0
      %796 = vmatprep.subr.mxu0 0.0
      %797 = vmatpush1.xpose.msra.mxu0 0.0
      %798 = vmatprep.subr.mxu0 0.0
      %799 = vmatpush1.xpose.msra.mxu0 0.0
      %800 = vmatprep.subr.mxu0 0.0
      %801 = vmatpush1.xpose.msra.mxu0 0.0
      %802 = vmatprep.subr.mxu0 0.0
      %803 = vmatpush1.xpose.msra.mxu0 0.0
      %804 = vmatprep.subr.mxu0 0.0
      %805 = vmatpush1.xpose.msra.mxu0 0.0
      %806 = vmatprep.subr.mxu0 0.0
      %807 = vmatpush1.xpose.msra.mxu0 0.0
      %808 = vmatprep.subr.mxu0 0.0
      %809 = vmatpush1.xpose.msra.mxu0 0.0
      %810 = vmatprep.subr.mxu0 0.0
      %811 = vmatpush1.xpose.msra.mxu0 0.0
      %812 = vmatprep.subr.mxu0 0.0
      %813 = vmatpush1.xpose.msra.mxu0 0.0
      %814 = vmatprep.subr.mxu0 0.0
      %815 = vmatpush1.xpose.msra.mxu0 0.0
      %816 = vmatprep.subr.mxu0 0.0
      %817 = vmatpush1.xpose.msra.mxu0 0.0
      %818 = vmatprep.subr.mxu0 0.0
      %819 = vmatpush1.xpose.msra.mxu0 0.0
      %820 = vmatprep.subr.mxu0 0.0
      %821 = vmatpush1.xpose.msra.mxu0 0.0
      %822 = vmatprep.subr.mxu0 0.0
      %823 = vmatpush1.xpose.msra.mxu0 0.0
      %824 = vmatprep.mubr.f32.mxu0 0.0
      %825 = vmatmul.mubr.f32.gmra.mrb[0].mxu0 %v758
      %v826 = vpop.f32.mrb[0].mxu0
      %v827 = vadd.f32 1e-05, %v826
      %v828 = vpop.f32.mrb[0].mxu0
      %829 = vdwg.mxu0
      %v830 = vrsqrt.pop %v827
      %v831 = vld [vmem:[%s1] sm:$0x1]
      %v832 = vmul.f32 %v830, %v831
      %v833 = vlaneseq
      %v834 = vshrl.u32 %v833, 7
      %v835 = vsub.s32 0, %v834
      %v836 = vrot.slane %v832, %v835
      %v837 = vmul.f32 %v550, %v836
      %v838 = vmul.f32 %v551, %v836
      %v839 = vmul.f32 %v552, %v836
      %v840 = vmul.f32 %v553, %v836
      %v841 = vmul.f32 %v554, %v836
      %v842 = vmul.f32 %v555, %v836
      %v843 = vmul.f32 %v556, %v836
      %v844 = vmul.f32 %v557, %v836
      %v845 = vmul.f32 %v558, %v836
      %v846 = vmul.f32 %v559, %v836
      %v847 = vmul.f32 %v560, %v836
      %v848 = vmul.f32 %v561, %v836
      %v849 = vmul.f32 %v562, %v836
      %v850 = vmul.f32 %v563, %v836
      %v851 = vmul.f32 %v564, %v836
      %v852 = vmul.f32 %v565, %v836
      %v853 = vmul.f32 %v566, %v836
      %v854 = vmul.f32 %v567, %v836
      %v855 = vmul.f32 %v568, %v836
      %v856 = vmul.f32 %v569, %v836
      %v857 = vmul.f32 %v570, %v836
      %v858 = vmul.f32 %v571, %v836
      %v859 = vmul.f32 %v572, %v836
      %v860 = vmul.f32 %v573, %v836
      %v861 = vmul.f32 %v574, %v836
      %v862 = vmul.f32 %v575, %v836
      %v863 = vmul.f32 %v576, %v836
      %v864 = vmul.f32 %v577, %v836
      %v865 = vmul.f32 %v578, %v836
      %v866 = vmul.f32 %v579, %v836
      %v867 = vmul.f32 %v580, %v836
      %v868 = vmul.f32 %v581, %v836
      %v869 = vld [vmem:[%s2] sm:$0x1]
      %v871 = vlaneseq
      %v872 = vshrl.u32 %v871, 7
      %v873 = vsub.s32 0, %v872
      %v874 = vrot.slane %v869, %v873
      %v876 = vadd.f32 %v837, %v874
      %v877 = vadd.f32 %v838, %v874
      %v878 = vadd.f32 %v839, %v874
      %v879 = vadd.f32 %v840, %v874
      %v880 = vadd.f32 %v841, %v874
      %v881 = vadd.f32 %v842, %v874
      %v882 = vadd.f32 %v843, %v874
      %v883 = vadd.f32 %v844, %v874
      %v884 = vadd.f32 %v845, %v874
      %v885 = vadd.f32 %v846, %v874
      %v886 = vadd.f32 %v847, %v874
      %v887 = vadd.f32 %v848, %v874
      %v888 = vadd.f32 %v849, %v874
      %v889 = vadd.f32 %v850, %v874
      %v890 = vadd.f32 %v851, %v874
      %v891 = vadd.f32 %v852, %v874
      %v892 = vadd.f32 %v853, %v874
      %v893 = vadd.f32 %v854, %v874
      %v894 = vadd.f32 %v855, %v874
      %v895 = vadd.f32 %v856, %v874
      %v896 = vadd.f32 %v857, %v874
      %v897 = vadd.f32 %v858, %v874
      %v898 = vadd.f32 %v859, %v874
      %v899 = vadd.f32 %v860, %v874
      %v900 = vadd.f32 %v861, %v874
      %v901 = vadd.f32 %v862, %v874
      %v902 = vadd.f32 %v863, %v874
      %v903 = vadd.f32 %v864, %v874
      %v904 = vadd.f32 %v865, %v874
      %v905 = vadd.f32 %v866, %v874
      %v906 = vadd.f32 %v867, %v874
      %v907 = vadd.f32 %v868, %v874
      %v908 = vxor.u32 %v876, 2147483648
      %v909 = vxor.u32 %v877, 2147483648
      %v910 = vxor.u32 %v878, 2147483648
      %v911 = vxor.u32 %v879, 2147483648
      %v912 = vxor.u32 %v880, 2147483648
      %v913 = vxor.u32 %v881, 2147483648
      %v914 = vxor.u32 %v882, 2147483648
      %v915 = vxor.u32 %v883, 2147483648
      %v916 = vxor.u32 %v884, 2147483648
      %v917 = vxor.u32 %v885, 2147483648
      %v918 = vxor.u32 %v886, 2147483648
      %v919 = vxor.u32 %v887, 2147483648
      %v920 = vxor.u32 %v888, 2147483648
      %v921 = vxor.u32 %v889, 2147483648
      %v922 = vxor.u32 %v890, 2147483648
      %v923 = vxor.u32 %v891, 2147483648
      %v924 = vxor.u32 %v892, 2147483648
      %v925 = vxor.u32 %v893, 2147483648
      %v926 = vxor.u32 %v894, 2147483648
      %v927 = vxor.u32 %v895, 2147483648
      %v928 = vxor.u32 %v896, 2147483648
      %v929 = vxor.u32 %v897, 2147483648
      %v930 = vxor.u32 %v898, 2147483648
      %v931 = vxor.u32 %v899, 2147483648
      %v932 = vxor.u32 %v900, 2147483648
      %v933 = vxor.u32 %v901, 2147483648
      %v934 = vxor.u32 %v902, 2147483648
      %v935 = vxor.u32 %v903, 2147483648
      %v936 = vxor.u32 %v904, 2147483648
      %v937 = vxor.u32 %v905, 2147483648
      %v938 = vxor.u32 %v906, 2147483648
      %v939 = vxor.u32 %v907, 2147483648
      %v940 = vmul.f32 %v908, 1.442695
      %v941 = vpow.pop %v940
      %v942 = vmul.f32 %v909, 1.442695
      %v943 = vpow.pop %v942
      %v944 = vmul.f32 %v910, 1.442695
      %v945 = vpow.pop %v944
      %v946 = vmul.f32 %v911, 1.442695
      %v947 = vpow.pop %v946
      %v948 = vmul.f32 %v912, 1.442695
      %v949 = vpow.pop %v948
      %v950 = vmul.f32 %v913, 1.442695
      %v951 = vpow.pop %v950
      %v952 = vmul.f32 %v914, 1.442695
      %v953 = vpow.pop %v952
      %v954 = vmul.f32 %v915, 1.442695
      %v955 = vpow.pop %v954
      %v956 = vmul.f32 %v916, 1.442695
      %v957 = vpow.pop %v956
      %v958 = vmul.f32 %v917, 1.442695
      %v959 = vpow.pop %v958
      %v960 = vmul.f32 %v918, 1.442695
      %v961 = vpow.pop %v960
      %v962 = vmul.f32 %v919, 1.442695
      %v963 = vpow.pop %v962
      %v964 = vmul.f32 %v920, 1.442695
      %v965 = vpow.pop %v964
      %v966 = vmul.f32 %v921, 1.442695
      %v967 = vpow.pop %v966
      %v968 = vmul.f32 %v922, 1.442695
      %v969 = vpow.pop %v968
      %v970 = vmul.f32 %v923, 1.442695
      %v971 = vpow.pop %v970
      %v972 = vmul.f32 %v924, 1.442695
      %v973 = vpow.pop %v972
      %v974 = vmul.f32 %v925, 1.442695
      %v975 = vpow.pop %v974
      %v976 = vmul.f32 %v926, 1.442695
      %v977 = vpow.pop %v976
      %v978 = vmul.f32 %v927, 1.442695
      %v979 = vpow.pop %v978
      %v980 = vmul.f32 %v928, 1.442695
      %v981 = vpow.pop %v980
      %v982 = vmul.f32 %v929, 1.442695
      %v983 = vpow.pop %v982
      %v984 = vmul.f32 %v930, 1.442695
      %v985 = vpow.pop %v984
      %v986 = vmul.f32 %v931, 1.442695
      %v987 = vpow.pop %v986
      %v988 = vmul.f32 %v932, 1.442695
      %v989 = vpow.pop %v988
      %v990 = vmul.f32 %v933, 1.442695
      %v991 = vpow.pop %v990
      %v992 = vmul.f32 %v934, 1.442695
      %v993 = vpow.pop %v992
      %v994 = vmul.f32 %v935, 1.442695
      %v995 = vpow.pop %v994
      %v996 = vmul.f32 %v936, 1.442695
      %v997 = vpow.pop %v996
      %v998 = vmul.f32 %v937, 1.442695
      %v999 = vpow.pop %v998
      %v1000 = vmul.f32 %v938, 1.442695
      %v1001 = vpow.pop %v1000
      %v1002 = vmul.f32 %v939, 1.442695
      %v1003 = vpow.pop %v1002
      %v1004 = vadd.f32 %v941, 1.0
      %v1005 = vadd.f32 %v943, 1.0
      %v1006 = vadd.f32 %v945, 1.0
      %v1007 = vadd.f32 %v947, 1.0
      %v1008 = vadd.f32 %v949, 1.0
      %v1009 = vadd.f32 %v951, 1.0
      %v1010 = vadd.f32 %v953, 1.0
      %v1011 = vadd.f32 %v955, 1.0
      %v1012 = vadd.f32 %v957, 1.0
      %v1013 = vadd.f32 %v959, 1.0
      %v1014 = vadd.f32 %v961, 1.0
      %v1015 = vadd.f32 %v963, 1.0
      %v1016 = vadd.f32 %v965, 1.0
      %v1017 = vadd.f32 %v967, 1.0
      %v1018 = vadd.f32 %v969, 1.0
      %v1019 = vadd.f32 %v971, 1.0
      %v1020 = vadd.f32 %v973, 1.0
      %v1021 = vadd.f32 %v975, 1.0
      %v1022 = vadd.f32 %v977, 1.0
      %v1023 = vadd.f32 %v979, 1.0
      %v1024 = vadd.f32 %v981, 1.0
      %v1025 = vadd.f32 %v983, 1.0
      %v1026 = vadd.f32 %v985, 1.0
      %v1027 = vadd.f32 %v987, 1.0
      %v1028 = vadd.f32 %v989, 1.0
      %v1029 = vadd.f32 %v991, 1.0
      %v1030 = vadd.f32 %v993, 1.0
      %v1031 = vadd.f32 %v995, 1.0
      %v1032 = vadd.f32 %v997, 1.0
      %v1033 = vadd.f32 %v999, 1.0
      %v1034 = vadd.f32 %v1001, 1.0
      %v1035 = vadd.f32 %v1003, 1.0
      %v1036 = vrcp.pop %v1004
      %v1037 = vmul.f32 1.0, %v1036
      %v1038 = vrcp.pop %v1005
      %v1039 = vmul.f32 1.0, %v1038
      %v1040 = vrcp.pop %v1006
      %v1041 = vmul.f32 1.0, %v1040
      %v1042 = vrcp.pop %v1007
      %v1043 = vmul.f32 1.0, %v1042
      %v1044 = vrcp.pop %v1008
      %v1045 = vmul.f32 1.0, %v1044
      %v1046 = vrcp.pop %v1009
      %v1047 = vmul.f32 1.0, %v1046
      %v1048 = vrcp.pop %v1010
      %v1049 = vmul.f32 1.0, %v1048
      %v1050 = vrcp.pop %v1011
      %v1051 = vmul.f32 1.0, %v1050
      %v1052 = vrcp.pop %v1012
      %v1053 = vmul.f32 1.0, %v1052
      %v1054 = vrcp.pop %v1013
      %v1055 = vmul.f32 1.0, %v1054
      %v1056 = vrcp.pop %v1014
      %v1057 = vmul.f32 1.0, %v1056
      %v1058 = vrcp.pop %v1015
      %v1059 = vmul.f32 1.0, %v1058
      %v1060 = vrcp.pop %v1016
      %v1061 = vmul.f32 1.0, %v1060
      %v1062 = vrcp.pop %v1017
      %v1063 = vmul.f32 1.0, %v1062
      %v1064 = vrcp.pop %v1018
      %v1065 = vmul.f32 1.0, %v1064
      %v1066 = vrcp.pop %v1019
      %v1067 = vmul.f32 1.0, %v1066
      %v1068 = vrcp.pop %v1020
      %v1069 = vmul.f32 1.0, %v1068
      %v1070 = vrcp.pop %v1021
      %v1071 = vmul.f32 1.0, %v1070
      %v1072 = vrcp.pop %v1022
      %v1073 = vmul.f32 1.0, %v1072
      %v1074 = vrcp.pop %v1023
      %v1075 = vmul.f32 1.0, %v1074
      %v1076 = vrcp.pop %v1024
      %v1077 = vmul.f32 1.0, %v1076
      %v1078 = vrcp.pop %v1025
      %v1079 = vmul.f32 1.0, %v1078
      %v1080 = vrcp.pop %v1026
      %v1081 = vmul.f32 1.0, %v1080
      %v1082 = vrcp.pop %v1027
      %v1083 = vmul.f32 1.0, %v1082
      %v1084 = vrcp.pop %v1028
      %v1085 = vmul.f32 1.0, %v1084
      %v1086 = vrcp.pop %v1029
      %v1087 = vmul.f32 1.0, %v1086
      %v1088 = vrcp.pop %v1030
      %v1089 = vmul.f32 1.0, %v1088
      %v1090 = vrcp.pop %v1031
      %v1091 = vmul.f32 1.0, %v1090
      %v1092 = vrcp.pop %v1032
      %v1093 = vmul.f32 1.0, %v1092
      %v1094 = vrcp.pop %v1033
      %v1095 = vmul.f32 1.0, %v1094
      %v1096 = vrcp.pop %v1034
      %v1097 = vmul.f32 1.0, %v1096
      %v1098 = vrcp.pop %v1035
      %v1099 = vmul.f32 1.0, %v1098
      %v1100 = vmul.f32 %v876, %v1037
      %v1101 = vmul.f32 %v877, %v1039
      %v1102 = vmul.f32 %v878, %v1041
      %v1103 = vmul.f32 %v879, %v1043
      %v1104 = vmul.f32 %v880, %v1045
      %v1105 = vmul.f32 %v881, %v1047
      %v1106 = vmul.f32 %v882, %v1049
      %v1107 = vmul.f32 %v883, %v1051
      %v1108 = vmul.f32 %v884, %v1053
      %v1109 = vmul.f32 %v885, %v1055
      %v1110 = vmul.f32 %v886, %v1057
      %v1111 = vmul.f32 %v887, %v1059
      %v1112 = vmul.f32 %v888, %v1061
      %v1113 = vmul.f32 %v889, %v1063
      %v1114 = vmul.f32 %v890, %v1065
      %v1115 = vmul.f32 %v891, %v1067
      %v1116 = vmul.f32 %v892, %v1069
      %v1117 = vmul.f32 %v893, %v1071
      %v1118 = vmul.f32 %v894, %v1073
      %v1119 = vmul.f32 %v895, %v1075
      %v1120 = vmul.f32 %v896, %v1077
      %v1121 = vmul.f32 %v897, %v1079
      %v1122 = vmul.f32 %v898, %v1081
      %v1123 = vmul.f32 %v899, %v1083
      %v1124 = vmul.f32 %v900, %v1085
      %v1125 = vmul.f32 %v901, %v1087
      %v1126 = vmul.f32 %v902, %v1089
      %v1127 = vmul.f32 %v903, %v1091
      %v1128 = vmul.f32 %v904, %v1093
      %v1129 = vmul.f32 %v905, %v1095
      %v1130 = vmul.f32 %v906, %v1097
      %v1131 = vmul.f32 %v907, %v1099
      %v1132 = vld [vmem:[%s6] sm:$0xff]
      %v1133 = vld [vmem:[%s6 + $0x8] sm:$0xff]
      %v1134 = vld [vmem:[%s6 + $0x10] sm:$0xff]
      %v1135 = vld [vmem:[%s6 + $0x18] sm:$0xff]
      %v1136 = vld [vmem:[%s6 + $0x20] sm:$0xff]
      %v1137 = vld [vmem:[%s6 + $0x28] sm:$0xff]
      %v1138 = vld [vmem:[%s6 + $0x30] sm:$0xff]
      %v1139 = vld [vmem:[%s6 + $0x38] sm:$0xff]
      %v1140 = vld [vmem:[%s6 + $0x40] sm:$0xff]
      %v1141 = vld [vmem:[%s6 + $0x48] sm:$0xff]
      %v1142 = vld [vmem:[%s6 + $0x50] sm:$0xff]
      %v1143 = vld [vmem:[%s6 + $0x58] sm:$0xff]
      %v1144 = vld [vmem:[%s6 + $0x60] sm:$0xff]
      %v1145 = vld [vmem:[%s6 + $0x68] sm:$0xff]
      %v1146 = vld [vmem:[%s6 + $0x70] sm:$0xff]
      %v1147 = vld [vmem:[%s6 + $0x78] sm:$0xff]
      %v1148 = vld [vmem:[%s6 + $0x80] sm:$0xff]
      %v1149 = vld [vmem:[%s6 + $0x88] sm:$0xff]
      %v1150 = vld [vmem:[%s6 + $0x90] sm:$0xff]
      %v1151 = vld [vmem:[%s6 + $0x98] sm:$0xff]
      %v1152 = vld [vmem:[%s6 + $0xa0] sm:$0xff]
      %v1153 = vld [vmem:[%s6 + $0xa8] sm:$0xff]
      %v1154 = vld [vmem:[%s6 + $0xb0] sm:$0xff]
      %v1155 = vld [vmem:[%s6 + $0xb8] sm:$0xff]
      %v1156 = vld [vmem:[%s6 + $0xc0] sm:$0xff]
      %v1157 = vld [vmem:[%s6 + $0xc8] sm:$0xff]
      %v1158 = vld [vmem:[%s6 + $0xd0] sm:$0xff]
      %v1159 = vld [vmem:[%s6 + $0xd8] sm:$0xff]
      %v1160 = vld [vmem:[%s6 + $0xe0] sm:$0xff]
      %v1161 = vld [vmem:[%s6 + $0xe8] sm:$0xff]
      %v1162 = vld [vmem:[%s6 + $0xf0] sm:$0xff]
      %v1163 = vld [vmem:[%s6 + $0xf8] sm:$0xff]
      %vm1167 = vcmask 1040384
      %v1168 = vrot.slane %v1129, 7
      %v1169 = vrot.slane %v1130, 7
      %v1170 = vsel %vm1167, %v1168, %v1169
      %v1171 = vrot.slane %v1131, 7
      %v1172 = vsel %vm1167, %v1169, %v1171
      %v1205 = vrot.slane %v1100, 7
      %v1206 = vrot.slane %v1101, 7
      %v1207 = vsel %vm1167, %v1205, %v1206
      %v1208 = vrot.slane %v1102, 7
      %v1209 = vsel %vm1167, %v1206, %v1208
      %v1210 = vrot.slane %v1103, 7
      %v1211 = vsel %vm1167, %v1208, %v1210
      %v1212 = vrot.slane %v1104, 7
      %v1213 = vsel %vm1167, %v1210, %v1212
      %v1214 = vrot.slane %v1105, 7
      %v1215 = vsel %vm1167, %v1212, %v1214
      %v1216 = vrot.slane %v1106, 7
      %v1217 = vsel %vm1167, %v1214, %v1216
      %v1218 = vrot.slane %v1107, 7
      %v1219 = vsel %vm1167, %v1216, %v1218
      %v1220 = vrot.slane %v1108, 7
      %v1221 = vsel %vm1167, %v1218, %v1220
      %v1222 = vrot.slane %v1109, 7
      %v1223 = vsel %vm1167, %v1220, %v1222
      %v1224 = vrot.slane %v1110, 7
      %v1225 = vsel %vm1167, %v1222, %v1224
      %v1226 = vrot.slane %v1111, 7
      %v1227 = vsel %vm1167, %v1224, %v1226
      %v1228 = vrot.slane %v1112, 7
      %v1229 = vsel %vm1167, %v1226, %v1228
      %v1230 = vrot.slane %v1113, 7
      %v1231 = vsel %vm1167, %v1228, %v1230
      %v1232 = vrot.slane %v1114, 7
      %v1233 = vsel %vm1167, %v1230, %v1232
      %v1234 = vrot.slane %v1115, 7
      %v1235 = vsel %vm1167, %v1232, %v1234
      %v1236 = vrot.slane %v1116, 7
      %v1237 = vsel %vm1167, %v1234, %v1236
      %v1238 = vrot.slane %v1117, 7
      %v1239 = vsel %vm1167, %v1236, %v1238
      %v1240 = vrot.slane %v1118, 7
      %v1241 = vsel %vm1167, %v1238, %v1240
      %v1242 = vrot.slane %v1119, 7
      %v1243 = vsel %vm1167, %v1240, %v1242
      %v1244 = vrot.slane %v1120, 7
      %v1245 = vsel %vm1167, %v1242, %v1244
      %v1246 = vrot.slane %v1121, 7
      %v1247 = vsel %vm1167, %v1244, %v1246
      %v1248 = vrot.slane %v1122, 7
      %v1249 = vsel %vm1167, %v1246, %v1248
      %v1250 = vrot.slane %v1123, 7
      %v1251 = vsel %vm1167, %v1248, %v1250
      %v1252 = vrot.slane %v1124, 7
      %v1253 = vsel %vm1167, %v1250, %v1252
      %v1254 = vrot.slane %v1125, 7
      %v1255 = vsel %vm1167, %v1252, %v1254
      %v1256 = vrot.slane %v1126, 7
      %v1257 = vsel %vm1167, %v1254, %v1256
      %v1258 = vrot.slane %v1127, 7
      %v1259 = vsel %vm1167, %v1256, %v1258
      %v1260 = vrot.slane %v1128, 7
      %v1261 = vsel %vm1167, %v1258, %v1260
      %v1262 = vsel %vm1167, %v1260, %v1168
      %v1293 = vsel %vm1167, %v1171, %v1205
      %1295 = vset.pattern.permute.xlu0 0
      %1296 = vperm.xlu0 %1295, %v1132
      %v1297 = vpop.permute.xlu0 %1296
      %1300 = vset.pattern.permute.xlu0 0
      %1301 = vperm.xlu0 %1300, %v1133
      %v1302 = vpop.permute.xlu0 %1301
      %1305 = vset.pattern.permute.xlu0 0
      %1306 = vperm.xlu0 %1305, %v1134
      %v1307 = vpop.permute.xlu0 %1306
      %1310 = vset.pattern.permute.xlu0 0
      %1311 = vperm.xlu0 %1310, %v1135
      %v1312 = vpop.permute.xlu0 %1311
      %1315 = vset.pattern.permute.xlu0 0
      %1316 = vperm.xlu0 %1315, %v1136
      %v1317 = vpop.permute.xlu0 %1316
      %1320 = vset.pattern.permute.xlu0 0
      %1321 = vperm.xlu0 %1320, %v1137
      %v1322 = vpop.permute.xlu0 %1321
      %1325 = vset.pattern.permute.xlu0 0
      %1326 = vperm.xlu0 %1325, %v1138
      %v1327 = vpop.permute.xlu0 %1326
      %1330 = vset.pattern.permute.xlu0 0
      %1331 = vperm.xlu0 %1330, %v1139
      %v1332 = vpop.permute.xlu0 %1331
      %1335 = vset.pattern.permute.xlu0 0
      %1336 = vperm.xlu0 %1335, %v1140
      %v1337 = vpop.permute.xlu0 %1336
      %1340 = vset.pattern.permute.xlu0 0
      %1341 = vperm.xlu0 %1340, %v1141
      %v1342 = vpop.permute.xlu0 %1341
      %1345 = vset.pattern.permute.xlu0 0
      %1346 = vperm.xlu0 %1345, %v1142
      %v1347 = vpop.permute.xlu0 %1346
      %1350 = vset.pattern.permute.xlu0 0
      %1351 = vperm.xlu0 %1350, %v1143
      %v1352 = vpop.permute.xlu0 %1351
      %1355 = vset.pattern.permute.xlu0 0
      %1356 = vperm.xlu0 %1355, %v1144
      %v1357 = vpop.permute.xlu0 %1356
      %1360 = vset.pattern.permute.xlu0 0
      %1361 = vperm.xlu0 %1360, %v1145
      %v1362 = vpop.permute.xlu0 %1361
      %1365 = vset.pattern.permute.xlu0 0
      %1366 = vperm.xlu0 %1365, %v1146
      %v1367 = vpop.permute.xlu0 %1366
      %1370 = vset.pattern.permute.xlu0 0
      %1371 = vperm.xlu0 %1370, %v1147
      %v1372 = vpop.permute.xlu0 %1371
      %1375 = vset.pattern.permute.xlu0 0
      %1376 = vperm.xlu0 %1375, %v1148
      %v1377 = vpop.permute.xlu0 %1376
      %1380 = vset.pattern.permute.xlu0 0
      %1381 = vperm.xlu0 %1380, %v1149
      %v1382 = vpop.permute.xlu0 %1381
      %1385 = vset.pattern.permute.xlu0 0
      %1386 = vperm.xlu0 %1385, %v1150
      %v1387 = vpop.permute.xlu0 %1386
      %1390 = vset.pattern.permute.xlu0 0
      %1391 = vperm.xlu0 %1390, %v1151
      %v1392 = vpop.permute.xlu0 %1391
      %1395 = vset.pattern.permute.xlu0 0
      %1396 = vperm.xlu0 %1395, %v1152
      %v1397 = vpop.permute.xlu0 %1396
      %1400 = vset.pattern.permute.xlu0 0
      %1401 = vperm.xlu0 %1400, %v1153
      %v1402 = vpop.permute.xlu0 %1401
      %1405 = vset.pattern.permute.xlu0 0
      %1406 = vperm.xlu0 %1405, %v1154
      %v1407 = vpop.permute.xlu0 %1406
      %1410 = vset.pattern.permute.xlu0 0
      %1411 = vperm.xlu0 %1410, %v1155
      %v1412 = vpop.permute.xlu0 %1411
      %1415 = vset.pattern.permute.xlu0 0
      %1416 = vperm.xlu0 %1415, %v1156
      %v1417 = vpop.permute.xlu0 %1416
      %1420 = vset.pattern.permute.xlu0 0
      %1421 = vperm.xlu0 %1420, %v1157
      %v1422 = vpop.permute.xlu0 %1421
      %1425 = vset.pattern.permute.xlu0 0
      %1426 = vperm.xlu0 %1425, %v1158
      %v1427 = vpop.permute.xlu0 %1426
      %1430 = vset.pattern.permute.xlu0 0
      %1431 = vperm.xlu0 %1430, %v1159
      %v1432 = vpop.permute.xlu0 %1431
      %1435 = vset.pattern.permute.xlu0 0
      %1436 = vperm.xlu0 %1435, %v1160
      %v1437 = vpop.permute.xlu0 %1436
      %1440 = vset.pattern.permute.xlu0 0
      %1441 = vperm.xlu0 %1440, %v1161
      %v1442 = vpop.permute.xlu0 %1441
      %1445 = vset.pattern.permute.xlu0 0
      %1446 = vperm.xlu0 %1445, %v1162
      %v1447 = vpop.permute.xlu0 %1446
      %1450 = vset.pattern.permute.xlu0 0
      %1451 = vperm.xlu0 %1450, %v1163
      %v1452 = vpop.permute.xlu0 %1451
      %v1454 = vmul.f32 %v1170, %v1297
      %v1455 = vmul.f32 %v1172, %v1302
      %v1456 = vmul.f32 %v1293, %v1307
      %v1457 = vmul.f32 %v1207, %v1312
      %v1458 = vmul.f32 %v1209, %v1317
      %v1459 = vmul.f32 %v1211, %v1322
      %v1460 = vmul.f32 %v1213, %v1327
      %v1461 = vmul.f32 %v1215, %v1332
      %v1462 = vmul.f32 %v1217, %v1337
      %v1463 = vmul.f32 %v1219, %v1342
      %v1464 = vmul.f32 %v1221, %v1347
      %v1465 = vmul.f32 %v1223, %v1352
      %v1466 = vmul.f32 %v1225, %v1357
      %v1467 = vmul.f32 %v1227, %v1362
      %v1468 = vmul.f32 %v1229, %v1367
      %v1469 = vmul.f32 %v1231, %v1372
      %v1470 = vmul.f32 %v1233, %v1377
      %v1471 = vmul.f32 %v1235, %v1382
      %v1472 = vmul.f32 %v1237, %v1387
      %v1473 = vmul.f32 %v1239, %v1392
      %v1474 = vmul.f32 %v1241, %v1397
      %v1475 = vmul.f32 %v1243, %v1402
      %v1476 = vmul.f32 %v1245, %v1407
      %v1477 = vmul.f32 %v1247, %v1412
      %v1478 = vmul.f32 %v1249, %v1417
      %v1479 = vmul.f32 %v1251, %v1422
      %v1480 = vmul.f32 %v1253, %v1427
      %v1481 = vmul.f32 %v1255, %v1432
      %v1482 = vmul.f32 %v1257, %v1437
      %v1483 = vmul.f32 %v1259, %v1442
      %v1484 = vmul.f32 %v1261, %v1447
      %v1485 = vmul.f32 %v1262, %v1452
      %v1486 = vpack.c.bf16 %v1455, %v1454
      %v1487 = vpack.c.bf16 %v1457, %v1456
      %v1488 = vpack.c.bf16 %v1459, %v1458
      %v1489 = vpack.c.bf16 %v1461, %v1460
      %v1490 = vpack.c.bf16 %v1463, %v1462
      %v1491 = vpack.c.bf16 %v1465, %v1464
      %v1492 = vpack.c.bf16 %v1467, %v1466
      %v1493 = vpack.c.bf16 %v1469, %v1468
      %v1494 = vpack.c.bf16 %v1471, %v1470
      %v1495 = vpack.c.bf16 %v1473, %v1472
      %v1496 = vpack.c.bf16 %v1475, %v1474
      %v1497 = vpack.c.bf16 %v1477, %v1476
      %v1498 = vpack.c.bf16 %v1479, %v1478
      %v1499 = vpack.c.bf16 %v1481, %v1480
      %v1500 = vpack.c.bf16 %v1483, %v1482
      %v1501 = vpack.c.bf16 %v1485, %v1484
      %1502 = vset.pattern.permute.xlu0 1
      %1503 = vperm.xlu0 %1502, %v1132
      %v1504 = vpop.permute.xlu0 %1503
      %1506 = vset.pattern.permute.xlu0 1
      %1507 = vperm.xlu0 %1506, %v1133
      %v1508 = vpop.permute.xlu0 %1507
      %1510 = vset.pattern.permute.xlu0 1
      %1511 = vperm.xlu0 %1510, %v1134
      %v1512 = vpop.permute.xlu0 %1511
      %1514 = vset.pattern.permute.xlu0 1
      %1515 = vperm.xlu0 %1514, %v1135
      %v1516 = vpop.permute.xlu0 %1515
      %1518 = vset.pattern.permute.xlu0 1
      %1519 = vperm.xlu0 %1518, %v1136
      %v1520 = vpop.permute.xlu0 %1519
      %1522 = vset.pattern.permute.xlu0 1
      %1523 = vperm.xlu0 %1522, %v1137
      %v1524 = vpop.permute.xlu0 %1523
      %1526 = vset.pattern.permute.xlu0 1
      %1527 = vperm.xlu0 %1526, %v1138
      %v1528 = vpop.permute.xlu0 %1527
      %1530 = vset.pattern.permute.xlu0 1
      %1531 = vperm.xlu0 %1530, %v1139
      %v1532 = vpop.permute.xlu0 %1531
      %1534 = vset.pattern.permute.xlu0 1
      %1535 = vperm.xlu0 %1534, %v1140
      %v1536 = vpop.permute.xlu0 %1535
      %1538 = vset.pattern.permute.xlu0 1
      %1539 = vperm.xlu0 %1538, %v1141
      %v1540 = vpop.permute.xlu0 %1539
      %1542 = vset.pattern.permute.xlu0 1
      %1543 = vperm.xlu0 %1542, %v1142
      %v1544 = vpop.permute.xlu0 %1543
      %1546 = vset.pattern.permute.xlu0 1
      %1547 = vperm.xlu0 %1546, %v1143
      %v1548 = vpop.permute.xlu0 %1547
      %1550 = vset.pattern.permute.xlu0 1
      %1551 = vperm.xlu0 %1550, %v1144
      %v1552 = vpop.permute.xlu0 %1551
      %1554 = vset.pattern.permute.xlu0 1
      %1555 = vperm.xlu0 %1554, %v1145
      %v1556 = vpop.permute.xlu0 %1555
      %1558 = vset.pattern.permute.xlu0 1
      %1559 = vperm.xlu0 %1558, %v1146
      %v1560 = vpop.permute.xlu0 %1559
      %1562 = vset.pattern.permute.xlu0 1
      %1563 = vperm.xlu0 %1562, %v1147
      %v1564 = vpop.permute.xlu0 %1563
      %1566 = vset.pattern.permute.xlu0 1
      %1567 = vperm.xlu0 %1566, %v1148
      %v1568 = vpop.permute.xlu0 %1567
      %1570 = vset.pattern.permute.xlu0 1
      %1571 = vperm.xlu0 %1570, %v1149
      %v1572 = vpop.permute.xlu0 %1571
      %1574 = vset.pattern.permute.xlu0 1
      %1575 = vperm.xlu0 %1574, %v1150
      %v1576 = vpop.permute.xlu0 %1575
      %1578 = vset.pattern.permute.xlu0 1
      %1579 = vperm.xlu0 %1578, %v1151
      %v1580 = vpop.permute.xlu0 %1579
      %1582 = vset.pattern.permute.xlu0 1
      %1583 = vperm.xlu0 %1582, %v1152
      %v1584 = vpop.permute.xlu0 %1583
      %1586 = vset.pattern.permute.xlu0 1
      %1587 = vperm.xlu0 %1586, %v1153
      %v1588 = vpop.permute.xlu0 %1587
      %1590 = vset.pattern.permute.xlu0 1
      %1591 = vperm.xlu0 %1590, %v1154
      %v1592 = vpop.permute.xlu0 %1591
      %1594 = vset.pattern.permute.xlu0 1
      %1595 = vperm.xlu0 %1594, %v1155
      %v1596 = vpop.permute.xlu0 %1595
      %1598 = vset.pattern.permute.xlu0 1
      %1599 = vperm.xlu0 %1598, %v1156
      %v1600 = vpop.permute.xlu0 %1599
      %1602 = vset.pattern.permute.xlu0 1
      %1603 = vperm.xlu0 %1602, %v1157
      %v1604 = vpop.permute.xlu0 %1603
      %1606 = vset.pattern.permute.xlu0 1
      %1607 = vperm.xlu0 %1606, %v1158
      %v1608 = vpop.permute.xlu0 %1607
      %1610 = vset.pattern.permute.xlu0 1
      %1611 = vperm.xlu0 %1610, %v1159
      %v1612 = vpop.permute.xlu0 %1611
      %1614 = vset.pattern.permute.xlu0 1
      %1615 = vperm.xlu0 %1614, %v1160
      %v1616 = vpop.permute.xlu0 %1615
      %1618 = vset.pattern.permute.xlu0 1
      %1619 = vperm.xlu0 %1618, %v1161
      %v1620 = vpop.permute.xlu0 %1619
      %1622 = vset.pattern.permute.xlu0 1
      %1623 = vperm.xlu0 %1622, %v1162
      %v1624 = vpop.permute.xlu0 %1623
      %1626 = vset.pattern.permute.xlu0 1
      %1627 = vperm.xlu0 %1626, %v1163
      %v1628 = vpop.permute.xlu0 %1627
      %v1630 = vmul.f32 %v1130, %v1504
      %v1631 = vmul.f32 %v1131, %v1508
      %v1632 = vmul.f32 %v1100, %v1512
      %v1633 = vmul.f32 %v1101, %v1516
      %v1634 = vmul.f32 %v1102, %v1520
      %v1635 = vmul.f32 %v1103, %v1524
      %v1636 = vmul.f32 %v1104, %v1528
      %v1637 = vmul.f32 %v1105, %v1532
      %v1638 = vmul.f32 %v1106, %v1536
      %v1639 = vmul.f32 %v1107, %v1540
      %v1640 = vmul.f32 %v1108, %v1544
      %v1641 = vmul.f32 %v1109, %v1548
      %v1642 = vmul.f32 %v1110, %v1552
      %v1643 = vmul.f32 %v1111, %v1556
      %v1644 = vmul.f32 %v1112, %v1560
      %v1645 = vmul.f32 %v1113, %v1564
      %v1646 = vmul.f32 %v1114, %v1568
      %v1647 = vmul.f32 %v1115, %v1572
      %v1648 = vmul.f32 %v1116, %v1576
      %v1649 = vmul.f32 %v1117, %v1580
      %v1650 = vmul.f32 %v1118, %v1584
      %v1651 = vmul.f32 %v1119, %v1588
      %v1652 = vmul.f32 %v1120, %v1592
      %v1653 = vmul.f32 %v1121, %v1596
      %v1654 = vmul.f32 %v1122, %v1600
      %v1655 = vmul.f32 %v1123, %v1604
      %v1656 = vmul.f32 %v1124, %v1608
      %v1657 = vmul.f32 %v1125, %v1612
      %v1658 = vmul.f32 %v1126, %v1616
      %v1659 = vmul.f32 %v1127, %v1620
      %v1660 = vmul.f32 %v1128, %v1624
      %v1661 = vmul.f32 %v1129, %v1628
      %v1662 = vpack.c.bf16 %v1631, %v1630
      %v1663 = vpack.c.bf16 %v1633, %v1632
      %v1664 = vpack.c.bf16 %v1635, %v1634
      %v1665 = vpack.c.bf16 %v1637, %v1636
      %v1666 = vpack.c.bf16 %v1639, %v1638
      %v1667 = vpack.c.bf16 %v1641, %v1640
      %v1668 = vpack.c.bf16 %v1643, %v1642
      %v1669 = vpack.c.bf16 %v1645, %v1644
      %v1670 = vpack.c.bf16 %v1647, %v1646
      %v1671 = vpack.c.bf16 %v1649, %v1648
      %v1672 = vpack.c.bf16 %v1651, %v1650
      %v1673 = vpack.c.bf16 %v1653, %v1652
      %v1674 = vpack.c.bf16 %v1655, %v1654
      %v1675 = vpack.c.bf16 %v1657, %v1656
      %v1676 = vpack.c.bf16 %v1659, %v1658
      %v1677 = vpack.c.bf16 %v1661, %v1660
      %vm1678 = vcmask 1046528
      %v1679 = vrot.slane %v1130, 1
      %v1680 = vrot.slane %v1131, 1
      %v1681 = vsel %vm1678, %v1679, %v1680
      %v1684 = vrot.slane %v1100, 1
      %v1685 = vrot.slane %v1101, 1
      %v1686 = vsel %vm1678, %v1684, %v1685
      %v1687 = vrot.slane %v1102, 1
      %v1688 = vsel %vm1678, %v1685, %v1687
      %v1689 = vrot.slane %v1103, 1
      %v1690 = vsel %vm1678, %v1687, %v1689
      %v1691 = vrot.slane %v1104, 1
      %v1692 = vsel %vm1678, %v1689, %v1691
      %v1693 = vrot.slane %v1105, 1
      %v1694 = vsel %vm1678, %v1691, %v1693
      %v1695 = vrot.slane %v1106, 1
      %v1696 = vsel %vm1678, %v1693, %v1695
      %v1697 = vrot.slane %v1107, 1
      %v1698 = vsel %vm1678, %v1695, %v1697
      %v1699 = vrot.slane %v1108, 1
      %v1700 = vsel %vm1678, %v1697, %v1699
      %v1701 = vrot.slane %v1109, 1
      %v1702 = vsel %vm1678, %v1699, %v1701
      %v1703 = vrot.slane %v1110, 1
      %v1704 = vsel %vm1678, %v1701, %v1703
      %v1705 = vrot.slane %v1111, 1
      %v1706 = vsel %vm1678, %v1703, %v1705
      %v1707 = vrot.slane %v1112, 1
      %v1708 = vsel %vm1678, %v1705, %v1707
      %v1709 = vrot.slane %v1113, 1
      %v1710 = vsel %vm1678, %v1707, %v1709
      %v1711 = vrot.slane %v1114, 1
      %v1712 = vsel %vm1678, %v1709, %v1711
      %v1713 = vrot.slane %v1115, 1
      %v1714 = vsel %vm1678, %v1711, %v1713
      %v1715 = vrot.slane %v1116, 1
      %v1716 = vsel %vm1678, %v1713, %v1715
      %v1717 = vrot.slane %v1117, 1
      %v1718 = vsel %vm1678, %v1715, %v1717
      %v1719 = vrot.slane %v1118, 1
      %v1720 = vsel %vm1678, %v1717, %v1719
      %v1721 = vrot.slane %v1119, 1
      %v1722 = vsel %vm1678, %v1719, %v1721
      %v1723 = vrot.slane %v1120, 1
      %v1724 = vsel %vm1678, %v1721, %v1723
      %v1725 = vrot.slane %v1121, 1
      %v1726 = vsel %vm1678, %v1723, %v1725
      %v1727 = vrot.slane %v1122, 1
      %v1728 = vsel %vm1678, %v1725, %v1727
      %v1729 = vrot.slane %v1123, 1
      %v1730 = vsel %vm1678, %v1727, %v1729
      %v1731 = vrot.slane %v1124, 1
      %v1732 = vsel %vm1678, %v1729, %v1731
      %v1733 = vrot.slane %v1125, 1
      %v1734 = vsel %vm1678, %v1731, %v1733
      %v1735 = vrot.slane %v1126, 1
      %v1736 = vsel %vm1678, %v1733, %v1735
      %v1737 = vrot.slane %v1127, 1
      %v1738 = vsel %vm1678, %v1735, %v1737
      %v1739 = vrot.slane %v1128, 1
      %v1740 = vsel %vm1678, %v1737, %v1739
      %v1741 = vrot.slane %v1129, 1
      %v1742 = vsel %vm1678, %v1739, %v1741
      %v1743 = vsel %vm1678, %v1741, %v1679
      %v1775 = vsel %vm1678, %v1680, %v1684
      %1776 = vset.pattern.permute.xlu0 2
      %1777 = vperm.xlu0 %1776, %v1132
      %v1778 = vpop.permute.xlu0 %1777
      %1780 = vset.pattern.permute.xlu0 2
      %1781 = vperm.xlu0 %1780, %v1133
      %v1782 = vpop.permute.xlu0 %1781
      %1784 = vset.pattern.permute.xlu0 2
      %1785 = vperm.xlu0 %1784, %v1134
      %v1786 = vpop.permute.xlu0 %1785
      %1788 = vset.pattern.permute.xlu0 2
      %1789 = vperm.xlu0 %1788, %v1135
      %v1790 = vpop.permute.xlu0 %1789
      %1792 = vset.pattern.permute.xlu0 2
      %1793 = vperm.xlu0 %1792, %v1136
      %v1794 = vpop.permute.xlu0 %1793
      %1796 = vset.pattern.permute.xlu0 2
      %1797 = vperm.xlu0 %1796, %v1137
      %v1798 = vpop.permute.xlu0 %1797
      %1800 = vset.pattern.permute.xlu0 2
      %1801 = vperm.xlu0 %1800, %v1138
      %v1802 = vpop.permute.xlu0 %1801
      %1804 = vset.pattern.permute.xlu0 2
      %1805 = vperm.xlu0 %1804, %v1139
      %v1806 = vpop.permute.xlu0 %1805
      %1808 = vset.pattern.permute.xlu0 2
      %1809 = vperm.xlu0 %1808, %v1140
      %v1810 = vpop.permute.xlu0 %1809
      %1812 = vset.pattern.permute.xlu0 2
      %1813 = vperm.xlu0 %1812, %v1141
      %v1814 = vpop.permute.xlu0 %1813
      %1816 = vset.pattern.permute.xlu0 2
      %1817 = vperm.xlu0 %1816, %v1142
      %v1818 = vpop.permute.xlu0 %1817
      %1820 = vset.pattern.permute.xlu0 2
      %1821 = vperm.xlu0 %1820, %v1143
      %v1822 = vpop.permute.xlu0 %1821
      %1824 = vset.pattern.permute.xlu0 2
      %1825 = vperm.xlu0 %1824, %v1144
      %v1826 = vpop.permute.xlu0 %1825
      %1828 = vset.pattern.permute.xlu0 2
      %1829 = vperm.xlu0 %1828, %v1145
      %v1830 = vpop.permute.xlu0 %1829
      %1832 = vset.pattern.permute.xlu0 2
      %1833 = vperm.xlu0 %1832, %v1146
      %v1834 = vpop.permute.xlu0 %1833
      %1836 = vset.pattern.permute.xlu0 2
      %1837 = vperm.xlu0 %1836, %v1147
      %v1838 = vpop.permute.xlu0 %1837
      %1840 = vset.pattern.permute.xlu0 2
      %1841 = vperm.xlu0 %1840, %v1148
      %v1842 = vpop.permute.xlu0 %1841
      %1844 = vset.pattern.permute.xlu0 2
      %1845 = vperm.xlu0 %1844, %v1149
      %v1846 = vpop.permute.xlu0 %1845
      %1848 = vset.pattern.permute.xlu0 2
      %1849 = vperm.xlu0 %1848, %v1150
      %v1850 = vpop.permute.xlu0 %1849
      %1852 = vset.pattern.permute.xlu0 2
      %1853 = vperm.xlu0 %1852, %v1151
      %v1854 = vpop.permute.xlu0 %1853
      %1856 = vset.pattern.permute.xlu0 2
      %1857 = vperm.xlu0 %1856, %v1152
      %v1858 = vpop.permute.xlu0 %1857
      %1860 = vset.pattern.permute.xlu0 2
      %1861 = vperm.xlu0 %1860, %v1153
      %v1862 = vpop.permute.xlu0 %1861
      %1864 = vset.pattern.permute.xlu0 2
      %1865 = vperm.xlu0 %1864, %v1154
      %v1866 = vpop.permute.xlu0 %1865
      %1868 = vset.pattern.permute.xlu0 2
      %1869 = vperm.xlu0 %1868, %v1155
      %v1870 = vpop.permute.xlu0 %1869
      %1872 = vset.pattern.permute.xlu0 2
      %1873 = vperm.xlu0 %1872, %v1156
      %v1874 = vpop.permute.xlu0 %1873
      %1876 = vset.pattern.permute.xlu0 2
      %1877 = vperm.xlu0 %1876, %v1157
      %v1878 = vpop.permute.xlu0 %1877
      %1880 = vset.pattern.permute.xlu0 2
      %1881 = vperm.xlu0 %1880, %v1158
      %v1882 = vpop.permute.xlu0 %1881
      %1884 = vset.pattern.permute.xlu0 2
      %1885 = vperm.xlu0 %1884, %v1159
      %v1886 = vpop.permute.xlu0 %1885
      %1888 = vset.pattern.permute.xlu0 2
      %1889 = vperm.xlu0 %1888, %v1160
      %v1890 = vpop.permute.xlu0 %1889
      %1892 = vset.pattern.permute.xlu0 2
      %1893 = vperm.xlu0 %1892, %v1161
      %v1894 = vpop.permute.xlu0 %1893
      %1896 = vset.pattern.permute.xlu0 2
      %1897 = vperm.xlu0 %1896, %v1162
      %v1898 = vpop.permute.xlu0 %1897
      %1900 = vset.pattern.permute.xlu0 2
      %1901 = vperm.xlu0 %1900, %v1163
      %v1902 = vpop.permute.xlu0 %1901
      %v1904 = vmul.f32 %v1681, %v1778
      %v1905 = vmul.f32 %v1775, %v1782
      %v1906 = vmul.f32 %v1686, %v1786
      %v1907 = vmul.f32 %v1688, %v1790
      %v1908 = vmul.f32 %v1690, %v1794
      %v1909 = vmul.f32 %v1692, %v1798
      %v1910 = vmul.f32 %v1694, %v1802
      %v1911 = vmul.f32 %v1696, %v1806
      %v1912 = vmul.f32 %v1698, %v1810
      %v1913 = vmul.f32 %v1700, %v1814
      %v1914 = vmul.f32 %v1702, %v1818
      %v1915 = vmul.f32 %v1704, %v1822
      %v1916 = vmul.f32 %v1706, %v1826
      %v1917 = vmul.f32 %v1708, %v1830
      %v1918 = vmul.f32 %v1710, %v1834
      %v1919 = vmul.f32 %v1712, %v1838
      %v1920 = vmul.f32 %v1714, %v1842
      %v1921 = vmul.f32 %v1716, %v1846
      %v1922 = vmul.f32 %v1718, %v1850
      %v1923 = vmul.f32 %v1720, %v1854
      %v1924 = vmul.f32 %v1722, %v1858
      %v1925 = vmul.f32 %v1724, %v1862
      %v1926 = vmul.f32 %v1726, %v1866
      %v1927 = vmul.f32 %v1728, %v1870
      %v1928 = vmul.f32 %v1730, %v1874
      %v1929 = vmul.f32 %v1732, %v1878
      %v1930 = vmul.f32 %v1734, %v1882
      %v1931 = vmul.f32 %v1736, %v1886
      %v1932 = vmul.f32 %v1738, %v1890
      %v1933 = vmul.f32 %v1740, %v1894
      %v1934 = vmul.f32 %v1742, %v1898
      %v1935 = vmul.f32 %v1743, %v1902
      %v1936 = vpack.c.bf16 %v1905, %v1904
      %v1937 = vpack.c.bf16 %v1907, %v1906
      %v1938 = vpack.c.bf16 %v1909, %v1908
      %v1939 = vpack.c.bf16 %v1911, %v1910
      %v1940 = vpack.c.bf16 %v1913, %v1912
      %v1941 = vpack.c.bf16 %v1915, %v1914
      %v1942 = vpack.c.bf16 %v1917, %v1916
      %v1943 = vpack.c.bf16 %v1919, %v1918
      %v1944 = vpack.c.bf16 %v1921, %v1920
      %v1945 = vpack.c.bf16 %v1923, %v1922
      %v1946 = vpack.c.bf16 %v1925, %v1924
      %v1947 = vpack.c.bf16 %v1927, %v1926
      %v1948 = vpack.c.bf16 %v1929, %v1928
      %v1949 = vpack.c.bf16 %v1931, %v1930
      %v1950 = vpack.c.bf16 %v1933, %v1932
      %v1951 = vpack.c.bf16 %v1935, %v1934
      %1952 = vset.pattern.permute.xlu0 3
      %1953 = vperm.xlu0 %1952, %v1132
      %v1954 = vpop.permute.xlu0 %1953
      %1956 = vset.pattern.permute.xlu0 3
      %1957 = vperm.xlu0 %1956, %v1133
      %v1958 = vpop.permute.xlu0 %1957
      %1960 = vset.pattern.permute.xlu0 3
      %1961 = vperm.xlu0 %1960, %v1134
      %v1962 = vpop.permute.xlu0 %1961
      %1964 = vset.pattern.permute.xlu0 3
      %1965 = vperm.xlu0 %1964, %v1135
      %v1966 = vpop.permute.xlu0 %1965
      %1968 = vset.pattern.permute.xlu0 3
      %1969 = vperm.xlu0 %1968, %v1136
      %v1970 = vpop.permute.xlu0 %1969
      %1972 = vset.pattern.permute.xlu0 3
      %1973 = vperm.xlu0 %1972, %v1137
      %v1974 = vpop.permute.xlu0 %1973
      %1976 = vset.pattern.permute.xlu0 3
      %1977 = vperm.xlu0 %1976, %v1138
      %v1978 = vpop.permute.xlu0 %1977
      %1980 = vset.pattern.permute.xlu0 3
      %1981 = vperm.xlu0 %1980, %v1139
      %v1982 = vpop.permute.xlu0 %1981
      %1984 = vset.pattern.permute.xlu0 3
      %1985 = vperm.xlu0 %1984, %v1140
      %v1986 = vpop.permute.xlu0 %1985
      %1988 = vset.pattern.permute.xlu0 3
      %1989 = vperm.xlu0 %1988, %v1141
      %v1990 = vpop.permute.xlu0 %1989
      %1992 = vset.pattern.permute.xlu0 3
      %1993 = vperm.xlu0 %1992, %v1142
      %v1994 = vpop.permute.xlu0 %1993
      %1996 = vset.pattern.permute.xlu0 3
      %1997 = vperm.xlu0 %1996, %v1143
      %v1998 = vpop.permute.xlu0 %1997
      %2000 = vset.pattern.permute.xlu0 3
      %2001 = vperm.xlu0 %2000, %v1144
      %v2002 = vpop.permute.xlu0 %2001
      %2004 = vset.pattern.permute.xlu0 3
      %2005 = vperm.xlu0 %2004, %v1145
      %v2006 = vpop.permute.xlu0 %2005
      %2008 = vset.pattern.permute.xlu0 3
      %2009 = vperm.xlu0 %2008, %v1146
      %v2010 = vpop.permute.xlu0 %2009
      %2012 = vset.pattern.permute.xlu0 3
      %2013 = vperm.xlu0 %2012, %v1147
      %v2014 = vpop.permute.xlu0 %2013
      %2016 = vset.pattern.permute.xlu0 3
      %2017 = vperm.xlu0 %2016, %v1148
      %v2018 = vpop.permute.xlu0 %2017
      %2020 = vset.pattern.permute.xlu0 3
      %2021 = vperm.xlu0 %2020, %v1149
      %v2022 = vpop.permute.xlu0 %2021
      %2024 = vset.pattern.permute.xlu0 3
      %2025 = vperm.xlu0 %2024, %v1150
      %v2026 = vpop.permute.xlu0 %2025
      %2028 = vset.pattern.permute.xlu0 3
      %2029 = vperm.xlu0 %2028, %v1151
      %v2030 = vpop.permute.xlu0 %2029
      %2032 = vset.pattern.permute.xlu0 3
      %2033 = vperm.xlu0 %2032, %v1152
      %v2034 = vpop.permute.xlu0 %2033
      %2036 = vset.pattern.permute.xlu0 3
      %2037 = vperm.xlu0 %2036, %v1153
      %v2038 = vpop.permute.xlu0 %2037
      %2040 = vset.pattern.permute.xlu0 3
      %2041 = vperm.xlu0 %2040, %v1154
      %v2042 = vpop.permute.xlu0 %2041
      %2044 = vset.pattern.permute.xlu0 3
      %2045 = vperm.xlu0 %2044, %v1155
      %v2046 = vpop.permute.xlu0 %2045
      %2048 = vset.pattern.permute.xlu0 3
      %2049 = vperm.xlu0 %2048, %v1156
      %v2050 = vpop.permute.xlu0 %2049
      %2052 = vset.pattern.permute.xlu0 3
      %2053 = vperm.xlu0 %2052, %v1157
      %v2054 = vpop.permute.xlu0 %2053
      %2056 = vset.pattern.permute.xlu0 3
      %2057 = vperm.xlu0 %2056, %v1158
      %v2058 = vpop.permute.xlu0 %2057
      %2060 = vset.pattern.permute.xlu0 3
      %2061 = vperm.xlu0 %2060, %v1159
      %v2062 = vpop.permute.xlu0 %2061
      %2064 = vset.pattern.permute.xlu0 3
      %2065 = vperm.xlu0 %2064, %v1160
      %v2066 = vpop.permute.xlu0 %2065
      %2068 = vset.pattern.permute.xlu0 3
      %2069 = vperm.xlu0 %2068, %v1161
      %v2070 = vpop.permute.xlu0 %2069
      %2072 = vset.pattern.permute.xlu0 3
      %2073 = vperm.xlu0 %2072, %v1162
      %v2074 = vpop.permute.xlu0 %2073
      %2076 = vset.pattern.permute.xlu0 3
      %2077 = vperm.xlu0 %2076, %v1163
      %v2078 = vpop.permute.xlu0 %2077
      %v2080 = vmul.f32 %v1293, %v1954
      %v2081 = vmul.f32 %v1207, %v1958
      %v2082 = vmul.f32 %v1209, %v1962
      %v2083 = vmul.f32 %v1211, %v1966
      %v2084 = vmul.f32 %v1213, %v1970
      %v2085 = vmul.f32 %v1215, %v1974
      %v2086 = vmul.f32 %v1217, %v1978
      %v2087 = vmul.f32 %v1219, %v1982
      %v2088 = vmul.f32 %v1221, %v1986
      %v2089 = vmul.f32 %v1223, %v1990
      %v2090 = vmul.f32 %v1225, %v1994
      %v2091 = vmul.f32 %v1227, %v1998
      %v2092 = vmul.f32 %v1229, %v2002
      %v2093 = vmul.f32 %v1231, %v2006
      %v2094 = vmul.f32 %v1233, %v2010
      %v2095 = vmul.f32 %v1235, %v2014
      %v2096 = vmul.f32 %v1237, %v2018
      %v2097 = vmul.f32 %v1239, %v2022
      %v2098 = vmul.f32 %v1241, %v2026
      %v2099 = vmul.f32 %v1243, %v2030
      %v2100 = vmul.f32 %v1245, %v2034
      %v2101 = vmul.f32 %v1247, %v2038
      %v2102 = vmul.f32 %v1249, %v2042
      %v2103 = vmul.f32 %v1251, %v2046
      %v2104 = vmul.f32 %v1253, %v2050
      %v2105 = vmul.f32 %v1255, %v2054
      %v2106 = vmul.f32 %v1257, %v2058
      %v2107 = vmul.f32 %v1259, %v2062
      %v2108 = vmul.f32 %v1261, %v2066
      %v2109 = vmul.f32 %v1262, %v2070
      %v2110 = vmul.f32 %v1170, %v2074
      %v2111 = vmul.f32 %v1172, %v2078
      %v2112 = vpack.c.bf16 %v2081, %v2080
      %v2113 = vpack.c.bf16 %v2083, %v2082
      %v2114 = vpack.c.bf16 %v2085, %v2084
      %v2115 = vpack.c.bf16 %v2087, %v2086
      %v2116 = vpack.c.bf16 %v2089, %v2088
      %v2117 = vpack.c.bf16 %v2091, %v2090
      %v2118 = vpack.c.bf16 %v2093, %v2092
      %v2119 = vpack.c.bf16 %v2095, %v2094
      %v2120 = vpack.c.bf16 %v2097, %v2096
      %v2121 = vpack.c.bf16 %v2099, %v2098
      %v2122 = vpack.c.bf16 %v2101, %v2100
      %v2123 = vpack.c.bf16 %v2103, %v2102
      %v2124 = vpack.c.bf16 %v2105, %v2104
      %v2125 = vpack.c.bf16 %v2107, %v2106
      %v2126 = vpack.c.bf16 %v2109, %v2108
      %v2127 = vpack.c.bf16 %v2111, %v2110
      %v2128 = vpack.c.bf16 %v1101, %v1100
      %v2129 = vpack.c.bf16 %v1103, %v1102
      %v2130 = vpack.c.bf16 %v1105, %v1104
      %v2131 = vpack.c.bf16 %v1107, %v1106
      %v2132 = vpack.c.bf16 %v1109, %v1108
      %v2133 = vpack.c.bf16 %v1111, %v1110
      %v2134 = vpack.c.bf16 %v1113, %v1112
      %v2135 = vpack.c.bf16 %v1115, %v1114
      %v2136 = vpack.c.bf16 %v1117, %v1116
      %v2137 = vpack.c.bf16 %v1119, %v1118
      %v2138 = vpack.c.bf16 %v1121, %v1120
      %v2139 = vpack.c.bf16 %v1123, %v1122
      %v2140 = vpack.c.bf16 %v1125, %v1124
      %v2141 = vpack.c.bf16 %v1127, %v1126
      %v2142 = vpack.c.bf16 %v1129, %v1128
      %v2143 = vpack.c.bf16 %v1131, %v1130
      %2144 = vset.pattern.permute.xlu0 5
      %2145 = vperm.xlu0 %2144, %v1132
      %v2146 = vpop.permute.xlu0 %2145
      %2148 = vset.pattern.permute.xlu0 5
      %2149 = vperm.xlu0 %2148, %v1133
      %v2150 = vpop.permute.xlu0 %2149
      %2152 = vset.pattern.permute.xlu0 5
      %2153 = vperm.xlu0 %2152, %v1134
      %v2154 = vpop.permute.xlu0 %2153
      %2156 = vset.pattern.permute.xlu0 5
      %2157 = vperm.xlu0 %2156, %v1135
      %v2158 = vpop.permute.xlu0 %2157
      %2160 = vset.pattern.permute.xlu0 5
      %2161 = vperm.xlu0 %2160, %v1136
      %v2162 = vpop.permute.xlu0 %2161
      %2164 = vset.pattern.permute.xlu0 5
      %2165 = vperm.xlu0 %2164, %v1137
      %v2166 = vpop.permute.xlu0 %2165
      %2168 = vset.pattern.permute.xlu0 5
      %2169 = vperm.xlu0 %2168, %v1138
      %v2170 = vpop.permute.xlu0 %2169
      %2172 = vset.pattern.permute.xlu0 5
      %2173 = vperm.xlu0 %2172, %v1139
      %v2174 = vpop.permute.xlu0 %2173
      %2176 = vset.pattern.permute.xlu0 5
      %2177 = vperm.xlu0 %2176, %v1140
      %v2178 = vpop.permute.xlu0 %2177
      %2180 = vset.pattern.permute.xlu0 5
      %2181 = vperm.xlu0 %2180, %v1141
      %v2182 = vpop.permute.xlu0 %2181
      %2184 = vset.pattern.permute.xlu0 5
      %2185 = vperm.xlu0 %2184, %v1142
      %v2186 = vpop.permute.xlu0 %2185
      %2188 = vset.pattern.permute.xlu0 5
      %2189 = vperm.xlu0 %2188, %v1143
      %v2190 = vpop.permute.xlu0 %2189
      %2192 = vset.pattern.permute.xlu0 5
      %2193 = vperm.xlu0 %2192, %v1144
      %v2194 = vpop.permute.xlu0 %2193
      %2196 = vset.pattern.permute.xlu0 5
      %2197 = vperm.xlu0 %2196, %v1145
      %v2198 = vpop.permute.xlu0 %2197
      %2200 = vset.pattern.permute.xlu0 5
      %2201 = vperm.xlu0 %2200, %v1146
      %v2202 = vpop.permute.xlu0 %2201
      %2204 = vset.pattern.permute.xlu0 5
      %2205 = vperm.xlu0 %2204, %v1147
      %v2206 = vpop.permute.xlu0 %2205
      %2208 = vset.pattern.permute.xlu0 5
      %2209 = vperm.xlu0 %2208, %v1148
      %v2210 = vpop.permute.xlu0 %2209
      %2212 = vset.pattern.permute.xlu0 5
      %2213 = vperm.xlu0 %2212, %v1149
      %v2214 = vpop.permute.xlu0 %2213
      %2216 = vset.pattern.permute.xlu0 5
      %2217 = vperm.xlu0 %2216, %v1150
      %v2218 = vpop.permute.xlu0 %2217
      %2220 = vset.pattern.permute.xlu0 5
      %2221 = vperm.xlu0 %2220, %v1151
      %v2222 = vpop.permute.xlu0 %2221
      %2224 = vset.pattern.permute.xlu0 5
      %2225 = vperm.xlu0 %2224, %v1152
      %v2226 = vpop.permute.xlu0 %2225
      %2228 = vset.pattern.permute.xlu0 5
      %2229 = vperm.xlu0 %2228, %v1153
      %v2230 = vpop.permute.xlu0 %2229
      %2232 = vset.pattern.permute.xlu0 5
      %2233 = vperm.xlu0 %2232, %v1154
      %v2234 = vpop.permute.xlu0 %2233
      %2236 = vset.pattern.permute.xlu0 5
      %2237 = vperm.xlu0 %2236, %v1155
      %v2238 = vpop.permute.xlu0 %2237
      %2240 = vset.pattern.permute.xlu0 5
      %2241 = vperm.xlu0 %2240, %v1156
      %v2242 = vpop.permute.xlu0 %2241
      %2244 = vset.pattern.permute.xlu0 5
      %2245 = vperm.xlu0 %2244, %v1157
      %v2246 = vpop.permute.xlu0 %2245
      %2248 = vset.pattern.permute.xlu0 5
      %2249 = vperm.xlu0 %2248, %v1158
      %v2250 = vpop.permute.xlu0 %2249
      %2252 = vset.pattern.permute.xlu0 5
      %2253 = vperm.xlu0 %2252, %v1159
      %v2254 = vpop.permute.xlu0 %2253
      %2256 = vset.pattern.permute.xlu0 5
      %2257 = vperm.xlu0 %2256, %v1160
      %v2258 = vpop.permute.xlu0 %2257
      %2260 = vset.pattern.permute.xlu0 5
      %2261 = vperm.xlu0 %2260, %v1161
      %v2262 = vpop.permute.xlu0 %2261
      %2264 = vset.pattern.permute.xlu0 5
      %2265 = vperm.xlu0 %2264, %v1162
      %v2266 = vpop.permute.xlu0 %2265
      %2268 = vset.pattern.permute.xlu0 5
      %2269 = vperm.xlu0 %2268, %v1163
      %v2270 = vpop.permute.xlu0 %2269
      %v2272 = vmul.f32 %v1686, %v2146
      %v2273 = vmul.f32 %v1688, %v2150
      %v2274 = vmul.f32 %v1690, %v2154
      %v2275 = vmul.f32 %v1692, %v2158
      %v2276 = vmul.f32 %v1694, %v2162
      %v2277 = vmul.f32 %v1696, %v2166
      %v2278 = vmul.f32 %v1698, %v2170
      %v2279 = vmul.f32 %v1700, %v2174
      %v2280 = vmul.f32 %v1702, %v2178
      %v2281 = vmul.f32 %v1704, %v2182
      %v2282 = vmul.f32 %v1706, %v2186
      %v2283 = vmul.f32 %v1708, %v2190
      %v2284 = vmul.f32 %v1710, %v2194
      %v2285 = vmul.f32 %v1712, %v2198
      %v2286 = vmul.f32 %v1714, %v2202
      %v2287 = vmul.f32 %v1716, %v2206
      %v2288 = vmul.f32 %v1718, %v2210
      %v2289 = vmul.f32 %v1720, %v2214
      %v2290 = vmul.f32 %v1722, %v2218
      %v2291 = vmul.f32 %v1724, %v2222
      %v2292 = vmul.f32 %v1726, %v2226
      %v2293 = vmul.f32 %v1728, %v2230
      %v2294 = vmul.f32 %v1730, %v2234
      %v2295 = vmul.f32 %v1732, %v2238
      %v2296 = vmul.f32 %v1734, %v2242
      %v2297 = vmul.f32 %v1736, %v2246
      %v2298 = vmul.f32 %v1738, %v2250
      %v2299 = vmul.f32 %v1740, %v2254
      %v2300 = vmul.f32 %v1742, %v2258
      %v2301 = vmul.f32 %v1743, %v2262
      %v2302 = vmul.f32 %v1681, %v2266
      %v2303 = vmul.f32 %v1775, %v2270
      %v2304 = vpack.c.bf16 %v2273, %v2272
      %v2305 = vpack.c.bf16 %v2275, %v2274
      %v2306 = vpack.c.bf16 %v2277, %v2276
      %v2307 = vpack.c.bf16 %v2279, %v2278
      %v2308 = vpack.c.bf16 %v2281, %v2280
      %v2309 = vpack.c.bf16 %v2283, %v2282
      %v2310 = vpack.c.bf16 %v2285, %v2284
      %v2311 = vpack.c.bf16 %v2287, %v2286
      %v2312 = vpack.c.bf16 %v2289, %v2288
      %v2313 = vpack.c.bf16 %v2291, %v2290
      %v2314 = vpack.c.bf16 %v2293, %v2292
      %v2315 = vpack.c.bf16 %v2295, %v2294
      %v2316 = vpack.c.bf16 %v2297, %v2296
      %v2317 = vpack.c.bf16 %v2299, %v2298
      %v2318 = vpack.c.bf16 %v2301, %v2300
      %v2319 = vpack.c.bf16 %v2303, %v2302
      %2320 = vset.pattern.permute.xlu0 6
      %2321 = vperm.xlu0 %2320, %v1132
      %v2322 = vpop.permute.xlu0 %2321
      %2324 = vset.pattern.permute.xlu0 6
      %2325 = vperm.xlu0 %2324, %v1133
      %v2326 = vpop.permute.xlu0 %2325
      %2328 = vset.pattern.permute.xlu0 6
      %2329 = vperm.xlu0 %2328, %v1134
      %v2330 = vpop.permute.xlu0 %2329
      %2332 = vset.pattern.permute.xlu0 6
      %2333 = vperm.xlu0 %2332, %v1135
      %v2334 = vpop.permute.xlu0 %2333
      %2336 = vset.pattern.permute.xlu0 6
      %2337 = vperm.xlu0 %2336, %v1136
      %v2338 = vpop.permute.xlu0 %2337
      %2340 = vset.pattern.permute.xlu0 6
      %2341 = vperm.xlu0 %2340, %v1137
      %v2342 = vpop.permute.xlu0 %2341
      %2344 = vset.pattern.permute.xlu0 6
      %2345 = vperm.xlu0 %2344, %v1138
      %v2346 = vpop.permute.xlu0 %2345
      %2348 = vset.pattern.permute.xlu0 6
      %2349 = vperm.xlu0 %2348, %v1139
      %v2350 = vpop.permute.xlu0 %2349
      %2352 = vset.pattern.permute.xlu0 6
      %2353 = vperm.xlu0 %2352, %v1140
      %v2354 = vpop.permute.xlu0 %2353
      %2356 = vset.pattern.permute.xlu0 6
      %2357 = vperm.xlu0 %2356, %v1141
      %v2358 = vpop.permute.xlu0 %2357
      %2360 = vset.pattern.permute.xlu0 6
      %2361 = vperm.xlu0 %2360, %v1142
      %v2362 = vpop.permute.xlu0 %2361
      %2364 = vset.pattern.permute.xlu0 6
      %2365 = vperm.xlu0 %2364, %v1143
      %v2366 = vpop.permute.xlu0 %2365
      %2368 = vset.pattern.permute.xlu0 6
      %2369 = vperm.xlu0 %2368, %v1144
      %v2370 = vpop.permute.xlu0 %2369
      %2372 = vset.pattern.permute.xlu0 6
      %2373 = vperm.xlu0 %2372, %v1145
      %v2374 = vpop.permute.xlu0 %2373
      %2376 = vset.pattern.permute.xlu0 6
      %2377 = vperm.xlu0 %2376, %v1146
      %v2378 = vpop.permute.xlu0 %2377
      %2380 = vset.pattern.permute.xlu0 6
      %2381 = vperm.xlu0 %2380, %v1147
      %v2382 = vpop.permute.xlu0 %2381
      %2384 = vset.pattern.permute.xlu0 6
      %2385 = vperm.xlu0 %2384, %v1148
      %v2386 = vpop.permute.xlu0 %2385
      %2388 = vset.pattern.permute.xlu0 6
      %2389 = vperm.xlu0 %2388, %v1149
      %v2390 = vpop.permute.xlu0 %2389
      %2392 = vset.pattern.permute.xlu0 6
      %2393 = vperm.xlu0 %2392, %v1150
      %v2394 = vpop.permute.xlu0 %2393
      %2396 = vset.pattern.permute.xlu0 6
      %2397 = vperm.xlu0 %2396, %v1151
      %v2398 = vpop.permute.xlu0 %2397
      %2400 = vset.pattern.permute.xlu0 6
      %2401 = vperm.xlu0 %2400, %v1152
      %v2402 = vpop.permute.xlu0 %2401
      %2404 = vset.pattern.permute.xlu0 6
      %2405 = vperm.xlu0 %2404, %v1153
      %v2406 = vpop.permute.xlu0 %2405
      %2408 = vset.pattern.permute.xlu0 6
      %2409 = vperm.xlu0 %2408, %v1154
      %v2410 = vpop.permute.xlu0 %2409
      %2412 = vset.pattern.permute.xlu0 6
      %2413 = vperm.xlu0 %2412, %v1155
      %v2414 = vpop.permute.xlu0 %2413
      %2416 = vset.pattern.permute.xlu0 6
      %2417 = vperm.xlu0 %2416, %v1156
      %v2418 = vpop.permute.xlu0 %2417
      %2420 = vset.pattern.permute.xlu0 6
      %2421 = vperm.xlu0 %2420, %v1157
      %v2422 = vpop.permute.xlu0 %2421
      %2424 = vset.pattern.permute.xlu0 6
      %2425 = vperm.xlu0 %2424, %v1158
      %v2426 = vpop.permute.xlu0 %2425
      %2428 = vset.pattern.permute.xlu0 6
      %2429 = vperm.xlu0 %2428, %v1159
      %v2430 = vpop.permute.xlu0 %2429
      %2432 = vset.pattern.permute.xlu0 6
      %2433 = vperm.xlu0 %2432, %v1160
      %v2434 = vpop.permute.xlu0 %2433
      %2436 = vset.pattern.permute.xlu0 6
      %2437 = vperm.xlu0 %2436, %v1161
      %v2438 = vpop.permute.xlu0 %2437
      %2440 = vset.pattern.permute.xlu0 6
      %2441 = vperm.xlu0 %2440, %v1162
      %v2442 = vpop.permute.xlu0 %2441
      %2444 = vset.pattern.permute.xlu0 6
      %2445 = vperm.xlu0 %2444, %v1163
      %v2446 = vpop.permute.xlu0 %2445
      %v2448 = vmul.f32 %v1209, %v2322
      %v2449 = vmul.f32 %v1211, %v2326
      %v2450 = vmul.f32 %v1213, %v2330
      %v2451 = vmul.f32 %v1215, %v2334
      %v2452 = vmul.f32 %v1217, %v2338
      %v2453 = vmul.f32 %v1219, %v2342
      %v2454 = vmul.f32 %v1221, %v2346
      %v2455 = vmul.f32 %v1223, %v2350
      %v2456 = vmul.f32 %v1225, %v2354
      %v2457 = vmul.f32 %v1227, %v2358
      %v2458 = vmul.f32 %v1229, %v2362
      %v2459 = vmul.f32 %v1231, %v2366
      %v2460 = vmul.f32 %v1233, %v2370
      %v2461 = vmul.f32 %v1235, %v2374
      %v2462 = vmul.f32 %v1237, %v2378
      %v2463 = vmul.f32 %v1239, %v2382
      %v2464 = vmul.f32 %v1241, %v2386
      %v2465 = vmul.f32 %v1243, %v2390
      %v2466 = vmul.f32 %v1245, %v2394
      %v2467 = vmul.f32 %v1247, %v2398
      %v2468 = vmul.f32 %v1249, %v2402
      %v2469 = vmul.f32 %v1251, %v2406
      %v2470 = vmul.f32 %v1253, %v2410
      %v2471 = vmul.f32 %v1255, %v2414
      %v2472 = vmul.f32 %v1257, %v2418
      %v2473 = vmul.f32 %v1259, %v2422
      %v2474 = vmul.f32 %v1261, %v2426
      %v2475 = vmul.f32 %v1262, %v2430
      %v2476 = vmul.f32 %v1170, %v2434
      %v2477 = vmul.f32 %v1172, %v2438
      %v2478 = vmul.f32 %v1293, %v2442
      %v2479 = vmul.f32 %v1207, %v2446
      %v2480 = vpack.c.bf16 %v2449, %v2448
      %v2481 = vpack.c.bf16 %v2451, %v2450
      %v2482 = vpack.c.bf16 %v2453, %v2452
      %v2483 = vpack.c.bf16 %v2455, %v2454
      %v2484 = vpack.c.bf16 %v2457, %v2456
      %v2485 = vpack.c.bf16 %v2459, %v2458
      %v2486 = vpack.c.bf16 %v2461, %v2460
      %v2487 = vpack.c.bf16 %v2463, %v2462
      %v2488 = vpack.c.bf16 %v2465, %v2464
      %v2489 = vpack.c.bf16 %v2467, %v2466
      %v2490 = vpack.c.bf16 %v2469, %v2468
      %v2491 = vpack.c.bf16 %v2471, %v2470
      %v2492 = vpack.c.bf16 %v2473, %v2472
      %v2493 = vpack.c.bf16 %v2475, %v2474
      %v2494 = vpack.c.bf16 %v2477, %v2476
      %v2495 = vpack.c.bf16 %v2479, %v2478
      %2496 = vset.pattern.permute.xlu0 7
      %2497 = vperm.xlu0 %2496, %v1132
      %v2498 = vpop.permute.xlu0 %2497
      %2500 = vset.pattern.permute.xlu0 7
      %2501 = vperm.xlu0 %2500, %v1133
      %v2502 = vpop.permute.xlu0 %2501
      %2504 = vset.pattern.permute.xlu0 7
      %2505 = vperm.xlu0 %2504, %v1134
      %v2506 = vpop.permute.xlu0 %2505
      %2508 = vset.pattern.permute.xlu0 7
      %2509 = vperm.xlu0 %2508, %v1135
      %v2510 = vpop.permute.xlu0 %2509
      %2512 = vset.pattern.permute.xlu0 7
      %2513 = vperm.xlu0 %2512, %v1136
      %v2514 = vpop.permute.xlu0 %2513
      %2516 = vset.pattern.permute.xlu0 7
      %2517 = vperm.xlu0 %2516, %v1137
      %v2518 = vpop.permute.xlu0 %2517
      %2520 = vset.pattern.permute.xlu0 7
      %2521 = vperm.xlu0 %2520, %v1138
      %v2522 = vpop.permute.xlu0 %2521
      %2524 = vset.pattern.permute.xlu0 7
      %2525 = vperm.xlu0 %2524, %v1139
      %v2526 = vpop.permute.xlu0 %2525
      %2528 = vset.pattern.permute.xlu0 7
      %2529 = vperm.xlu0 %2528, %v1140
      %v2530 = vpop.permute.xlu0 %2529
      %2532 = vset.pattern.permute.xlu0 7
      %2533 = vperm.xlu0 %2532, %v1141
      %v2534 = vpop.permute.xlu0 %2533
      %2536 = vset.pattern.permute.xlu0 7
      %2537 = vperm.xlu0 %2536, %v1142
      %v2538 = vpop.permute.xlu0 %2537
      %2540 = vset.pattern.permute.xlu0 7
      %2541 = vperm.xlu0 %2540, %v1143
      %v2542 = vpop.permute.xlu0 %2541
      %2544 = vset.pattern.permute.xlu0 7
      %2545 = vperm.xlu0 %2544, %v1144
      %v2546 = vpop.permute.xlu0 %2545
      %2548 = vset.pattern.permute.xlu0 7
      %2549 = vperm.xlu0 %2548, %v1145
      %v2550 = vpop.permute.xlu0 %2549
      %2552 = vset.pattern.permute.xlu0 7
      %2553 = vperm.xlu0 %2552, %v1146
      %v2554 = vpop.permute.xlu0 %2553
      %2556 = vset.pattern.permute.xlu0 7
      %2557 = vperm.xlu0 %2556, %v1147
      %v2558 = vpop.permute.xlu0 %2557
      %2560 = vset.pattern.permute.xlu0 7
      %2561 = vperm.xlu0 %2560, %v1148
      %v2562 = vpop.permute.xlu0 %2561
      %2564 = vset.pattern.permute.xlu0 7
      %2565 = vperm.xlu0 %2564, %v1149
      %v2566 = vpop.permute.xlu0 %2565
      %2568 = vset.pattern.permute.xlu0 7
      %2569 = vperm.xlu0 %2568, %v1150
      %v2570 = vpop.permute.xlu0 %2569
      %2572 = vset.pattern.permute.xlu0 7
      %2573 = vperm.xlu0 %2572, %v1151
      %v2574 = vpop.permute.xlu0 %2573
      %2576 = vset.pattern.permute.xlu0 7
      %2577 = vperm.xlu0 %2576, %v1152
      %v2578 = vpop.permute.xlu0 %2577
      %2580 = vset.pattern.permute.xlu0 7
      %2581 = vperm.xlu0 %2580, %v1153
      %v2582 = vpop.permute.xlu0 %2581
      %2584 = vset.pattern.permute.xlu0 7
      %2585 = vperm.xlu0 %2584, %v1154
      %v2586 = vpop.permute.xlu0 %2585
      %2588 = vset.pattern.permute.xlu0 7
      %2589 = vperm.xlu0 %2588, %v1155
      %v2590 = vpop.permute.xlu0 %2589
      %2592 = vset.pattern.permute.xlu0 7
      %2593 = vperm.xlu0 %2592, %v1156
      %v2594 = vpop.permute.xlu0 %2593
      %2596 = vset.pattern.permute.xlu0 7
      %2597 = vperm.xlu0 %2596, %v1157
      %v2598 = vpop.permute.xlu0 %2597
      %2600 = vset.pattern.permute.xlu0 7
      %2601 = vperm.xlu0 %2600, %v1158
      %v2602 = vpop.permute.xlu0 %2601
      %2604 = vset.pattern.permute.xlu0 7
      %2605 = vperm.xlu0 %2604, %v1159
      %v2606 = vpop.permute.xlu0 %2605
      %2608 = vset.pattern.permute.xlu0 7
      %2609 = vperm.xlu0 %2608, %v1160
      %v2610 = vpop.permute.xlu0 %2609
      %2612 = vset.pattern.permute.xlu0 7
      %2613 = vperm.xlu0 %2612, %v1161
      %v2614 = vpop.permute.xlu0 %2613
      %2616 = vset.pattern.permute.xlu0 7
      %2617 = vperm.xlu0 %2616, %v1162
      %v2618 = vpop.permute.xlu0 %2617
      %2620 = vset.pattern.permute.xlu0 7
      %2621 = vperm.xlu0 %2620, %v1163
      %v2622 = vpop.permute.xlu0 %2621
      %v2624 = vmul.f32 %v1102, %v2498
      %v2625 = vmul.f32 %v1103, %v2502
      %v2626 = vmul.f32 %v1104, %v2506
      %v2627 = vmul.f32 %v1105, %v2510
      %v2628 = vmul.f32 %v1106, %v2514
      %v2629 = vmul.f32 %v1107, %v2518
      %v2630 = vmul.f32 %v1108, %v2522
      %v2631 = vmul.f32 %v1109, %v2526
      %v2632 = vmul.f32 %v1110, %v2530
      %v2633 = vmul.f32 %v1111, %v2534
      %v2634 = vmul.f32 %v1112, %v2538
      %v2635 = vmul.f32 %v1113, %v2542
      %v2636 = vmul.f32 %v1114, %v2546
      %v2637 = vmul.f32 %v1115, %v2550
      %v2638 = vmul.f32 %v1116, %v2554
      %v2639 = vmul.f32 %v1117, %v2558
      %v2640 = vmul.f32 %v1118, %v2562
      %v2641 = vmul.f32 %v1119, %v2566
      %v2642 = vmul.f32 %v1120, %v2570
      %v2643 = vmul.f32 %v1121, %v2574
      %v2644 = vmul.f32 %v1122, %v2578
      %v2645 = vmul.f32 %v1123, %v2582
      %v2646 = vmul.f32 %v1124, %v2586
      %v2647 = vmul.f32 %v1125, %v2590
      %v2648 = vmul.f32 %v1126, %v2594
      %v2649 = vmul.f32 %v1127, %v2598
      %v2650 = vmul.f32 %v1128, %v2602
      %v2651 = vmul.f32 %v1129, %v2606
      %v2652 = vmul.f32 %v1130, %v2610
      %v2653 = vmul.f32 %v1131, %v2614
      %v2654 = vmul.f32 %v1100, %v2618
      %v2655 = vmul.f32 %v1101, %v2622
      %v2656 = vpack.c.bf16 %v2625, %v2624
      %v2657 = vpack.c.bf16 %v2627, %v2626
      %v2658 = vpack.c.bf16 %v2629, %v2628
      %v2659 = vpack.c.bf16 %v2631, %v2630
      %v2660 = vpack.c.bf16 %v2633, %v2632
      %v2661 = vpack.c.bf16 %v2635, %v2634
      %v2662 = vpack.c.bf16 %v2637, %v2636
      %v2663 = vpack.c.bf16 %v2639, %v2638
      %v2664 = vpack.c.bf16 %v2641, %v2640
      %v2665 = vpack.c.bf16 %v2643, %v2642
      %v2666 = vpack.c.bf16 %v2645, %v2644
      %v2667 = vpack.c.bf16 %v2647, %v2646
      %v2668 = vpack.c.bf16 %v2649, %v2648
      %v2669 = vpack.c.bf16 %v2651, %v2650
      %v2670 = vpack.c.bf16 %v2653, %v2652
      %v2671 = vpack.c.bf16 %v2655, %v2654
      %2672 = vset.pattern.permute.xlu0 8
      %2673 = vperm.xlu0 %2672, %v1132
      %v2674 = vpop.permute.xlu0 %2673
      %2676 = vset.pattern.permute.xlu0 8
      %2677 = vperm.xlu0 %2676, %v1133
      %v2678 = vpop.permute.xlu0 %2677
      %2680 = vset.pattern.permute.xlu0 8
      %2681 = vperm.xlu0 %2680, %v1134
      %v2682 = vpop.permute.xlu0 %2681
      %2684 = vset.pattern.permute.xlu0 8
      %2685 = vperm.xlu0 %2684, %v1135
      %v2686 = vpop.permute.xlu0 %2685
      %2688 = vset.pattern.permute.xlu0 8
      %2689 = vperm.xlu0 %2688, %v1136
      %v2690 = vpop.permute.xlu0 %2689
      %2692 = vset.pattern.permute.xlu0 8
      %2693 = vperm.xlu0 %2692, %v1137
      %v2694 = vpop.permute.xlu0 %2693
      %2696 = vset.pattern.permute.xlu0 8
      %2697 = vperm.xlu0 %2696, %v1138
      %v2698 = vpop.permute.xlu0 %2697
      %2700 = vset.pattern.permute.xlu0 8
      %2701 = vperm.xlu0 %2700, %v1139
      %v2702 = vpop.permute.xlu0 %2701
      %2704 = vset.pattern.permute.xlu0 8
      %2705 = vperm.xlu0 %2704, %v1140
      %v2706 = vpop.permute.xlu0 %2705
      %2708 = vset.pattern.permute.xlu0 8
      %2709 = vperm.xlu0 %2708, %v1141
      %v2710 = vpop.permute.xlu0 %2709
      %2712 = vset.pattern.permute.xlu0 8
      %2713 = vperm.xlu0 %2712, %v1142
      %v2714 = vpop.permute.xlu0 %2713
      %2716 = vset.pattern.permute.xlu0 8
      %2717 = vperm.xlu0 %2716, %v1143
      %v2718 = vpop.permute.xlu0 %2717
      %2720 = vset.pattern.permute.xlu0 8
      %2721 = vperm.xlu0 %2720, %v1144
      %v2722 = vpop.permute.xlu0 %2721
      %2724 = vset.pattern.permute.xlu0 8
      %2725 = vperm.xlu0 %2724, %v1145
      %v2726 = vpop.permute.xlu0 %2725
      %2728 = vset.pattern.permute.xlu0 8
      %2729 = vperm.xlu0 %2728, %v1146
      %v2730 = vpop.permute.xlu0 %2729
      %2732 = vset.pattern.permute.xlu0 8
      %2733 = vperm.xlu0 %2732, %v1147
      %v2734 = vpop.permute.xlu0 %2733
      %2736 = vset.pattern.permute.xlu0 8
      %2737 = vperm.xlu0 %2736, %v1148
      %v2738 = vpop.permute.xlu0 %2737
      %2740 = vset.pattern.permute.xlu0 8
      %2741 = vperm.xlu0 %2740, %v1149
      %v2742 = vpop.permute.xlu0 %2741
      %2744 = vset.pattern.permute.xlu0 8
      %2745 = vperm.xlu0 %2744, %v1150
      %v2746 = vpop.permute.xlu0 %2745
      %2748 = vset.pattern.permute.xlu0 8
      %2749 = vperm.xlu0 %2748, %v1151
      %v2750 = vpop.permute.xlu0 %2749
      %2752 = vset.pattern.permute.xlu0 8
      %2753 = vperm.xlu0 %2752, %v1152
      %v2754 = vpop.permute.xlu0 %2753
      %2756 = vset.pattern.permute.xlu0 8
      %2757 = vperm.xlu0 %2756, %v1153
      %v2758 = vpop.permute.xlu0 %2757
      %2760 = vset.pattern.permute.xlu0 8
      %2761 = vperm.xlu0 %2760, %v1154
      %v2762 = vpop.permute.xlu0 %2761
      %2764 = vset.pattern.permute.xlu0 8
      %2765 = vperm.xlu0 %2764, %v1155
      %v2766 = vpop.permute.xlu0 %2765
      %2768 = vset.pattern.permute.xlu0 8
      %2769 = vperm.xlu0 %2768, %v1156
      %v2770 = vpop.permute.xlu0 %2769
      %2772 = vset.pattern.permute.xlu0 8
      %2773 = vperm.xlu0 %2772, %v1157
      %v2774 = vpop.permute.xlu0 %2773
      %2776 = vset.pattern.permute.xlu0 8
      %2777 = vperm.xlu0 %2776, %v1158
      %v2778 = vpop.permute.xlu0 %2777
      %2780 = vset.pattern.permute.xlu0 8
      %2781 = vperm.xlu0 %2780, %v1159
      %v2782 = vpop.permute.xlu0 %2781
      %2784 = vset.pattern.permute.xlu0 8
      %2785 = vperm.xlu0 %2784, %v1160
      %v2786 = vpop.permute.xlu0 %2785
      %2788 = vset.pattern.permute.xlu0 8
      %2789 = vperm.xlu0 %2788, %v1161
      %v2790 = vpop.permute.xlu0 %2789
      %2792 = vset.pattern.permute.xlu0 8
      %2793 = vperm.xlu0 %2792, %v1162
      %v2794 = vpop.permute.xlu0 %2793
      %2796 = vset.pattern.permute.xlu0 8
      %2797 = vperm.xlu0 %2796, %v1163
      %v2798 = vpop.permute.xlu0 %2797
      %v2800 = vmul.f32 %v1690, %v2674
      %v2801 = vmul.f32 %v1692, %v2678
      %v2802 = vmul.f32 %v1694, %v2682
      %v2803 = vmul.f32 %v1696, %v2686
      %v2804 = vmul.f32 %v1698, %v2690
      %v2805 = vmul.f32 %v1700, %v2694
      %v2806 = vmul.f32 %v1702, %v2698
      %v2807 = vmul.f32 %v1704, %v2702
      %v2808 = vmul.f32 %v1706, %v2706
      %v2809 = vmul.f32 %v1708, %v2710
      %v2810 = vmul.f32 %v1710, %v2714
      %v2811 = vmul.f32 %v1712, %v2718
      %v2812 = vmul.f32 %v1714, %v2722
      %v2813 = vmul.f32 %v1716, %v2726
      %v2814 = vmul.f32 %v1718, %v2730
      %v2815 = vmul.f32 %v1720, %v2734
      %v2816 = vmul.f32 %v1722, %v2738
      %v2817 = vmul.f32 %v1724, %v2742
      %v2818 = vmul.f32 %v1726, %v2746
      %v2819 = vmul.f32 %v1728, %v2750
      %v2820 = vmul.f32 %v1730, %v2754
      %v2821 = vmul.f32 %v1732, %v2758
      %v2822 = vmul.f32 %v1734, %v2762
      %v2823 = vmul.f32 %v1736, %v2766
      %v2824 = vmul.f32 %v1738, %v2770
      %v2825 = vmul.f32 %v1740, %v2774
      %v2826 = vmul.f32 %v1742, %v2778
      %v2827 = vmul.f32 %v1743, %v2782
      %v2828 = vmul.f32 %v1681, %v2786
      %v2829 = vmul.f32 %v1775, %v2790
      %v2830 = vmul.f32 %v1686, %v2794
      %v2831 = vmul.f32 %v1688, %v2798
      %v2832 = vpack.c.bf16 %v2801, %v2800
      %v2833 = vpack.c.bf16 %v2803, %v2802
      %v2834 = vpack.c.bf16 %v2805, %v2804
      %v2835 = vpack.c.bf16 %v2807, %v2806
      %v2836 = vpack.c.bf16 %v2809, %v2808
      %v2837 = vpack.c.bf16 %v2811, %v2810
      %v2838 = vpack.c.bf16 %v2813, %v2812
      %v2839 = vpack.c.bf16 %v2815, %v2814
      %v2840 = vpack.c.bf16 %v2817, %v2816
      %v2841 = vpack.c.bf16 %v2819, %v2818
      %v2842 = vpack.c.bf16 %v2821, %v2820
      %v2843 = vpack.c.bf16 %v2823, %v2822
      %v2844 = vpack.c.bf16 %v2825, %v2824
      %v2845 = vpack.c.bf16 %v2827, %v2826
      %v2846 = vpack.c.bf16 %v2829, %v2828
      %v2847 = vpack.c.bf16 %v2831, %v2830
      %2864 = vrot.lane.b32.xlu0 %v1662, 32
      %v2865 = vpop.permute.xlu0 %2864
      %2866 = vrot.lane.b32.xlu0 %v1663, 32
      %v2867 = vpop.permute.xlu0 %2866
      %2868 = vrot.lane.b32.xlu0 %v1664, 32
      %v2869 = vpop.permute.xlu0 %2868
      %2870 = vrot.lane.b32.xlu0 %v1665, 32
      %v2871 = vpop.permute.xlu0 %2870
      %2872 = vrot.lane.b32.xlu0 %v1666, 32
      %v2873 = vpop.permute.xlu0 %2872
      %2874 = vrot.lane.b32.xlu0 %v1667, 32
      %v2875 = vpop.permute.xlu0 %2874
      %2876 = vrot.lane.b32.xlu0 %v1668, 32
      %v2877 = vpop.permute.xlu0 %2876
      %2878 = vrot.lane.b32.xlu0 %v1669, 32
      %v2879 = vpop.permute.xlu0 %2878
      %2880 = vrot.lane.b32.xlu0 %v1670, 32
      %v2881 = vpop.permute.xlu0 %2880
      %2882 = vrot.lane.b32.xlu0 %v1671, 32
      %v2883 = vpop.permute.xlu0 %2882
      %2884 = vrot.lane.b32.xlu0 %v1672, 32
      %v2885 = vpop.permute.xlu0 %2884
      %2886 = vrot.lane.b32.xlu0 %v1673, 32
      %v2887 = vpop.permute.xlu0 %2886
      %2888 = vrot.lane.b32.xlu0 %v1674, 32
      %v2889 = vpop.permute.xlu0 %2888
      %2890 = vrot.lane.b32.xlu0 %v1675, 32
      %v2891 = vpop.permute.xlu0 %2890
      %2892 = vrot.lane.b32.xlu0 %v1676, 32
      %v2893 = vpop.permute.xlu0 %2892
      %2894 = vrot.lane.b32.xlu0 %v1677, 32
      %v2895 = vpop.permute.xlu0 %2894
      %2912 = vrot.lane.b32.xlu0 %v1936, 64
      %v2913 = vpop.permute.xlu0 %2912
      %2914 = vrot.lane.b32.xlu0 %v1937, 64
      %v2915 = vpop.permute.xlu0 %2914
      %2916 = vrot.lane.b32.xlu0 %v1938, 64
      %v2917 = vpop.permute.xlu0 %2916
      %2918 = vrot.lane.b32.xlu0 %v1939, 64
      %v2919 = vpop.permute.xlu0 %2918
      %2920 = vrot.lane.b32.xlu0 %v1940, 64
      %v2921 = vpop.permute.xlu0 %2920
      %2922 = vrot.lane.b32.xlu0 %v1941, 64
      %v2923 = vpop.permute.xlu0 %2922
      %2924 = vrot.lane.b32.xlu0 %v1942, 64
      %v2925 = vpop.permute.xlu0 %2924
      %2926 = vrot.lane.b32.xlu0 %v1943, 64
      %v2927 = vpop.permute.xlu0 %2926
      %2928 = vrot.lane.b32.xlu0 %v1944, 64
      %v2929 = vpop.permute.xlu0 %2928
      %2930 = vrot.lane.b32.xlu0 %v1945, 64
      %v2931 = vpop.permute.xlu0 %2930
      %2932 = vrot.lane.b32.xlu0 %v1946, 64
      %v2933 = vpop.permute.xlu0 %2932
      %2934 = vrot.lane.b32.xlu0 %v1947, 64
      %v2935 = vpop.permute.xlu0 %2934
      %2936 = vrot.lane.b32.xlu0 %v1948, 64
      %v2937 = vpop.permute.xlu0 %2936
      %2938 = vrot.lane.b32.xlu0 %v1949, 64
      %v2939 = vpop.permute.xlu0 %2938
      %2940 = vrot.lane.b32.xlu0 %v1950, 64
      %v2941 = vpop.permute.xlu0 %2940
      %2942 = vrot.lane.b32.xlu0 %v1951, 64
      %v2943 = vpop.permute.xlu0 %2942
      %2960 = vrot.lane.b32.xlu0 %v2112, 96
      %v2961 = vpop.permute.xlu0 %2960
      %2962 = vrot.lane.b32.xlu0 %v2113, 96
      %v2963 = vpop.permute.xlu0 %2962
      %2964 = vrot.lane.b32.xlu0 %v2114, 96
      %v2965 = vpop.permute.xlu0 %2964
      %2966 = vrot.lane.b32.xlu0 %v2115, 96
      %v2967 = vpop.permute.xlu0 %2966
      %2968 = vrot.lane.b32.xlu0 %v2116, 96
      %v2969 = vpop.permute.xlu0 %2968
      %2970 = vrot.lane.b32.xlu0 %v2117, 96
      %v2971 = vpop.permute.xlu0 %2970
      %2972 = vrot.lane.b32.xlu0 %v2118, 96
      %v2973 = vpop.permute.xlu0 %2972
      %2974 = vrot.lane.b32.xlu0 %v2119, 96
      %v2975 = vpop.permute.xlu0 %2974
      %2976 = vrot.lane.b32.xlu0 %v2120, 96
      %v2977 = vpop.permute.xlu0 %2976
      %2978 = vrot.lane.b32.xlu0 %v2121, 96
      %v2979 = vpop.permute.xlu0 %2978
      %2980 = vrot.lane.b32.xlu0 %v2122, 96
      %v2981 = vpop.permute.xlu0 %2980
      %2982 = vrot.lane.b32.xlu0 %v2123, 96
      %v2983 = vpop.permute.xlu0 %2982
      %2984 = vrot.lane.b32.xlu0 %v2124, 96
      %v2985 = vpop.permute.xlu0 %2984
      %2986 = vrot.lane.b32.xlu0 %v2125, 96
      %v2987 = vpop.permute.xlu0 %2986
      %2988 = vrot.lane.b32.xlu0 %v2126, 96
      %v2989 = vpop.permute.xlu0 %2988
      %2990 = vrot.lane.b32.xlu0 %v2127, 96
      %v2991 = vpop.permute.xlu0 %2990
      %3008 = vrot.lane.b32.xlu0 %v2304, 32
      %v3009 = vpop.permute.xlu0 %3008
      %3010 = vrot.lane.b32.xlu0 %v2305, 32
      %v3011 = vpop.permute.xlu0 %3010
      %3012 = vrot.lane.b32.xlu0 %v2306, 32
      %v3013 = vpop.permute.xlu0 %3012
      %3014 = vrot.lane.b32.xlu0 %v2307, 32
      %v3015 = vpop.permute.xlu0 %3014
      %3016 = vrot.lane.b32.xlu0 %v2308, 32
      %v3017 = vpop.permute.xlu0 %3016
      %3018 = vrot.lane.b32.xlu0 %v2309, 32
      %v3019 = vpop.permute.xlu0 %3018
      %3020 = vrot.lane.b32.xlu0 %v2310, 32
      %v3021 = vpop.permute.xlu0 %3020
      %3022 = vrot.lane.b32.xlu0 %v2311, 32
      %v3023 = vpop.permute.xlu0 %3022
      %3024 = vrot.lane.b32.xlu0 %v2312, 32
      %v3025 = vpop.permute.xlu0 %3024
      %3026 = vrot.lane.b32.xlu0 %v2313, 32
      %v3027 = vpop.permute.xlu0 %3026
      %3028 = vrot.lane.b32.xlu0 %v2314, 32
      %v3029 = vpop.permute.xlu0 %3028
      %3030 = vrot.lane.b32.xlu0 %v2315, 32
      %v3031 = vpop.permute.xlu0 %3030
      %3032 = vrot.lane.b32.xlu0 %v2316, 32
      %v3033 = vpop.permute.xlu0 %3032
      %3034 = vrot.lane.b32.xlu0 %v2317, 32
      %v3035 = vpop.permute.xlu0 %3034
      %3036 = vrot.lane.b32.xlu0 %v2318, 32
      %v3037 = vpop.permute.xlu0 %3036
      %3038 = vrot.lane.b32.xlu0 %v2319, 32
      %v3039 = vpop.permute.xlu0 %3038
      %3056 = vrot.lane.b32.xlu0 %v2480, 64
      %v3057 = vpop.permute.xlu0 %3056
      %3058 = vrot.lane.b32.xlu0 %v2481, 64
      %v3059 = vpop.permute.xlu0 %3058
      %3060 = vrot.lane.b32.xlu0 %v2482, 64
      %v3061 = vpop.permute.xlu0 %3060
      %3062 = vrot.lane.b32.xlu0 %v2483, 64
      %v3063 = vpop.permute.xlu0 %3062
      %3064 = vrot.lane.b32.xlu0 %v2484, 64
      %v3065 = vpop.permute.xlu0 %3064
      %3066 = vrot.lane.b32.xlu0 %v2485, 64
      %v3067 = vpop.permute.xlu0 %3066
      %3068 = vrot.lane.b32.xlu0 %v2486, 64
      %v3069 = vpop.permute.xlu0 %3068
      %3070 = vrot.lane.b32.xlu0 %v2487, 64
      %v3071 = vpop.permute.xlu0 %3070
      %3072 = vrot.lane.b32.xlu0 %v2488, 64
      %v3073 = vpop.permute.xlu0 %3072
      %3074 = vrot.lane.b32.xlu0 %v2489, 64
      %v3075 = vpop.permute.xlu0 %3074
      %3076 = vrot.lane.b32.xlu0 %v2490, 64
      %v3077 = vpop.permute.xlu0 %3076
      %3078 = vrot.lane.b32.xlu0 %v2491, 64
      %v3079 = vpop.permute.xlu0 %3078
      %3080 = vrot.lane.b32.xlu0 %v2492, 64
      %v3081 = vpop.permute.xlu0 %3080
      %3082 = vrot.lane.b32.xlu0 %v2493, 64
      %v3083 = vpop.permute.xlu0 %3082
      %3084 = vrot.lane.b32.xlu0 %v2494, 64
      %v3085 = vpop.permute.xlu0 %3084
      %3086 = vrot.lane.b32.xlu0 %v2495, 64
      %v3087 = vpop.permute.xlu0 %3086
      %3104 = vrot.lane.b32.xlu0 %v2656, 96
      %v3105 = vpop.permute.xlu0 %3104
      %3106 = vrot.lane.b32.xlu0 %v2657, 96
      %v3107 = vpop.permute.xlu0 %3106
      %3108 = vrot.lane.b32.xlu0 %v2658, 96
      %v3109 = vpop.permute.xlu0 %3108
      %3110 = vrot.lane.b32.xlu0 %v2659, 96
      %v3111 = vpop.permute.xlu0 %3110
      %3112 = vrot.lane.b32.xlu0 %v2660, 96
      %v3113 = vpop.permute.xlu0 %3112
      %3114 = vrot.lane.b32.xlu0 %v2661, 96
      %v3115 = vpop.permute.xlu0 %3114
      %3116 = vrot.lane.b32.xlu0 %v2662, 96
      %v3117 = vpop.permute.xlu0 %3116
      %3118 = vrot.lane.b32.xlu0 %v2663, 96
      %v3119 = vpop.permute.xlu0 %3118
      %3120 = vrot.lane.b32.xlu0 %v2664, 96
      %v3121 = vpop.permute.xlu0 %3120
      %3122 = vrot.lane.b32.xlu0 %v2665, 96
      %v3123 = vpop.permute.xlu0 %3122
      %3124 = vrot.lane.b32.xlu0 %v2666, 96
      %v3125 = vpop.permute.xlu0 %3124
      %3126 = vrot.lane.b32.xlu0 %v2667, 96
      %v3127 = vpop.permute.xlu0 %3126
      %3128 = vrot.lane.b32.xlu0 %v2668, 96
      %v3129 = vpop.permute.xlu0 %3128
      %3130 = vrot.lane.b32.xlu0 %v2669, 96
      %v3131 = vpop.permute.xlu0 %3130
      %3132 = vrot.lane.b32.xlu0 %v2670, 96
      %v3133 = vpop.permute.xlu0 %3132
      %3134 = vrot.lane.b32.xlu0 %v2671, 96
      %v3135 = vpop.permute.xlu0 %3134
      %v3138 = vsel %vm316, %v1486, %v2865
      %v3141 = vsel %vm316, %v1487, %v2867
      %v3144 = vsel %vm316, %v1488, %v2869
      %v3147 = vsel %vm316, %v1489, %v2871
      %v3150 = vsel %vm316, %v1490, %v2873
      %v3153 = vsel %vm316, %v1491, %v2875
      %v3156 = vsel %vm316, %v1492, %v2877
      %v3159 = vsel %vm316, %v1493, %v2879
      %v3162 = vsel %vm316, %v1494, %v2881
      %v3165 = vsel %vm316, %v1495, %v2883
      %v3168 = vsel %vm316, %v1496, %v2885
      %v3171 = vsel %vm316, %v1497, %v2887
      %v3174 = vsel %vm316, %v1498, %v2889
      %v3177 = vsel %vm316, %v1499, %v2891
      %v3180 = vsel %vm316, %v1500, %v2893
      %v3183 = vsel %vm316, %v1501, %v2895
      %vm3184 = vcmask 523264
      %v3186 = vsel %vm3184, %v3138, %v2913
      %v3188 = vsel %vm3184, %v3141, %v2915
      %v3190 = vsel %vm3184, %v3144, %v2917
      %v3192 = vsel %vm3184, %v3147, %v2919
      %v3194 = vsel %vm3184, %v3150, %v2921
      %v3196 = vsel %vm3184, %v3153, %v2923
      %v3198 = vsel %vm3184, %v3156, %v2925
      %v3200 = vsel %vm3184, %v3159, %v2927
      %v3202 = vsel %vm3184, %v3162, %v2929
      %v3204 = vsel %vm3184, %v3165, %v2931
      %v3206 = vsel %vm3184, %v3168, %v2933
      %v3208 = vsel %vm3184, %v3171, %v2935
      %v3210 = vsel %vm3184, %v3174, %v2937
      %v3212 = vsel %vm3184, %v3177, %v2939
      %v3214 = vsel %vm3184, %v3180, %v2941
      %v3216 = vsel %vm3184, %v3183, %v2943
      %vm3217 = vcmask 785408
      %v3219 = vsel %vm3217, %v3186, %v2961
      %v3222 = vsel %vm3217, %v3188, %v2963
      %v3225 = vsel %vm3217, %v3190, %v2965
      %v3228 = vsel %vm3217, %v3192, %v2967
      %v3231 = vsel %vm3217, %v3194, %v2969
      %v3234 = vsel %vm3217, %v3196, %v2971
      %v3237 = vsel %vm3217, %v3198, %v2973
      %v3240 = vsel %vm3217, %v3200, %v2975
      %v3243 = vsel %vm3217, %v3202, %v2977
      %v3246 = vsel %vm3217, %v3204, %v2979
      %v3249 = vsel %vm3217, %v3206, %v2981
      %v3252 = vsel %vm3217, %v3208, %v2983
      %v3255 = vsel %vm3217, %v3210, %v2985
      %v3258 = vsel %vm3217, %v3212, %v2987
      %v3261 = vsel %vm3217, %v3214, %v2989
      %v3264 = vsel %vm3217, %v3216, %v2991
      %v3268 = vsel %vm316, %v2128, %v3009
      %v3271 = vsel %vm316, %v2129, %v3011
      %v3274 = vsel %vm316, %v2130, %v3013
      %v3277 = vsel %vm316, %v2131, %v3015
      %v3280 = vsel %vm316, %v2132, %v3017
      %v3283 = vsel %vm316, %v2133, %v3019
      %v3286 = vsel %vm316, %v2134, %v3021
      %v3289 = vsel %vm316, %v2135, %v3023
      %v3292 = vsel %vm316, %v2136, %v3025
      %v3295 = vsel %vm316, %v2137, %v3027
      %v3298 = vsel %vm316, %v2138, %v3029
      %v3301 = vsel %vm316, %v2139, %v3031
      %v3304 = vsel %vm316, %v2140, %v3033
      %v3307 = vsel %vm316, %v2141, %v3035
      %v3310 = vsel %vm316, %v2142, %v3037
      %v3313 = vsel %vm316, %v2143, %v3039
      %v3315 = vsel %vm3184, %v3268, %v3057
      %v3317 = vsel %vm3184, %v3271, %v3059
      %v3319 = vsel %vm3184, %v3274, %v3061
      %v3321 = vsel %vm3184, %v3277, %v3063
      %v3323 = vsel %vm3184, %v3280, %v3065
      %v3325 = vsel %vm3184, %v3283, %v3067
      %v3327 = vsel %vm3184, %v3286, %v3069
      %v3329 = vsel %vm3184, %v3289, %v3071
      %v3331 = vsel %vm3184, %v3292, %v3073
      %v3333 = vsel %vm3184, %v3295, %v3075
      %v3335 = vsel %vm3184, %v3298, %v3077
      %v3337 = vsel %vm3184, %v3301, %v3079
      %v3339 = vsel %vm3184, %v3304, %v3081
      %v3341 = vsel %vm3184, %v3307, %v3083
      %v3343 = vsel %vm3184, %v3310, %v3085
      %v3345 = vsel %vm3184, %v3313, %v3087
      %v3347 = vsel %vm3217, %v3315, %v3105
      %v3350 = vsel %vm3217, %v3317, %v3107
      %v3353 = vsel %vm3217, %v3319, %v3109
      %v3356 = vsel %vm3217, %v3321, %v3111
      %v3359 = vsel %vm3217, %v3323, %v3113
      %v3362 = vsel %vm3217, %v3325, %v3115
      %v3365 = vsel %vm3217, %v3327, %v3117
      %v3368 = vsel %vm3217, %v3329, %v3119
      %v3371 = vsel %vm3217, %v3331, %v3121
      %v3374 = vsel %vm3217, %v3333, %v3123
      %v3377 = vsel %vm3217, %v3335, %v3125
      %v3380 = vsel %vm3217, %v3337, %v3127
      %v3383 = vsel %vm3217, %v3339, %v3129
      %v3386 = vsel %vm3217, %v3341, %v3131
      %v3389 = vsel %vm3217, %v3343, %v3133
      %v3392 = vsel %vm3217, %v3345, %v3135
      %v3394 = vld [vmem:[%s4] sm:$0xf]
      %v3395 = vld [vmem:[%s4 + $0x4] sm:$0xf]
      %v3396 = vld [vmem:[%s4 + $0x8] sm:$0xf]
      %v3397 = vld [vmem:[%s4 + $0xc] sm:$0xf]
      %v3398 = vld [vmem:[%s4 + $0x10] sm:$0xf]
      %v3399 = vld [vmem:[%s4 + $0x14] sm:$0xf]
      %v3400 = vld [vmem:[%s4 + $0x18] sm:$0xf]
      %v3401 = vld [vmem:[%s4 + $0x1c] sm:$0xf]
      %v3402 = vld [vmem:[%s4 + $0x20] sm:$0xf]
      %v3403 = vld [vmem:[%s4 + $0x24] sm:$0xf]
      %v3404 = vld [vmem:[%s4 + $0x28] sm:$0xf]
      %v3405 = vld [vmem:[%s4 + $0x2c] sm:$0xf]
      %v3406 = vld [vmem:[%s4 + $0x30] sm:$0xf]
      %v3407 = vld [vmem:[%s4 + $0x34] sm:$0xf]
      %v3408 = vld [vmem:[%s4 + $0x38] sm:$0xf]
      %v3409 = vld [vmem:[%s4 + $0x3c] sm:$0xf]
      %v3410 = vld [vmem:[%s4 + $0x40] sm:$0xf]
      %v3411 = vld [vmem:[%s4 + $0x44] sm:$0xf]
      %v3412 = vld [vmem:[%s4 + $0x48] sm:$0xf]
      %v3413 = vld [vmem:[%s4 + $0x4c] sm:$0xf]
      %v3414 = vld [vmem:[%s4 + $0x50] sm:$0xf]
      %v3415 = vld [vmem:[%s4 + $0x54] sm:$0xf]
      %v3416 = vld [vmem:[%s4 + $0x58] sm:$0xf]
      %v3417 = vld [vmem:[%s4 + $0x5c] sm:$0xf]
      %v3418 = vld [vmem:[%s4 + $0x60] sm:$0xf]
      %v3419 = vld [vmem:[%s4 + $0x64] sm:$0xf]
      %v3420 = vld [vmem:[%s4 + $0x68] sm:$0xf]
      %v3421 = vld [vmem:[%s4 + $0x6c] sm:$0xf]
      %v3422 = vld [vmem:[%s4 + $0x70] sm:$0xf]
      %v3423 = vld [vmem:[%s4 + $0x74] sm:$0xf]
      %v3424 = vld [vmem:[%s4 + $0x78] sm:$0xf]
      %v3425 = vld [vmem:[%s4 + $0x7c] sm:$0xf]
      %v3426 = vld [vmem:[%s4 + $0x80] sm:$0xf]
      %v3427 = vld [vmem:[%s4 + $0x84] sm:$0xf]
      %v3428 = vld [vmem:[%s4 + $0x88] sm:$0xf]
      %v3429 = vld [vmem:[%s4 + $0x8c] sm:$0xf]
      %v3430 = vld [vmem:[%s5] sm:$0x1]
      %v3432 = vlaneseq
      %v3433 = vshrl.u32 %v3432, 7
      %v3434 = vsub.s32 0, %v3433
      %v3435 = vrot.slane %v3430, %v3434
      %v3473 = vunpack.c.l.b16 %v3394
      %v3474 = vunpack.c.l.b16 %v3395
      %v3475 = vunpack.c.l.b16 %v3396
      %v3476 = vunpack.c.l.b16 %v3397
      %v3477 = vunpack.c.l.b16 %v3398
      %v3478 = vunpack.c.l.b16 %v3399
      %v3479 = vunpack.c.l.b16 %v3400
      %v3480 = vunpack.c.l.b16 %v3401
      %v3481 = vunpack.c.l.b16 %v3402
      %v3482 = vunpack.c.l.b16 %v3403
      %v3483 = vunpack.c.l.b16 %v3404
      %v3484 = vunpack.c.l.b16 %v3405
      %v3485 = vunpack.c.l.b16 %v3406
      %v3486 = vunpack.c.l.b16 %v3407
      %v3487 = vunpack.c.l.b16 %v3408
      %v3488 = vunpack.c.l.b16 %v3409
      %v3489 = vunpack.c.l.b16 %v3410
      %v3490 = vunpack.c.l.b16 %v3411
      %v3491 = vunpack.c.l.b16 %v3412
      %v3492 = vunpack.c.l.b16 %v3413
      %v3493 = vunpack.c.l.b16 %v3414
      %v3494 = vunpack.c.l.b16 %v3415
      %v3495 = vunpack.c.l.b16 %v3416
      %v3496 = vunpack.c.l.b16 %v3417
      %v3497 = vunpack.c.l.b16 %v3418
      %v3498 = vunpack.c.l.b16 %v3419
      %v3499 = vunpack.c.l.b16 %v3420
      %v3500 = vunpack.c.l.b16 %v3421
      %v3501 = vunpack.c.l.b16 %v3422
      %v3502 = vunpack.c.l.b16 %v3423
      %v3503 = vunpack.c.l.b16 %v3424
      %v3504 = vunpack.c.l.b16 %v3425
      %v3505 = vunpack.c.l.b16 %v3426
      %v3506 = vunpack.c.l.b16 %v3427
      %v3507 = vunpack.c.l.b16 %v3428
      %v3508 = vunpack.c.l.b16 %v3429
      %v3509 = vpack.c.b16 %v3474, %v3473
      %v3510 = vpack.c.b16 %v3476, %v3475
      %v3511 = vpack.c.b16 %v3478, %v3477
      %v3512 = vpack.c.b16 %v3480, %v3479
      %v3513 = vpack.c.b16 %v3482, %v3481
      %v3514 = vpack.c.b16 %v3484, %v3483
      %v3515 = vpack.c.b16 %v3486, %v3485
      %v3516 = vpack.c.b16 %v3488, %v3487
      %v3517 = vpack.c.b16 %v3490, %v3489
      %v3518 = vpack.c.b16 %v3492, %v3491
      %v3519 = vpack.c.b16 %v3494, %v3493
      %v3520 = vpack.c.b16 %v3496, %v3495
      %v3521 = vpack.c.b16 %v3498, %v3497
      %v3522 = vpack.c.b16 %v3500, %v3499
      %v3523 = vpack.c.b16 %v3502, %v3501
      %v3524 = vpack.c.b16 %v3504, %v3503
      %v3525 = vpack.c.b16 %v3506, %v3505
      %v3526 = vpack.c.b16 %v3508, %v3507
      %v3546 = vsel %vm316, %v2832, 0
      %v3549 = vsel %vm316, %v2833, 0
      %v3552 = vsel %vm316, %v2834, 0
      %v3555 = vsel %vm316, %v2835, 0
      %v3558 = vsel %vm316, %v2836, 0
      %v3561 = vsel %vm316, %v2837, 0
      %v3564 = vsel %vm316, %v2838, 0
      %v3567 = vsel %vm316, %v2839, 0
      %v3570 = vsel %vm316, %v2840, 0
      %v3573 = vsel %vm316, %v2841, 0
      %v3576 = vsel %vm316, %v2842, 0
      %v3579 = vsel %vm316, %v2843, 0
      %v3582 = vsel %vm316, %v2844, 0
      %v3585 = vsel %vm316, %v2845, 0
      %v3588 = vsel %vm316, %v2846, 0
      %v3591 = vsel %vm316, %v2847, 0
      %3593 = vmatprep.subr.bf16.mxu0 0
      %3594 = vmatpush1.bf16.msra.mxu0 %v3509
      %3595 = vmatprep.subr.bf16.mxu0 0
      %3596 = vmatpush1.bf16.msra.mxu0 %v3510
      %3597 = vmatprep.subr.bf16.mxu0 0
      %3598 = vmatpush1.bf16.msra.mxu0 %v3511
      %3599 = vmatprep.subr.bf16.mxu0 0
      %3600 = vmatpush1.bf16.msra.mxu0 %v3512
      %3601 = vmatprep.subr.bf16.mxu0 0
      %3602 = vmatpush1.bf16.msra.mxu0 %v3513
      %3603 = vmatprep.subr.bf16.mxu0 0
      %3604 = vmatpush1.bf16.msra.mxu0 %v3514
      %3605 = vmatprep.subr.bf16.mxu0 0
      %3606 = vmatpush1.bf16.msra.mxu0 %v3515
      %3607 = vmatprep.subr.bf16.mxu0 0
      %3608 = vmatpush1.bf16.msra.mxu0 %v3516
      %3609 = vmatprep.subr.bf16.mxu0 0
      %3610 = vmatpush1.bf16.msra.mxu0 %v3517
      %3611 = vmatprep.subr.bf16.mxu0 0
      %3612 = vmatpush1.bf16.msra.mxu0 %v3518
      %3613 = vmatprep.subr.bf16.mxu0 0
      %3614 = vmatpush1.bf16.msra.mxu0 %v3519
      %3615 = vmatprep.subr.bf16.mxu0 0
      %3616 = vmatpush1.bf16.msra.mxu0 %v3520
      %3617 = vmatprep.subr.bf16.mxu0 0
      %3618 = vmatpush1.bf16.msra.mxu0 %v3521
      %3619 = vmatprep.subr.bf16.mxu0 0
      %3620 = vmatpush1.bf16.msra.mxu0 %v3522
      %3621 = vmatprep.subr.bf16.mxu0 0
      %3622 = vmatpush1.bf16.msra.mxu0 %v3523
      %3623 = vmatprep.subr.bf16.mxu0 0
      %3624 = vmatpush1.bf16.msra.mxu0 %v3524
      %3625 = vmatprep.mubr.bf16.mxu0 %v3347
      %3626 = vmatmul.mubr.bf16.gmra.mrb[0].mxu0 %v3219
      %v3627 = vpop.f32.mrb[0].mxu0
      %v3628 = vadd.f32 %v3435, %v3627
      %v3629 = vpop.f32.mrb[0].mxu0
      %v3630 = vpop.f32.mrb[0].mxu0
      %v3631 = vadd.f32 %v3435, %v3630
      %v3632 = vpop.f32.mrb[0].mxu0
      %3633 = vmatprep.mubr.bf16.mxu0 %v3350
      %3634 = vmatmul.mubr.bf16.gmra.mrb[0].mxu0 %v3222
      %v3635 = vpop.f32.mrb[0].mxu0
      %v3636 = vadd.f32 %v3435, %v3635
      %v3637 = vpop.f32.mrb[0].mxu0
      %v3638 = vpop.f32.mrb[0].mxu0
      %v3639 = vadd.f32 %v3435, %v3638
      %v3640 = vpop.f32.mrb[0].mxu0
      %3641 = vmatprep.mubr.bf16.mxu0 %v3353
      %3642 = vmatmul.mubr.bf16.gmra.mrb[0].mxu0 %v3225
      %v3643 = vpop.f32.mrb[0].mxu0
      %v3644 = vadd.f32 %v3435, %v3643
      %v3645 = vpop.f32.mrb[0].mxu0
      %v3646 = vpop.f32.mrb[0].mxu0
      %v3647 = vadd.f32 %v3435, %v3646
      %v3648 = vpop.f32.mrb[0].mxu0
      %3649 = vmatprep.mubr.bf16.mxu0 %v3356
      %3650 = vmatmul.mubr.bf16.gmra.mrb[0].mxu0 %v3228
      %v3651 = vpop.f32.mrb[0].mxu0
      %v3652 = vadd.f32 %v3435, %v3651
      %v3653 = vpop.f32.mrb[0].mxu0
      %v3654 = vpop.f32.mrb[0].mxu0
      %v3655 = vadd.f32 %v3435, %v3654
      %v3656 = vpop.f32.mrb[0].mxu0
      %3657 = vmatprep.mubr.bf16.mxu0 %v3359
      %3658 = vmatmul.mubr.bf16.gmra.mrb[0].mxu0 %v3231
      %v3659 = vpop.f32.mrb[0].mxu0
      %v3660 = vadd.f32 %v3435, %v3659
      %v3661 = vpop.f32.mrb[0].mxu0
      %v3662 = vpop.f32.mrb[0].mxu0
      %v3663 = vadd.f32 %v3435, %v3662
      %v3664 = vpop.f32.mrb[0].mxu0
      %3665 = vmatprep.mubr.bf16.mxu0 %v3362
      %3666 = vmatmul.mubr.bf16.gmra.mrb[0].mxu0 %v3234
      %v3667 = vpop.f32.mrb[0].mxu0
      %v3668 = vadd.f32 %v3435, %v3667
      %v3669 = vpop.f32.mrb[0].mxu0
      %v3670 = vpop.f32.mrb[0].mxu0
      %v3671 = vadd.f32 %v3435, %v3670
      %v3672 = vpop.f32.mrb[0].mxu0
      %3673 = vmatprep.mubr.bf16.mxu0 %v3365
      %3674 = vmatmul.mubr.bf16.gmra.mrb[0].mxu0 %v3237
      %v3675 = vpop.f32.mrb[0].mxu0
      %v3676 = vadd.f32 %v3435, %v3675
      %v3677 = vpop.f32.mrb[0].mxu0
      %v3678 = vpop.f32.mrb[0].mxu0
      %v3679 = vadd.f32 %v3435, %v3678
      %v3680 = vpop.f32.mrb[0].mxu0
      %3681 = vmatprep.mubr.bf16.mxu0 %v3368
      %3682 = vmatmul.mubr.bf16.gmra.mrb[0].mxu0 %v3240
      %v3683 = vpop.f32.mrb[0].mxu0
      %v3684 = vadd.f32 %v3435, %v3683
      %v3685 = vpop.f32.mrb[0].mxu0
      %v3686 = vpop.f32.mrb[0].mxu0
      %v3687 = vadd.f32 %v3435, %v3686
      %v3688 = vpop.f32.mrb[0].mxu0
      %3689 = vmatprep.mubr.bf16.mxu0 %v3371
      %3690 = vmatmul.mubr.bf16.gmra.mrb[0].mxu0 %v3243
      %v3691 = vpop.f32.mrb[0].mxu0
      %v3692 = vadd.f32 %v3435, %v3691
      %v3693 = vpop.f32.mrb[0].mxu0
      %v3694 = vpop.f32.mrb[0].mxu0
      %v3695 = vadd.f32 %v3435, %v3694
      %v3696 = vpop.f32.mrb[0].mxu0
      %3697 = vmatprep.mubr.bf16.mxu0 %v3374
      %3698 = vmatmul.mubr.bf16.gmra.mrb[0].mxu0 %v3246
      %v3699 = vpop.f32.mrb[0].mxu0
      %v3700 = vadd.f32 %v3435, %v3699
      %v3701 = vpop.f32.mrb[0].mxu0
      %v3702 = vpop.f32.mrb[0].mxu0
      %v3703 = vadd.f32 %v3435, %v3702
      %v3704 = vpop.f32.mrb[0].mxu0
      %3705 = vmatprep.mubr.bf16.mxu0 %v3377
      %3706 = vmatmul.mubr.bf16.gmra.mrb[0].mxu0 %v3249
      %v3707 = vpop.f32.mrb[0].mxu0
      %v3708 = vadd.f32 %v3435, %v3707
      %v3709 = vpop.f32.mrb[0].mxu0
      %v3710 = vpop.f32.mrb[0].mxu0
      %v3711 = vadd.f32 %v3435, %v3710
      %v3712 = vpop.f32.mrb[0].mxu0
      %3713 = vmatprep.mubr.bf16.mxu0 %v3380
      %3714 = vmatmul.mubr.bf16.gmra.mrb[0].mxu0 %v3252
      %v3715 = vpop.f32.mrb[0].mxu0
      %v3716 = vadd.f32 %v3435, %v3715
      %v3717 = vpop.f32.mrb[0].mxu0
      %v3718 = vpop.f32.mrb[0].mxu0
      %v3719 = vadd.f32 %v3435, %v3718
      %v3720 = vpop.f32.mrb[0].mxu0
      %3721 = vmatprep.mubr.bf16.mxu0 %v3383
      %3722 = vmatmul.mubr.bf16.gmra.mrb[0].mxu0 %v3255
      %v3723 = vpop.f32.mrb[0].mxu0
      %v3724 = vadd.f32 %v3435, %v3723
      %v3725 = vpop.f32.mrb[0].mxu0
      %v3726 = vpop.f32.mrb[0].mxu0
      %v3727 = vadd.f32 %v3435, %v3726
      %v3728 = vpop.f32.mrb[0].mxu0
      %3729 = vmatprep.mubr.bf16.mxu0 %v3386
      %3730 = vmatmul.mubr.bf16.gmra.mrb[0].mxu0 %v3258
      %v3731 = vpop.f32.mrb[0].mxu0
      %v3732 = vadd.f32 %v3435, %v3731
      %v3733 = vpop.f32.mrb[0].mxu0
      %v3734 = vpop.f32.mrb[0].mxu0
      %v3735 = vadd.f32 %v3435, %v3734
      %v3736 = vpop.f32.mrb[0].mxu0
      %3737 = vmatprep.mubr.bf16.mxu0 %v3389
      %3738 = vmatmul.mubr.bf16.gmra.mrb[0].mxu0 %v3261
      %v3739 = vpop.f32.mrb[0].mxu0
      %v3740 = vadd.f32 %v3435, %v3739
      %v3741 = vpop.f32.mrb[0].mxu0
      %v3742 = vpop.f32.mrb[0].mxu0
      %v3743 = vadd.f32 %v3435, %v3742
      %v3744 = vpop.f32.mrb[0].mxu0
      %3745 = vmatprep.mubr.bf16.mxu0 %v3392
      %3746 = vmatmul.mubr.bf16.gmra.mrb[0].mxu0 %v3264
      %v3747 = vpop.f32.mrb[0].mxu0
      %v3748 = vadd.f32 %v3435, %v3747
      %v3749 = vpop.f32.mrb[0].mxu0
      %v3750 = vpop.f32.mrb[0].mxu0
      %v3751 = vadd.f32 %v3435, %v3750
      %v3752 = vpop.f32.mrb[0].mxu0
      %3753 = vdwg.mxu0
      %3754 = vmatprep.subr.bf16.mxu0 0
      %3755 = vmatpush1.bf16.msra.mxu0 %v3525
      %3756 = vmatprep.subr.bf16.mxu0 0
      %3757 = vmatpush1.bf16.msra.mxu0 %v3526
      %3758 = vmatprep.subr.bf16.mxu0 0
      %3759 = vmatpush1.bf16.msra.mxu0 0
      %3760 = vmatprep.subr.bf16.mxu0 0
      %3761 = vmatpush1.bf16.msra.mxu0 0
      %3762 = vmatprep.subr.bf16.mxu0 0
      %3763 = vmatpush1.bf16.msra.mxu0 0
      %3764 = vmatprep.subr.bf16.mxu0 0
      %3765 = vmatpush1.bf16.msra.mxu0 0
      %3766 = vmatprep.subr.bf16.mxu0 0
      %3767 = vmatpush1.bf16.msra.mxu0 0
      %3768 = vmatprep.subr.bf16.mxu0 0
      %3769 = vmatpush1.bf16.msra.mxu0 0
      %3770 = vmatprep.subr.bf16.mxu0 0
      %3771 = vmatpush1.bf16.msra.mxu0 0
      %3772 = vmatprep.subr.bf16.mxu0 0
      %3773 = vmatpush1.bf16.msra.mxu0 0
      %3774 = vmatprep.subr.bf16.mxu0 0
      %3775 = vmatpush1.bf16.msra.mxu0 0
      %3776 = vmatprep.subr.bf16.mxu0 0
      %3777 = vmatpush1.bf16.msra.mxu0 0
      %3778 = vmatprep.subr.bf16.mxu0 0
      %3779 = vmatpush1.bf16.msra.mxu0 0
      %3780 = vmatprep.subr.bf16.mxu0 0
      %3781 = vmatpush1.bf16.msra.mxu0 0
      %3782 = vmatprep.subr.bf16.mxu0 0
      %3783 = vmatpush1.bf16.msra.mxu0 0
      %3784 = vmatprep.subr.bf16.mxu0 0
      %3785 = vmatpush1.bf16.msra.mxu0 0
      %3786 = vmatprep.mubr.bf16.mxu0 0
      %3787 = vmatmul.mubr.bf16.gmra.mrb[0].mxu0 %v3546
      %v3788 = vpop.f32.mrb[0].mxu0
      %v3789 = vadd.f32 %v3628, %v3788
      %v3790 = vpop.f32.mrb[0].mxu0
      %v3791 = vpop.f32.mrb[0].mxu0
      %v3792 = vadd.f32 %v3631, %v3791
      %v3793 = vpop.f32.mrb[0].mxu0
      %3794 = vmatprep.mubr.bf16.mxu0 0
      %3795 = vmatmul.mubr.bf16.gmra.mrb[0].mxu0 %v3549
      %v3796 = vpop.f32.mrb[0].mxu0
      %v3797 = vadd.f32 %v3636, %v3796
      %v3798 = vpop.f32.mrb[0].mxu0
      %v3799 = vpop.f32.mrb[0].mxu0
      %v3800 = vadd.f32 %v3639, %v3799
      %v3801 = vpop.f32.mrb[0].mxu0
      %3802 = vmatprep.mubr.bf16.mxu0 0
      %3803 = vmatmul.mubr.bf16.gmra.mrb[0].mxu0 %v3552
      %v3804 = vpop.f32.mrb[0].mxu0
      %v3805 = vadd.f32 %v3644, %v3804
      %v3806 = vpop.f32.mrb[0].mxu0
      %v3807 = vpop.f32.mrb[0].mxu0
      %v3808 = vadd.f32 %v3647, %v3807
      %v3809 = vpop.f32.mrb[0].mxu0
      %3810 = vmatprep.mubr.bf16.mxu0 0
      %3811 = vmatmul.mubr.bf16.gmra.mrb[0].mxu0 %v3555
      %v3812 = vpop.f32.mrb[0].mxu0
      %v3813 = vadd.f32 %v3652, %v3812
      %v3814 = vpop.f32.mrb[0].mxu0
      %v3815 = vpop.f32.mrb[0].mxu0
      %v3816 = vadd.f32 %v3655, %v3815
      %v3817 = vpop.f32.mrb[0].mxu0
      %3818 = vmatprep.mubr.bf16.mxu0 0
      %3819 = vmatmul.mubr.bf16.gmra.mrb[0].mxu0 %v3558
      %v3820 = vpop.f32.mrb[0].mxu0
      %v3821 = vadd.f32 %v3660, %v3820
      %v3822 = vpop.f32.mrb[0].mxu0
      %v3823 = vpop.f32.mrb[0].mxu0
      %v3824 = vadd.f32 %v3663, %v3823
      %v3825 = vpop.f32.mrb[0].mxu0
      %3826 = vmatprep.mubr.bf16.mxu0 0
      %3827 = vmatmul.mubr.bf16.gmra.mrb[0].mxu0 %v3561
      %v3828 = vpop.f32.mrb[0].mxu0
      %v3829 = vadd.f32 %v3668, %v3828
      %v3830 = vpop.f32.mrb[0].mxu0
      %v3831 = vpop.f32.mrb[0].mxu0
      %v3832 = vadd.f32 %v3671, %v3831
      %v3833 = vpop.f32.mrb[0].mxu0
      %3834 = vmatprep.mubr.bf16.mxu0 0
      %3835 = vmatmul.mubr.bf16.gmra.mrb[0].mxu0 %v3564
      %v3836 = vpop.f32.mrb[0].mxu0
      %v3837 = vadd.f32 %v3676, %v3836
      %v3838 = vpop.f32.mrb[0].mxu0
      %v3839 = vpop.f32.mrb[0].mxu0
      %v3840 = vadd.f32 %v3679, %v3839
      %v3841 = vpop.f32.mrb[0].mxu0
      %3842 = vmatprep.mubr.bf16.mxu0 0
      %3843 = vmatmul.mubr.bf16.gmra.mrb[0].mxu0 %v3567
      %v3844 = vpop.f32.mrb[0].mxu0
      %v3845 = vadd.f32 %v3684, %v3844
      %v3846 = vpop.f32.mrb[0].mxu0
      %v3847 = vpop.f32.mrb[0].mxu0
      %v3848 = vadd.f32 %v3687, %v3847
      %v3849 = vpop.f32.mrb[0].mxu0
      %3850 = vmatprep.mubr.bf16.mxu0 0
      %3851 = vmatmul.mubr.bf16.gmra.mrb[0].mxu0 %v3570
      %v3852 = vpop.f32.mrb[0].mxu0
      %v3853 = vadd.f32 %v3692, %v3852
      %v3854 = vpop.f32.mrb[0].mxu0
      %v3855 = vpop.f32.mrb[0].mxu0
      %v3856 = vadd.f32 %v3695, %v3855
      %v3857 = vpop.f32.mrb[0].mxu0
      %3858 = vmatprep.mubr.bf16.mxu0 0
      %3859 = vmatmul.mubr.bf16.gmra.mrb[0].mxu0 %v3573
      %v3860 = vpop.f32.mrb[0].mxu0
      %v3861 = vadd.f32 %v3700, %v3860
      %v3862 = vpop.f32.mrb[0].mxu0
      %v3863 = vpop.f32.mrb[0].mxu0
      %v3864 = vadd.f32 %v3703, %v3863
      %v3865 = vpop.f32.mrb[0].mxu0
      %3866 = vmatprep.mubr.bf16.mxu0 0
      %3867 = vmatmul.mubr.bf16.gmra.mrb[0].mxu0 %v3576
      %v3868 = vpop.f32.mrb[0].mxu0
      %v3869 = vadd.f32 %v3708, %v3868
      %v3870 = vpop.f32.mrb[0].mxu0
      %v3871 = vpop.f32.mrb[0].mxu0
      %v3872 = vadd.f32 %v3711, %v3871
      %v3873 = vpop.f32.mrb[0].mxu0
      %3874 = vmatprep.mubr.bf16.mxu0 0
      %3875 = vmatmul.mubr.bf16.gmra.mrb[0].mxu0 %v3579
      %v3876 = vpop.f32.mrb[0].mxu0
      %v3877 = vadd.f32 %v3716, %v3876
      %v3878 = vpop.f32.mrb[0].mxu0
      %v3879 = vpop.f32.mrb[0].mxu0
      %v3880 = vadd.f32 %v3719, %v3879
      %v3881 = vpop.f32.mrb[0].mxu0
      %3882 = vmatprep.mubr.bf16.mxu0 0
      %3883 = vmatmul.mubr.bf16.gmra.mrb[0].mxu0 %v3582
      %v3884 = vpop.f32.mrb[0].mxu0
      %v3885 = vadd.f32 %v3724, %v3884
      %v3886 = vpop.f32.mrb[0].mxu0
      %v3887 = vpop.f32.mrb[0].mxu0
      %v3888 = vadd.f32 %v3727, %v3887
      %v3889 = vpop.f32.mrb[0].mxu0
      %3890 = vmatprep.mubr.bf16.mxu0 0
      %3891 = vmatmul.mubr.bf16.gmra.mrb[0].mxu0 %v3585
      %v3892 = vpop.f32.mrb[0].mxu0
      %v3893 = vadd.f32 %v3732, %v3892
      %v3894 = vpop.f32.mrb[0].mxu0
      %v3895 = vpop.f32.mrb[0].mxu0
      %v3896 = vadd.f32 %v3735, %v3895
      %v3897 = vpop.f32.mrb[0].mxu0
      %3898 = vmatprep.mubr.bf16.mxu0 0
      %3899 = vmatmul.mubr.bf16.gmra.mrb[0].mxu0 %v3588
      %v3900 = vpop.f32.mrb[0].mxu0
      %v3901 = vadd.f32 %v3740, %v3900
      %v3902 = vpop.f32.mrb[0].mxu0
      %v3903 = vpop.f32.mrb[0].mxu0
      %v3904 = vadd.f32 %v3743, %v3903
      %v3905 = vpop.f32.mrb[0].mxu0
      %3906 = vmatprep.mubr.bf16.mxu0 0
      %3907 = vmatmul.mubr.bf16.gmra.mrb[0].mxu0 %v3591
      %v3908 = vpop.f32.mrb[0].mxu0
      %v3909 = vadd.f32 %v3748, %v3908
      %v3910 = vpop.f32.mrb[0].mxu0
      %v3911 = vpop.f32.mrb[0].mxu0
      %v3912 = vadd.f32 %v3751, %v3911
      %v3913 = vpop.f32.mrb[0].mxu0
      %3914 = vdwg.mxu0
      %v3915 = vpack.c.bf16 %v3792, %v3789
      %v3916 = vpack.c.bf16 %v3800, %v3797
      %v3917 = vpack.c.bf16 %v3808, %v3805
      %v3918 = vpack.c.bf16 %v3816, %v3813
      %v3919 = vpack.c.bf16 %v3824, %v3821
      %v3920 = vpack.c.bf16 %v3832, %v3829
      %v3921 = vpack.c.bf16 %v3840, %v3837
      %v3922 = vpack.c.bf16 %v3848, %v3845
      %v3923 = vpack.c.bf16 %v3856, %v3853
      %v3924 = vpack.c.bf16 %v3864, %v3861
      %v3925 = vpack.c.bf16 %v3872, %v3869
      %v3926 = vpack.c.bf16 %v3880, %v3877
      %v3927 = vpack.c.bf16 %v3888, %v3885
      %v3928 = vpack.c.bf16 %v3896, %v3893
      %v3929 = vpack.c.bf16 %v3904, %v3901
      %v3930 = vpack.c.bf16 %v3912, %v3909
      %v3947 = vunpack.c.l.b16 %v3915
      %v3948 = vunpack.c.h.b16 %v3915
      %v3949 = vunpack.c.l.b16 %v3916
      %v3950 = vunpack.c.h.b16 %v3916
      %v3951 = vunpack.c.l.b16 %v3917
      %v3952 = vunpack.c.h.b16 %v3917
      %v3953 = vunpack.c.l.b16 %v3918
      %v3954 = vunpack.c.h.b16 %v3918
      %v3955 = vunpack.c.l.b16 %v3919
      %v3956 = vunpack.c.h.b16 %v3919
      %v3957 = vunpack.c.l.b16 %v3920
      %v3958 = vunpack.c.h.b16 %v3920
      %v3959 = vunpack.c.l.b16 %v3921
      %v3960 = vunpack.c.h.b16 %v3921
      %v3961 = vunpack.c.l.b16 %v3922
      %v3962 = vunpack.c.h.b16 %v3922
      %v3963 = vunpack.c.l.b16 %v3923
      %v3964 = vunpack.c.h.b16 %v3923
      %v3965 = vunpack.c.l.b16 %v3924
      %v3966 = vunpack.c.h.b16 %v3924
      %v3967 = vunpack.c.l.b16 %v3925
      %v3968 = vunpack.c.h.b16 %v3925
      %v3969 = vunpack.c.l.b16 %v3926
      %v3970 = vunpack.c.h.b16 %v3926
      %v3971 = vunpack.c.l.b16 %v3927
      %v3972 = vunpack.c.h.b16 %v3927
      %v3973 = vunpack.c.l.b16 %v3928
      %v3974 = vunpack.c.h.b16 %v3928
      %v3975 = vunpack.c.l.b16 %v3929
      %v3976 = vunpack.c.h.b16 %v3929
      %v3977 = vunpack.c.l.b16 %v3930
      %v3978 = vunpack.c.h.b16 %v3930
      %v3979 = vpack.c.b16 %v3947, %v3947
      %v3980 = vpack.c.b16 %v3948, %v3948
      %v3981 = vpack.c.b16 %v3949, %v3949
      %v3982 = vpack.c.b16 %v3950, %v3950
      %v3983 = vpack.c.b16 %v3951, %v3951
      %v3984 = vpack.c.b16 %v3952, %v3952
      %v3985 = vpack.c.b16 %v3953, %v3953
      %v3986 = vpack.c.b16 %v3954, %v3954
      %v3987 = vpack.c.b16 %v3955, %v3955
      %v3988 = vpack.c.b16 %v3956, %v3956
      %v3989 = vpack.c.b16 %v3957, %v3957
      %v3990 = vpack.c.b16 %v3958, %v3958
      %v3991 = vpack.c.b16 %v3959, %v3959
      %v3992 = vpack.c.b16 %v3960, %v3960
      %v3993 = vpack.c.b16 %v3961, %v3961
      %v3994 = vpack.c.b16 %v3962, %v3962
      %v3995 = vpack.c.b16 %v3963, %v3963
      %v3996 = vpack.c.b16 %v3964, %v3964
      %v3997 = vpack.c.b16 %v3965, %v3965
      %v3998 = vpack.c.b16 %v3966, %v3966
      %v3999 = vpack.c.b16 %v3967, %v3967
      %v4000 = vpack.c.b16 %v3968, %v3968
      %v4001 = vpack.c.b16 %v3969, %v3969
      %v4002 = vpack.c.b16 %v3970, %v3970
      %v4003 = vpack.c.b16 %v3971, %v3971
      %v4004 = vpack.c.b16 %v3972, %v3972
      %v4005 = vpack.c.b16 %v3973, %v3973
      %v4006 = vpack.c.b16 %v3974, %v3974
      %v4007 = vpack.c.b16 %v3975, %v3975
      %v4008 = vpack.c.b16 %v3976, %v3976
      %v4009 = vpack.c.b16 %v3977, %v3977
      %v4010 = vpack.c.b16 %v3978, %v3978
      %vm4043 = vcmask 519168
      %4044 = vst.msk [vmem:[%s278] sm:$0xf] %vm4043, %v3979
      %4045 = vst.msk [vmem:[%s278 + $0x4] sm:$0xf] %vm4043, %v3980
      %4046 = vst.msk [vmem:[%s278 + $0x8] sm:$0xf] %vm4043, %v3981
      %4047 = vst.msk [vmem:[%s278 + $0xc] sm:$0xf] %vm4043, %v3982
      %4048 = vst.msk [vmem:[%s278 + $0x10] sm:$0xf] %vm4043, %v3983
      %4049 = vst.msk [vmem:[%s278 + $0x14] sm:$0xf] %vm4043, %v3984
      %4050 = vst.msk [vmem:[%s278 + $0x18] sm:$0xf] %vm4043, %v3985
      %4051 = vst.msk [vmem:[%s278 + $0x1c] sm:$0xf] %vm4043, %v3986
      %4052 = vst.msk [vmem:[%s278 + $0x20] sm:$0xf] %vm4043, %v3987
      %4053 = vst.msk [vmem:[%s278 + $0x24] sm:$0xf] %vm4043, %v3988
      %4054 = vst.msk [vmem:[%s278 + $0x28] sm:$0xf] %vm4043, %v3989
      %4055 = vst.msk [vmem:[%s278 + $0x2c] sm:$0xf] %vm4043, %v3990
      %4056 = vst.msk [vmem:[%s278 + $0x30] sm:$0xf] %vm4043, %v3991
      %4057 = vst.msk [vmem:[%s278 + $0x34] sm:$0xf] %vm4043, %v3992
      %4058 = vst.msk [vmem:[%s278 + $0x38] sm:$0xf] %vm4043, %v3993
      %4059 = vst.msk [vmem:[%s278 + $0x3c] sm:$0xf] %vm4043, %v3994
      %4060 = vst.msk [vmem:[%s278 + $0x40] sm:$0xf] %vm4043, %v3995
      %4061 = vst.msk [vmem:[%s278 + $0x44] sm:$0xf] %vm4043, %v3996
      %4062 = vst.msk [vmem:[%s278 + $0x48] sm:$0xf] %vm4043, %v3997
      %4063 = vst.msk [vmem:[%s278 + $0x4c] sm:$0xf] %vm4043, %v3998
      %4064 = vst.msk [vmem:[%s278 + $0x50] sm:$0xf] %vm4043, %v3999
      %4065 = vst.msk [vmem:[%s278 + $0x54] sm:$0xf] %vm4043, %v4000
      %4066 = vst.msk [vmem:[%s278 + $0x58] sm:$0xf] %vm4043, %v4001
      %4067 = vst.msk [vmem:[%s278 + $0x5c] sm:$0xf] %vm4043, %v4002
      %4068 = vst.msk [vmem:[%s278 + $0x60] sm:$0xf] %vm4043, %v4003
      %4069 = vst.msk [vmem:[%s278 + $0x64] sm:$0xf] %vm4043, %v4004
      %4070 = vst.msk [vmem:[%s278 + $0x68] sm:$0xf] %vm4043, %v4005
      %4071 = vst.msk [vmem:[%s278 + $0x6c] sm:$0xf] %vm4043, %v4006
      %4072 = vst.msk [vmem:[%s278 + $0x70] sm:$0xf] %vm4043, %v4007
      %4073 = vst.msk [vmem:[%s278 + $0x74] sm:$0xf] %vm4043, %v4008
      %4074 = vst.msk [vmem:[%s278 + $0x78] sm:$0xf] %vm4043, %v4009
      %4075 = vst.msk [vmem:[%s278 + $0x7c] sm:$0xf] %vm4043, %v4010
      %p4076 = scmp.lt.s32.totalorder %s18, 1
      %s4077 = scalar_select %p4076, %s18, 1
      %s4078 = smul.addr %s4077, 32
      %s4079 = smul.addr %s4078, 4
      %s4080 = scalar_lea.vmem %s7, %s4079
      // Predicated region
      $region49: #{vae_residual_block.2} parent=47 // pred_check
        %p4081 = pneg %p188
      $region50: #{vae_residual_block.2} parent=47 // pred_check_branch
        %4083 = sbr.rel (%p4081) target = $region52
      $region51: #{vae_residual_block.2} parent=47 // pred_region
        _
      $region52: #{vae_residual_block.2} parent=47 // pred_fallthru
        _
    $region48: #{vae_residual_block.2} parent=5 // pred_fallthru
      _
    %p4084 = scmp.le.s32.totalorder 2, %s13
    // Predicated region
    $region53: #{vae_residual_block.2} parent=5 // pred_check
      %p4085 = pneg %p4084
    $region54: #{vae_residual_block.2} parent=5 // pred_check_branch
      %4087 = sbr.rel (%p4085) target = $region56
    $region55: #{vae_residual_block.2} parent=5 // pred_region
      %s4088 = ssub.s32 %s13, 2
      // Predicated region
      $region57: #{vae_residual_block.2} parent=55 // pred_check
        %p4089 = pneg %p194
      $region58: #{vae_residual_block.2} parent=55 // pred_check_branch
        %4091 = sbr.rel (%p4089) target = $region60
      $region59: #{vae_residual_block.2} parent=55 // pred_region
        %p4092 = scmp.lt.s32.totalorder %s19, 1
        %s4093 = scalar_select %p4092, %s19, 1
        %s4094 = smul.addr %s4093, 32
        %s4095 = smul.addr %s4094, 4
        %s4096 = scalar_lea.vmem %s7, %s4095
      $region60: #{vae_residual_block.2} parent=55 // pred_fallthru
        _
    $region56: #{vae_residual_block.2} parent=5 // pred_fallthru
      _
  $region6: #{vae_residual_block.2} parent=0 // loop_footer
    %s17 = sadd.s32 1, %s13
  $region7: #{vae_residual_block.2} parent=0 // loop_footer_branch
    %12 = sbr.rel target = $region3
  $region8: #{vae_residual_block.2} parent=0 // loop_exit
    _

// kernel: vae_residual_block.3
$region0: #{vae_residual_block.3}
  #allocation0 [shape = 'u32[]', space=smem, size = 0x4, offset = 0x4, fixed_abs, tag = 'smem constant byte address 0x4 - core index']
  #allocation1 [shape = 'u32[144,128]{1,0:T(1,128)}', space=vmem, size = 0x12000, scoped, tag = 'internal scratch']
  %s0 = inlined_call_operand.vmem [shape: bf16[2,256,64], index: 0, kind: input, shape index: {}]
  %s1 = inlined_call_operand.vmem [shape: f32[1,64], index: 1, kind: input, shape index: {}]
  %s2 = inlined_call_operand.vmem [shape: f32[1,64], index: 2, kind: input, shape index: {}]
  %s3 = inlined_call_operand.vmem [shape: f32[64,32], index: 3, kind: input, shape index: {}]
  %s4 = inlined_call_operand.vmem [shape: bf16[576,64], index: 4, kind: input, shape index: {}]
  %s5 = inlined_call_operand.vmem [shape: f32[1,64], index: 5, kind: input, shape index: {}]
  %s6 = inlined_call_operand.vmem [shape: f32[256,9], index: 6, kind: input, shape index: {}]
  %s7 = inlined_call_operand.vmem [shape: f32[2,256,32], index: 7, kind: input, shape index: {}]
  %s8 = inlined_call_operand.vmem [shape: bf16[32,64], index: 8, kind: input, shape index: {}]
  %s9 = inlined_call_operand.vmem [shape: f32[1,64], index: 9, kind: input, shape index: {}]
  %s10 = inlined_call_operand.hbm [shape: f32[2,256,64], index: 10, kind: output, shape index: {}]
  %s11 = sld [smem:[#allocation0]]
  $region73: #{vae_residual_block.3} parent=0
    _
  %s13 = ssub.s32 1, %s11
  %s14 = scalar_select 0, %s13, %s11
  $region1: #{vae_residual_block.3} parent=0
    #allocation2 [shape = 'u8[262144]{0}', space=vmem, size = 0x40000, scoped, tag = 'output window, operand 0']
    #allocation3 [shape = 's32[2]{0}', space=sflag, size = 0x8, scoped, tag = 'scoped memory for vae_residual_block.3']
    %15 = vsyncpa [#allocation3], 0
    %s16 = scalar_lea.sflag [#allocation3], 1
    %17 = vsyncpa %s16, 0
    loop: start=0, step=1, limit=4
    $region2: #{vae_residual_block.3} parent=1 // loop_pre_header
      _
    $region3: #{vae_residual_block.3} parent=1 // loop_header
      %s19 = sphi 0, %s23
      %p20 = scmp.ge.s32.totalorder %s19, 4
      %s29 = sphi 0, %s31
      %s32 = sphi 0, %s29
      %s33 = sphi 0, %s32
      %s49 = sphi 0, %s33
      %s53 = sphi 0, %s53
      %s55 = sphi 0, %s53
      %s56 = sphi 0, %s55
      %s70 = sphi 0, %s56
      %s74 = sphi 0, %s74
      %s76 = sphi 0, %s74
      %s77 = sphi 0, %s76
      %s91 = sphi 0, %s77
      %s95 = sphi 0, %s95
      %s97 = sphi 0, %s95
      %s98 = sphi 0, %s97
      %s112 = sphi 0, %s98
      %s116 = sphi 0, %s116
      %s118 = sphi 0, %s116
      %s119 = sphi 0, %s118
      %s133 = sphi 0, %s119
      %s137 = sphi 0, %s137
      %s139 = sphi 0, %s137
      %s140 = sphi 0, %s139
      %s154 = sphi 0, %s140
      %s158 = sphi 0, %s158
      %s160 = sphi 0, %s158
      %s161 = sphi 0, %s160
      %s175 = sphi 0, %s161
      %s181 = sphi 0, %s183
      %s184 = sphi 0, %s181
      %s185 = sphi 0, %s184
      %s201 = sphi 0, %s185
      %s205 = sphi 0, %s205
      %s207 = sphi 0, %s205
      %s208 = sphi 0, %s207
      %s222 = sphi 0, %s208
      %s226 = sphi 0, %s226
      %s228 = sphi 0, %s226
      %s229 = sphi 0, %s228
      %s243 = sphi 0, %s229
      %s249 = sphi 0, %s251
      %s252 = sphi 0, %s249
      %s253 = sphi 0, %s252
      %s269 = sphi 0, %s253
    $region4: #{vae_residual_block.3} parent=1 // loop_header_branch
      %22 = sbr.rel (%p20) target = $region8
    $region5: #{vae_residual_block.3} parent=1 // loop_body
      %s24 = ssub.s32 %s19, 1
      %s25 = ssub.s32 %s19, 2
      %s26 = sadd.s32 %s19, 1
      %s27 = ssub.s32 %s19, %s26
      %p28 = scmp.eq.s32.totalorder %s27, 0
      %s30 = sadd.s32 %s29, 1
      %s31 = scalar_select %p28, %s29, %s30
      %p34 = pneg %p28
      %p35 = scmp.eq.s32.totalorder %s19, 1
      %p36 = por %p34, %p35
      %p37 = scmp.ne.s32.totalorder %s29, %s32
      %p38 = scmp.eq.s32.totalorder %s19, 0
      %p39 = por %p37, %p38
      %p40 = scmp.ne.s32.totalorder %s29, %s32
      %p41 = scmp.eq.s32.totalorder %s24, 1
      %p42 = por %p40, %p41
      %p43 = scmp.ne.s32.totalorder %s32, %s33
      %p44 = scmp.eq.s32.totalorder %s24, 0
      %p45 = por %p43, %p44
      %p46 = scmp.ne.s32.totalorder %s32, %s33
      %p47 = scmp.eq.s32.totalorder %s25, 1
      %p48 = por %p46, %p47
      %p50 = scmp.ne.s32.totalorder %s33, %s49
      %p51 = scmp.eq.s32.totalorder %s25, 0
      %p52 = por %p50, %p51
      %s54 = sadd.s32 %s53, 1
      %p57 = scmp.eq.s32.totalorder %s19, 1
      %p58 = scmp.ne.s32.totalorder %s53, %s55
      %p59 = scmp.eq.s32.totalorder %s19, 0
      %p60 = por %p58, %p59
      %p61 = scmp.ne.s32.totalorder %s53, %s55
      %p62 = scmp.eq.s32.totalorder %s24, 1
      %p63 = por %p61, %p62
      %p64 = scmp.ne.s32.totalorder %s55, %s56
      %p65 = scmp.eq.s32.totalorder %s24, 0
      %p66 = por %p64, %p65
      %p67 = scmp.ne.s32.totalorder %s55, %s56
      %p68 = scmp.eq.s32.totalorder %s25, 1
      %p69 = por %p67, %p68
      %p71 = scmp.ne.s32.totalorder %s56, %s70
      %p72 = scmp.eq.s32.totalorder %s25, 0
      %p73 = por %p71, %p72
      %s75 = sadd.s32 %s74, 1
      %p78 = scmp.eq.s32.totalorder %s19, 1
      %p79 = scmp.ne.s32.totalorder %s74, %s76
      %p80 = scmp.eq.s32.totalorder %s19, 0
      %p81 = por %p79, %p80
      %p82 = scmp.ne.s32.totalorder %s74, %s76
      %p83 = scmp.eq.s32.totalorder %s24, 1
      %p84 = por %p82, %p83
      %p85 = scmp.ne.s32.totalorder %s76, %s77
      %p86 = scmp.eq.s32.totalorder %s24, 0
      %p87 = por %p85, %p86
      %p88 = scmp.ne.s32.totalorder %s76, %s77
      %p89 = scmp.eq.s32.totalorder %s25, 1
      %p90 = por %p88, %p89
      %p92 = scmp.ne.s32.totalorder %s77, %s91
      %p93 = scmp.eq.s32.totalorder %s25, 0
      %p94 = por %p92, %p93
      %s96 = sadd.s32 %s95, 1
      %p99 = scmp.eq.s32.totalorder %s19, 1
      %p100 = scmp.ne.s32.totalorder %s95, %s97
      %p101 = scmp.eq.s32.totalorder %s19, 0
      %p102 = por %p100, %p101
      %p103 = scmp.ne.s32.totalorder %s95, %s97
      %p104 = scmp.eq.s32.totalorder %s24, 1
      %p105 = por %p103, %p104
      %p106 = scmp.ne.s32.totalorder %s97, %s98
      %p107 = scmp.eq.s32.totalorder %s24, 0
      %p108 = por %p106, %p107
      %p109 = scmp.ne.s32.totalorder %s97, %s98
      %p110 = scmp.eq.s32.totalorder %s25, 1
      %p111 = por %p109, %p110
      %p113 = scmp.ne.s32.totalorder %s98, %s112
      %p114 = scmp.eq.s32.totalorder %s25, 0
      %p115 = por %p113, %p114
      %s117 = sadd.s32 %s116, 1
      %p120 = scmp.eq.s32.totalorder %s19, 1
      %p121 = scmp.ne.s32.totalorder %s116, %s118
      %p122 = scmp.eq.s32.totalorder %s19, 0
      %p123 = por %p121, %p122
      %p124 = scmp.ne.s32.totalorder %s116, %s118
      %p125 = scmp.eq.s32.totalorder %s24, 1
      %p126 = por %p124, %p125
      %p127 = scmp.ne.s32.totalorder %s118, %s119
      %p128 = scmp.eq.s32.totalorder %s24, 0
      %p129 = por %p127, %p128
      %p130 = scmp.ne.s32.totalorder %s118, %s119
      %p131 = scmp.eq.s32.totalorder %s25, 1
      %p132 = por %p130, %p131
      %p134 = scmp.ne.s32.totalorder %s119, %s133
      %p135 = scmp.eq.s32.totalorder %s25, 0
      %p136 = por %p134, %p135
      %s138 = sadd.s32 %s137, 1
      %p141 = scmp.eq.s32.totalorder %s19, 1
      %p142 = scmp.ne.s32.totalorder %s137, %s139
      %p143 = scmp.eq.s32.totalorder %s19, 0
      %p144 = por %p142, %p143
      %p145 = scmp.ne.s32.totalorder %s137, %s139
      %p146 = scmp.eq.s32.totalorder %s24, 1
      %p147 = por %p145, %p146
      %p148 = scmp.ne.s32.totalorder %s139, %s140
      %p149 = scmp.eq.s32.totalorder %s24, 0
      %p150 = por %p148, %p149
      %p151 = scmp.ne.s32.totalorder %s139, %s140
      %p152 = scmp.eq.s32.totalorder %s25, 1
      %p153 = por %p151, %p152
      %p155 = scmp.ne.s32.totalorder %s140, %s154
      %p156 = scmp.eq.s32.totalorder %s25, 0
      %p157 = por %p155, %p156
      %s159 = sadd.s32 %s158, 1
      %p162 = scmp.eq.s32.totalorder %s19, 1
      %p163 = scmp.ne.s32.totalorder %s158, %s160
      %p164 = scmp.eq.s32.totalorder %s19, 0
      %p165 = por %p163, %p164
      %p166 = scmp.ne.s32.totalorder %s158, %s160
      %p167 = scmp.eq.s32.totalorder %s24, 1
      %p168 = por %p166, %p167
      %p169 = scmp.ne.s32.totalorder %s160, %s161
      %p170 = scmp.eq.s32.totalorder %s24, 0
      %p171 = por %p169, %p170
      %p172 = scmp.ne.s32.totalorder %s160, %s161
      %p173 = scmp.eq.s32.totalorder %s25, 1
      %p174 = por %p172, %p173
      %p176 = scmp.ne.s32.totalorder %s161, %s175
      %p177 = scmp.eq.s32.totalorder %s25, 0
      %p178 = por %p176, %p177
      %s179 = ssub.s32 %s19, %s26
      %p180 = scmp.eq.s32.totalorder %s179, 0
      %s182 = sadd.s32 %s181, 1
      %s183 = scalar_select %p180, %s181, %s182
      %p186 = pneg %p180
      %p187 = scmp.eq.s32.totalorder %s19, 1
      %p188 = por %p186, %p187
      %p189 = scmp.ne.s32.totalorder %s181, %s184
      %p190 = scmp.eq.s32.totalorder %s19, 0
      %p191 = por %p189, %p190
      %p192 = scmp.ne.s32.totalorder %s181, %s184
      %p193 = scmp.eq.s32.totalorder %s24, 1
      %p194 = por %p192, %p193
      %p195 = scmp.ne.s32.totalorder %s184, %s185
      %p196 = scmp.eq.s32.totalorder %s24, 0
      %p197 = por %p195, %p196
      %p198 = scmp.ne.s32.totalorder %s184, %s185
      %p199 = scmp.eq.s32.totalorder %s25, 1
      %p200 = por %p198, %p199
      %p202 = scmp.ne.s32.totalorder %s185, %s201
      %p203 = scmp.eq.s32.totalorder %s25, 0
      %p204 = por %p202, %p203
      %s206 = sadd.s32 %s205, 1
      %p209 = scmp.eq.s32.totalorder %s19, 1
      %p210 = scmp.ne.s32.totalorder %s205, %s207
      %p211 = scmp.eq.s32.totalorder %s19, 0
      %p212 = por %p210, %p211
      %p213 = scmp.ne.s32.totalorder %s205, %s207
      %p214 = scmp.eq.s32.totalorder %s24, 1
      %p215 = por %p213, %p214
      %p216 = scmp.ne.s32.totalorder %s207, %s208
      %p217 = scmp.eq.s32.totalorder %s24, 0
      %p218 = por %p216, %p217
      %p219 = scmp.ne.s32.totalorder %s207, %s208
      %p220 = scmp.eq.s32.totalorder %s25, 1
      %p221 = por %p219, %p220
      %p223 = scmp.ne.s32.totalorder %s208, %s222
      %p224 = scmp.eq.s32.totalorder %s25, 0
      %p225 = por %p223, %p224
      %s227 = sadd.s32 %s226, 1
      %p230 = scmp.eq.s32.totalorder %s19, 1
      %p231 = scmp.ne.s32.totalorder %s226, %s228
      %p232 = scmp.eq.s32.totalorder %s19, 0
      %p233 = por %p231, %p232
      %p234 = scmp.ne.s32.totalorder %s226, %s228
      %p235 = scmp.eq.s32.totalorder %s24, 1
      %p236 = por %p234, %p235
      %p237 = scmp.ne.s32.totalorder %s228, %s229
      %p238 = scmp.eq.s32.totalorder %s24, 0
      %p239 = por %p237, %p238
      %p240 = scmp.ne.s32.totalorder %s228, %s229
      %p241 = scmp.eq.s32.totalorder %s25, 1
      %p242 = por %p240, %p241
      %p244 = scmp.ne.s32.totalorder %s229, %s243
      %p245 = scmp.eq.s32.totalorder %s25, 0
      %p246 = por %p244, %p245
      %s247 = ssub.s32 %s19, %s26
      %p248 = scmp.eq.s32.totalorder %s247, 0
      %s250 = sadd.s32 %s249, 1
      %s251 = scalar_select %p248, %s249, %s250
      %p254 = pneg %p248
      %p255 = scmp.eq.s32.totalorder %s19, 1
      %p256 = por %p254, %p255
      %p257 = scmp.ne.s32.totalorder %s249, %s252
      %p258 = scmp.eq.s32.totalorder %s19, 0
      %p259 = por %p257, %p258
      %p260 = scmp.ne.s32.totalorder %s249, %s252
      %p261 = scmp.eq.s32.totalorder %s24, 1
      %p262 = por %p260, %p261
      %p263 = scmp.ne.s32.totalorder %s252, %s253
      %p264 = scmp.eq.s32.totalorder %s24, 0
      %p265 = por %p263, %p264
      %p266 = scmp.ne.s32.totalorder %s252, %s253
      %p267 = scmp.eq.s32.totalorder %s25, 1
      %p268 = por %p266, %p267
      %p270 = scmp.ne.s32.totalorder %s253, %s269
      %p271 = scmp.eq.s32.totalorder %s25, 0
      %p272 = por %p270, %p271
      %p273 = scmp.le.s32.totalorder 1, %s19
      %p274 = scmp.lt.s32.totalorder %s19, 3
      %p275 = pnand %p273, %p274
      %p276 = pneg %p275
      // Predicated region
      $region9: #{vae_residual_block.3} parent=5 // pred_check
        _
      $region10: #{vae_residual_block.3} parent=5 // pred_check_branch
        %278 = sbr.rel (%p275) target = $region12
      $region11: #{vae_residual_block.3} parent=5 // pred_region
        %s279 = ssub.s32 %s19, 1
        // Predicated region
        $region13: #{vae_residual_block.3} parent=11 // pred_check
          %p280 = pneg %p66
        $region14: #{vae_residual_block.3} parent=11 // pred_check_branch
          %282 = sbr.rel (%p280) target = $region16
        $region15: #{vae_residual_block.3} parent=11 // pred_region
          _
        $region16: #{vae_residual_block.3} parent=11 // pred_fallthru
          _
        // Predicated region
        $region17: #{vae_residual_block.3} parent=11 // pred_check
          %p283 = pneg %p87
        $region18: #{vae_residual_block.3} parent=11 // pred_check_branch
          %285 = sbr.rel (%p283) target = $region20
        $region19: #{vae_residual_block.3} parent=11 // pred_region
          _
        $region20: #{vae_residual_block.3} parent=11 // pred_fallthru
          _
        // Predicated region
        $region21: #{vae_residual_block.3} parent=11 // pred_check
          %p286 = pneg %p108
        $region22: #{vae_residual_block.3} parent=11 // pred_check_branch
          %288 = sbr.rel (%p286) target = $region24
        $region23: #{vae_residual_block.3} parent=11 // pred_region
          _
        $region24: #{vae_residual_block.3} parent=11 // pred_fallthru
          _
        // Predicated region
        $region25: #{vae_residual_block.3} parent=11 // pred_check
          %p289 = pneg %p129
        $region26: #{vae_residual_block.3} parent=11 // pred_check_branch
          %291 = sbr.rel (%p289) target = $region28
        $region27: #{vae_residual_block.3} parent=11 // pred_region
          _
        $region28: #{vae_residual_block.3} parent=11 // pred_fallthru
          _
        // Predicated region
        $region29: #{vae_residual_block.3} parent=11 // pred_check
          %p292 = pneg %p150
        $region30: #{vae_residual_block.3} parent=11 // pred_check_branch
          %294 = sbr.rel (%p292) target = $region32
        $region31: #{vae_residual_block.3} parent=11 // pred_region
          _
        $region32: #{vae_residual_block.3} parent=11 // pred_fallthru
          _
        // Predicated region
        $region33: #{vae_residual_block.3} parent=11 // pred_check
          %p295 = pneg %p171
        $region34: #{vae_residual_block.3} parent=11 // pred_check_branch
          %297 = sbr.rel (%p295) target = $region36
        $region35: #{vae_residual_block.3} parent=11 // pred_region
          _
        $region36: #{vae_residual_block.3} parent=11 // pred_fallthru
          _
        // Predicated region
        $region37: #{vae_residual_block.3} parent=11 // pred_check
          %p298 = pneg %p218
        $region38: #{vae_residual_block.3} parent=11 // pred_check_branch
          %300 = sbr.rel (%p298) target = $region40
        $region39: #{vae_residual_block.3} parent=11 // pred_region
          _
        $region40: #{vae_residual_block.3} parent=11 // pred_fallthru
          _
        // Predicated region
        $region41: #{vae_residual_block.3} parent=11 // pred_check
          %p301 = pneg %p239
        $region42: #{vae_residual_block.3} parent=11 // pred_check_branch
          %303 = sbr.rel (%p301) target = $region44
        $region43: #{vae_residual_block.3} parent=11 // pred_region
          _
        $region44: #{vae_residual_block.3} parent=11 // pred_fallthru
          _
      $region12: #{vae_residual_block.3} parent=5 // pred_fallthru
        _
      %p304 = scmp.lt.s32.totalorder %s19, 2
      // Predicated region
      $region45: #{vae_residual_block.3} parent=5 // pred_check
        %p305 = pneg %p304
      $region46: #{vae_residual_block.3} parent=5 // pred_check_branch
        %307 = sbr.rel (%p305) target = $region48
      $region47: #{vae_residual_block.3} parent=5 // pred_region
        // Predicated region
        $region49: #{vae_residual_block.3} parent=47 // pred_check
          %p308 = pneg %p39
        $region50: #{vae_residual_block.3} parent=47 // pred_check_branch
          %310 = sbr.rel (%p308) target = $region52
        $region51: #{vae_residual_block.3} parent=47 // pred_region
          %p311 = scmp.lt.s32.totalorder %s19, 1
          %s312 = scalar_select %p311, %s19, 1
          %s313 = smul.addr %s312, 32
          %s314 = smul.addr %s313, 4
          %s315 = scalar_lea.vmem %s0, %s314
        $region52: #{vae_residual_block.3} parent=47 // pred_fallthru
          _
        // Predicated region
        $region53: #{vae_residual_block.3} parent=47 // pred_check
          %p316 = pneg %p191
        $region54: #{vae_residual_block.3} parent=47 // pred_check_branch
          %318 = sbr.rel (%p316) target = $region56
        $region55: #{vae_residual_block.3} parent=47 // pred_region
          %p319 = scmp.lt.s32.totalorder %s19, 1
          %s320 = scalar_select %p319, %s19, 1
          %s321 = smul.addr %s320, 32
          %s322 = smul.addr %s321, 8
          %s323 = scalar_lea.vmem %s7, %s322
        $region56: #{vae_residual_block.3} parent=47 // pred_fallthru
          _
      $region48: #{vae_residual_block.3} parent=5 // pred_fallthru
        _
      %p324 = scmp.le.s32.totalorder 1, %s19
      %p325 = scmp.lt.s32.totalorder %s19, 3
      %p326 = pnand %p324, %p325
      %p327 = pneg %p326
      // Predicated region
      $region57: #{vae_residual_block.3} parent=5 // pred_check
        _
      $region58: #{vae_residual_block.3} parent=5 // pred_check_branch
        %329 = sbr.rel (%p326) target = $region60
      $region59: #{vae_residual_block.3} parent=5 // pred_region
        %s330 = ssub.s32 %s19, 1
        %p331 = scmp.lt.s32.totalorder %s24, 1
        %s332 = scalar_select %p331, %s24, 1
        %s333 = smul.addr %s332, 32
        %s334 = smul.addr %s333, 4
        %s335 = scalar_lea.vmem %s0, %s334
        %p336 = pneg %p45
        %p337 = pneg %p42
        %p338 = pneg %p66
        %p339 = pneg %p63
        %p340 = pneg %p87
        %p341 = pneg %p84
        %p342 = pneg %p108
        %p343 = pneg %p105
        %p344 = pneg %p129
        %p345 = pneg %p126
        %p346 = pneg %p150
        %p347 = pneg %p147
        %p348 = pneg %p171
        %p349 = pneg %p168
        %p350 = scmp.lt.s32.totalorder %s24, 1
        %s351 = scalar_select %p350, %s24, 1
        %s352 = smul.addr %s351, 32
        %s353 = smul.addr %s352, 8
        %s354 = scalar_lea.vmem %s7, %s353
        %p355 = pneg %p197
        %p356 = pneg %p194
        %p357 = pneg %p218
        %p358 = pneg %p215
        %p359 = pneg %p239
        %p360 = pneg %p236
        %p361 = pneg %p265
        %p362 = pneg %p262
        %s363 = sand.u32 %s252, 1
        %s364 = scalar_lea.sflag [#allocation3], %s363
        %s365 = sand.u32 %s252, 1
        %s366 = smul.addr %s365, 256
        %s367 = scalar_lea.vmem [#allocation2], %s366
        %p368 = scmp.lt.s32.totalorder %s24, 1
        %s369 = scalar_select %p368, %s24, 1
        %s370 = smul.addr %s369, 32
        %s371 = smul.addr %s370, 4
        %s372 = scalar_lea.vmem %s0, %s371
        %p373 = scmp.lt.s32.totalorder %s24, 1
        %s374 = scalar_select %p373, %s24, 1
        %s375 = smul.addr %s374, 32
        %s376 = smul.addr %s375, 8
        %s377 = scalar_lea.vmem %s7, %s376
        %v379 = vld [vmem:[%s372] sm:$0xf]
        %v380 = vld [vmem:[%s372 + $0x4] sm:$0xf]
        %v381 = vld [vmem:[%s372 + $0x8] sm:$0xf]
        %v382 = vld [vmem:[%s372 + $0xc] sm:$0xf]
        %v383 = vld [vmem:[%s372 + $0x10] sm:$0xf]
        %v384 = vld [vmem:[%s372 + $0x14] sm:$0xf]
        %v385 = vld [vmem:[%s372 + $0x18] sm:$0xf]
        %v386 = vld [vmem:[%s372 + $0x1c] sm:$0xf]
        %v387 = vld [vmem:[%s372 + $0x20] sm:$0xf]
        %v388 = vld [vmem:[%s372 + $0x24] sm:$0xf]
        %v389 = vld [vmem:[%s372 + $0x28] sm:$0xf]
        %v390 = vld [vmem:[%s372 + $0x2c] sm:$0xf]
        %v391 = vld [vmem:[%s372 + $0x30] sm:$0xf]
        %v392 = vld [vmem:[%s372 + $0x34] sm:$0xf]
        %v393 = vld [vmem:[%s372 + $0x38] sm:$0xf]
        %v394 = vld [vmem:[%s372 + $0x3c] sm:$0xf]
        %v395 = vld [vmem:[%s372 + $0x40] sm:$0xf]
        %v396 = vld [vmem:[%s372 + $0x44] sm:$0xf]
        %v397 = vld [vmem:[%s372 + $0x48] sm:$0xf]
        %v398 = vld [vmem:[%s372 + $0x4c] sm:$0xf]
        %v399 = vld [vmem:[%s372 + $0x50] sm:$0xf]
        %v400 = vld [vmem:[%s372 + $0x54] sm:$0xf]
        %v401 = vld [vmem:[%s372 + $0x58] sm:$0xf]
        %v402 = vld [vmem:[%s372 + $0x5c] sm:$0xf]
        %v403 = vld [vmem:[%s372 + $0x60] sm:$0xf]
        %v404 = vld [vmem:[%s372 + $0x64] sm:$0xf]
        %v405 = vld [vmem:[%s372 + $0x68] sm:$0xf]
        %v406 = vld [vmem:[%s372 + $0x6c] sm:$0xf]
        %v407 = vld [vmem:[%s372 + $0x70] sm:$0xf]
        %v408 = vld [vmem:[%s372 + $0x74] sm:$0xf]
        %v409 = vld [vmem:[%s372 + $0x78] sm:$0xf]
        %v410 = vld [vmem:[%s372 + $0x7c] sm:$0xf]
        %v411 = vunpack.c.l.bf16 %v379
        %v412 = vunpack.c.l.bf16 %v380
        %v413 = vunpack.c.l.bf16 %v381
        %v414 = vunpack.c.l.bf16 %v382
        %v415 = vunpack.c.l.bf16 %v383
        %v416 = vunpack.c.l.bf16 %v384
        %v417 = vunpack.c.l.bf16 %v385
        %v418 = vunpack.c.l.bf16 %v386
        %v419 = vunpack.c.l.bf16 %v387
        %v420 = vunpack.c.l.bf16 %v388
        %v421 = vunpack.c.l.bf16 %v389
        %v422 = vunpack.c.l.bf16 %v390
        %v423 = vunpack.c.l.bf16 %v391
        %v424 = vunpack.c.l.bf16 %v392
        %v425 = vunpack.c.l.bf16 %v393
        %v426 = vunpack.c.l.bf16 %v394
        %v427 = vunpack.c.l.bf16 %v395
        %v428 = vunpack.c.l.bf16 %v396
        %v429 = vunpack.c.l.bf16 %v397
        %v430 = vunpack.c.l.bf16 %v398
        %v431 = vunpack.c.l.bf16 %v399
        %v432 = vunpack.c.l.bf16 %v400
        %v433 = vunpack.c.l.bf16 %v401
        %v434 = vunpack.c.l.bf16 %v402
        %v435 = vunpack.c.l.bf16 %v403
        %v436 = vunpack.c.l.bf16 %v404
        %v437 = vunpack.c.l.bf16 %v405
        %v438 = vunpack.c.l.bf16 %v406
        %v439 = vunpack.c.l.bf16 %v407
        %v440 = vunpack.c.l.bf16 %v408
        %v441 = vunpack.c.l.bf16 %v409
        %v442 = vunpack.c.l.bf16 %v410
        %v443 = vld [vmem:[%s3] sm:$0xff]
        %v444 = vld [vmem:[%s3 + $0x8] sm:$0xff]
        %v445 = vld [vmem:[%s3 + $0x10] sm:$0xff]
        %v446 = vld [vmem:[%s3 + $0x18] sm:$0xff]
        %v447 = vld [vmem:[%s3 + $0x20] sm:$0xff]
        %v448 = vld [vmem:[%s3 + $0x28] sm:$0xff]
        %v449 = vld [vmem:[%s3 + $0x30] sm:$0xff]
        %v450 = vld [vmem:[%s3 + $0x38] sm:$0xff]
        %vm451 = vcmask 523264
        %v452 = vsel %vm451, %v411, 0.0
        %v453 = vsel %vm451, %v412, 0.0
        %v454 = vadd.f32 %v452, %v453
        %v455 = vsel %vm451, %v413, 0.0
        %v456 = vadd.f32 %v454, %v455
        %v457 = vsel %vm451, %v414, 0.0
        %v458 = vadd.f32 %v456, %v457
        %v459 = vsel %vm451, %v415, 0.0
        %v460 = vadd.f32 %v458, %v459
        %v461 = vsel %vm451, %v416, 0.0
        %v462 = vadd.f32 %v460, %v461
        %v463 = vsel %vm451, %v417, 0.0
        %v464 = vadd.f32 %v462, %v463
        %v465 = vsel %vm451, %v418, 0.0
        %v466 = vadd.f32 %v464, %v465
        %v467 = vsel %vm451, %v419, 0.0
        %v468 = vadd.f32 %v466, %v467
        %v469 = vsel %vm451, %v420, 0.0
        %v470 = vadd.f32 %v468, %v469
        %v471 = vsel %vm451, %v421, 0.0
        %v472 = vadd.f32 %v470, %v471
        %v473 = vsel %vm451, %v422, 0.0
        %v474 = vadd.f32 %v472, %v473
        %v475 = vsel %vm451, %v423, 0.0
        %v476 = vadd.f32 %v474, %v475
        %v477 = vsel %vm451, %v424, 0.0
        %v478 = vadd.f32 %v476, %v477
        %v479 = vsel %vm451, %v425, 0.0
        %v480 = vadd.f32 %v478, %v479
        %v481 = vsel %vm451, %v426, 0.0
        %v482 = vadd.f32 %v480, %v481
        %v483 = vsel %vm451, %v427, 0.0
        %v484 = vadd.f32 %v482, %v483
        %v485 = vsel %vm451, %v428, 0.0
        %v486 = vadd.f32 %v484, %v485
        %v487 = vsel %vm451, %v429, 0.0
        %v488 = vadd.f32 %v486, %v487
        %v489 = vsel %vm451, %v430, 0.0
        %v490 = vadd.f32 %v488, %v489
        %v491 = vsel %vm451, %v431, 0.0
        %v492 = vadd.f32 %v490, %v491
        %v493 = vsel %vm451, %v432, 0.0
        %v494 = vadd.f32 %v492, %v493
        %v495 = vsel %vm451, %v433, 0.0
        %v496 = vadd.f32 %v494, %v495
        %v497 = vsel %vm451, %v434, 0.0
        %v498 = vadd.f32 %v496, %v497
        %v499 = vsel %vm451, %v435, 0.0
        %v500 = vadd.f32 %v498, %v499
        %v501 = vsel %vm451, %v436, 0.0
        %v502 = vadd.f32 %v500, %v501
        %v503 = vsel %vm451, %v437, 0.0
        %v504 = vadd.f32 %v502, %v503
        %v505 = vsel %vm451, %v438, 0.0
        %v506 = vadd.f32 %v504, %v505
        %v507 = vsel %vm451, %v439, 0.0
        %v508 = vadd.f32 %v506, %v507
        %v509 = vsel %vm451, %v440, 0.0
        %v510 = vadd.f32 %v508, %v509
        %v511 = vsel %vm451, %v441, 0.0
        %v512 = vadd.f32 %v510, %v511
        %v513 = vsel %vm451, %v442, 0.0
        %v514 = vadd.f32 %v512, %v513
        %v515 = vrot.slane %v514, 4
        %v516 = vadd.f32 %v514, %v515
        %v517 = vrot.slane %v516, 2
        %v518 = vadd.f32 %v516, %v517
        %v519 = vrot.slane %v518, 1
        %v520 = vadd.f32 %v518, %v519
        %v522 = vsel %vm451, %v520, 0
        %524 = vmatprep.subr.mxu0 0.0
        %525 = vmatpush1.msra.mxu0 %v443
        %526 = vmatprep.subr.mxu0 0.0
        %527 = vmatpush1.msra.mxu0 %v444
        %528 = vmatprep.subr.mxu0 0.0
        %529 = vmatpush1.msra.mxu0 %v445
        %530 = vmatprep.subr.mxu0 0.0
        %531 = vmatpush1.msra.mxu0 %v446
        %532 = vmatprep.subr.mxu0 0.0
        %533 = vmatpush1.msra.mxu0 %v447
        %534 = vmatprep.subr.mxu0 0.0
        %535 = vmatpush1.msra.mxu0 %v448
        %536 = vmatprep.subr.mxu0 0.0
        %537 = vmatpush1.msra.mxu0 %v449
        %538 = vmatprep.subr.mxu0 0.0
        %539 = vmatpush1.msra.mxu0 %v450
        %540 = vmatprep.subr.mxu0 0.0
        %541 = vmatpush1.msra.mxu0 0.0
        %542 = vmatprep.subr.mxu0 0.0
        %543 = vmatpush1.msra.mxu0 0.0
        %544 = vmatprep.subr.mxu0 0.0
        %545 = vmatpush1.msra.mxu0 0.0
        %546 = vmatprep.subr.mxu0 0.0
        %547 = vmatpush1.msra.mxu0 0.0
        %548 = vmatprep.subr.mxu0 0.0
        %549 = vmatpush1.msra.mxu0 0.0
        %550 = vmatprep.subr.mxu0 0.0
        %551 = vmatpush1.msra.mxu0 0.0
        %552 = vmatprep.subr.mxu0 0.0
        %553 = vmatpush1.msra.mxu0 0.0
        %554 = vmatprep.subr.mxu0 0.0
        %555 = vmatpush1.msra.mxu0 0.0
        %556 = vmatprep.subr.mxu0 0.0
        %557 = vmatpush1.msra.mxu0 0.0
        %558 = vmatprep.subr.mxu0 0.0
        %559 = vmatpush1.msra.mxu0 0.0
        %560 = vmatprep.subr.mxu0 0.0
        %561 = vmatpush1.msra.mxu0 0.0
        %562 = vmatprep.subr.mxu0 0.0
        %563 = vmatpush1.msra.mxu0 0.0
        %564 = vmatprep.subr.mxu0 0.0
        %565 = vmatpush1.msra.mxu0 0.0
        %566 = vmatprep.subr.mxu0 0.0
        %567 = vmatpush1.msra.mxu0 0.0
        %568 = vmatprep.subr.mxu0 0.0
        %569 = vmatpush1.msra.mxu0 0.0
        %570 = vmatprep.subr.mxu0 0.0
        %571 = vmatpush1.msra.mxu0 0.0
        %572 = vmatprep.subr.mxu0 0.0
        %573 = vmatpush1.msra.mxu0 0.0
        %574 = vmatprep.subr.mxu0 0.0
        %575 = vmatpush1.msra.mxu0 0.0
        %576 = vmatprep.subr.mxu0 0.0
        %577 = vmatpush1.msra.mxu0 0.0
        %578 = vmatprep.subr.mxu0 0.0
        %579 = vmatpush1.msra.mxu0 0.0
        %580 = vmatprep.subr.mxu0 0.0
        %581 = vmatpush1.msra.mxu0 0.0
        %582 = vmatprep.subr.mxu0 0.0
        %583 = vmatpush1.msra.mxu0 0.0
        %584 = vmatprep.subr.mxu0 0.0
        %585 = vmatpush1.msra.mxu0 0.0
        %586 = vmatprep.subr.mxu0 0.0
        %587 = vmatpush1.msra.mxu0 0.0
        %588 = vmatprep.mubr.f32.mxu0 0.0
        %589 = vmatmul.mubr.f32.gmra.mrb[0].mxu0 %v522
        %v590 = vpop.f32.mrb[0].mxu0
        %v591 = vadd.f32 0.0, %v590
        %v592 = vpop.f32.mrb[0].mxu0
        %593 = vdwg.mxu0
        %v594 = vrcp.pop 512.0
        %v595 = vmul.f32 %v591, %v594
        %vm596 = vcmask 261120
        %v598 = vsel %vm596, %v595, 0
        %v601 = vsel %vm596, %v443, 0
        %v604 = vsel %vm596, %v444, 0
        %v607 = vsel %vm596, %v445, 0
        %v610 = vsel %vm596, %v446, 0
        %v613 = vsel %vm596, %v447, 0
        %v616 = vsel %vm596, %v448, 0
        %v619 = vsel %vm596, %v449, 0
        %v622 = vsel %vm596, %v450, 0
        %624 = vmatprep.subr.mxu0 0.0
        %625 = vmatpush1.xpose.msra.mxu0 %v601
        %626 = vmatprep.subr.mxu0 0.0
        %627 = vmatpush1.xpose.msra.mxu0 %v604
        %628 = vmatprep.subr.mxu0 0.0
        %629 = vmatpush1.xpose.msra.mxu0 %v607
        %630 = vmatprep.subr.mxu0 0.0
        %631 = vmatpush1.xpose.msra.mxu0 %v610
        %632 = vmatprep.subr.mxu0 0.0
        %633 = vmatpush1.xpose.msra.mxu0 %v613
        %634 = vmatprep.subr.mxu0 0.0
        %635 = vmatpush1.xpose.msra.mxu0 %v616
        %636 = vmatprep.subr.mxu0 0.0
        %637 = vmatpush1.xpose.msra.mxu0 %v619
        %638 = vmatprep.subr.mxu0 0.0
        %639 = vmatpush1.xpose.msra.mxu0 %v622
        %640 = vmatprep.subr.mxu0 0.0
        %641 = vmatpush1.xpose.msra.mxu0 0.0
        %642 = vmatprep.subr.mxu0 0.0
        %643 = vmatpush1.xpose.msra.mxu0 0.0
        %644 = vmatprep.subr.mxu0 0.0
        %645 = vmatpush1.xpose.msra.mxu0 0.0
        %646 = vmatprep.subr.mxu0 0.0
        %647 = vmatpush1.xpose.msra.mxu0 0.0
        %648 = vmatprep.subr.mxu0 0.0
        %649 = vmatpush1.xpose.msra.mxu0 0.0
        %650 = vmatprep.subr.mxu0 0.0
        %651 = vmatpush1.xpose.msra.mxu0 0.0
        %652 = vmatprep.subr.mxu0 0.0
        %653 = vmatpush1.xpose.msra.mxu0 0.0
        %654 = vmatprep.subr.mxu0 0.0
        %655 = vmatpush1.xpose.msra.mxu0 0.0
        %656 = vmatprep.subr.mxu0 0.0
        %657 = vmatpush1.xpose.msra.mxu0 0.0
        %658 = vmatprep.subr.mxu0 0.0
        %659 = vmatpush1.xpose.msra.mxu0 0.0
        %660 = vmatprep.subr.mxu0 0.0
        %661 = vmatpush1.xpose.msra.mxu0 0.0
        %662 = vmatprep.subr.mxu0 0.0
        %663 = vmatpush1.xpose.msra.mxu0 0.0
        %664 = vmatprep.subr.mxu0 0.0
        %665 = vmatpush1.xpose.msra.mxu0 0.0
        %666 = vmatprep.subr.mxu0 0.0
        %667 = vmatpush1.xpose.msra.mxu0 0.0
        %668 = vmatprep.subr.mxu0 0.0
        %669 = vmatpush1.xpose.msra.mxu0 0.0
        %670 = vmatprep.subr.mxu0 0.0
        %671 = vmatpush1.xpose.msra.mxu0 0.0
        %672 = vmatprep.subr.mxu0 0.0
        %673 = vmatpush1.xpose.msra.mxu0 0.0
        %674 = vmatprep.subr.mxu0 0.0
        %675 = vmatpush1.xpose.msra.mxu0 0.0
        %676 = vmatprep.subr.mxu0 0.0
        %677 = vmatpush1.xpose.msra.mxu0 0.0
        %678 = vmatprep.subr.mxu0 0.0
        %679 = vmatpush1.xpose.msra.mxu0 0.0
        %680 = vmatprep.subr.mxu0 0.0
        %681 = vmatpush1.xpose.msra.mxu0 0.0
        %682 = vmatprep.subr.mxu0 0.0
        %683 = vmatpush1.xpose.msra.mxu0 0.0
        %684 = vmatprep.subr.mxu0 0.0
        %685 = vmatpush1.xpose.msra.mxu0 0.0
        %686 = vmatprep.subr.mxu0 0.0
        %687 = vmatpush1.xpose.msra.mxu0 0.0
        %688 = vmatprep.mubr.f32.mxu0 0.0
        %689 = vmatmul.mubr.f32.gmra.mrb[0].mxu0 %v598
        %v690 = vpop.f32.mrb[0].mxu0
        %v691 = vadd.f32 0.0, %v690
        %v692 = vpop.f32.mrb[0].mxu0
        %693 = vdwg.mxu0
        %v694 = vlaneseq
        %v695 = vshrl.u32 %v694, 7
        %v696 = vsub.s32 0, %v695
        %v697 = vrot.slane %v691, %v696
        %v698 = vsub.f32 %v411, %v697
        %v699 = vsub.f32 %v412, %v697
        %v700 = vsub.f32 %v413, %v697
        %v701 = vsub.f32 %v414, %v697
        %v702 = vsub.f32 %v415, %v697
        %v703 = vsub.f32 %v416, %v697
        %v704 = vsub.f32 %v417, %v697
        %v705 = vsub.f32 %v418, %v697
        %v706 = vsub.f32 %v419, %v697
        %v707 = vsub.f32 %v420, %v697
        %v708 = vsub.f32 %v421, %v697
        %v709 = vsub.f32 %v422, %v697
        %v710 = vsub.f32 %v423, %v697
        %v711 = vsub.f32 %v424, %v697
        %v712 = vsub.f32 %v425, %v697
        %v713 = vsub.f32 %v426, %v697
        %v714 = vsub.f32 %v427, %v697
        %v715 = vsub.f32 %v428, %v697
        %v716 = vsub.f32 %v429, %v697
        %v717 = vsub.f32 %v430, %v697
        %v718 = vsub.f32 %v431, %v697
        %v719 = vsub.f32 %v432, %v697
        %v720 = vsub.f32 %v433, %v697
        %v721 = vsub.f32 %v434, %v697
        %v722 = vsub.f32 %v435, %v697
        %v723 = vsub.f32 %v436, %v697
        %v724 = vsub.f32 %v437, %v697
        %v725 = vsub.f32 %v438, %v697
        %v726 = vsub.f32 %v439, %v697
        %v727 = vsub.f32 %v440, %v697
        %v728 = vsub.f32 %v441, %v697
        %v729 = vsub.f32 %v442, %v697
        %v730 = vmul.f32 %v698, %v698
        %v731 = vmul.f32 %v699, %v699
        %v732 = vmul.f32 %v700, %v700
        %v733 = vmul.f32 %v701, %v701
        %v734 = vmul.f32 %v702, %v702
        %v735 = vmul.f32 %v703, %v703
        %v736 = vmul.f32 %v704, %v704
        %v737 = vmul.f32 %v705, %v705
        %v738 = vmul.f32 %v706, %v706
        %v739 = vmul.f32 %v707, %v707
        %v740 = vmul.f32 %v708, %v708
        %v741 = vmul.f32 %v709, %v709
        %v742 = vmul.f32 %v710, %v710
        %v743 = vmul.f32 %v711, %v711
        %v744 = vmul.f32 %v712, %v712
        %v745 = vmul.f32 %v713, %v713
        %v746 = vmul.f32 %v714, %v714
        %v747 = vmul.f32 %v715, %v715
        %v748 = vmul.f32 %v716, %v716
        %v749 = vmul.f32 %v717, %v717
        %v750 = vmul.f32 %v718, %v718
        %v751 = vmul.f32 %v719, %v719
        %v752 = vmul.f32 %v720, %v720
        %v753 = vmul.f32 %v721, %v721
        %v754 = vmul.f32 %v722, %v722
        %v755 = vmul.f32 %v723, %v723
        %v756 = vmul.f32 %v724, %v724
        %v757 = vmul.f32 %v725, %v725
        %v758 = vmul.f32 %v726, %v726
        %v759 = vmul.f32 %v727, %v727
        %v760 = vmul.f32 %v728, %v728
        %v761 = vmul.f32 %v729, %v729
        %v762 = vsel %vm451, %v730, 0.0
        %v763 = vsel %vm451, %v731, 0.0
        %v764 = vadd.f32 %v762, %v763
        %v765 = vsel %vm451, %v732, 0.0
        %v766 = vadd.f32 %v764, %v765
        %v767 = vsel %vm451, %v733, 0.0
        %v768 = vadd.f32 %v766, %v767
        %v769 = vsel %vm451, %v734, 0.0
        %v770 = vadd.f32 %v768, %v769
        %v771 = vsel %vm451, %v735, 0.0
        %v772 = vadd.f32 %v770, %v771
        %v773 = vsel %vm451, %v736, 0.0
        %v774 = vadd.f32 %v772, %v773
        %v775 = vsel %vm451, %v737, 0.0
        %v776 = vadd.f32 %v774, %v775
        %v777 = vsel %vm451, %v738, 0.0
        %v778 = vadd.f32 %v776, %v777
        %v779 = vsel %vm451, %v739, 0.0
        %v780 = vadd.f32 %v778, %v779
        %v781 = vsel %vm451, %v740, 0.0
        %v782 = vadd.f32 %v780, %v781
        %v783 = vsel %vm451, %v741, 0.0
        %v784 = vadd.f32 %v782, %v783
        %v785 = vsel %vm451, %v742, 0.0
        %v786 = vadd.f32 %v784, %v785
        %v787 = vsel %vm451, %v743, 0.0
        %v788 = vadd.f32 %v786, %v787
        %v789 = vsel %vm451, %v744, 0.0
        %v790 = vadd.f32 %v788, %v789
        %v791 = vsel %vm451, %v745, 0.0
        %v792 = vadd.f32 %v790, %v791
        %v793 = vsel %vm451, %v746, 0.0
        %v794 = vadd.f32 %v792, %v793
        %v795 = vsel %vm451, %v747, 0.0
        %v796 = vadd.f32 %v794, %v795
        %v797 = vsel %vm451, %v748, 0.0
        %v798 = vadd.f32 %v796, %v797
        %v799 = vsel %vm451, %v749, 0.0
        %v800 = vadd.f32 %v798, %v799
        %v801 = vsel %vm451, %v750, 0.0
        %v802 = vadd.f32 %v800, %v801
        %v803 = vsel %vm451, %v751, 0.0
        %v804 = vadd.f32 %v802, %v803
        %v805 = vsel %vm451, %v752, 0.0
        %v806 = vadd.f32 %v804, %v805
        %v807 = vsel %vm451, %v753, 0.0
        %v808 = vadd.f32 %v806, %v807
        %v809 = vsel %vm451, %v754, 0.0
        %v810 = vadd.f32 %v808, %v809
        %v811 = vsel %vm451, %v755, 0.0
        %v812 = vadd.f32 %v810, %v811
        %v813 = vsel %vm451, %v756, 0.0
        %v814 = vadd.f32 %v812, %v813
        %v815 = vsel %vm451, %v757, 0.0
        %v816 = vadd.f32 %v814, %v815
        %v817 = vsel %vm451, %v758, 0.0
        %v818 = vadd.f32 %v816, %v817
        %v819 = vsel %vm451, %v759, 0.0
        %v820 = vadd.f32 %v818, %v819
        %v821 = vsel %vm451, %v760, 0.0
        %v822 = vadd.f32 %v820, %v821
        %v823 = vsel %vm451, %v761, 0.0
        %v824 = vadd.f32 %v822, %v823
        %v825 = vrot.slane %v824, 4
        %v826 = vadd.f32 %v824, %v825
        %v827 = vrot.slane %v826, 2
        %v828 = vadd.f32 %v826, %v827
        %v829 = vrot.slane %v828, 1
        %v830 = vadd.f32 %v828, %v829
        %v832 = vsel %vm451, %v830, 0
        %834 = vmatprep.subr.mxu0 0.0
        %835 = vmatpush1.msra.mxu0 %v443
        %836 = vmatprep.subr.mxu0 0.0
        %837 = vmatpush1.msra.mxu0 %v444
        %838 = vmatprep.subr.mxu0 0.0
        %839 = vmatpush1.msra.mxu0 %v445
        %840 = vmatprep.subr.mxu0 0.0
        %841 = vmatpush1.msra.mxu0 %v446
        %842 = vmatprep.subr.mxu0 0.0
        %843 = vmatpush1.msra.mxu0 %v447
        %844 = vmatprep.subr.mxu0 0.0
        %845 = vmatpush1.msra.mxu0 %v448
        %846 = vmatprep.subr.mxu0 0.0
        %847 = vmatpush1.msra.mxu0 %v449
        %848 = vmatprep.subr.mxu0 0.0
        %849 = vmatpush1.msra.mxu0 %v450
        %850 = vmatprep.subr.mxu0 0.0
        %851 = vmatpush1.msra.mxu0 0.0
        %852 = vmatprep.subr.mxu0 0.0
        %853 = vmatpush1.msra.mxu0 0.0
        %854 = vmatprep.subr.mxu0 0.0
        %855 = vmatpush1.msra.mxu0 0.0
        %856 = vmatprep.subr.mxu0 0.0
        %857 = vmatpush1.msra.mxu0 0.0
        %858 = vmatprep.subr.mxu0 0.0
        %859 = vmatpush1.msra.mxu0 0.0
        %860 = vmatprep.subr.mxu0 0.0
        %861 = vmatpush1.msra.mxu0 0.0
        %862 = vmatprep.subr.mxu0 0.0
        %863 = vmatpush1.msra.mxu0 0.0
        %864 = vmatprep.subr.mxu0 0.0
        %865 = vmatpush1.msra.mxu0 0.0
        %866 = vmatprep.subr.mxu0 0.0
        %867 = vmatpush1.msra.mxu0 0.0
        %868 = vmatprep.subr.mxu0 0.0
        %869 = vmatpush1.msra.mxu0 0.0
        %870 = vmatprep.subr.mxu0 0.0
        %871 = vmatpush1.msra.mxu0 0.0
        %872 = vmatprep.subr.mxu0 0.0
        %873 = vmatpush1.msra.mxu0 0.0
        %874 = vmatprep.subr.mxu0 0.0
        %875 = vmatpush1.msra.mxu0 0.0
        %876 = vmatprep.subr.mxu0 0.0
        %877 = vmatpush1.msra.mxu0 0.0
        %878 = vmatprep.subr.mxu0 0.0
        %879 = vmatpush1.msra.mxu0 0.0
        %880 = vmatprep.subr.mxu0 0.0
        %881 = vmatpush1.msra.mxu0 0.0
        %882 = vmatprep.subr.mxu0 0.0
        %883 = vmatpush1.msra.mxu0 0.0
        %884 = vmatprep.subr.mxu0 0.0
        %885 = vmatpush1.msra.mxu0 0.0
        %886 = vmatprep.subr.mxu0 0.0
        %887 = vmatpush1.msra.mxu0 0.0
        %888 = vmatprep.subr.mxu0 0.0
        %889 = vmatpush1.msra.mxu0 0.0
        %890 = vmatprep.subr.mxu0 0.0
        %891 = vmatpush1.msra.mxu0 0.0
        %892 = vmatprep.subr.mxu0 0.0
        %893 = vmatpush1.msra.mxu0 0.0
        %894 = vmatprep.subr.mxu0 0.0
        %895 = vmatpush1.msra.mxu0 0.0
        %896 = vmatprep.subr.mxu0 0.0
        %897 = vmatpush1.msra.mxu0 0.0
        %898 = vmatprep.mubr.f32.mxu0 0.0
        %899 = vmatmul.mubr.f32.gmra.mrb[0].mxu0 %v832
        %v900 = vpop.f32.mrb[0].mxu0
        %v901 = vadd.f32 0.0, %v900
        %v902 = vpop.f32.mrb[0].mxu0
        %903 = vdwg.mxu0
        %v904 = vmul.f32 %v901, %v594
        %v906 = vsel %vm596, %v904, 0
        %908 = vmatprep.subr.mxu0 0.0
        %909 = vmatpush1.xpose.msra.mxu0 %v601
        %910 = vmatprep.subr.mxu0 0.0
        %911 = vmatpush1.xpose.msra.mxu0 %v604
        %912 = vmatprep.subr.mxu0 0.0
        %913 = vmatpush1.xpose.msra.mxu0 %v607
        %914 = vmatprep.subr.mxu0 0.0
        %915 = vmatpush1.xpose.msra.mxu0 %v610
        %916 = vmatprep.subr.mxu0 0.0
        %917 = vmatpush1.xpose.msra.mxu0 %v613
        %918 = vmatprep.subr.mxu0 0.0
        %919 = vmatpush1.xpose.msra.mxu0 %v616
        %920 = vmatprep.subr.mxu0 0.0
        %921 = vmatpush1.xpose.msra.mxu0 %v619
        %922 = vmatprep.subr.mxu0 0.0
        %923 = vmatpush1.xpose.msra.mxu0 %v622
        %924 = vmatprep.subr.mxu0 0.0
        %925 = vmatpush1.xpose.msra.mxu0 0.0
        %926 = vmatprep.subr.mxu0 0.0
        %927 = vmatpush1.xpose.msra.mxu0 0.0
        %928 = vmatprep.subr.mxu0 0.0
        %929 = vmatpush1.xpose.msra.mxu0 0.0
        %930 = vmatprep.subr.mxu0 0.0
        %931 = vmatpush1.xpose.msra.mxu0 0.0
        %932 = vmatprep.subr.mxu0 0.0
        %933 = vmatpush1.xpose.msra.mxu0 0.0
        %934 = vmatprep.subr.mxu0 0.0
        %935 = vmatpush1.xpose.msra.mxu0 0.0
        %936 = vmatprep.subr.mxu0 0.0
        %937 = vmatpush1.xpose.msra.mxu0 0.0
        %938 = vmatprep.subr.mxu0 0.0
        %939 = vmatpush1.xpose.msra.mxu0 0.0
        %940 = vmatprep.subr.mxu0 0.0
        %941 = vmatpush1.xpose.msra.mxu0 0.0
        %942 = vmatprep.subr.mxu0 0.0
        %943 = vmatpush1.xpose.msra.mxu0 0.0
        %944 = vmatprep.subr.mxu0 0.0
        %945 = vmatpush1.xpose.msra.mxu0 0.0
        %946 = vmatprep.subr.mxu0 0.0
        %947 = vmatpush1.xpose.msra.mxu0 0.0
        %948 = vmatprep.subr.mxu0 0.0
        %949 = vmatpush1.xpose.msra.mxu0 0.0
        %950 = vmatprep.subr.mxu0 0.0
        %951 = vmatpush1.xpose.msra.mxu0 0.0
        %952 = vmatprep.subr.mxu0 0.0
        %953 = vmatpush1.xpose.msra.mxu0 0.0
        %954 = vmatprep.subr.mxu0 0.0
        %955 = vmatpush1.xpose.msra.mxu0 0.0
        %956 = vmatprep.subr.mxu0 0.0
        %957 = vmatpush1.xpose.msra.mxu0 0.0
        %958 = vmatprep.subr.mxu0 0.0
        %959 = vmatpush1.xpose.msra.mxu0 0.0
        %960 = vmatprep.subr.mxu0 0.0
        %961 = vmatpush1.xpose.msra.mxu0 0.0
        %962 = vmatprep.subr.mxu0 0.0
        %963 = vmatpush1.xpose.msra.mxu0 0.0
        %964 = vmatprep.subr.mxu0 0.0
        %965 = vmatpush1.xpose.msra.mxu0 0.0
        %966 = vmatprep.subr.mxu0 0.0
        %967 = vmatpush1.xpose.msra.mxu0 0.0
        %968 = vmatprep.subr.mxu0 0.0
        %969 = vmatpush1.xpose.msra.mxu0 0.0
        %970 = vmatprep.subr.mxu0 0.0
        %971 = vmatpush1.xpose.msra.mxu0 0.0
        %972 = vmatprep.mubr.f32.mxu0 0.0
        %973 = vmatmul.mubr.f32.gmra.mrb[0].mxu0 %v906
        %v974 = vpop.f32.mrb[0].mxu0
        %v975 = vadd.f32 1e-05, %v974
        %v976 = vpop.f32.mrb[0].mxu0
        %977 = vdwg.mxu0
        %v978 = vrsqrt.pop %v975
        %v979 = vld [vmem:[%s1] sm:$0x1]
        %v980 = vmul.f32 %v978, %v979
        %v981 = vlaneseq
        %v982 = vshrl.u32 %v981, 7
        %v983 = vsub.s32 0, %v982
        %v984 = vrot.slane %v980, %v983
        %v985 = vmul.f32 %v698, %v984
        %v986 = vmul.f32 %v699, %v984
        %v987 = vmul.f32 %v700, %v984
        %v988 = vmul.f32 %v701, %v984
        %v989 = vmul.f32 %v702, %v984
        %v990 = vmul.f32 %v703, %v984
        %v991 = vmul.f32 %v704, %v984
        %v992 = vmul.f32 %v705, %v984
        %v993 = vmul.f32 %v706, %v984
        %v994 = vmul.f32 %v707, %v984
        %v995 = vmul.f32 %v708, %v984
        %v996 = vmul.f32 %v709, %v984
        %v997 = vmul.f32 %v710, %v984
        %v998 = vmul.f32 %v711, %v984
        %v999 = vmul.f32 %v712, %v984
        %v1000 = vmul.f32 %v713, %v984
        %v1001 = vmul.f32 %v714, %v984
        %v1002 = vmul.f32 %v715, %v984
        %v1003 = vmul.f32 %v716, %v984
        %v1004 = vmul.f32 %v717, %v984
        %v1005 = vmul.f32 %v718, %v984
        %v1006 = vmul.f32 %v719, %v984
        %v1007 = vmul.f32 %v720, %v984
        %v1008 = vmul.f32 %v721, %v984
        %v1009 = vmul.f32 %v722, %v984
        %v1010 = vmul.f32 %v723, %v984
        %v1011 = vmul.f32 %v724, %v984
        %v1012 = vmul.f32 %v725, %v984
        %v1013 = vmul.f32 %v726, %v984
        %v1014 = vmul.f32 %v727, %v984
        %v1015 = vmul.f32 %v728, %v984
        %v1016 = vmul.f32 %v729, %v984
        %v1017 = vld [vmem:[%s2] sm:$0x1]
        %v1019 = vlaneseq
        %v1020 = vshrl.u32 %v1019, 7
        %v1021 = vsub.s32 0, %v1020
        %v1022 = vrot.slane %v1017, %v1021
        %v1024 = vadd.f32 %v985, %v1022
        %v1025 = vadd.f32 %v986, %v1022
        %v1026 = vadd.f32 %v987, %v1022
        %v1027 = vadd.f32 %v988, %v1022
        %v1028 = vadd.f32 %v989, %v1022
        %v1029 = vadd.f32 %v990, %v1022
        %v1030 = vadd.f32 %v991, %v1022
        %v1031 = vadd.f32 %v992, %v1022
        %v1032 = vadd.f32 %v993, %v1022
        %v1033 = vadd.f32 %v994, %v1022
        %v1034 = vadd.f32 %v995, %v1022
        %v1035 = vadd.f32 %v996, %v1022
        %v1036 = vadd.f32 %v997, %v1022
        %v1037 = vadd.f32 %v998, %v1022
        %v1038 = vadd.f32 %v999, %v1022
        %v1039 = vadd.f32 %v1000, %v1022
        %v1040 = vadd.f32 %v1001, %v1022
        %v1041 = vadd.f32 %v1002, %v1022
        %v1042 = vadd.f32 %v1003, %v1022
        %v1043 = vadd.f32 %v1004, %v1022
        %v1044 = vadd.f32 %v1005, %v1022
        %v1045 = vadd.f32 %v1006, %v1022
        %v1046 = vadd.f32 %v1007, %v1022
        %v1047 = vadd.f32 %v1008, %v1022
        %v1048 = vadd.f32 %v1009, %v1022
        %v1049 = vadd.f32 %v1010, %v1022
        %v1050 = vadd.f32 %v1011, %v1022
        %v1051 = vadd.f32 %v1012, %v1022
        %v1052 = vadd.f32 %v1013, %v1022
        %v1053 = vadd.f32 %v1014, %v1022
        %v1054 = vadd.f32 %v1015, %v1022
        %v1055 = vadd.f32 %v1016, %v1022
        %v1056 = vxor.u32 %v1024, 2147483648
        %v1057 = vxor.u32 %v1025, 2147483648
        %v1058 = vxor.u32 %v1026, 2147483648
        %v1059 = vxor.u32 %v1027, 2147483648
        %v1060 = vxor.u32 %v1028, 2147483648
        %v1061 = vxor.u32 %v1029, 2147483648
        %v1062 = vxor.u32 %v1030, 2147483648
        %v1063 = vxor.u32 %v1031, 2147483648
        %v1064 = vxor.u32 %v1032, 2147483648
        %v1065 = vxor.u32 %v1033, 2147483648
        %v1066 = vxor.u32 %v1034, 2147483648
        %v1067 = vxor.u32 %v1035, 2147483648
        %v1068 = vxor.u32 %v1036, 2147483648
        %v1069 = vxor.u32 %v1037, 2147483648
        %v1070 = vxor.u32 %v1038, 2147483648
        %v1071 = vxor.u32 %v1039, 2147483648
        %v1072 = vxor.u32 %v1040, 2147483648
        %v1073 = vxor.u32 %v1041, 2147483648
        %v1074 = vxor.u32 %v1042, 2147483648
        %v1075 = vxor.u32 %v1043, 2147483648
        %v1076 = vxor.u32 %v1044, 2147483648
        %v1077 = vxor.u32 %v1045, 2147483648
        %v1078 = vxor.u32 %v1046, 2147483648
        %v1079 = vxor.u32 %v1047, 2147483648
        %v1080 = vxor.u32 %v1048, 2147483648
        %v1081 = vxor.u32 %v1049, 2147483648
        %v1082 = vxor.u32 %v1050, 2147483648
        %v1083 = vxor.u32 %v1051, 2147483648
        %v1084 = vxor.u32 %v1052, 2147483648
        %v1085 = vxor.u32 %v1053, 2147483648
        %v1086 = vxor.u32 %v1054, 2147483648
        %v1087 = vxor.u32 %v1055, 2147483648
        %v1088 = vmul.f32 %v1056, 1.442695
        %v1089 = vpow.pop %v1088
        %v1090 = vmul.f32 %v1057, 1.442695
        %v1091 = vpow.pop %v1090
        %v1092 = vmul.f32 %v1058, 1.442695
        %v1093 = vpow.pop %v1092
        %v1094 = vmul.f32 %v1059, 1.442695
        %v1095 = vpow.pop %v1094
        %v1096 = vmul.f32 %v1060, 1.442695
        %v1097 = vpow.pop %v1096
        %v1098 = vmul.f32 %v1061, 1.442695
        %v1099 = vpow.pop %v1098
        %v1100 = vmul.f32 %v1062, 1.442695
        %v1101 = vpow.pop %v1100
        %v1102 = vmul.f32 %v1063, 1.442695
        %v1103 = vpow.pop %v1102
        %v1104 = vmul.f32 %v1064, 1.442695
        %v1105 = vpow.pop %v1104
        %v1106 = vmul.f32 %v1065, 1.442695
        %v1107 = vpow.pop %v1106
        %v1108 = vmul.f32 %v1066, 1.442695
        %v1109 = vpow.pop %v1108
        %v1110 = vmul.f32 %v1067, 1.442695
        %v1111 = vpow.pop %v1110
        %v1112 = vmul.f32 %v1068, 1.442695
        %v1113 = vpow.pop %v1112
        %v1114 = vmul.f32 %v1069, 1.442695
        %v1115 = vpow.pop %v1114
        %v1116 = vmul.f32 %v1070, 1.442695
        %v1117 = vpow.pop %v1116
        %v1118 = vmul.f32 %v1071, 1.442695
        %v1119 = vpow.pop %v1118
        %v1120 = vmul.f32 %v1072, 1.442695
        %v1121 = vpow.pop %v1120
        %v1122 = vmul.f32 %v1073, 1.442695
        %v1123 = vpow.pop %v1122
        %v1124 = vmul.f32 %v1074, 1.442695
        %v1125 = vpow.pop %v1124
        %v1126 = vmul.f32 %v1075, 1.442695
        %v1127 = vpow.pop %v1126
        %v1128 = vmul.f32 %v1076, 1.442695
        %v1129 = vpow.pop %v1128
        %v1130 = vmul.f32 %v1077, 1.442695
        %v1131 = vpow.pop %v1130
        %v1132 = vmul.f32 %v1078, 1.442695
        %v1133 = vpow.pop %v1132
        %v1134 = vmul.f32 %v1079, 1.442695
        %v1135 = vpow.pop %v1134
        %v1136 = vmul.f32 %v1080, 1.442695
        %v1137 = vpow.pop %v1136
        %v1138 = vmul.f32 %v1081, 1.442695
        %v1139 = vpow.pop %v1138
        %v1140 = vmul.f32 %v1082, 1.442695
        %v1141 = vpow.pop %v1140
        %v1142 = vmul.f32 %v1083, 1.442695
        %v1143 = vpow.pop %v1142
        %v1144 = vmul.f32 %v1084, 1.442695
        %v1145 = vpow.pop %v1144
        %v1146 = vmul.f32 %v1085, 1.442695
        %v1147 = vpow.pop %v1146
        %v1148 = vmul.f32 %v1086, 1.442695
        %v1149 = vpow.pop %v1148
        %v1150 = vmul.f32 %v1087, 1.442695
        %v1151 = vpow.pop %v1150
        %v1152 = vadd.f32 %v1089, 1.0
        %v1153 = vadd.f32 %v1091, 1.0
        %v1154 = vadd.f32 %v1093, 1.0
        %v1155 = vadd.f32 %v1095, 1.0
        %v1156 = vadd.f32 %v1097, 1.0
        %v1157 = vadd.f32 %v1099, 1.0
        %v1158 = vadd.f32 %v1101, 1.0
        %v1159 = vadd.f32 %v1103, 1.0
        %v1160 = vadd.f32 %v1105, 1.0
        %v1161 = vadd.f32 %v1107, 1.0
        %v1162 = vadd.f32 %v1109, 1.0
        %v1163 = vadd.f32 %v1111, 1.0
        %v1164 = vadd.f32 %v1113, 1.0
        %v1165 = vadd.f32 %v1115, 1.0
        %v1166 = vadd.f32 %v1117, 1.0
        %v1167 = vadd.f32 %v1119, 1.0
        %v1168 = vadd.f32 %v1121, 1.0
        %v1169 = vadd.f32 %v1123, 1.0
        %v1170 = vadd.f32 %v1125, 1.0
        %v1171 = vadd.f32 %v1127, 1.0
        %v1172 = vadd.f32 %v1129, 1.0
        %v1173 = vadd.f32 %v1131, 1.0
        %v1174 = vadd.f32 %v1133, 1.0
        %v1175 = vadd.f32 %v1135, 1.0
        %v1176 = vadd.f32 %v1137, 1.0
        %v1177 = vadd.f32 %v1139, 1.0
        %v1178 = vadd.f32 %v1141, 1.0
        %v1179 = vadd.f32 %v1143, 1.0
        %v1180 = vadd.f32 %v1145, 1.0
        %v1181 = vadd.f32 %v1147, 1.0
        %v1182 = vadd.f32 %v1149, 1.0
        %v1183 = vadd.f32 %v1151, 1.0
        %v1184 = vrcp.pop %v1152
        %v1185 = vmul.f32 1.0, %v1184
        %v1186 = vrcp.pop %v1153
        %v1187 = vmul.f32 1.0, %v1186
        %v1188 = vrcp.pop %v1154
        %v1189 = vmul.f32 1.0, %v1188
        %v1190 = vrcp.pop %v1155
        %v1191 = vmul.f32 1.0, %v1190
        %v1192 = vrcp.pop %v1156
        %v1193 = vmul.f32 1.0, %v1192
        %v1194 = vrcp.pop %v1157
        %v1195 = vmul.f32 1.0, %v1194
        %v1196 = vrcp.pop %v1158
        %v1197 = vmul.f32 1.0, %v1196
        %v1198 = vrcp.pop %v1159
        %v1199 = vmul.f32 1.0, %v1198
        %v1200 = vrcp.pop %v1160
        %v1201 = vmul.f32 1.0, %v1200
        %v1202 = vrcp.pop %v1161
        %v1203 = vmul.f32 1.0, %v1202
        %v1204 = vrcp.pop %v1162
        %v1205 = vmul.f32 1.0, %v1204
        %v1206 = vrcp.pop %v1163
        %v1207 = vmul.f32 1.0, %v1206
        %v1208 = vrcp.pop %v1164
        %v1209 = vmul.f32 1.0, %v1208
        %v1210 = vrcp.pop %v1165
        %v1211 = vmul.f32 1.0, %v1210
        %v1212 = vrcp.pop %v1166
        %v1213 = vmul.f32 1.0, %v1212
        %v1214 = vrcp.pop %v1167
        %v1215 = vmul.f32 1.0, %v1214
        %v1216 = vrcp.pop %v1168
        %v1217 = vmul.f32 1.0, %v1216
        %v1218 = vrcp.pop %v1169
        %v1219 = vmul.f32 1.0, %v1218
        %v1220 = vrcp.pop %v1170
        %v1221 = vmul.f32 1.0, %v1220
        %v1222 = vrcp.pop %v1171
        %v1223 = vmul.f32 1.0, %v1222
        %v1224 = vrcp.pop %v1172
        %v1225 = vmul.f32 1.0, %v1224
        %v1226 = vrcp.pop %v1173
        %v1227 = vmul.f32 1.0, %v1226
        %v1228 = vrcp.pop %v1174
        %v1229 = vmul.f32 1.0, %v1228
        %v1230 = vrcp.pop %v1175
        %v1231 = vmul.f32 1.0, %v1230
        %v1232 = vrcp.pop %v1176
        %v1233 = vmul.f32 1.0, %v1232
        %v1234 = vrcp.pop %v1177
        %v1235 = vmul.f32 1.0, %v1234
        %v1236 = vrcp.pop %v1178
        %v1237 = vmul.f32 1.0, %v1236
        %v1238 = vrcp.pop %v1179
        %v1239 = vmul.f32 1.0, %v1238
        %v1240 = vrcp.pop %v1180
        %v1241 = vmul.f32 1.0, %v1240
        %v1242 = vrcp.pop %v1181
        %v1243 = vmul.f32 1.0, %v1242
        %v1244 = vrcp.pop %v1182
        %v1245 = vmul.f32 1.0, %v1244
        %v1246 = vrcp.pop %v1183
        %v1247 = vmul.f32 1.0, %v1246
        %v1248 = vmul.f32 %v1024, %v1185
        %v1249 = vmul.f32 %v1025, %v1187
        %v1250 = vmul.f32 %v1026, %v1189
        %v1251 = vmul.f32 %v1027, %v1191
        %v1252 = vmul.f32 %v1028, %v1193
        %v1253 = vmul.f32 %v1029, %v1195
        %v1254 = vmul.f32 %v1030, %v1197
        %v1255 = vmul.f32 %v1031, %v1199
        %v1256 = vmul.f32 %v1032, %v1201
        %v1257 = vmul.f32 %v1033, %v1203
        %v1258 = vmul.f32 %v1034, %v1205
        %v1259 = vmul.f32 %v1035, %v1207
        %v1260 = vmul.f32 %v1036, %v1209
        %v1261 = vmul.f32 %v1037, %v1211
        %v1262 = vmul.f32 %v1038, %v1213
        %v1263 = vmul.f32 %v1039, %v1215
        %v1264 = vmul.f32 %v1040, %v1217
        %v1265 = vmul.f32 %v1041, %v1219
        %v1266 = vmul.f32 %v1042, %v1221
        %v1267 = vmul.f32 %v1043, %v1223
        %v1268 = vmul.f32 %v1044, %v1225
        %v1269 = vmul.f32 %v1045, %v1227
        %v1270 = vmul.f32 %v1046, %v1229
        %v1271 = vmul.f32 %v1047, %v1231
        %v1272 = vmul.f32 %v1048, %v1233
        %v1273 = vmul.f32 %v1049, %v1235
        %v1274 = vmul.f32 %v1050, %v1237
        %v1275 = vmul.f32 %v1051, %v1239
        %v1276 = vmul.f32 %v1052, %v1241
        %v1277 = vmul.f32 %v1053, %v1243
        %v1278 = vmul.f32 %v1054, %v1245
        %v1279 = vmul.f32 %v1055, %v1247
        %v1280 = vld [vmem:[%s6] sm:$0xff]
        %v1281 = vld [vmem:[%s6 + $0x8] sm:$0xff]
        %v1282 = vld [vmem:[%s6 + $0x10] sm:$0xff]
        %v1283 = vld [vmem:[%s6 + $0x18] sm:$0xff]
        %v1284 = vld [vmem:[%s6 + $0x20] sm:$0xff]
        %v1285 = vld [vmem:[%s6 + $0x28] sm:$0xff]
        %v1286 = vld [vmem:[%s6 + $0x30] sm:$0xff]
        %v1287 = vld [vmem:[%s6 + $0x38] sm:$0xff]
        %v1288 = vld [vmem:[%s6 + $0x40] sm:$0xff]
        %v1289 = vld [vmem:[%s6 + $0x48] sm:$0xff]
        %v1290 = vld [vmem:[%s6 + $0x50] sm:$0xff]
        %v1291 = vld [vmem:[%s6 + $0x58] sm:$0xff]
        %v1292 = vld [vmem:[%s6 + $0x60] sm:$0xff]
        %v1293 = vld [vmem:[%s6 + $0x68] sm:$0xff]
        %v1294 = vld [vmem:[%s6 + $0x70] sm:$0xff]
        %v1295 = vld [vmem:[%s6 + $0x78] sm:$0xff]
        %v1296 = vld [vmem:[%s6 + $0x80] sm:$0xff]
        %v1297 = vld [vmem:[%s6 + $0x88] sm:$0xff]
        %v1298 = vld [vmem:[%s6 + $0x90] sm:$0xff]
        %v1299 = vld [vmem:[%s6 + $0x98] sm:$0xff]
        %v1300 = vld [vmem:[%s6 + $0xa0] sm:$0xff]
        %v1301 = vld [vmem:[%s6 + $0xa8] sm:$0xff]
        %v1302 = vld [vmem:[%s6 + $0xb0] sm:$0xff]
        %v1303 = vld [vmem:[%s6 + $0xb8] sm:$0xff]
        %v1304 = vld [vmem:[%s6 + $0xc0] sm:$0xff]
        %v1305 = vld [vmem:[%s6 + $0xc8] sm:$0xff]
        %v1306 = vld [vmem:[%s6 + $0xd0] sm:$0xff]
        %v1307 = vld [vmem:[%s6 + $0xd8] sm:$0xff]
        %v1308 = vld [vmem:[%s6 + $0xe0] sm:$0xff]
        %v1309 = vld [vmem:[%s6 + $0xe8] sm:$0xff]
        %v1310 = vld [vmem:[%s6 + $0xf0] sm:$0xff]
        %v1311 = vld [vmem:[%s6 + $0xf8] sm:$0xff]
        %vm1315 = vcmask 1040384
        %v1316 = vrot.slane %v1277, 7
        %v1317 = vrot.slane %v1278, 7
        %v1318 = vsel %vm1315, %v1316, %v1317
        %v1319 = vrot.slane %v1279, 7
        %v1320 = vsel %vm1315, %v1317, %v1319
        %v1353 = vrot.slane %v1248, 7
        %v1354 = vrot.slane %v1249, 7
        %v1355 = vsel %vm1315, %v1353, %v1354
        %v1356 = vrot.slane %v1250, 7
        %v1357 = vsel %vm1315, %v1354, %v1356
        %v1358 = vrot.slane %v1251, 7
        %v1359 = vsel %vm1315, %v1356, %v1358
        %v1360 = vrot.slane %v1252, 7
        %v1361 = vsel %vm1315, %v1358, %v1360
        %v1362 = vrot.slane %v1253, 7
        %v1363 = vsel %vm1315, %v1360, %v1362
        %v1364 = vrot.slane %v1254, 7
        %v1365 = vsel %vm1315, %v1362, %v1364
        %v1366 = vrot.slane %v1255, 7
        %v1367 = vsel %vm1315, %v1364, %v1366
        %v1368 = vrot.slane %v1256, 7
        %v1369 = vsel %vm1315, %v1366, %v1368
        %v1370 = vrot.slane %v1257, 7
        %v1371 = vsel %vm1315, %v1368, %v1370
        %v1372 = vrot.slane %v1258, 7
        %v1373 = vsel %vm1315, %v1370, %v1372
        %v1374 = vrot.slane %v1259, 7
        %v1375 = vsel %vm1315, %v1372, %v1374
        %v1376 = vrot.slane %v1260, 7
        %v1377 = vsel %vm1315, %v1374, %v1376
        %v1378 = vrot.slane %v1261, 7
        %v1379 = vsel %vm1315, %v1376, %v1378
        %v1380 = vrot.slane %v1262, 7
        %v1381 = vsel %vm1315, %v1378, %v1380
        %v1382 = vrot.slane %v1263, 7
        %v1383 = vsel %vm1315, %v1380, %v1382
        %v1384 = vrot.slane %v1264, 7
        %v1385 = vsel %vm1315, %v1382, %v1384
        %v1386 = vrot.slane %v1265, 7
        %v1387 = vsel %vm1315, %v1384, %v1386
        %v1388 = vrot.slane %v1266, 7
        %v1389 = vsel %vm1315, %v1386, %v1388
        %v1390 = vrot.slane %v1267, 7
        %v1391 = vsel %vm1315, %v1388, %v1390
        %v1392 = vrot.slane %v1268, 7
        %v1393 = vsel %vm1315, %v1390, %v1392
        %v1394 = vrot.slane %v1269, 7
        %v1395 = vsel %vm1315, %v1392, %v1394
        %v1396 = vrot.slane %v1270, 7
        %v1397 = vsel %vm1315, %v1394, %v1396
        %v1398 = vrot.slane %v1271, 7
        %v1399 = vsel %vm1315, %v1396, %v1398
        %v1400 = vrot.slane %v1272, 7
        %v1401 = vsel %vm1315, %v1398, %v1400
        %v1402 = vrot.slane %v1273, 7
        %v1403 = vsel %vm1315, %v1400, %v1402
        %v1404 = vrot.slane %v1274, 7
        %v1405 = vsel %vm1315, %v1402, %v1404
        %v1406 = vrot.slane %v1275, 7
        %v1407 = vsel %vm1315, %v1404, %v1406
        %v1408 = vrot.slane %v1276, 7
        %v1409 = vsel %vm1315, %v1406, %v1408
        %v1410 = vsel %vm1315, %v1408, %v1316
        %v1441 = vsel %vm1315, %v1319, %v1353
        %1443 = vset.pattern.permute.xlu0 0
        %1444 = vperm.xlu0 %1443, %v1280
        %v1445 = vpop.permute.xlu0 %1444
        %1448 = vset.pattern.permute.xlu0 0
        %1449 = vperm.xlu0 %1448, %v1281
        %v1450 = vpop.permute.xlu0 %1449
        %1453 = vset.pattern.permute.xlu0 0
        %1454 = vperm.xlu0 %1453, %v1282
        %v1455 = vpop.permute.xlu0 %1454
        %1458 = vset.pattern.permute.xlu0 0
        %1459 = vperm.xlu0 %1458, %v1283
        %v1460 = vpop.permute.xlu0 %1459
        %1463 = vset.pattern.permute.xlu0 0
        %1464 = vperm.xlu0 %1463, %v1284
        %v1465 = vpop.permute.xlu0 %1464
        %1468 = vset.pattern.permute.xlu0 0
        %1469 = vperm.xlu0 %1468, %v1285
        %v1470 = vpop.permute.xlu0 %1469
        %1473 = vset.pattern.permute.xlu0 0
        %1474 = vperm.xlu0 %1473, %v1286
        %v1475 = vpop.permute.xlu0 %1474
        %1478 = vset.pattern.permute.xlu0 0
        %1479 = vperm.xlu0 %1478, %v1287
        %v1480 = vpop.permute.xlu0 %1479
        %1483 = vset.pattern.permute.xlu0 0
        %1484 = vperm.xlu0 %1483, %v1288
        %v1485 = vpop.permute.xlu0 %1484
        %1488 = vset.pattern.permute.xlu0 0
        %1489 = vperm.xlu0 %1488, %v1289
        %v1490 = vpop.permute.xlu0 %1489
        %1493 = vset.pattern.permute.xlu0 0
        %1494 = vperm.xlu0 %1493, %v1290
        %v1495 = vpop.permute.xlu0 %1494
        %1498 = vset.pattern.permute.xlu0 0
        %1499 = vperm.xlu0 %1498, %v1291
        %v1500 = vpop.permute.xlu0 %1499
        %1503 = vset.pattern.permute.xlu0 0
        %1504 = vperm.xlu0 %1503, %v1292
        %v1505 = vpop.permute.xlu0 %1504
        %1508 = vset.pattern.permute.xlu0 0
        %1509 = vperm.xlu0 %1508, %v1293
        %v1510 = vpop.permute.xlu0 %1509
        %1513 = vset.pattern.permute.xlu0 0
        %1514 = vperm.xlu0 %1513, %v1294
        %v1515 = vpop.permute.xlu0 %1514
        %1518 = vset.pattern.permute.xlu0 0
        %1519 = vperm.xlu0 %1518, %v1295
        %v1520 = vpop.permute.xlu0 %1519
        %1523 = vset.pattern.permute.xlu0 0
        %1524 = vperm.xlu0 %1523, %v1296
        %v1525 = vpop.permute.xlu0 %1524
        %1528 = vset.pattern.permute.xlu0 0
        %1529 = vperm.xlu0 %1528, %v1297
        %v1530 = vpop.permute.xlu0 %1529
        %1533 = vset.pattern.permute.xlu0 0
        %1534 = vperm.xlu0 %1533, %v1298
        %v1535 = vpop.permute.xlu0 %1534
        %1538 = vset.pattern.permute.xlu0 0
        %1539 = vperm.xlu0 %1538, %v1299
        %v1540 = vpop.permute.xlu0 %1539
        %1543 = vset.pattern.permute.xlu0 0
        %1544 = vperm.xlu0 %1543, %v1300
        %v1545 = vpop.permute.xlu0 %1544
        %1548 = vset.pattern.permute.xlu0 0
        %1549 = vperm.xlu0 %1548, %v1301
        %v1550 = vpop.permute.xlu0 %1549
        %1553 = vset.pattern.permute.xlu0 0
        %1554 = vperm.xlu0 %1553, %v1302
        %v1555 = vpop.permute.xlu0 %1554
        %1558 = vset.pattern.permute.xlu0 0
        %1559 = vperm.xlu0 %1558, %v1303
        %v1560 = vpop.permute.xlu0 %1559
        %1563 = vset.pattern.permute.xlu0 0
        %1564 = vperm.xlu0 %1563, %v1304
        %v1565 = vpop.permute.xlu0 %1564
        %1568 = vset.pattern.permute.xlu0 0
        %1569 = vperm.xlu0 %1568, %v1305
        %v1570 = vpop.permute.xlu0 %1569
        %1573 = vset.pattern.permute.xlu0 0
        %1574 = vperm.xlu0 %1573, %v1306
        %v1575 = vpop.permute.xlu0 %1574
        %1578 = vset.pattern.permute.xlu0 0
        %1579 = vperm.xlu0 %1578, %v1307
        %v1580 = vpop.permute.xlu0 %1579
        %1583 = vset.pattern.permute.xlu0 0
        %1584 = vperm.xlu0 %1583, %v1308
        %v1585 = vpop.permute.xlu0 %1584
        %1588 = vset.pattern.permute.xlu0 0
        %1589 = vperm.xlu0 %1588, %v1309
        %v1590 = vpop.permute.xlu0 %1589
        %1593 = vset.pattern.permute.xlu0 0
        %1594 = vperm.xlu0 %1593, %v1310
        %v1595 = vpop.permute.xlu0 %1594
        %1598 = vset.pattern.permute.xlu0 0
        %1599 = vperm.xlu0 %1598, %v1311
        %v1600 = vpop.permute.xlu0 %1599
        %v1602 = vmul.f32 %v1318, %v1445
        %v1603 = vmul.f32 %v1320, %v1450
        %v1604 = vmul.f32 %v1441, %v1455
        %v1605 = vmul.f32 %v1355, %v1460
        %v1606 = vmul.f32 %v1357, %v1465
        %v1607 = vmul.f32 %v1359, %v1470
        %v1608 = vmul.f32 %v1361, %v1475
        %v1609 = vmul.f32 %v1363, %v1480
        %v1610 = vmul.f32 %v1365, %v1485
        %v1611 = vmul.f32 %v1367, %v1490
        %v1612 = vmul.f32 %v1369, %v1495
        %v1613 = vmul.f32 %v1371, %v1500
        %v1614 = vmul.f32 %v1373, %v1505
        %v1615 = vmul.f32 %v1375, %v1510
        %v1616 = vmul.f32 %v1377, %v1515
        %v1617 = vmul.f32 %v1379, %v1520
        %v1618 = vmul.f32 %v1381, %v1525
        %v1619 = vmul.f32 %v1383, %v1530
        %v1620 = vmul.f32 %v1385, %v1535
        %v1621 = vmul.f32 %v1387, %v1540
        %v1622 = vmul.f32 %v1389, %v1545
        %v1623 = vmul.f32 %v1391, %v1550
        %v1624 = vmul.f32 %v1393, %v1555
        %v1625 = vmul.f32 %v1395, %v1560
        %v1626 = vmul.f32 %v1397, %v1565
        %v1627 = vmul.f32 %v1399, %v1570
        %v1628 = vmul.f32 %v1401, %v1575
        %v1629 = vmul.f32 %v1403, %v1580
        %v1630 = vmul.f32 %v1405, %v1585
        %v1631 = vmul.f32 %v1407, %v1590
        %v1632 = vmul.f32 %v1409, %v1595
        %v1633 = vmul.f32 %v1410, %v1600
        %v1634 = vpack.c.bf16 %v1603, %v1602
        %v1635 = vpack.c.bf16 %v1605, %v1604
        %v1636 = vpack.c.bf16 %v1607, %v1606
        %v1637 = vpack.c.bf16 %v1609, %v1608
        %v1638 = vpack.c.bf16 %v1611, %v1610
        %v1639 = vpack.c.bf16 %v1613, %v1612
        %v1640 = vpack.c.bf16 %v1615, %v1614
        %v1641 = vpack.c.bf16 %v1617, %v1616
        %v1642 = vpack.c.bf16 %v1619, %v1618
        %v1643 = vpack.c.bf16 %v1621, %v1620
        %v1644 = vpack.c.bf16 %v1623, %v1622
        %v1645 = vpack.c.bf16 %v1625, %v1624
        %v1646 = vpack.c.bf16 %v1627, %v1626
        %v1647 = vpack.c.bf16 %v1629, %v1628
        %v1648 = vpack.c.bf16 %v1631, %v1630
        %v1649 = vpack.c.bf16 %v1633, %v1632
        %1650 = vset.pattern.permute.xlu0 1
        %1651 = vperm.xlu0 %1650, %v1280
        %v1652 = vpop.permute.xlu0 %1651
        %1654 = vset.pattern.permute.xlu0 1
        %1655 = vperm.xlu0 %1654, %v1281
        %v1656 = vpop.permute.xlu0 %1655
        %1658 = vset.pattern.permute.xlu0 1
        %1659 = vperm.xlu0 %1658, %v1282
        %v1660 = vpop.permute.xlu0 %1659
        %1662 = vset.pattern.permute.xlu0 1
        %1663 = vperm.xlu0 %1662, %v1283
        %v1664 = vpop.permute.xlu0 %1663
        %1666 = vset.pattern.permute.xlu0 1
        %1667 = vperm.xlu0 %1666, %v1284
        %v1668 = vpop.permute.xlu0 %1667
        %1670 = vset.pattern.permute.xlu0 1
        %1671 = vperm.xlu0 %1670, %v1285
        %v1672 = vpop.permute.xlu0 %1671
        %1674 = vset.pattern.permute.xlu0 1
        %1675 = vperm.xlu0 %1674, %v1286
        %v1676 = vpop.permute.xlu0 %1675
        %1678 = vset.pattern.permute.xlu0 1
        %1679 = vperm.xlu0 %1678, %v1287
        %v1680 = vpop.permute.xlu0 %1679
        %1682 = vset.pattern.permute.xlu0 1
        %1683 = vperm.xlu0 %1682, %v1288
        %v1684 = vpop.permute.xlu0 %1683
        %1686 = vset.pattern.permute.xlu0 1
        %1687 = vperm.xlu0 %1686, %v1289
        %v1688 = vpop.permute.xlu0 %1687
        %1690 = vset.pattern.permute.xlu0 1
        %1691 = vperm.xlu0 %1690, %v1290
        %v1692 = vpop.permute.xlu0 %1691
        %1694 = vset.pattern.permute.xlu0 1
        %1695 = vperm.xlu0 %1694, %v1291
        %v1696 = vpop.permute.xlu0 %1695
        %1698 = vset.pattern.permute.xlu0 1
        %1699 = vperm.xlu0 %1698, %v1292
        %v1700 = vpop.permute.xlu0 %1699
        %1702 = vset.pattern.permute.xlu0 1
        %1703 = vperm.xlu0 %1702, %v1293
        %v1704 = vpop.permute.xlu0 %1703
        %1706 = vset.pattern.permute.xlu0 1
        %1707 = vperm.xlu0 %1706, %v1294
        %v1708 = vpop.permute.xlu0 %1707
        %1710 = vset.pattern.permute.xlu0 1
        %1711 = vperm.xlu0 %1710, %v1295
        %v1712 = vpop.permute.xlu0 %1711
        %1714 = vset.pattern.permute.xlu0 1
        %1715 = vperm.xlu0 %1714, %v1296
        %v1716 = vpop.permute.xlu0 %1715
        %1718 = vset.pattern.permute.xlu0 1
        %1719 = vperm.xlu0 %1718, %v1297
        %v1720 = vpop.permute.xlu0 %1719
        %1722 = vset.pattern.permute.xlu0 1
        %1723 = vperm.xlu0 %1722, %v1298
        %v1724 = vpop.permute.xlu0 %1723
        %1726 = vset.pattern.permute.xlu0 1
        %1727 = vperm.xlu0 %1726, %v1299
        %v1728 = vpop.permute.xlu0 %1727
        %1730 = vset.pattern.permute.xlu0 1
        %1731 = vperm.xlu0 %1730, %v1300
        %v1732 = vpop.permute.xlu0 %1731
        %1734 = vset.pattern.permute.xlu0 1
        %1735 = vperm.xlu0 %1734, %v1301
        %v1736 = vpop.permute.xlu0 %1735
        %1738 = vset.pattern.permute.xlu0 1
        %1739 = vperm.xlu0 %1738, %v1302
        %v1740 = vpop.permute.xlu0 %1739
        %1742 = vset.pattern.permute.xlu0 1
        %1743 = vperm.xlu0 %1742, %v1303
        %v1744 = vpop.permute.xlu0 %1743
        %1746 = vset.pattern.permute.xlu0 1
        %1747 = vperm.xlu0 %1746, %v1304
        %v1748 = vpop.permute.xlu0 %1747
        %1750 = vset.pattern.permute.xlu0 1
        %1751 = vperm.xlu0 %1750, %v1305
        %v1752 = vpop.permute.xlu0 %1751
        %1754 = vset.pattern.permute.xlu0 1
        %1755 = vperm.xlu0 %1754, %v1306
        %v1756 = vpop.permute.xlu0 %1755
        %1758 = vset.pattern.permute.xlu0 1
        %1759 = vperm.xlu0 %1758, %v1307
        %v1760 = vpop.permute.xlu0 %1759
        %1762 = vset.pattern.permute.xlu0 1
        %1763 = vperm.xlu0 %1762, %v1308
        %v1764 = vpop.permute.xlu0 %1763
        %1766 = vset.pattern.permute.xlu0 1
        %1767 = vperm.xlu0 %1766, %v1309
        %v1768 = vpop.permute.xlu0 %1767
        %1770 = vset.pattern.permute.xlu0 1
        %1771 = vperm.xlu0 %1770, %v1310
        %v1772 = vpop.permute.xlu0 %1771
        %1774 = vset.pattern.permute.xlu0 1
        %1775 = vperm.xlu0 %1774, %v1311
        %v1776 = vpop.permute.xlu0 %1775
        %v1778 = vmul.f32 %v1278, %v1652
        %v1779 = vmul.f32 %v1279, %v1656
        %v1780 = vmul.f32 %v1248, %v1660
        %v1781 = vmul.f32 %v1249, %v1664
        %v1782 = vmul.f32 %v1250, %v1668
        %v1783 = vmul.f32 %v1251, %v1672
        %v1784 = vmul.f32 %v1252, %v1676
        %v1785 = vmul.f32 %v1253, %v1680
        %v1786 = vmul.f32 %v1254, %v1684
        %v1787 = vmul.f32 %v1255, %v1688
        %v1788 = vmul.f32 %v1256, %v1692
        %v1789 = vmul.f32 %v1257, %v1696
        %v1790 = vmul.f32 %v1258, %v1700
        %v1791 = vmul.f32 %v1259, %v1704
        %v1792 = vmul.f32 %v1260, %v1708
        %v1793 = vmul.f32 %v1261, %v1712
        %v1794 = vmul.f32 %v1262, %v1716
        %v1795 = vmul.f32 %v1263, %v1720
        %v1796 = vmul.f32 %v1264, %v1724
        %v1797 = vmul.f32 %v1265, %v1728
        %v1798 = vmul.f32 %v1266, %v1732
        %v1799 = vmul.f32 %v1267, %v1736
        %v1800 = vmul.f32 %v1268, %v1740
        %v1801 = vmul.f32 %v1269, %v1744
        %v1802 = vmul.f32 %v1270, %v1748
        %v1803 = vmul.f32 %v1271, %v1752
        %v1804 = vmul.f32 %v1272, %v1756
        %v1805 = vmul.f32 %v1273, %v1760
        %v1806 = vmul.f32 %v1274, %v1764
        %v1807 = vmul.f32 %v1275, %v1768
        %v1808 = vmul.f32 %v1276, %v1772
        %v1809 = vmul.f32 %v1277, %v1776
        %v1810 = vpack.c.bf16 %v1779, %v1778
        %v1811 = vpack.c.bf16 %v1781, %v1780
        %v1812 = vpack.c.bf16 %v1783, %v1782
        %v1813 = vpack.c.bf16 %v1785, %v1784
        %v1814 = vpack.c.bf16 %v1787, %v1786
        %v1815 = vpack.c.bf16 %v1789, %v1788
        %v1816 = vpack.c.bf16 %v1791, %v1790
        %v1817 = vpack.c.bf16 %v1793, %v1792
        %v1818 = vpack.c.bf16 %v1795, %v1794
        %v1819 = vpack.c.bf16 %v1797, %v1796
        %v1820 = vpack.c.bf16 %v1799, %v1798
        %v1821 = vpack.c.bf16 %v1801, %v1800
        %v1822 = vpack.c.bf16 %v1803, %v1802
        %v1823 = vpack.c.bf16 %v1805, %v1804
        %v1824 = vpack.c.bf16 %v1807, %v1806
        %v1825 = vpack.c.bf16 %v1809, %v1808
        %vm1826 = vcmask 1046528
        %v1827 = vrot.slane %v1278, 1
        %v1828 = vrot.slane %v1279, 1
        %v1829 = vsel %vm1826, %v1827, %v1828
        %v1832 = vrot.slane %v1248, 1
        %v1833 = vrot.slane %v1249, 1
        %v1834 = vsel %vm1826, %v1832, %v1833
        %v1835 = vrot.slane %v1250, 1
        %v1836 = vsel %vm1826, %v1833, %v1835
        %v1837 = vrot.slane %v1251, 1
        %v1838 = vsel %vm1826, %v1835, %v1837
        %v1839 = vrot.slane %v1252, 1
        %v1840 = vsel %vm1826, %v1837, %v1839
        %v1841 = vrot.slane %v1253, 1
        %v1842 = vsel %vm1826, %v1839, %v1841
        %v1843 = vrot.slane %v1254, 1
        %v1844 = vsel %vm1826, %v1841, %v1843
        %v1845 = vrot.slane %v1255, 1
        %v1846 = vsel %vm1826, %v1843, %v1845
        %v1847 = vrot.slane %v1256, 1
        %v1848 = vsel %vm1826, %v1845, %v1847
        %v1849 = vrot.slane %v1257, 1
        %v1850 = vsel %vm1826, %v1847, %v1849
        %v1851 = vrot.slane %v1258, 1
        %v1852 = vsel %vm1826, %v1849, %v1851
        %v1853 = vrot.slane %v1259, 1
        %v1854 = vsel %vm1826, %v1851, %v1853
        %v1855 = vrot.slane %v1260, 1
        %v1856 = vsel %vm1826, %v1853, %v1855
        %v1857 = vrot.slane %v1261, 1
        %v1858 = vsel %vm1826, %v1855, %v1857
        %v1859 = vrot.slane %v1262, 1
        %v1860 = vsel %vm1826, %v1857, %v1859
        %v1861 = vrot.slane %v1263, 1
        %v1862 = vsel %vm1826, %v1859, %v1861
        %v1863 = vrot.slane %v1264, 1
        %v1864 = vsel %vm1826, %v1861, %v1863
        %v1865 = vrot.slane %v1265, 1
        %v1866 = vsel %vm1826, %v1863, %v1865
        %v1867 = vrot.slane %v1266, 1
        %v1868 = vsel %vm1826, %v1865, %v1867
        %v1869 = vrot.slane %v1267, 1
        %v1870 = vsel %vm1826, %v1867, %v1869
        %v1871 = vrot.slane %v1268, 1
        %v1872 = vsel %vm1826, %v1869, %v1871
        %v1873 = vrot.slane %v1269, 1
        %v1874 = vsel %vm1826, %v1871, %v1873
        %v1875 = vrot.slane %v1270, 1
        %v1876 = vsel %vm1826, %v1873, %v1875
        %v1877 = vrot.slane %v1271, 1
        %v1878 = vsel %vm1826, %v1875, %v1877
        %v1879 = vrot.slane %v1272, 1
        %v1880 = vsel %vm1826, %v1877, %v1879
        %v1881 = vrot.slane %v1273, 1
        %v1882 = vsel %vm1826, %v1879, %v1881
        %v1883 = vrot.slane %v1274, 1
        %v1884 = vsel %vm1826, %v1881, %v1883
        %v1885 = vrot.slane %v1275, 1
        %v1886 = vsel %vm1826, %v1883, %v1885
        %v1887 = vrot.slane %v1276, 1
        %v1888 = vsel %vm1826, %v1885, %v1887
        %v1889 = vrot.slane %v1277, 1
        %v1890 = vsel %vm1826, %v1887, %v1889
        %v1891 = vsel %vm1826, %v1889, %v1827
        %v1923 = vsel %vm1826, %v1828, %v1832
        %1924 = vset.pattern.permute.xlu0 2
        %1925 = vperm.xlu0 %1924, %v1280
        %v1926 = vpop.permute.xlu0 %1925
        %1928 = vset.pattern.permute.xlu0 2
        %1929 = vperm.xlu0 %1928, %v1281
        %v1930 = vpop.permute.xlu0 %1929
        %1932 = vset.pattern.permute.xlu0 2
        %1933 = vperm.xlu0 %1932, %v1282
        %v1934 = vpop.permute.xlu0 %1933
        %1936 = vset.pattern.permute.xlu0 2
        %1937 = vperm.xlu0 %1936, %v1283
        %v1938 = vpop.permute.xlu0 %1937
        %1940 = vset.pattern.permute.xlu0 2
        %1941 = vperm.xlu0 %1940, %v1284
        %v1942 = vpop.permute.xlu0 %1941
        %1944 = vset.pattern.permute.xlu0 2
        %1945 = vperm.xlu0 %1944, %v1285
        %v1946 = vpop.permute.xlu0 %1945
        %1948 = vset.pattern.permute.xlu0 2
        %1949 = vperm.xlu0 %1948, %v1286
        %v1950 = vpop.permute.xlu0 %1949
        %1952 = vset.pattern.permute.xlu0 2
        %1953 = vperm.xlu0 %1952, %v1287
        %v1954 = vpop.permute.xlu0 %1953
        %1956 = vset.pattern.permute.xlu0 2
        %1957 = vperm.xlu0 %1956, %v1288
        %v1958 = vpop.permute.xlu0 %1957
        %1960 = vset.pattern.permute.xlu0 2
        %1961 = vperm.xlu0 %1960, %v1289
        %v1962 = vpop.permute.xlu0 %1961
        %1964 = vset.pattern.permute.xlu0 2
        %1965 = vperm.xlu0 %1964, %v1290
        %v1966 = vpop.permute.xlu0 %1965
        %1968 = vset.pattern.permute.xlu0 2
        %1969 = vperm.xlu0 %1968, %v1291
        %v1970 = vpop.permute.xlu0 %1969
        %1972 = vset.pattern.permute.xlu0 2
        %1973 = vperm.xlu0 %1972, %v1292
        %v1974 = vpop.permute.xlu0 %1973
        %1976 = vset.pattern.permute.xlu0 2
        %1977 = vperm.xlu0 %1976, %v1293
        %v1978 = vpop.permute.xlu0 %1977
        %1980 = vset.pattern.permute.xlu0 2
        %1981 = vperm.xlu0 %1980, %v1294
        %v1982 = vpop.permute.xlu0 %1981
        %1984 = vset.pattern.permute.xlu0 2
        %1985 = vperm.xlu0 %1984, %v1295
        %v1986 = vpop.permute.xlu0 %1985
        %1988 = vset.pattern.permute.xlu0 2
        %1989 = vperm.xlu0 %1988, %v1296
        %v1990 = vpop.permute.xlu0 %1989
        %1992 = vset.pattern.permute.xlu0 2
        %1993 = vperm.xlu0 %1992, %v1297
        %v1994 = vpop.permute.xlu0 %1993
        %1996 = vset.pattern.permute.xlu0 2
        %1997 = vperm.xlu0 %1996, %v1298
        %v1998 = vpop.permute.xlu0 %1997
        %2000 = vset.pattern.permute.xlu0 2
        %2001 = vperm.xlu0 %2000, %v1299
        %v2002 = vpop.permute.xlu0 %2001
        %2004 = vset.pattern.permute.xlu0 2
        %2005 = vperm.xlu0 %2004, %v1300
        %v2006 = vpop.permute.xlu0 %2005
        %2008 = vset.pattern.permute.xlu0 2
        %2009 = vperm.xlu0 %2008, %v1301
        %v2010 = vpop.permute.xlu0 %2009
        %2012 = vset.pattern.permute.xlu0 2
        %2013 = vperm.xlu0 %2012, %v1302
        %v2014 = vpop.permute.xlu0 %2013
        %2016 = vset.pattern.permute.xlu0 2
        %2017 = vperm.xlu0 %2016, %v1303
        %v2018 = vpop.permute.xlu0 %2017
        %2020 = vset.pattern.permute.xlu0 2
        %2021 = vperm.xlu0 %2020, %v1304
        %v2022 = vpop.permute.xlu0 %2021
        %2024 = vset.pattern.permute.xlu0 2
        %2025 = vperm.xlu0 %2024, %v1305
        %v2026 = vpop.permute.xlu0 %2025
        %2028 = vset.pattern.permute.xlu0 2
        %2029 = vperm.xlu0 %2028, %v1306
        %v2030 = vpop.permute.xlu0 %2029
        %2032 = vset.pattern.permute.xlu0 2
        %2033 = vperm.xlu0 %2032, %v1307
        %v2034 = vpop.permute.xlu0 %2033
        %2036 = vset.pattern.permute.xlu0 2
        %2037 = vperm.xlu0 %2036, %v1308
        %v2038 = vpop.permute.xlu0 %2037
        %2040 = vset.pattern.permute.xlu0 2
        %2041 = vperm.xlu0 %2040, %v1309
        %v2042 = vpop.permute.xlu0 %2041
        %2044 = vset.pattern.permute.xlu0 2
        %2045 = vperm.xlu0 %2044, %v1310
        %v2046 = vpop.permute.xlu0 %2045
        %2048 = vset.pattern.permute.xlu0 2
        %2049 = vperm.xlu0 %2048, %v1311
        %v2050 = vpop.permute.xlu0 %2049
        %v2052 = vmul.f32 %v1829, %v1926
        %v2053 = vmul.f32 %v1923, %v1930
        %v2054 = vmul.f32 %v1834, %v1934
        %v2055 = vmul.f32 %v1836, %v1938
        %v2056 = vmul.f32 %v1838, %v1942
        %v2057 = vmul.f32 %v1840, %v1946
        %v2058 = vmul.f32 %v1842, %v1950
        %v2059 = vmul.f32 %v1844, %v1954
        %v2060 = vmul.f32 %v1846, %v1958
        %v2061 = vmul.f32 %v1848, %v1962
        %v2062 = vmul.f32 %v1850, %v1966
        %v2063 = vmul.f32 %v1852, %v1970
        %v2064 = vmul.f32 %v1854, %v1974
        %v2065 = vmul.f32 %v1856, %v1978
        %v2066 = vmul.f32 %v1858, %v1982
        %v2067 = vmul.f32 %v1860, %v1986
        %v2068 = vmul.f32 %v1862, %v1990
        %v2069 = vmul.f32 %v1864, %v1994
        %v2070 = vmul.f32 %v1866, %v1998
        %v2071 = vmul.f32 %v1868, %v2002
        %v2072 = vmul.f32 %v1870, %v2006
        %v2073 = vmul.f32 %v1872, %v2010
        %v2074 = vmul.f32 %v1874, %v2014
        %v2075 = vmul.f32 %v1876, %v2018
        %v2076 = vmul.f32 %v1878, %v2022
        %v2077 = vmul.f32 %v1880, %v2026
        %v2078 = vmul.f32 %v1882, %v2030
        %v2079 = vmul.f32 %v1884, %v2034
        %v2080 = vmul.f32 %v1886, %v2038
        %v2081 = vmul.f32 %v1888, %v2042
        %v2082 = vmul.f32 %v1890, %v2046
        %v2083 = vmul.f32 %v1891, %v2050
        %v2084 = vpack.c.bf16 %v2053, %v2052
        %v2085 = vpack.c.bf16 %v2055, %v2054
        %v2086 = vpack.c.bf16 %v2057, %v2056
        %v2087 = vpack.c.bf16 %v2059, %v2058
        %v2088 = vpack.c.bf16 %v2061, %v2060
        %v2089 = vpack.c.bf16 %v2063, %v2062
        %v2090 = vpack.c.bf16 %v2065, %v2064
        %v2091 = vpack.c.bf16 %v2067, %v2066
        %v2092 = vpack.c.bf16 %v2069, %v2068
        %v2093 = vpack.c.bf16 %v2071, %v2070
        %v2094 = vpack.c.bf16 %v2073, %v2072
        %v2095 = vpack.c.bf16 %v2075, %v2074
        %v2096 = vpack.c.bf16 %v2077, %v2076
        %v2097 = vpack.c.bf16 %v2079, %v2078
        %v2098 = vpack.c.bf16 %v2081, %v2080
        %v2099 = vpack.c.bf16 %v2083, %v2082
        %2100 = vset.pattern.permute.xlu0 3
        %2101 = vperm.xlu0 %2100, %v1280
        %v2102 = vpop.permute.xlu0 %2101
        %2104 = vset.pattern.permute.xlu0 3
        %2105 = vperm.xlu0 %2104, %v1281
        %v2106 = vpop.permute.xlu0 %2105
        %2108 = vset.pattern.permute.xlu0 3
        %2109 = vperm.xlu0 %2108, %v1282
        %v2110 = vpop.permute.xlu0 %2109
        %2112 = vset.pattern.permute.xlu0 3
        %2113 = vperm.xlu0 %2112, %v1283
        %v2114 = vpop.permute.xlu0 %2113
        %2116 = vset.pattern.permute.xlu0 3
        %2117 = vperm.xlu0 %2116, %v1284
        %v2118 = vpop.permute.xlu0 %2117
        %2120 = vset.pattern.permute.xlu0 3
        %2121 = vperm.xlu0 %2120, %v1285
        %v2122 = vpop.permute.xlu0 %2121
        %2124 = vset.pattern.permute.xlu0 3
        %2125 = vperm.xlu0 %2124, %v1286
        %v2126 = vpop.permute.xlu0 %2125
        %2128 = vset.pattern.permute.xlu0 3
        %2129 = vperm.xlu0 %2128, %v1287
        %v2130 = vpop.permute.xlu0 %2129
        %2132 = vset.pattern.permute.xlu0 3
        %2133 = vperm.xlu0 %2132, %v1288
        %v2134 = vpop.permute.xlu0 %2133
        %2136 = vset.pattern.permute.xlu0 3
        %2137 = vperm.xlu0 %2136, %v1289
        %v2138 = vpop.permute.xlu0 %2137
        %2140 = vset.pattern.permute.xlu0 3
        %2141 = vperm.xlu0 %2140, %v1290
        %v2142 = vpop.permute.xlu0 %2141
        %2144 = vset.pattern.permute.xlu0 3
        %2145 = vperm.xlu0 %2144, %v1291
        %v2146 = vpop.permute.xlu0 %2145
        %2148 = vset.pattern.permute.xlu0 3
        %2149 = vperm.xlu0 %2148, %v1292
        %v2150 = vpop.permute.xlu0 %2149
        %2152 = vset.pattern.permute.xlu0 3
        %2153 = vperm.xlu0 %2152, %v1293
        %v2154 = vpop.permute.xlu0 %2153
        %2156 = vset.pattern.permute.xlu0 3
        %2157 = vperm.xlu0 %2156, %v1294
        %v2158 = vpop.permute.xlu0 %2157
        %2160 = vset.pattern.permute.xlu0 3
        %2161 = vperm.xlu0 %2160, %v1295
        %v2162 = vpop.permute.xlu0 %2161
        %2164 = vset.pattern.permute.xlu0 3
        %2165 = vperm.xlu0 %2164, %v1296
        %v2166 = vpop.permute.xlu0 %2165
        %2168 = vset.pattern.permute.xlu0 3
        %2169 = vperm.xlu0 %2168, %v1297
        %v2170 = vpop.permute.xlu0 %2169
        %2172 = vset.pattern.permute.xlu0 3
        %2173 = vperm.xlu0 %2172, %v1298
        %v2174 = vpop.permute.xlu0 %2173
        %2176 = vset.pattern.permute.xlu0 3
        %2177 = vperm.xlu0 %2176, %v1299
        %v2178 = vpop.permute.xlu0 %2177
        %2180 = vset.pattern.permute.xlu0 3
        %2181 = vperm.xlu0 %2180, %v1300
        %v2182 = vpop.permute.xlu0 %2181
        %2184 = vset.pattern.permute.xlu0 3
        %2185 = vperm.xlu0 %2184, %v1301
        %v2186 = vpop.permute.xlu0 %2185
        %2188 = vset.pattern.permute.xlu0 3
        %2189 = vperm.xlu0 %2188, %v1302
        %v2190 = vpop.permute.xlu0 %2189
        %2192 = vset.pattern.permute.xlu0 3
        %2193 = vperm.xlu0 %2192, %v1303
        %v2194 = vpop.permute.xlu0 %2193
        %2196 = vset.pattern.permute.xlu0 3
        %2197 = vperm.xlu0 %2196, %v1304
        %v2198 = vpop.permute.xlu0 %2197
        %2200 = vset.pattern.permute.xlu0 3
        %2201 = vperm.xlu0 %2200, %v1305
        %v2202 = vpop.permute.xlu0 %2201
        %2204 = vset.pattern.permute.xlu0 3
        %2205 = vperm.xlu0 %2204, %v1306
        %v2206 = vpop.permute.xlu0 %2205
        %2208 = vset.pattern.permute.xlu0 3
        %2209 = vperm.xlu0 %2208, %v1307
        %v2210 = vpop.permute.xlu0 %2209
        %2212 = vset.pattern.permute.xlu0 3
        %2213 = vperm.xlu0 %2212, %v1308
        %v2214 = vpop.permute.xlu0 %2213
        %2216 = vset.pattern.permute.xlu0 3
        %2217 = vperm.xlu0 %2216, %v1309
        %v2218 = vpop.permute.xlu0 %2217
        %2220 = vset.pattern.permute.xlu0 3
        %2221 = vperm.xlu0 %2220, %v1310
        %v2222 = vpop.permute.xlu0 %2221
        %2224 = vset.pattern.permute.xlu0 3
        %2225 = vperm.xlu0 %2224, %v1311
        %v2226 = vpop.permute.xlu0 %2225
        %v2228 = vmul.f32 %v1441, %v2102
        %v2229 = vmul.f32 %v1355, %v2106
        %v2230 = vmul.f32 %v1357, %v2110
        %v2231 = vmul.f32 %v1359, %v2114
        %v2232 = vmul.f32 %v1361, %v2118
        %v2233 = vmul.f32 %v1363, %v2122
        %v2234 = vmul.f32 %v1365, %v2126
        %v2235 = vmul.f32 %v1367, %v2130
        %v2236 = vmul.f32 %v1369, %v2134
        %v2237 = vmul.f32 %v1371, %v2138
        %v2238 = vmul.f32 %v1373, %v2142
        %v2239 = vmul.f32 %v1375, %v2146
        %v2240 = vmul.f32 %v1377, %v2150
        %v2241 = vmul.f32 %v1379, %v2154
        %v2242 = vmul.f32 %v1381, %v2158
        %v2243 = vmul.f32 %v1383, %v2162
        %v2244 = vmul.f32 %v1385, %v2166
        %v2245 = vmul.f32 %v1387, %v2170
        %v2246 = vmul.f32 %v1389, %v2174
        %v2247 = vmul.f32 %v1391, %v2178
        %v2248 = vmul.f32 %v1393, %v2182
        %v2249 = vmul.f32 %v1395, %v2186
        %v2250 = vmul.f32 %v1397, %v2190
        %v2251 = vmul.f32 %v1399, %v2194
        %v2252 = vmul.f32 %v1401, %v2198
        %v2253 = vmul.f32 %v1403, %v2202
        %v2254 = vmul.f32 %v1405, %v2206
        %v2255 = vmul.f32 %v1407, %v2210
        %v2256 = vmul.f32 %v1409, %v2214
        %v2257 = vmul.f32 %v1410, %v2218
        %v2258 = vmul.f32 %v1318, %v2222
        %v2259 = vmul.f32 %v1320, %v2226
        %v2260 = vpack.c.bf16 %v2229, %v2228
        %v2261 = vpack.c.bf16 %v2231, %v2230
        %v2262 = vpack.c.bf16 %v2233, %v2232
        %v2263 = vpack.c.bf16 %v2235, %v2234
        %v2264 = vpack.c.bf16 %v2237, %v2236
        %v2265 = vpack.c.bf16 %v2239, %v2238
        %v2266 = vpack.c.bf16 %v2241, %v2240
        %v2267 = vpack.c.bf16 %v2243, %v2242
        %v2268 = vpack.c.bf16 %v2245, %v2244
        %v2269 = vpack.c.bf16 %v2247, %v2246
        %v2270 = vpack.c.bf16 %v2249, %v2248
        %v2271 = vpack.c.bf16 %v2251, %v2250
        %v2272 = vpack.c.bf16 %v2253, %v2252
        %v2273 = vpack.c.bf16 %v2255, %v2254
        %v2274 = vpack.c.bf16 %v2257, %v2256
        %v2275 = vpack.c.bf16 %v2259, %v2258
        %v2276 = vpack.c.bf16 %v1249, %v1248
        %v2277 = vpack.c.bf16 %v1251, %v1250
        %v2278 = vpack.c.bf16 %v1253, %v1252
        %v2279 = vpack.c.bf16 %v1255, %v1254
        %v2280 = vpack.c.bf16 %v1257, %v1256
        %v2281 = vpack.c.bf16 %v1259, %v1258
        %v2282 = vpack.c.bf16 %v1261, %v1260
        %v2283 = vpack.c.bf16 %v1263, %v1262
        %v2284 = vpack.c.bf16 %v1265, %v1264
        %v2285 = vpack.c.bf16 %v1267, %v1266
        %v2286 = vpack.c.bf16 %v1269, %v1268
        %v2287 = vpack.c.bf16 %v1271, %v1270
        %v2288 = vpack.c.bf16 %v1273, %v1272
        %v2289 = vpack.c.bf16 %v1275, %v1274
        %v2290 = vpack.c.bf16 %v1277, %v1276
        %v2291 = vpack.c.bf16 %v1279, %v1278
        %2292 = vset.pattern.permute.xlu0 5
        %2293 = vperm.xlu0 %2292, %v1280
        %v2294 = vpop.permute.xlu0 %2293
        %2296 = vset.pattern.permute.xlu0 5
        %2297 = vperm.xlu0 %2296, %v1281
        %v2298 = vpop.permute.xlu0 %2297
        %2300 = vset.pattern.permute.xlu0 5
        %2301 = vperm.xlu0 %2300, %v1282
        %v2302 = vpop.permute.xlu0 %2301
        %2304 = vset.pattern.permute.xlu0 5
        %2305 = vperm.xlu0 %2304, %v1283
        %v2306 = vpop.permute.xlu0 %2305
        %2308 = vset.pattern.permute.xlu0 5
        %2309 = vperm.xlu0 %2308, %v1284
        %v2310 = vpop.permute.xlu0 %2309
        %2312 = vset.pattern.permute.xlu0 5
        %2313 = vperm.xlu0 %2312, %v1285
        %v2314 = vpop.permute.xlu0 %2313
        %2316 = vset.pattern.permute.xlu0 5
        %2317 = vperm.xlu0 %2316, %v1286
        %v2318 = vpop.permute.xlu0 %2317
        %2320 = vset.pattern.permute.xlu0 5
        %2321 = vperm.xlu0 %2320, %v1287
        %v2322 = vpop.permute.xlu0 %2321
        %2324 = vset.pattern.permute.xlu0 5
        %2325 = vperm.xlu0 %2324, %v1288
        %v2326 = vpop.permute.xlu0 %2325
        %2328 = vset.pattern.permute.xlu0 5
        %2329 = vperm.xlu0 %2328, %v1289
        %v2330 = vpop.permute.xlu0 %2329
        %2332 = vset.pattern.permute.xlu0 5
        %2333 = vperm.xlu0 %2332, %v1290
        %v2334 = vpop.permute.xlu0 %2333
        %2336 = vset.pattern.permute.xlu0 5
        %2337 = vperm.xlu0 %2336, %v1291
        %v2338 = vpop.permute.xlu0 %2337
        %2340 = vset.pattern.permute.xlu0 5
        %2341 = vperm.xlu0 %2340, %v1292
        %v2342 = vpop.permute.xlu0 %2341
        %2344 = vset.pattern.permute.xlu0 5
        %2345 = vperm.xlu0 %2344, %v1293
        %v2346 = vpop.permute.xlu0 %2345
        %2348 = vset.pattern.permute.xlu0 5
        %2349 = vperm.xlu0 %2348, %v1294
        %v2350 = vpop.permute.xlu0 %2349
        %2352 = vset.pattern.permute.xlu0 5
        %2353 = vperm.xlu0 %2352, %v1295
        %v2354 = vpop.permute.xlu0 %2353
        %2356 = vset.pattern.permute.xlu0 5
        %2357 = vperm.xlu0 %2356, %v1296
        %v2358 = vpop.permute.xlu0 %2357
        %2360 = vset.pattern.permute.xlu0 5
        %2361 = vperm.xlu0 %2360, %v1297
        %v2362 = vpop.permute.xlu0 %2361
        %2364 = vset.pattern.permute.xlu0 5
        %2365 = vperm.xlu0 %2364, %v1298
        %v2366 = vpop.permute.xlu0 %2365
        %2368 = vset.pattern.permute.xlu0 5
        %2369 = vperm.xlu0 %2368, %v1299
        %v2370 = vpop.permute.xlu0 %2369
        %2372 = vset.pattern.permute.xlu0 5
        %2373 = vperm.xlu0 %2372, %v1300
        %v2374 = vpop.permute.xlu0 %2373
        %2376 = vset.pattern.permute.xlu0 5
        %2377 = vperm.xlu0 %2376, %v1301
        %v2378 = vpop.permute.xlu0 %2377
        %2380 = vset.pattern.permute.xlu0 5
        %2381 = vperm.xlu0 %2380, %v1302
        %v2382 = vpop.permute.xlu0 %2381
        %2384 = vset.pattern.permute.xlu0 5
        %2385 = vperm.xlu0 %2384, %v1303
        %v2386 = vpop.permute.xlu0 %2385
        %2388 = vset.pattern.permute.xlu0 5
        %2389 = vperm.xlu0 %2388, %v1304
        %v2390 = vpop.permute.xlu0 %2389
        %2392 = vset.pattern.permute.xlu0 5
        %2393 = vperm.xlu0 %2392, %v1305
        %v2394 = vpop.permute.xlu0 %2393
        %2396 = vset.pattern.permute.xlu0 5
        %2397 = vperm.xlu0 %2396, %v1306
        %v2398 = vpop.permute.xlu0 %2397
        %2400 = vset.pattern.permute.xlu0 5
        %2401 = vperm.xlu0 %2400, %v1307
        %v2402 = vpop.permute.xlu0 %2401
        %2404 = vset.pattern.permute.xlu0 5
        %2405 = vperm.xlu0 %2404, %v1308
        %v2406 = vpop.permute.xlu0 %2405
        %2408 = vset.pattern.permute.xlu0 5
        %2409 = vperm.xlu0 %2408, %v1309
        %v2410 = vpop.permute.xlu0 %2409
        %2412 = vset.pattern.permute.xlu0 5
        %2413 = vperm.xlu0 %2412, %v1310
        %v2414 = vpop.permute.xlu0 %2413
        %2416 = vset.pattern.permute.xlu0 5
        %2417 = vperm.xlu0 %2416, %v1311
        %v2418 = vpop.permute.xlu0 %2417
        %v2420 = vmul.f32 %v1834, %v2294
        %v2421 = vmul.f32 %v1836, %v2298
        %v2422 = vmul.f32 %v1838, %v2302
        %v2423 = vmul.f32 %v1840, %v2306
        %v2424 = vmul.f32 %v1842, %v2310
        %v2425 = vmul.f32 %v1844, %v2314
        %v2426 = vmul.f32 %v1846, %v2318
        %v2427 = vmul.f32 %v1848, %v2322
        %v2428 = vmul.f32 %v1850, %v2326
        %v2429 = vmul.f32 %v1852, %v2330
        %v2430 = vmul.f32 %v1854, %v2334
        %v2431 = vmul.f32 %v1856, %v2338
        %v2432 = vmul.f32 %v1858, %v2342
        %v2433 = vmul.f32 %v1860, %v2346
        %v2434 = vmul.f32 %v1862, %v2350
        %v2435 = vmul.f32 %v1864, %v2354
        %v2436 = vmul.f32 %v1866, %v2358
        %v2437 = vmul.f32 %v1868, %v2362
        %v2438 = vmul.f32 %v1870, %v2366
        %v2439 = vmul.f32 %v1872, %v2370
        %v2440 = vmul.f32 %v1874, %v2374
        %v2441 = vmul.f32 %v1876, %v2378
        %v2442 = vmul.f32 %v1878, %v2382
        %v2443 = vmul.f32 %v1880, %v2386
        %v2444 = vmul.f32 %v1882, %v2390
        %v2445 = vmul.f32 %v1884, %v2394
        %v2446 = vmul.f32 %v1886, %v2398
        %v2447 = vmul.f32 %v1888, %v2402
        %v2448 = vmul.f32 %v1890, %v2406
        %v2449 = vmul.f32 %v1891, %v2410
        %v2450 = vmul.f32 %v1829, %v2414
        %v2451 = vmul.f32 %v1923, %v2418
        %v2452 = vpack.c.bf16 %v2421, %v2420
        %v2453 = vpack.c.bf16 %v2423, %v2422
        %v2454 = vpack.c.bf16 %v2425, %v2424
        %v2455 = vpack.c.bf16 %v2427, %v2426
        %v2456 = vpack.c.bf16 %v2429, %v2428
        %v2457 = vpack.c.bf16 %v2431, %v2430
        %v2458 = vpack.c.bf16 %v2433, %v2432
        %v2459 = vpack.c.bf16 %v2435, %v2434
        %v2460 = vpack.c.bf16 %v2437, %v2436
        %v2461 = vpack.c.bf16 %v2439, %v2438
        %v2462 = vpack.c.bf16 %v2441, %v2440
        %v2463 = vpack.c.bf16 %v2443, %v2442
        %v2464 = vpack.c.bf16 %v2445, %v2444
        %v2465 = vpack.c.bf16 %v2447, %v2446
        %v2466 = vpack.c.bf16 %v2449, %v2448
        %v2467 = vpack.c.bf16 %v2451, %v2450
        %2468 = vset.pattern.permute.xlu0 6
        %2469 = vperm.xlu0 %2468, %v1280
        %v2470 = vpop.permute.xlu0 %2469
        %2472 = vset.pattern.permute.xlu0 6
        %2473 = vperm.xlu0 %2472, %v1281
        %v2474 = vpop.permute.xlu0 %2473
        %2476 = vset.pattern.permute.xlu0 6
        %2477 = vperm.xlu0 %2476, %v1282
        %v2478 = vpop.permute.xlu0 %2477
        %2480 = vset.pattern.permute.xlu0 6
        %2481 = vperm.xlu0 %2480, %v1283
        %v2482 = vpop.permute.xlu0 %2481
        %2484 = vset.pattern.permute.xlu0 6
        %2485 = vperm.xlu0 %2484, %v1284
        %v2486 = vpop.permute.xlu0 %2485
        %2488 = vset.pattern.permute.xlu0 6
        %2489 = vperm.xlu0 %2488, %v1285
        %v2490 = vpop.permute.xlu0 %2489
        %2492 = vset.pattern.permute.xlu0 6
        %2493 = vperm.xlu0 %2492, %v1286
        %v2494 = vpop.permute.xlu0 %2493
        %2496 = vset.pattern.permute.xlu0 6
        %2497 = vperm.xlu0 %2496, %v1287
        %v2498 = vpop.permute.xlu0 %2497
        %2500 = vset.pattern.permute.xlu0 6
        %2501 = vperm.xlu0 %2500, %v1288
        %v2502 = vpop.permute.xlu0 %2501
        %2504 = vset.pattern.permute.xlu0 6
        %2505 = vperm.xlu0 %2504, %v1289
        %v2506 = vpop.permute.xlu0 %2505
        %2508 = vset.pattern.permute.xlu0 6
        %2509 = vperm.xlu0 %2508, %v1290
        %v2510 = vpop.permute.xlu0 %2509
        %2512 = vset.pattern.permute.xlu0 6
        %2513 = vperm.xlu0 %2512, %v1291
        %v2514 = vpop.permute.xlu0 %2513
        %2516 = vset.pattern.permute.xlu0 6
        %2517 = vperm.xlu0 %2516, %v1292
        %v2518 = vpop.permute.xlu0 %2517
        %2520 = vset.pattern.permute.xlu0 6
        %2521 = vperm.xlu0 %2520, %v1293
        %v2522 = vpop.permute.xlu0 %2521
        %2524 = vset.pattern.permute.xlu0 6
        %2525 = vperm.xlu0 %2524, %v1294
        %v2526 = vpop.permute.xlu0 %2525
        %2528 = vset.pattern.permute.xlu0 6
        %2529 = vperm.xlu0 %2528, %v1295
        %v2530 = vpop.permute.xlu0 %2529
        %2532 = vset.pattern.permute.xlu0 6
        %2533 = vperm.xlu0 %2532, %v1296
        %v2534 = vpop.permute.xlu0 %2533
        %2536 = vset.pattern.permute.xlu0 6
        %2537 = vperm.xlu0 %2536, %v1297
        %v2538 = vpop.permute.xlu0 %2537
        %2540 = vset.pattern.permute.xlu0 6
        %2541 = vperm.xlu0 %2540, %v1298
        %v2542 = vpop.permute.xlu0 %2541
        %2544 = vset.pattern.permute.xlu0 6
        %2545 = vperm.xlu0 %2544, %v1299
        %v2546 = vpop.permute.xlu0 %2545
        %2548 = vset.pattern.permute.xlu0 6
        %2549 = vperm.xlu0 %2548, %v1300
        %v2550 = vpop.permute.xlu0 %2549
        %2552 = vset.pattern.permute.xlu0 6
        %2553 = vperm.xlu0 %2552, %v1301
        %v2554 = vpop.permute.xlu0 %2553
        %2556 = vset.pattern.permute.xlu0 6
        %2557 = vperm.xlu0 %2556, %v1302
        %v2558 = vpop.permute.xlu0 %2557
        %2560 = vset.pattern.permute.xlu0 6
        %2561 = vperm.xlu0 %2560, %v1303
        %v2562 = vpop.permute.xlu0 %2561
        %2564 = vset.pattern.permute.xlu0 6
        %2565 = vperm.xlu0 %2564, %v1304
        %v2566 = vpop.permute.xlu0 %2565
        %2568 = vset.pattern.permute.xlu0 6
        %2569 = vperm.xlu0 %2568, %v1305
        %v2570 = vpop.permute.xlu0 %2569
        %2572 = vset.pattern.permute.xlu0 6
        %2573 = vperm.xlu0 %2572, %v1306
        %v2574 = vpop.permute.xlu0 %2573
        %2576 = vset.pattern.permute.xlu0 6
        %2577 = vperm.xlu0 %2576, %v1307
        %v2578 = vpop.permute.xlu0 %2577
        %2580 = vset.pattern.permute.xlu0 6
        %2581 = vperm.xlu0 %2580, %v1308
        %v2582 = vpop.permute.xlu0 %2581
        %2584 = vset.pattern.permute.xlu0 6
        %2585 = vperm.xlu0 %2584, %v1309
        %v2586 = vpop.permute.xlu0 %2585
        %2588 = vset.pattern.permute.xlu0 6
        %2589 = vperm.xlu0 %2588, %v1310
        %v2590 = vpop.permute.xlu0 %2589
        %2592 = vset.pattern.permute.xlu0 6
        %2593 = vperm.xlu0 %2592, %v1311
        %v2594 = vpop.permute.xlu0 %2593
        %v2596 = vmul.f32 %v1357, %v2470
        %v2597 = vmul.f32 %v1359, %v2474
        %v2598 = vmul.f32 %v1361, %v2478
        %v2599 = vmul.f32 %v1363, %v2482
        %v2600 = vmul.f32 %v1365, %v2486
        %v2601 = vmul.f32 %v1367, %v2490
        %v2602 = vmul.f32 %v1369, %v2494
        %v2603 = vmul.f32 %v1371, %v2498
        %v2604 = vmul.f32 %v1373, %v2502
        %v2605 = vmul.f32 %v1375, %v2506
        %v2606 = vmul.f32 %v1377, %v2510
        %v2607 = vmul.f32 %v1379, %v2514
        %v2608 = vmul.f32 %v1381, %v2518
        %v2609 = vmul.f32 %v1383, %v2522
        %v2610 = vmul.f32 %v1385, %v2526
        %v2611 = vmul.f32 %v1387, %v2530
        %v2612 = vmul.f32 %v1389, %v2534
        %v2613 = vmul.f32 %v1391, %v2538
        %v2614 = vmul.f32 %v1393, %v2542
        %v2615 = vmul.f32 %v1395, %v2546
        %v2616 = vmul.f32 %v1397, %v2550
        %v2617 = vmul.f32 %v1399, %v2554
        %v2618 = vmul.f32 %v1401, %v2558
        %v2619 = vmul.f32 %v1403, %v2562
        %v2620 = vmul.f32 %v1405, %v2566
        %v2621 = vmul.f32 %v1407, %v2570
        %v2622 = vmul.f32 %v1409, %v2574
        %v2623 = vmul.f32 %v1410, %v2578
        %v2624 = vmul.f32 %v1318, %v2582
        %v2625 = vmul.f32 %v1320, %v2586
        %v2626 = vmul.f32 %v1441, %v2590
        %v2627 = vmul.f32 %v1355, %v2594
        %v2628 = vpack.c.bf16 %v2597, %v2596
        %v2629 = vpack.c.bf16 %v2599, %v2598
        %v2630 = vpack.c.bf16 %v2601, %v2600
        %v2631 = vpack.c.bf16 %v2603, %v2602
        %v2632 = vpack.c.bf16 %v2605, %v2604
        %v2633 = vpack.c.bf16 %v2607, %v2606
        %v2634 = vpack.c.bf16 %v2609, %v2608
        %v2635 = vpack.c.bf16 %v2611, %v2610
        %v2636 = vpack.c.bf16 %v2613, %v2612
        %v2637 = vpack.c.bf16 %v2615, %v2614
        %v2638 = vpack.c.bf16 %v2617, %v2616
        %v2639 = vpack.c.bf16 %v2619, %v2618
        %v2640 = vpack.c.bf16 %v2621, %v2620
        %v2641 = vpack.c.bf16 %v2623, %v2622
        %v2642 = vpack.c.bf16 %v2625, %v2624
        %v2643 = vpack.c.bf16 %v2627, %v2626
        %2644 = vset.pattern.permute.xlu0 7
        %2645 = vperm.xlu0 %2644, %v1280
        %v2646 = vpop.permute.xlu0 %2645
        %2648 = vset.pattern.permute.xlu0 7
        %2649 = vperm.xlu0 %2648, %v1281
        %v2650 = vpop.permute.xlu0 %2649
        %2652 = vset.pattern.permute.xlu0 7
        %2653 = vperm.xlu0 %2652, %v1282
        %v2654 = vpop.permute.xlu0 %2653
        %2656 = vset.pattern.permute.xlu0 7
        %2657 = vperm.xlu0 %2656, %v1283
        %v2658 = vpop.permute.xlu0 %2657
        %2660 = vset.pattern.permute.xlu0 7
        %2661 = vperm.xlu0 %2660, %v1284
        %v2662 = vpop.permute.xlu0 %2661
        %2664 = vset.pattern.permute.xlu0 7
        %2665 = vperm.xlu0 %2664, %v1285
        %v2666 = vpop.permute.xlu0 %2665
        %2668 = vset.pattern.permute.xlu0 7
        %2669 = vperm.xlu0 %2668, %v1286
        %v2670 = vpop.permute.xlu0 %2669
        %2672 = vset.pattern.permute.xlu0 7
        %2673 = vperm.xlu0 %2672, %v1287
        %v2674 = vpop.permute.xlu0 %2673
        %2676 = vset.pattern.permute.xlu0 7
        %2677 = vperm.xlu0 %2676, %v1288
        %v2678 = vpop.permute.xlu0 %2677
        %2680 = vset.pattern.permute.xlu0 7
        %2681 = vperm.xlu0 %2680, %v1289
        %v2682 = vpop.permute.xlu0 %2681
        %2684 = vset.pattern.permute.xlu0 7
        %2685 = vperm.xlu0 %2684, %v1290
        %v2686 = vpop.permute.xlu0 %2685
        %2688 = vset.pattern.permute.xlu0 7
        %2689 = vperm.xlu0 %2688, %v1291
        %v2690 = vpop.permute.xlu0 %2689
        %2692 = vset.pattern.permute.xlu0 7
        %2693 = vperm.xlu0 %2692, %v1292
        %v2694 = vpop.permute.xlu0 %2693
        %2696 = vset.pattern.permute.xlu0 7
        %2697 = vperm.xlu0 %2696, %v1293
        %v2698 = vpop.permute.xlu0 %2697
        %2700 = vset.pattern.permute.xlu0 7
        %2701 = vperm.xlu0 %2700, %v1294
        %v2702 = vpop.permute.xlu0 %2701
        %2704 = vset.pattern.permute.xlu0 7
        %2705 = vperm.xlu0 %2704, %v1295
        %v2706 = vpop.permute.xlu0 %2705
        %2708 = vset.pattern.permute.xlu0 7
        %2709 = vperm.xlu0 %2708, %v1296
        %v2710 = vpop.permute.xlu0 %2709
        %2712 = vset.pattern.permute.xlu0 7
        %2713 = vperm.xlu0 %2712, %v1297
        %v2714 = vpop.permute.xlu0 %2713
        %2716 = vset.pattern.permute.xlu0 7
        %2717 = vperm.xlu0 %2716, %v1298
        %v2718 = vpop.permute.xlu0 %2717
        %2720 = vset.pattern.permute.xlu0 7
        %2721 = vperm.xlu0 %2720, %v1299
        %v2722 = vpop.permute.xlu0 %2721
        %2724 = vset.pattern.permute.xlu0 7
        %2725 = vperm.xlu0 %2724, %v1300
        %v2726 = vpop.permute.xlu0 %2725
        %2728 = vset.pattern.permute.xlu0 7
        %2729 = vperm.xlu0 %2728, %v1301
        %v2730 = vpop.permute.xlu0 %2729
        %2732 = vset.pattern.permute.xlu0 7
        %2733 = vperm.xlu0 %2732, %v1302
        %v2734 = vpop.permute.xlu0 %2733
        %2736 = vset.pattern.permute.xlu0 7
        %2737 = vperm.xlu0 %2736, %v1303
        %v2738 = vpop.permute.xlu0 %2737
        %2740 = vset.pattern.permute.xlu0 7
        %2741 = vperm.xlu0 %2740, %v1304
        %v2742 = vpop.permute.xlu0 %2741
        %2744 = vset.pattern.permute.xlu0 7
        %2745 = vperm.xlu0 %2744, %v1305
        %v2746 = vpop.permute.xlu0 %2745
        %2748 = vset.pattern.permute.xlu0 7
        %2749 = vperm.xlu0 %2748, %v1306
        %v2750 = vpop.permute.xlu0 %2749
        %2752 = vset.pattern.permute.xlu0 7
        %2753 = vperm.xlu0 %2752, %v1307
        %v2754 = vpop.permute.xlu0 %2753
        %2756 = vset.pattern.permute.xlu0 7
        %2757 = vperm.xlu0 %2756, %v1308
        %v2758 = vpop.permute.xlu0 %2757
        %2760 = vset.pattern.permute.xlu0 7
        %2761 = vperm.xlu0 %2760, %v1309
        %v2762 = vpop.permute.xlu0 %2761
        %2764 = vset.pattern.permute.xlu0 7
        %2765 = vperm.xlu0 %2764, %v1310
        %v2766 = vpop.permute.xlu0 %2765
        %2768 = vset.pattern.permute.xlu0 7
        %2769 = vperm.xlu0 %2768, %v1311
        %v2770 = vpop.permute.xlu0 %2769
        %v2772 = vmul.f32 %v1250, %v2646
        %v2773 = vmul.f32 %v1251, %v2650
        %v2774 = vmul.f32 %v1252, %v2654
        %v2775 = vmul.f32 %v1253, %v2658
        %v2776 = vmul.f32 %v1254, %v2662
        %v2777 = vmul.f32 %v1255, %v2666
        %v2778 = vmul.f32 %v1256, %v2670
        %v2779 = vmul.f32 %v1257, %v2674
        %v2780 = vmul.f32 %v1258, %v2678
        %v2781 = vmul.f32 %v1259, %v2682
        %v2782 = vmul.f32 %v1260, %v2686
        %v2783 = vmul.f32 %v1261, %v2690
        %v2784 = vmul.f32 %v1262, %v2694
        %v2785 = vmul.f32 %v1263, %v2698
        %v2786 = vmul.f32 %v1264, %v2702
        %v2787 = vmul.f32 %v1265, %v2706
        %v2788 = vmul.f32 %v1266, %v2710
        %v2789 = vmul.f32 %v1267, %v2714
        %v2790 = vmul.f32 %v1268, %v2718
        %v2791 = vmul.f32 %v1269, %v2722
        %v2792 = vmul.f32 %v1270, %v2726
        %v2793 = vmul.f32 %v1271, %v2730
        %v2794 = vmul.f32 %v1272, %v2734
        %v2795 = vmul.f32 %v1273, %v2738
        %v2796 = vmul.f32 %v1274, %v2742
        %v2797 = vmul.f32 %v1275, %v2746
        %v2798 = vmul.f32 %v1276, %v2750
        %v2799 = vmul.f32 %v1277, %v2754
        %v2800 = vmul.f32 %v1278, %v2758
        %v2801 = vmul.f32 %v1279, %v2762
        %v2802 = vmul.f32 %v1248, %v2766
        %v2803 = vmul.f32 %v1249, %v2770
        %v2804 = vpack.c.bf16 %v2773, %v2772
        %v2805 = vpack.c.bf16 %v2775, %v2774
        %v2806 = vpack.c.bf16 %v2777, %v2776
        %v2807 = vpack.c.bf16 %v2779, %v2778
        %v2808 = vpack.c.bf16 %v2781, %v2780
        %v2809 = vpack.c.bf16 %v2783, %v2782
        %v2810 = vpack.c.bf16 %v2785, %v2784
        %v2811 = vpack.c.bf16 %v2787, %v2786
        %v2812 = vpack.c.bf16 %v2789, %v2788
        %v2813 = vpack.c.bf16 %v2791, %v2790
        %v2814 = vpack.c.bf16 %v2793, %v2792
        %v2815 = vpack.c.bf16 %v2795, %v2794
        %v2816 = vpack.c.bf16 %v2797, %v2796
        %v2817 = vpack.c.bf16 %v2799, %v2798
        %v2818 = vpack.c.bf16 %v2801, %v2800
        %v2819 = vpack.c.bf16 %v2803, %v2802
        %2820 = vset.pattern.permute.xlu0 8
        %2821 = vperm.xlu0 %2820, %v1280
        %v2822 = vpop.permute.xlu0 %2821
        %2824 = vset.pattern.permute.xlu0 8
        %2825 = vperm.xlu0 %2824, %v1281
        %v2826 = vpop.permute.xlu0 %2825
        %2828 = vset.pattern.permute.xlu0 8
        %2829 = vperm.xlu0 %2828, %v1282
        %v2830 = vpop.permute.xlu0 %2829
        %2832 = vset.pattern.permute.xlu0 8
        %2833 = vperm.xlu0 %2832, %v1283
        %v2834 = vpop.permute.xlu0 %2833
        %2836 = vset.pattern.permute.xlu0 8
        %2837 = vperm.xlu0 %2836, %v1284
        %v2838 = vpop.permute.xlu0 %2837
        %2840 = vset.pattern.permute.xlu0 8
        %2841 = vperm.xlu0 %2840, %v1285
        %v2842 = vpop.permute.xlu0 %2841
        %2844 = vset.pattern.permute.xlu0 8
        %2845 = vperm.xlu0 %2844, %v1286
        %v2846 = vpop.permute.xlu0 %2845
        %2848 = vset.pattern.permute.xlu0 8
        %2849 = vperm.xlu0 %2848, %v1287
        %v2850 = vpop.permute.xlu0 %2849
        %2852 = vset.pattern.permute.xlu0 8
        %2853 = vperm.xlu0 %2852, %v1288
        %v2854 = vpop.permute.xlu0 %2853
        %2856 = vset.pattern.permute.xlu0 8
        %2857 = vperm.xlu0 %2856, %v1289
        %v2858 = vpop.permute.xlu0 %2857
        %2860 = vset.pattern.permute.xlu0 8
        %2861 = vperm.xlu0 %2860, %v1290
        %v2862 = vpop.permute.xlu0 %2861
        %2864 = vset.pattern.permute.xlu0 8
        %2865 = vperm.xlu0 %2864, %v1291
        %v2866 = vpop.permute.xlu0 %2865
        %2868 = vset.pattern.permute.xlu0 8
        %2869 = vperm.xlu0 %2868, %v1292
        %v2870 = vpop.permute.xlu0 %2869
        %2872 = vset.pattern.permute.xlu0 8
        %2873 = vperm.xlu0 %2872, %v1293
        %v2874 = vpop.permute.xlu0 %2873
        %2876 = vset.pattern.permute.xlu0 8
        %2877 = vperm.xlu0 %2876, %v1294
        %v2878 = vpop.permute.xlu0 %2877
        %2880 = vset.pattern.permute.xlu0 8
        %2881 = vperm.xlu0 %2880, %v1295
        %v2882 = vpop.permute.xlu0 %2881
        %2884 = vset.pattern.permute.xlu0 8
        %2885 = vperm.xlu0 %2884, %v1296
        %v2886 = vpop.permute.xlu0 %2885
        %2888 = vset.pattern.permute.xlu0 8
        %2889 = vperm.xlu0 %2888, %v1297
        %v2890 = vpop.permute.xlu0 %2889
        %2892 = vset.pattern.permute.xlu0 8
        %2893 = vperm.xlu0 %2892, %v1298
        %v2894 = vpop.permute.xlu0 %2893
        %2896 = vset.pattern.permute.xlu0 8
        %2897 = vperm.xlu0 %2896, %v1299
        %v2898 = vpop.permute.xlu0 %2897
        %2900 = vset.pattern.permute.xlu0 8
        %2901 = vperm.xlu0 %2900, %v1300
        %v2902 = vpop.permute.xlu0 %2901
        %2904 = vset.pattern.permute.xlu0 8
        %2905 = vperm.xlu0 %2904, %v1301
        %v2906 = vpop.permute.xlu0 %2905
        %2908 = vset.pattern.permute.xlu0 8
        %2909 = vperm.xlu0 %2908, %v1302
        %v2910 = vpop.permute.xlu0 %2909
        %2912 = vset.pattern.permute.xlu0 8
        %2913 = vperm.xlu0 %2912, %v1303
        %v2914 = vpop.permute.xlu0 %2913
        %2916 = vset.pattern.permute.xlu0 8
        %2917 = vperm.xlu0 %2916, %v1304
        %v2918 = vpop.permute.xlu0 %2917
        %2920 = vset.pattern.permute.xlu0 8
        %2921 = vperm.xlu0 %2920, %v1305
        %v2922 = vpop.permute.xlu0 %2921
        %2924 = vset.pattern.permute.xlu0 8
        %2925 = vperm.xlu0 %2924, %v1306
        %v2926 = vpop.permute.xlu0 %2925
        %2928 = vset.pattern.permute.xlu0 8
        %2929 = vperm.xlu0 %2928, %v1307
        %v2930 = vpop.permute.xlu0 %2929
        %2932 = vset.pattern.permute.xlu0 8
        %2933 = vperm.xlu0 %2932, %v1308
        %v2934 = vpop.permute.xlu0 %2933
        %2936 = vset.pattern.permute.xlu0 8
        %2937 = vperm.xlu0 %2936, %v1309
        %v2938 = vpop.permute.xlu0 %2937
        %2940 = vset.pattern.permute.xlu0 8
        %2941 = vperm.xlu0 %2940, %v1310
        %v2942 = vpop.permute.xlu0 %2941
        %2944 = vset.pattern.permute.xlu0 8
        %2945 = vperm.xlu0 %2944, %v1311
        %v2946 = vpop.permute.xlu0 %2945
        %v2948 = vmul.f32 %v1838, %v2822
        %v2949 = vmul.f32 %v1840, %v2826
        %v2950 = vmul.f32 %v1842, %v2830
        %v2951 = vmul.f32 %v1844, %v2834
        %v2952 = vmul.f32 %v1846, %v2838
        %v2953 = vmul.f32 %v1848, %v2842
        %v2954 = vmul.f32 %v1850, %v2846
        %v2955 = vmul.f32 %v1852, %v2850
        %v2956 = vmul.f32 %v1854, %v2854
        %v2957 = vmul.f32 %v1856, %v2858
        %v2958 = vmul.f32 %v1858, %v2862
        %v2959 = vmul.f32 %v1860, %v2866
        %v2960 = vmul.f32 %v1862, %v2870
        %v2961 = vmul.f32 %v1864, %v2874
        %v2962 = vmul.f32 %v1866, %v2878
        %v2963 = vmul.f32 %v1868, %v2882
        %v2964 = vmul.f32 %v1870, %v2886
        %v2965 = vmul.f32 %v1872, %v2890
        %v2966 = vmul.f32 %v1874, %v2894
        %v2967 = vmul.f32 %v1876, %v2898
        %v2968 = vmul.f32 %v1878, %v2902
        %v2969 = vmul.f32 %v1880, %v2906
        %v2970 = vmul.f32 %v1882, %v2910
        %v2971 = vmul.f32 %v1884, %v2914
        %v2972 = vmul.f32 %v1886, %v2918
        %v2973 = vmul.f32 %v1888, %v2922
        %v2974 = vmul.f32 %v1890, %v2926
        %v2975 = vmul.f32 %v1891, %v2930
        %v2976 = vmul.f32 %v1829, %v2934
        %v2977 = vmul.f32 %v1923, %v2938
        %v2978 = vmul.f32 %v1834, %v2942
        %v2979 = vmul.f32 %v1836, %v2946
        %v2980 = vpack.c.bf16 %v2949, %v2948
        %v2981 = vpack.c.bf16 %v2951, %v2950
        %v2982 = vpack.c.bf16 %v2953, %v2952
        %v2983 = vpack.c.bf16 %v2955, %v2954
        %v2984 = vpack.c.bf16 %v2957, %v2956
        %v2985 = vpack.c.bf16 %v2959, %v2958
        %v2986 = vpack.c.bf16 %v2961, %v2960
        %v2987 = vpack.c.bf16 %v2963, %v2962
        %v2988 = vpack.c.bf16 %v2965, %v2964
        %v2989 = vpack.c.bf16 %v2967, %v2966
        %v2990 = vpack.c.bf16 %v2969, %v2968
        %v2991 = vpack.c.bf16 %v2971, %v2970
        %v2992 = vpack.c.bf16 %v2973, %v2972
        %v2993 = vpack.c.bf16 %v2975, %v2974
        %v2994 = vpack.c.bf16 %v2977, %v2976
        %v2995 = vpack.c.bf16 %v2979, %v2978
        %3012 = vrot.lane.b32.xlu0 %v1810, 64
        %v3013 = vpop.permute.xlu0 %3012
        %3014 = vrot.lane.b32.xlu0 %v1811, 64
        %v3015 = vpop.permute.xlu0 %3014
        %3016 = vrot.lane.b32.xlu0 %v1812, 64
        %v3017 = vpop.permute.xlu0 %3016
        %3018 = vrot.lane.b32.xlu0 %v1813, 64
        %v3019 = vpop.permute.xlu0 %3018
        %3020 = vrot.lane.b32.xlu0 %v1814, 64
        %v3021 = vpop.permute.xlu0 %3020
        %3022 = vrot.lane.b32.xlu0 %v1815, 64
        %v3023 = vpop.permute.xlu0 %3022
        %3024 = vrot.lane.b32.xlu0 %v1816, 64
        %v3025 = vpop.permute.xlu0 %3024
        %3026 = vrot.lane.b32.xlu0 %v1817, 64
        %v3027 = vpop.permute.xlu0 %3026
        %3028 = vrot.lane.b32.xlu0 %v1818, 64
        %v3029 = vpop.permute.xlu0 %3028
        %3030 = vrot.lane.b32.xlu0 %v1819, 64
        %v3031 = vpop.permute.xlu0 %3030
        %3032 = vrot.lane.b32.xlu0 %v1820, 64
        %v3033 = vpop.permute.xlu0 %3032
        %3034 = vrot.lane.b32.xlu0 %v1821, 64
        %v3035 = vpop.permute.xlu0 %3034
        %3036 = vrot.lane.b32.xlu0 %v1822, 64
        %v3037 = vpop.permute.xlu0 %3036
        %3038 = vrot.lane.b32.xlu0 %v1823, 64
        %v3039 = vpop.permute.xlu0 %3038
        %3040 = vrot.lane.b32.xlu0 %v1824, 64
        %v3041 = vpop.permute.xlu0 %3040
        %3042 = vrot.lane.b32.xlu0 %v1825, 64
        %v3043 = vpop.permute.xlu0 %3042
        %3060 = vrot.lane.b32.xlu0 %v2260, 64
        %v3061 = vpop.permute.xlu0 %3060
        %3062 = vrot.lane.b32.xlu0 %v2261, 64
        %v3063 = vpop.permute.xlu0 %3062
        %3064 = vrot.lane.b32.xlu0 %v2262, 64
        %v3065 = vpop.permute.xlu0 %3064
        %3066 = vrot.lane.b32.xlu0 %v2263, 64
        %v3067 = vpop.permute.xlu0 %3066
        %3068 = vrot.lane.b32.xlu0 %v2264, 64
        %v3069 = vpop.permute.xlu0 %3068
        %3070 = vrot.lane.b32.xlu0 %v2265, 64
        %v3071 = vpop.permute.xlu0 %3070
        %3072 = vrot.lane.b32.xlu0 %v2266, 64
        %v3073 = vpop.permute.xlu0 %3072
        %3074 = vrot.lane.b32.xlu0 %v2267, 64
        %v3075 = vpop.permute.xlu0 %3074
        %3076 = vrot.lane.b32.xlu0 %v2268, 64
        %v3077 = vpop.permute.xlu0 %3076
        %3078 = vrot.lane.b32.xlu0 %v2269, 64
        %v3079 = vpop.permute.xlu0 %3078
        %3080 = vrot.lane.b32.xlu0 %v2270, 64
        %v3081 = vpop.permute.xlu0 %3080
        %3082 = vrot.lane.b32.xlu0 %v2271, 64
        %v3083 = vpop.permute.xlu0 %3082
        %3084 = vrot.lane.b32.xlu0 %v2272, 64
        %v3085 = vpop.permute.xlu0 %3084
        %3086 = vrot.lane.b32.xlu0 %v2273, 64
        %v3087 = vpop.permute.xlu0 %3086
        %3088 = vrot.lane.b32.xlu0 %v2274, 64
        %v3089 = vpop.permute.xlu0 %3088
        %3090 = vrot.lane.b32.xlu0 %v2275, 64
        %v3091 = vpop.permute.xlu0 %3090
        %3108 = vrot.lane.b32.xlu0 %v2452, 64
        %v3109 = vpop.permute.xlu0 %3108
        %3110 = vrot.lane.b32.xlu0 %v2453, 64
        %v3111 = vpop.permute.xlu0 %3110
        %3112 = vrot.lane.b32.xlu0 %v2454, 64
        %v3113 = vpop.permute.xlu0 %3112
        %3114 = vrot.lane.b32.xlu0 %v2455, 64
        %v3115 = vpop.permute.xlu0 %3114
        %3116 = vrot.lane.b32.xlu0 %v2456, 64
        %v3117 = vpop.permute.xlu0 %3116
        %3118 = vrot.lane.b32.xlu0 %v2457, 64
        %v3119 = vpop.permute.xlu0 %3118
        %3120 = vrot.lane.b32.xlu0 %v2458, 64
        %v3121 = vpop.permute.xlu0 %3120
        %3122 = vrot.lane.b32.xlu0 %v2459, 64
        %v3123 = vpop.permute.xlu0 %3122
        %3124 = vrot.lane.b32.xlu0 %v2460, 64
        %v3125 = vpop.permute.xlu0 %3124
        %3126 = vrot.lane.b32.xlu0 %v2461, 64
        %v3127 = vpop.permute.xlu0 %3126
        %3128 = vrot.lane.b32.xlu0 %v2462, 64
        %v3129 = vpop.permute.xlu0 %3128
        %3130 = vrot.lane.b32.xlu0 %v2463, 64
        %v3131 = vpop.permute.xlu0 %3130
        %3132 = vrot.lane.b32.xlu0 %v2464, 64
        %v3133 = vpop.permute.xlu0 %3132
        %3134 = vrot.lane.b32.xlu0 %v2465, 64
        %v3135 = vpop.permute.xlu0 %3134
        %3136 = vrot.lane.b32.xlu0 %v2466, 64
        %v3137 = vpop.permute.xlu0 %3136
        %3138 = vrot.lane.b32.xlu0 %v2467, 64
        %v3139 = vpop.permute.xlu0 %3138
        %3156 = vrot.lane.b32.xlu0 %v2804, 64
        %v3157 = vpop.permute.xlu0 %3156
        %3158 = vrot.lane.b32.xlu0 %v2805, 64
        %v3159 = vpop.permute.xlu0 %3158
        %3160 = vrot.lane.b32.xlu0 %v2806, 64
        %v3161 = vpop.permute.xlu0 %3160
        %3162 = vrot.lane.b32.xlu0 %v2807, 64
        %v3163 = vpop.permute.xlu0 %3162
        %3164 = vrot.lane.b32.xlu0 %v2808, 64
        %v3165 = vpop.permute.xlu0 %3164
        %3166 = vrot.lane.b32.xlu0 %v2809, 64
        %v3167 = vpop.permute.xlu0 %3166
        %3168 = vrot.lane.b32.xlu0 %v2810, 64
        %v3169 = vpop.permute.xlu0 %3168
        %3170 = vrot.lane.b32.xlu0 %v2811, 64
        %v3171 = vpop.permute.xlu0 %3170
        %3172 = vrot.lane.b32.xlu0 %v2812, 64
        %v3173 = vpop.permute.xlu0 %3172
        %3174 = vrot.lane.b32.xlu0 %v2813, 64
        %v3175 = vpop.permute.xlu0 %3174
        %3176 = vrot.lane.b32.xlu0 %v2814, 64
        %v3177 = vpop.permute.xlu0 %3176
        %3178 = vrot.lane.b32.xlu0 %v2815, 64
        %v3179 = vpop.permute.xlu0 %3178
        %3180 = vrot.lane.b32.xlu0 %v2816, 64
        %v3181 = vpop.permute.xlu0 %3180
        %3182 = vrot.lane.b32.xlu0 %v2817, 64
        %v3183 = vpop.permute.xlu0 %3182
        %3184 = vrot.lane.b32.xlu0 %v2818, 64
        %v3185 = vpop.permute.xlu0 %3184
        %3186 = vrot.lane.b32.xlu0 %v2819, 64
        %v3187 = vpop.permute.xlu0 %3186
        %v3190 = vsel %vm451, %v1634, %v3013
        %v3194 = vsel %vm451, %v1635, %v3015
        %v3198 = vsel %vm451, %v1636, %v3017
        %v3202 = vsel %vm451, %v1637, %v3019
        %v3206 = vsel %vm451, %v1638, %v3021
        %v3210 = vsel %vm451, %v1639, %v3023
        %v3214 = vsel %vm451, %v1640, %v3025
        %v3218 = vsel %vm451, %v1641, %v3027
        %v3222 = vsel %vm451, %v1642, %v3029
        %v3226 = vsel %vm451, %v1643, %v3031
        %v3230 = vsel %vm451, %v1644, %v3033
        %v3234 = vsel %vm451, %v1645, %v3035
        %v3238 = vsel %vm451, %v1646, %v3037
        %v3242 = vsel %vm451, %v1647, %v3039
        %v3246 = vsel %vm451, %v1648, %v3041
        %v3250 = vsel %vm451, %v1649, %v3043
        %v3254 = vsel %vm451, %v2084, %v3061
        %v3258 = vsel %vm451, %v2085, %v3063
        %v3262 = vsel %vm451, %v2086, %v3065
        %v3266 = vsel %vm451, %v2087, %v3067
        %v3270 = vsel %vm451, %v2088, %v3069
        %v3274 = vsel %vm451, %v2089, %v3071
        %v3278 = vsel %vm451, %v2090, %v3073
        %v3282 = vsel %vm451, %v2091, %v3075
        %v3286 = vsel %vm451, %v2092, %v3077
        %v3290 = vsel %vm451, %v2093, %v3079
        %v3294 = vsel %vm451, %v2094, %v3081
        %v3298 = vsel %vm451, %v2095, %v3083
        %v3302 = vsel %vm451, %v2096, %v3085
        %v3306 = vsel %vm451, %v2097, %v3087
        %v3310 = vsel %vm451, %v2098, %v3089
        %v3314 = vsel %vm451, %v2099, %v3091
        %v3318 = vsel %vm451, %v2276, %v3109
        %v3322 = vsel %vm451, %v2277, %v3111
        %v3326 = vsel %vm451, %v2278, %v3113
        %v3330 = vsel %vm451, %v2279, %v3115
        %v3334 = vsel %vm451, %v2280, %v3117
        %v3338 = vsel %vm451, %v2281, %v3119
        %v3342 = vsel %vm451, %v2282, %v3121
        %v3346 = vsel %vm451, %v2283, %v3123
        %v3350 = vsel %vm451, %v2284, %v3125
        %v3354 = vsel %vm451, %v2285, %v3127
        %v3358 = vsel %vm451, %v2286, %v3129
        %v3362 = vsel %vm451, %v2287, %v3131
        %v3366 = vsel %vm451, %v2288, %v3133
        %v3370 = vsel %vm451, %v2289, %v3135
        %v3374 = vsel %vm451, %v2290, %v3137
        %v3378 = vsel %vm451, %v2291, %v3139
        %v3382 = vsel %vm451, %v2628, %v3157
        %v3386 = vsel %vm451, %v2629, %v3159
        %v3390 = vsel %vm451, %v2630, %v3161
        %v3394 = vsel %vm451, %v2631, %v3163
        %v3398 = vsel %vm451, %v2632, %v3165
        %v3402 = vsel %vm451, %v2633, %v3167
        %v3406 = vsel %vm451, %v2634, %v3169
        %v3410 = vsel %vm451, %v2635, %v3171
        %v3414 = vsel %vm451, %v2636, %v3173
        %v3418 = vsel %vm451, %v2637, %v3175
        %v3422 = vsel %vm451, %v2638, %v3177
        %v3426 = vsel %vm451, %v2639, %v3179
        %v3430 = vsel %vm451, %v2640, %v3181
        %v3434 = vsel %vm451, %v2641, %v3183
        %v3438 = vsel %vm451, %v2642, %v3185
        %v3442 = vsel %vm451, %v2643, %v3187
        %v3444 = vld [vmem:[%s4] sm:$0xf]
        %v3445 = vld [vmem:[%s4 + $0x4] sm:$0xf]
        %v3446 = vld [vmem:[%s4 + $0x8] sm:$0xf]
        %v3447 = vld [vmem:[%s4 + $0xc] sm:$0xf]
        %v3448 = vld [vmem:[%s4 + $0x10] sm:$0xf]
        %v3449 = vld [vmem:[%s4 + $0x14] sm:$0xf]
        %v3450 = vld [vmem:[%s4 + $0x18] sm:$0xf]
        %v3451 = vld [vmem:[%s4 + $0x1c] sm:$0xf]
        %v3452 = vld [vmem:[%s4 + $0x20] sm:$0xf]
        %v3453 = vld [vmem:[%s4 + $0x24] sm:$0xf]
        %v3454 = vld [vmem:[%s4 + $0x28] sm:$0xf]
        %v3455 = vld [vmem:[%s4 + $0x2c] sm:$0xf]
        %v3456 = vld [vmem:[%s4 + $0x30] sm:$0xf]
        %v3457 = vld [vmem:[%s4 + $0x34] sm:$0xf]
        %v3458 = vld [vmem:[%s4 + $0x38] sm:$0xf]
        %v3459 = vld [vmem:[%s4 + $0x3c] sm:$0xf]
        %v3460 = vld [vmem:[%s4 + $0x40] sm:$0xf]
        %v3461 = vld [vmem:[%s4 + $0x44] sm:$0xf]
        %v3462 = vld [vmem:[%s4 + $0x48] sm:$0xf]
        %v3463 = vld [vmem:[%s4 + $0x4c] sm:$0xf]
        %v3464 = vld [vmem:[%s4 + $0x50] sm:$0xf]
        %v3465 = vld [vmem:[%s4 + $0x54] sm:$0xf]
        %v3466 = vld [vmem:[%s4 + $0x58] sm:$0xf]
        %v3467 = vld [vmem:[%s4 + $0x5c] sm:$0xf]
        %v3468 = vld [vmem:[%s4 + $0x60] sm:$0xf]
        %v3469 = vld [vmem:[%s4 + $0x64] sm:$0xf]
        %v3470 = vld [vmem:[%s4 + $0x68] sm:$0xf]
        %v3471 = vld [vmem:[%s4 + $0x6c] sm:$0xf]
        %v3472 = vld [vmem:[%s4 + $0x70] sm:$0xf]
        %v3473 = vld [vmem:[%s4 + $0x74] sm:$0xf]
        %v3474 = vld [vmem:[%s4 + $0x78] sm:$0xf]
        %v3475 = vld [vmem:[%s4 + $0x7c] sm:$0xf]
        %v3476 = vld [vmem:[%s4 + $0x80] sm:$0xf]
        %v3477 = vld [vmem:[%s4 + $0x84] sm:$0xf]
        %v3478 = vld [vmem:[%s4 + $0x88] sm:$0xf]
        %v3479 = vld [vmem:[%s4 + $0x8c] sm:$0xf]
        %v3480 = vld [vmem:[%s4 + $0x90] sm:$0xf]
        %v3481 = vld [vmem:[%s4 + $0x94] sm:$0xf]
        %v3482 = vld [vmem:[%s4 + $0x98] sm:$0xf]
        %v3483 = vld [vmem:[%s4 + $0x9c] sm:$0xf]
        %v3484 = vld [vmem:[%s4 + $0xa0] sm:$0xf]
        %v3485 = vld [vmem:[%s4 + $0xa4] sm:$0xf]
        %v3486 = vld [vmem:[%s4 + $0xa8] sm:$0xf]
        %v3487 = vld [vmem:[%s4 + $0xac] sm:$0xf]
        %v3488 = vld [vmem:[%s4 + $0xb0] sm:$0xf]
        %v3489 = vld [vmem:[%s4 + $0xb4] sm:$0xf]
        %v3490 = vld [vmem:[%s4 + $0xb8] sm:$0xf]
        %v3491 = vld [vmem:[%s4 + $0xbc] sm:$0xf]
        %v3492 = vld [vmem:[%s4 + $0xc0] sm:$0xf]
        %v3493 = vld [vmem:[%s4 + $0xc4] sm:$0xf]
        %v3494 = vld [vmem:[%s4 + $0xc8] sm:$0xf]
        %v3495 = vld [vmem:[%s4 + $0xcc] sm:$0xf]
        %v3496 = vld [vmem:[%s4 + $0xd0] sm:$0xf]
        %v3497 = vld [vmem:[%s4 + $0xd4] sm:$0xf]
        %v3498 = vld [vmem:[%s4 + $0xd8] sm:$0xf]
        %v3499 = vld [vmem:[%s4 + $0xdc] sm:$0xf]
        %v3500 = vld [vmem:[%s4 + $0xe0] sm:$0xf]
        %v3501 = vld [vmem:[%s4 + $0xe4] sm:$0xf]
        %v3502 = vld [vmem:[%s4 + $0xe8] sm:$0xf]
        %v3503 = vld [vmem:[%s4 + $0xec] sm:$0xf]
        %v3504 = vld [vmem:[%s4 + $0xf0] sm:$0xf]
        %v3505 = vld [vmem:[%s4 + $0xf4] sm:$0xf]
        %v3506 = vld [vmem:[%s4 + $0xf8] sm:$0xf]
        %v3507 = vld [vmem:[%s4 + $0xfc] sm:$0xf]
        %v3508 = vld [vmem:[%s4 + $0x100] sm:$0xf]
        %v3509 = vld [vmem:[%s4 + $0x104] sm:$0xf]
        %v3510 = vld [vmem:[%s4 + $0x108] sm:$0xf]
        %v3511 = vld [vmem:[%s4 + $0x10c] sm:$0xf]
        %v3512 = vld [vmem:[%s4 + $0x110] sm:$0xf]
        %v3513 = vld [vmem:[%s4 + $0x114] sm:$0xf]
        %v3514 = vld [vmem:[%s4 + $0x118] sm:$0xf]
        %v3515 = vld [vmem:[%s4 + $0x11c] sm:$0xf]
        %v3516 = vld [vmem:[%s5] sm:$0x1]
        %v3518 = vlaneseq
        %v3519 = vshrl.u32 %v3518, 7
        %v3520 = vsub.s32 0, %v3519
        %v3521 = vrot.slane %v3516, %v3520
        %v3595 = vunpack.c.l.b16 %v3444
        %v3596 = vunpack.c.l.b16 %v3445
        %v3597 = vunpack.c.l.b16 %v3446
        %v3598 = vunpack.c.l.b16 %v3447
        %v3599 = vunpack.c.l.b16 %v3448
        %v3600 = vunpack.c.l.b16 %v3449
        %v3601 = vunpack.c.l.b16 %v3450
        %v3602 = vunpack.c.l.b16 %v3451
        %v3603 = vunpack.c.l.b16 %v3452
        %v3604 = vunpack.c.l.b16 %v3453
        %v3605 = vunpack.c.l.b16 %v3454
        %v3606 = vunpack.c.l.b16 %v3455
        %v3607 = vunpack.c.l.b16 %v3456
        %v3608 = vunpack.c.l.b16 %v3457
        %v3609 = vunpack.c.l.b16 %v3458
        %v3610 = vunpack.c.l.b16 %v3459
        %v3611 = vunpack.c.l.b16 %v3460
        %v3612 = vunpack.c.l.b16 %v3461
        %v3613 = vunpack.c.l.b16 %v3462
        %v3614 = vunpack.c.l.b16 %v3463
        %v3615 = vunpack.c.l.b16 %v3464
        %v3616 = vunpack.c.l.b16 %v3465
        %v3617 = vunpack.c.l.b16 %v3466
        %v3618 = vunpack.c.l.b16 %v3467
        %v3619 = vunpack.c.l.b16 %v3468
        %v3620 = vunpack.c.l.b16 %v3469
        %v3621 = vunpack.c.l.b16 %v3470
        %v3622 = vunpack.c.l.b16 %v3471
        %v3623 = vunpack.c.l.b16 %v3472
        %v3624 = vunpack.c.l.b16 %v3473
        %v3625 = vunpack.c.l.b16 %v3474
        %v3626 = vunpack.c.l.b16 %v3475
        %v3627 = vunpack.c.l.b16 %v3476
        %v3628 = vunpack.c.l.b16 %v3477
        %v3629 = vunpack.c.l.b16 %v3478
        %v3630 = vunpack.c.l.b16 %v3479
        %v3631 = vunpack.c.l.b16 %v3480
        %v3632 = vunpack.c.l.b16 %v3481
        %v3633 = vunpack.c.l.b16 %v3482
        %v3634 = vunpack.c.l.b16 %v3483
        %v3635 = vunpack.c.l.b16 %v3484
        %v3636 = vunpack.c.l.b16 %v3485
        %v3637 = vunpack.c.l.b16 %v3486
        %v3638 = vunpack.c.l.b16 %v3487
        %v3639 = vunpack.c.l.b16 %v3488
        %v3640 = vunpack.c.l.b16 %v3489
        %v3641 = vunpack.c.l.b16 %v3490
        %v3642 = vunpack.c.l.b16 %v3491
        %v3643 = vunpack.c.l.b16 %v3492
        %v3644 = vunpack.c.l.b16 %v3493
        %v3645 = vunpack.c.l.b16 %v3494
        %v3646 = vunpack.c.l.b16 %v3495
        %v3647 = vunpack.c.l.b16 %v3496
        %v3648 = vunpack.c.l.b16 %v3497
        %v3649 = vunpack.c.l.b16 %v3498
        %v3650 = vunpack.c.l.b16 %v3499
        %v3651 = vunpack.c.l.b16 %v3500
        %v3652 = vunpack.c.l.b16 %v3501
        %v3653 = vunpack.c.l.b16 %v3502
        %v3654 = vunpack.c.l.b16 %v3503
        %v3655 = vunpack.c.l.b16 %v3504
        %v3656 = vunpack.c.l.b16 %v3505
        %v3657 = vunpack.c.l.b16 %v3506
        %v3658 = vunpack.c.l.b16 %v3507
        %v3659 = vunpack.c.l.b16 %v3508
        %v3660 = vunpack.c.l.b16 %v3509
        %v3661 = vunpack.c.l.b16 %v3510
        %v3662 = vunpack.c.l.b16 %v3511
        %v3663 = vunpack.c.l.b16 %v3512
        %v3664 = vunpack.c.l.b16 %v3513
        %v3665 = vunpack.c.l.b16 %v3514
        %v3666 = vunpack.c.l.b16 %v3515
        %v3667 = vpack.c.b16 %v3596, %v3595
        %v3668 = vpack.c.b16 %v3598, %v3597
        %v3669 = vpack.c.b16 %v3600, %v3599
        %v3670 = vpack.c.b16 %v3602, %v3601
        %v3671 = vpack.c.b16 %v3604, %v3603
        %v3672 = vpack.c.b16 %v3606, %v3605
        %v3673 = vpack.c.b16 %v3608, %v3607
        %v3674 = vpack.c.b16 %v3610, %v3609
        %v3675 = vpack.c.b16 %v3612, %v3611
        %v3676 = vpack.c.b16 %v3614, %v3613
        %v3677 = vpack.c.b16 %v3616, %v3615
        %v3678 = vpack.c.b16 %v3618, %v3617
        %v3679 = vpack.c.b16 %v3620, %v3619
        %v3680 = vpack.c.b16 %v3622, %v3621
        %v3681 = vpack.c.b16 %v3624, %v3623
        %v3682 = vpack.c.b16 %v3626, %v3625
        %v3683 = vpack.c.b16 %v3628, %v3627
        %v3684 = vpack.c.b16 %v3630, %v3629
        %v3685 = vpack.c.b16 %v3632, %v3631
        %v3686 = vpack.c.b16 %v3634, %v3633
        %v3687 = vpack.c.b16 %v3636, %v3635
        %v3688 = vpack.c.b16 %v3638, %v3637
        %v3689 = vpack.c.b16 %v3640, %v3639
        %v3690 = vpack.c.b16 %v3642, %v3641
        %v3691 = vpack.c.b16 %v3644, %v3643
        %v3692 = vpack.c.b16 %v3646, %v3645
        %v3693 = vpack.c.b16 %v3648, %v3647
        %v3694 = vpack.c.b16 %v3650, %v3649
        %v3695 = vpack.c.b16 %v3652, %v3651
        %v3696 = vpack.c.b16 %v3654, %v3653
        %v3697 = vpack.c.b16 %v3656, %v3655
        %v3698 = vpack.c.b16 %v3658, %v3657
        %v3699 = vpack.c.b16 %v3660, %v3659
        %v3700 = vpack.c.b16 %v3662, %v3661
        %v3701 = vpack.c.b16 %v3664, %v3663
        %v3702 = vpack.c.b16 %v3666, %v3665
        %v3740 = vsel %vm451, %v2980, 0
        %v3743 = vsel %vm451, %v2981, 0
        %v3746 = vsel %vm451, %v2982, 0
        %v3749 = vsel %vm451, %v2983, 0
        %v3752 = vsel %vm451, %v2984, 0
        %v3755 = vsel %vm451, %v2985, 0
        %v3758 = vsel %vm451, %v2986, 0
        %v3761 = vsel %vm451, %v2987, 0
        %v3764 = vsel %vm451, %v2988, 0
        %v3767 = vsel %vm451, %v2989, 0
        %v3770 = vsel %vm451, %v2990, 0
        %v3773 = vsel %vm451, %v2991, 0
        %v3776 = vsel %vm451, %v2992, 0
        %v3779 = vsel %vm451, %v2993, 0
        %v3782 = vsel %vm451, %v2994, 0
        %v3785 = vsel %vm451, %v2995, 0
        %3787 = vmatprep.subr.bf16.mxu0 0
        %3788 = vmatpush1.bf16.msra.mxu0 %v3667
        %3789 = vmatprep.subr.bf16.mxu0 0
        %3790 = vmatpush1.bf16.msra.mxu0 %v3668
        %3791 = vmatprep.subr.bf16.mxu0 0
        %3792 = vmatpush1.bf16.msra.mxu0 %v3669
        %3793 = vmatprep.subr.bf16.mxu0 0
        %3794 = vmatpush1.bf16.msra.mxu0 %v3670
        %3795 = vmatprep.subr.bf16.mxu0 0
        %3796 = vmatpush1.bf16.msra.mxu0 %v3671
        %3797 = vmatprep.subr.bf16.mxu0 0
        %3798 = vmatpush1.bf16.msra.mxu0 %v3672
        %3799 = vmatprep.subr.bf16.mxu0 0
        %3800 = vmatpush1.bf16.msra.mxu0 %v3673
        %3801 = vmatprep.subr.bf16.mxu0 0
        %3802 = vmatpush1.bf16.msra.mxu0 %v3674
        %3803 = vmatprep.subr.bf16.mxu0 0
        %3804 = vmatpush1.bf16.msra.mxu0 %v3675
        %3805 = vmatprep.subr.bf16.mxu0 0
        %3806 = vmatpush1.bf16.msra.mxu0 %v3676
        %3807 = vmatprep.subr.bf16.mxu0 0
        %3808 = vmatpush1.bf16.msra.mxu0 %v3677
        %3809 = vmatprep.subr.bf16.mxu0 0
        %3810 = vmatpush1.bf16.msra.mxu0 %v3678
        %3811 = vmatprep.subr.bf16.mxu0 0
        %3812 = vmatpush1.bf16.msra.mxu0 %v3679
        %3813 = vmatprep.subr.bf16.mxu0 0
        %3814 = vmatpush1.bf16.msra.mxu0 %v3680
        %3815 = vmatprep.subr.bf16.mxu0 0
        %3816 = vmatpush1.bf16.msra.mxu0 %v3681
        %3817 = vmatprep.subr.bf16.mxu0 0
        %3818 = vmatpush1.bf16.msra.mxu0 %v3682
        %3819 = vmatprep.mubr.bf16.mxu0 %v3254
        %3820 = vmatmul.mubr.bf16.gmra.mrb[0].mxu0 %v3190
        %v3821 = vpop.f32.mrb[0].mxu0
        %v3822 = vadd.f32 %v3521, %v3821
        %v3823 = vpop.f32.mrb[0].mxu0
        %v3824 = vpop.f32.mrb[0].mxu0
        %v3825 = vadd.f32 %v3521, %v3824
        %v3826 = vpop.f32.mrb[0].mxu0
        %3827 = vmatprep.mubr.bf16.mxu0 %v3258
        %3828 = vmatmul.mubr.bf16.gmra.mrb[0].mxu0 %v3194
        %v3829 = vpop.f32.mrb[0].mxu0
        %v3830 = vadd.f32 %v3521, %v3829
        %v3831 = vpop.f32.mrb[0].mxu0
        %v3832 = vpop.f32.mrb[0].mxu0
        %v3833 = vadd.f32 %v3521, %v3832
        %v3834 = vpop.f32.mrb[0].mxu0
        %3835 = vmatprep.mubr.bf16.mxu0 %v3262
        %3836 = vmatmul.mubr.bf16.gmra.mrb[0].mxu0 %v3198
        %v3837 = vpop.f32.mrb[0].mxu0
        %v3838 = vadd.f32 %v3521, %v3837
        %v3839 = vpop.f32.mrb[0].mxu0
        %v3840 = vpop.f32.mrb[0].mxu0
        %v3841 = vadd.f32 %v3521, %v3840
        %v3842 = vpop.f32.mrb[0].mxu0
        %3843 = vmatprep.mubr.bf16.mxu0 %v3266
        %3844 = vmatmul.mubr.bf16.gmra.mrb[0].mxu0 %v3202
        %v3845 = vpop.f32.mrb[0].mxu0
        %v3846 = vadd.f32 %v3521, %v3845
        %v3847 = vpop.f32.mrb[0].mxu0
        %v3848 = vpop.f32.mrb[0].mxu0
        %v3849 = vadd.f32 %v3521, %v3848
        %v3850 = vpop.f32.mrb[0].mxu0
        %3851 = vmatprep.mubr.bf16.mxu0 %v3270
        %3852 = vmatmul.mubr.bf16.gmra.mrb[0].mxu0 %v3206
        %v3853 = vpop.f32.mrb[0].mxu0
        %v3854 = vadd.f32 %v3521, %v3853
        %v3855 = vpop.f32.mrb[0].mxu0
        %v3856 = vpop.f32.mrb[0].mxu0
        %v3857 = vadd.f32 %v3521, %v3856
        %v3858 = vpop.f32.mrb[0].mxu0
        %3859 = vmatprep.mubr.bf16.mxu0 %v3274
        %3860 = vmatmul.mubr.bf16.gmra.mrb[0].mxu0 %v3210
        %v3861 = vpop.f32.mrb[0].mxu0
        %v3862 = vadd.f32 %v3521, %v3861
        %v3863 = vpop.f32.mrb[0].mxu0
        %v3864 = vpop.f32.mrb[0].mxu0
        %v3865 = vadd.f32 %v3521, %v3864
        %v3866 = vpop.f32.mrb[0].mxu0
        %3867 = vmatprep.mubr.bf16.mxu0 %v3278
        %3868 = vmatmul.mubr.bf16.gmra.mrb[0].mxu0 %v3214
        %v3869 = vpop.f32.mrb[0].mxu0
        %v3870 = vadd.f32 %v3521, %v3869
        %v3871 = vpop.f32.mrb[0].mxu0
        %v3872 = vpop.f32.mrb[0].mxu0
        %v3873 = vadd.f32 %v3521, %v3872
        %v3874 = vpop.f32.mrb[0].mxu0
        %3875 = vmatprep.mubr.bf16.mxu0 %v3282
        %3876 = vmatmul.mubr.bf16.gmra.mrb[0].mxu0 %v3218
        %v3877 = vpop.f32.mrb[0].mxu0
        %v3878 = vadd.f32 %v3521, %v3877
        %v3879 = vpop.f32.mrb[0].mxu0
        %v3880 = vpop.f32.mrb[0].mxu0
        %v3881 = vadd.f32 %v3521, %v3880
        %v3882 = vpop.f32.mrb[0].mxu0
        %3883 = vmatprep.mubr.bf16.mxu0 %v3286
        %3884 = vmatmul.mubr.bf16.gmra.mrb[0].mxu0 %v3222
        %v3885 = vpop.f32.mrb[0].mxu0
        %v3886 = vadd.f32 %v3521, %v3885
        %v3887 = vpop.f32.mrb[0].mxu0
        %v3888 = vpop.f32.mrb[0].mxu0
        %v3889 = vadd.f32 %v3521, %v3888
        %v3890 = vpop.f32.mrb[0].mxu0
        %3891 = vmatprep.mubr.bf16.mxu0 %v3290
        %3892 = vmatmul.mubr.bf16.gmra.mrb[0].mxu0 %v3226
        %v3893 = vpop.f32.mrb[0].mxu0
        %v3894 = vadd.f32 %v3521, %v3893
        %v3895 = vpop.f32.mrb[0].mxu0
        %v3896 = vpop.f32.mrb[0].mxu0
        %v3897 = vadd.f32 %v3521, %v3896
        %v3898 = vpop.f32.mrb[0].mxu0
        %3899 = vmatprep.mubr.bf16.mxu0 %v3294
        %3900 = vmatmul.mubr.bf16.gmra.mrb[0].mxu0 %v3230
        %v3901 = vpop.f32.mrb[0].mxu0
        %v3902 = vadd.f32 %v3521, %v3901
        %v3903 = vpop.f32.mrb[0].mxu0
        %v3904 = vpop.f32.mrb[0].mxu0
        %v3905 = vadd.f32 %v3521, %v3904
        %v3906 = vpop.f32.mrb[0].mxu0
        %3907 = vmatprep.mubr.bf16.mxu0 %v3298
        %3908 = vmatmul.mubr.bf16.gmra.mrb[0].mxu0 %v3234
        %v3909 = vpop.f32.mrb[0].mxu0
        %v3910 = vadd.f32 %v3521, %v3909
        %v3911 = vpop.f32.mrb[0].mxu0
        %v3912 = vpop.f32.mrb[0].mxu0
        %v3913 = vadd.f32 %v3521, %v3912
        %v3914 = vpop.f32.mrb[0].mxu0
        %3915 = vmatprep.mubr.bf16.mxu0 %v3302
        %3916 = vmatmul.mubr.bf16.gmra.mrb[0].mxu0 %v3238
        %v3917 = vpop.f32.mrb[0].mxu0
        %v3918 = vadd.f32 %v3521, %v3917
        %v3919 = vpop.f32.mrb[0].mxu0
        %v3920 = vpop.f32.mrb[0].mxu0
        %v3921 = vadd.f32 %v3521, %v3920
        %v3922 = vpop.f32.mrb[0].mxu0
        %3923 = vmatprep.mubr.bf16.mxu0 %v3306
        %3924 = vmatmul.mubr.bf16.gmra.mrb[0].mxu0 %v3242
        %v3925 = vpop.f32.mrb[0].mxu0
        %v3926 = vadd.f32 %v3521, %v3925
        %v3927 = vpop.f32.mrb[0].mxu0
        %v3928 = vpop.f32.mrb[0].mxu0
        %v3929 = vadd.f32 %v3521, %v3928
        %v3930 = vpop.f32.mrb[0].mxu0
        %3931 = vmatprep.mubr.bf16.mxu0 %v3310
        %3932 = vmatmul.mubr.bf16.gmra.mrb[0].mxu0 %v3246
        %v3933 = vpop.f32.mrb[0].mxu0
        %v3934 = vadd.f32 %v3521, %v3933
        %v3935 = vpop.f32.mrb[0].mxu0
        %v3936 = vpop.f32.mrb[0].mxu0
        %v3937 = vadd.f32 %v3521, %v3936
        %v3938 = vpop.f32.mrb[0].mxu0
        %3939 = vmatprep.mubr.bf16.mxu0 %v3314
        %3940 = vmatmul.mubr.bf16.gmra.mrb[0].mxu0 %v3250
        %v3941 = vpop.f32.mrb[0].mxu0
        %v3942 = vadd.f32 %v3521, %v3941
        %v3943 = vpop.f32.mrb[0].mxu0
        %v3944 = vpop.f32.mrb[0].mxu0
        %v3945 = vadd.f32 %v3521, %v3944
        %v3946 = vpop.f32.mrb[0].mxu0
        %3947 = vdwg.mxu0
        %3948 = vmatprep.subr.bf16.mxu0 0
        %3949 = vmatpush1.bf16.msra.mxu0 %v3683
        %3950 = vmatprep.subr.bf16.mxu0 0
        %3951 = vmatpush1.bf16.msra.mxu0 %v3684
        %3952 = vmatprep.subr.bf16.mxu0 0
        %3953 = vmatpush1.bf16.msra.mxu0 %v3685
        %3954 = vmatprep.subr.bf16.mxu0 0
        %3955 = vmatpush1.bf16.msra.mxu0 %v3686
        %3956 = vmatprep.subr.bf16.mxu0 0
        %3957 = vmatpush1.bf16.msra.mxu0 %v3687
        %3958 = vmatprep.subr.bf16.mxu0 0
        %3959 = vmatpush1.bf16.msra.mxu0 %v3688
        %3960 = vmatprep.subr.bf16.mxu0 0
        %3961 = vmatpush1.bf16.msra.mxu0 %v3689
        %3962 = vmatprep.subr.bf16.mxu0 0
        %3963 = vmatpush1.bf16.msra.mxu0 %v3690
        %3964 = vmatprep.subr.bf16.mxu0 0
        %3965 = vmatpush1.bf16.msra.mxu0 %v3691
        %3966 = vmatprep.subr.bf16.mxu0 0
        %3967 = vmatpush1.bf16.msra.mxu0 %v3692
        %3968 = vmatprep.subr.bf16.mxu0 0
        %3969 = vmatpush1.bf16.msra.mxu0 %v3693
        %3970 = vmatprep.subr.bf16.mxu0 0
        %3971 = vmatpush1.bf16.msra.mxu0 %v3694
        %3972 = vmatprep.subr.bf16.mxu0 0
        %3973 = vmatpush1.bf16.msra.mxu0 %v3695
        %3974 = vmatprep.subr.bf16.mxu0 0
        %3975 = vmatpush1.bf16.msra.mxu0 %v3696
        %3976 = vmatprep.subr.bf16.mxu0 0
        %3977 = vmatpush1.bf16.msra.mxu0 %v3697
        %3978 = vmatprep.subr.bf16.mxu0 0
        %3979 = vmatpush1.bf16.msra.mxu0 %v3698
        %3980 = vmatprep.mubr.bf16.mxu0 %v3382
        %3981 = vmatmul.mubr.bf16.gmra.mrb[0].mxu0 %v3318
        %v3982 = vpop.f32.mrb[0].mxu0
        %v3983 = vadd.f32 %v3822, %v3982
        %v3984 = vpop.f32.mrb[0].mxu0
        %v3985 = vpop.f32.mrb[0].mxu0
        %v3986 = vadd.f32 %v3825, %v3985
        %v3987 = vpop.f32.mrb[0].mxu0
        %3988 = vmatprep.mubr.bf16.mxu0 %v3386
        %3989 = vmatmul.mubr.bf16.gmra.mrb[0].mxu0 %v3322
        %v3990 = vpop.f32.mrb[0].mxu0
        %v3991 = vadd.f32 %v3830, %v3990
        %v3992 = vpop.f32.mrb[0].mxu0
        %v3993 = vpop.f32.mrb[0].mxu0
        %v3994 = vadd.f32 %v3833, %v3993
        %v3995 = vpop.f32.mrb[0].mxu0
        %3996 = vmatprep.mubr.bf16.mxu0 %v3390
        %3997 = vmatmul.mubr.bf16.gmra.mrb[0].mxu0 %v3326
        %v3998 = vpop.f32.mrb[0].mxu0
        %v3999 = vadd.f32 %v3838, %v3998
        %v4000 = vpop.f32.mrb[0].mxu0
        %v4001 = vpop.f32.mrb[0].mxu0
        %v4002 = vadd.f32 %v3841, %v4001
        %v4003 = vpop.f32.mrb[0].mxu0
        %4004 = vmatprep.mubr.bf16.mxu0 %v3394
        %4005 = vmatmul.mubr.bf16.gmra.mrb[0].mxu0 %v3330
        %v4006 = vpop.f32.mrb[0].mxu0
        %v4007 = vadd.f32 %v3846, %v4006
        %v4008 = vpop.f32.mrb[0].mxu0
        %v4009 = vpop.f32.mrb[0].mxu0
        %v4010 = vadd.f32 %v3849, %v4009
        %v4011 = vpop.f32.mrb[0].mxu0
        %4012 = vmatprep.mubr.bf16.mxu0 %v3398
        %4013 = vmatmul.mubr.bf16.gmra.mrb[0].mxu0 %v3334
        %v4014 = vpop.f32.mrb[0].mxu0
        %v4015 = vadd.f32 %v3854, %v4014
        %v4016 = vpop.f32.mrb[0].mxu0
        %v4017 = vpop.f32.mrb[0].mxu0
        %v4018 = vadd.f32 %v3857, %v4017
        %v4019 = vpop.f32.mrb[0].mxu0
        %4020 = vmatprep.mubr.bf16.mxu0 %v3402
        %4021 = vmatmul.mubr.bf16.gmra.mrb[0].mxu0 %v3338
        %v4022 = vpop.f32.mrb[0].mxu0
        %v4023 = vadd.f32 %v3862, %v4022
        %v4024 = vpop.f32.mrb[0].mxu0
        %v4025 = vpop.f32.mrb[0].mxu0
        %v4026 = vadd.f32 %v3865, %v4025
        %v4027 = vpop.f32.mrb[0].mxu0
        %4028 = vmatprep.mubr.bf16.mxu0 %v3406
        %4029 = vmatmul.mubr.bf16.gmra.mrb[0].mxu0 %v3342
        %v4030 = vpop.f32.mrb[0].mxu0
        %v4031 = vadd.f32 %v3870, %v4030
        %v4032 = vpop.f32.mrb[0].mxu0
        %v4033 = vpop.f32.mrb[0].mxu0
        %v4034 = vadd.f32 %v3873, %v4033
        %v4035 = vpop.f32.mrb[0].mxu0
        %4036 = vmatprep.mubr.bf16.mxu0 %v3410
        %4037 = vmatmul.mubr.bf16.gmra.mrb[0].mxu0 %v3346
        %v4038 = vpop.f32.mrb[0].mxu0
        %v4039 = vadd.f32 %v3878, %v4038
        %v4040 = vpop.f32.mrb[0].mxu0
        %v4041 = vpop.f32.mrb[0].mxu0
        %v4042 = vadd.f32 %v3881, %v4041
        %v4043 = vpop.f32.mrb[0].mxu0
        %4044 = vmatprep.mubr.bf16.mxu0 %v3414
        %4045 = vmatmul.mubr.bf16.gmra.mrb[0].mxu0 %v3350
        %v4046 = vpop.f32.mrb[0].mxu0
        %v4047 = vadd.f32 %v3886, %v4046
        %v4048 = vpop.f32.mrb[0].mxu0
        %v4049 = vpop.f32.mrb[0].mxu0
        %v4050 = vadd.f32 %v3889, %v4049
        %v4051 = vpop.f32.mrb[0].mxu0
        %4052 = vmatprep.mubr.bf16.mxu0 %v3418
        %4053 = vmatmul.mubr.bf16.gmra.mrb[0].mxu0 %v3354
        %v4054 = vpop.f32.mrb[0].mxu0
        %v4055 = vadd.f32 %v3894, %v4054
        %v4056 = vpop.f32.mrb[0].mxu0
        %v4057 = vpop.f32.mrb[0].mxu0
        %v4058 = vadd.f32 %v3897, %v4057
        %v4059 = vpop.f32.mrb[0].mxu0
        %4060 = vmatprep.mubr.bf16.mxu0 %v3422
        %4061 = vmatmul.mubr.bf16.gmra.mrb[0].mxu0 %v3358
        %v4062 = vpop.f32.mrb[0].mxu0
        %v4063 = vadd.f32 %v3902, %v4062
        %v4064 = vpop.f32.mrb[0].mxu0
        %v4065 = vpop.f32.mrb[0].mxu0
        %v4066 = vadd.f32 %v3905, %v4065
        %v4067 = vpop.f32.mrb[0].mxu0
        %4068 = vmatprep.mubr.bf16.mxu0 %v3426
        %4069 = vmatmul.mubr.bf16.gmra.mrb[0].mxu0 %v3362
        %v4070 = vpop.f32.mrb[0].mxu0
        %v4071 = vadd.f32 %v3910, %v4070
        %v4072 = vpop.f32.mrb[0].mxu0
        %v4073 = vpop.f32.mrb[0].mxu0
        %v4074 = vadd.f32 %v3913, %v4073
        %v4075 = vpop.f32.mrb[0].mxu0
        %4076 = vmatprep.mubr.bf16.mxu0 %v3430
        %4077 = vmatmul.mubr.bf16.gmra.mrb[0].mxu0 %v3366
        %v4078 = vpop.f32.mrb[0].mxu0
        %v4079 = vadd.f32 %v3918, %v4078
        %v4080 = vpop.f32.mrb[0].mxu0
        %v4081 = vpop.f32.mrb[0].mxu0
        %v4082 = vadd.f32 %v3921, %v4081
        %v4083 = vpop.f32.mrb[0].mxu0
        %4084 = vmatprep.mubr.bf16.mxu0 %v3434
        %4085 = vmatmul.mubr.bf16.gmra.mrb[0].mxu0 %v3370
        %v4086 = vpop.f32.mrb[0].mxu0
        %v4087 = vadd.f32 %v3926, %v4086
        %v4088 = vpop.f32.mrb[0].mxu0
        %v4089 = vpop.f32.mrb[0].mxu0
        %v4090 = vadd.f32 %v3929, %v4089
        %v4091 = vpop.f32.mrb[0].mxu0
        %4092 = vmatprep.mubr.bf16.mxu0 %v3438
        %4093 = vmatmul.mubr.bf16.gmra.mrb[0].mxu0 %v3374
        %v4094 = vpop.f32.mrb[0].mxu0
        %v4095 = vadd.f32 %v3934, %v4094
        %v4096 = vpop.f32.mrb[0].mxu0
        %v4097 = vpop.f32.mrb[0].mxu0
        %v4098 = vadd.f32 %v3937, %v4097
        %v4099 = vpop.f32.mrb[0].mxu0
        %4100 = vmatprep.mubr.bf16.mxu0 %v3442
        %4101 = vmatmul.mubr.bf16.gmra.mrb[0].mxu0 %v3378
        %v4102 = vpop.f32.mrb[0].mxu0
        %v4103 = vadd.f32 %v3942, %v4102
        %v4104 = vpop.f32.mrb[0].mxu0
        %v4105 = vpop.f32.mrb[0].mxu0
        %v4106 = vadd.f32 %v3945, %v4105
        %v4107 = vpop.f32.mrb[0].mxu0
        %4108 = vdwg.mxu0
        %4109 = vmatprep.subr.bf16.mxu0 0
        %4110 = vmatpush1.bf16.msra.mxu0 %v3699
        %4111 = vmatprep.subr.bf16.mxu0 0
        %4112 = vmatpush1.bf16.msra.mxu0 %v3700
        %4113 = vmatprep.subr.bf16.mxu0 0
        %4114 = vmatpush1.bf16.msra.mxu0 %v3701
        %4115 = vmatprep.subr.bf16.mxu0 0
        %4116 = vmatpush1.bf16.msra.mxu0 %v3702
        %4117 = vmatprep.subr.bf16.mxu0 0
        %4118 = vmatpush1.bf16.msra.mxu0 0
        %4119 = vmatprep.subr.bf16.mxu0 0
        %4120 = vmatpush1.bf16.msra.mxu0 0
        %4121 = vmatprep.subr.bf16.mxu0 0
        %4122 = vmatpush1.bf16.msra.mxu0 0
        %4123 = vmatprep.subr.bf16.mxu0 0
        %4124 = vmatpush1.bf16.msra.mxu0 0
        %4125 = vmatprep.subr.bf16.mxu0 0
        %4126 = vmatpush1.bf16.msra.mxu0 0
        %4127 = vmatprep.subr.bf16.mxu0 0
        %4128 = vmatpush1.bf16.msra.mxu0 0
        %4129 = vmatprep.subr.bf16.mxu0 0
        %4130 = vmatpush1.bf16.msra.mxu0 0
        %4131 = vmatprep.subr.bf16.mxu0 0
        %4132 = vmatpush1.bf16.msra.mxu0 0
        %4133 = vmatprep.subr.bf16.mxu0 0
        %4134 = vmatpush1.bf16.msra.mxu0 0
        %4135 = vmatprep.subr.bf16.mxu0 0
        %4136 = vmatpush1.bf16.msra.mxu0 0
        %4137 = vmatprep.subr.bf16.mxu0 0
        %4138 = vmatpush1.bf16.msra.mxu0 0
        %4139 = vmatprep.subr.bf16.mxu0 0
        %4140 = vmatpush1.bf16.msra.mxu0 0
        %4141 = vmatprep.mubr.bf16.mxu0 0
        %4142 = vmatmul.mubr.bf16.gmra.mrb[0].mxu0 %v3740
        %v4143 = vpop.f32.mrb[0].mxu0
        %v4144 = vadd.f32 %v3983, %v4143
        %v4145 = vpop.f32.mrb[0].mxu0
        %v4146 = vpop.f32.mrb[0].mxu0
        %v4147 = vadd.f32 %v3986, %v4146
        %v4148 = vpop.f32.mrb[0].mxu0
        %4149 = vmatprep.mubr.bf16.mxu0 0
        %4150 = vmatmul.mubr.bf16.gmra.mrb[0].mxu0 %v3743
        %v4151 = vpop.f32.mrb[0].mxu0
        %v4152 = vadd.f32 %v3991, %v4151
        %v4153 = vpop.f32.mrb[0].mxu0
        %v4154 = vpop.f32.mrb[0].mxu0
        %v4155 = vadd.f32 %v3994, %v4154
        %v4156 = vpop.f32.mrb[0].mxu0
        %4157 = vmatprep.mubr.bf16.mxu0 0
        %4158 = vmatmul.mubr.bf16.gmra.mrb[0].mxu0 %v3746
        %v4159 = vpop.f32.mrb[0].mxu0
        %v4160 = vadd.f32 %v3999, %v4159
        %v4161 = vpop.f32.mrb[0].mxu0
        %v4162 = vpop.f32.mrb[0].mxu0
        %v4163 = vadd.f32 %v4002, %v4162
        %v4164 = vpop.f32.mrb[0].mxu0
        %4165 = vmatprep.mubr.bf16.mxu0 0
        %4166 = vmatmul.mubr.bf16.gmra.mrb[0].mxu0 %v3749
        %v4167 = vpop.f32.mrb[0].mxu0
        %v4168 = vadd.f32 %v4007, %v4167
        %v4169 = vpop.f32.mrb[0].mxu0
        %v4170 = vpop.f32.mrb[0].mxu0
        %v4171 = vadd.f32 %v4010, %v4170
        %v4172 = vpop.f32.mrb[0].mxu0
        %4173 = vmatprep.mubr.bf16.mxu0 0
        %4174 = vmatmul.mubr.bf16.gmra.mrb[0].mxu0 %v3752
        %v4175 = vpop.f32.mrb[0].mxu0
        %v4176 = vadd.f32 %v4015, %v4175
        %v4177 = vpop.f32.mrb[0].mxu0
        %v4178 = vpop.f32.mrb[0].mxu0
        %v4179 = vadd.f32 %v4018, %v4178
        %v4180 = vpop.f32.mrb[0].mxu0
        %4181 = vmatprep.mubr.bf16.mxu0 0
        %4182 = vmatmul.mubr.bf16.gmra.mrb[0].mxu0 %v3755
        %v4183 = vpop.f32.mrb[0].mxu0
        %v4184 = vadd.f32 %v4023, %v4183
        %v4185 = vpop.f32.mrb[0].mxu0
        %v4186 = vpop.f32.mrb[0].mxu0
        %v4187 = vadd.f32 %v4026, %v4186
        %v4188 = vpop.f32.mrb[0].mxu0
        %4189 = vmatprep.mubr.bf16.mxu0 0
        %4190 = vmatmul.mubr.bf16.gmra.mrb[0].mxu0 %v3758
        %v4191 = vpop.f32.mrb[0].mxu0
        %v4192 = vadd.f32 %v4031, %v4191
        %v4193 = vpop.f32.mrb[0].mxu0
        %v4194 = vpop.f32.mrb[0].mxu0
        %v4195 = vadd.f32 %v4034, %v4194
        %v4196 = vpop.f32.mrb[0].mxu0
        %4197 = vmatprep.mubr.bf16.mxu0 0
        %4198 = vmatmul.mubr.bf16.gmra.mrb[0].mxu0 %v3761
        %v4199 = vpop.f32.mrb[0].mxu0
        %v4200 = vadd.f32 %v4039, %v4199
        %v4201 = vpop.f32.mrb[0].mxu0
        %v4202 = vpop.f32.mrb[0].mxu0
        %v4203 = vadd.f32 %v4042, %v4202
        %v4204 = vpop.f32.mrb[0].mxu0
        %4205 = vmatprep.mubr.bf16.mxu0 0
        %4206 = vmatmul.mubr.bf16.gmra.mrb[0].mxu0 %v3764
        %v4207 = vpop.f32.mrb[0].mxu0
        %v4208 = vadd.f32 %v4047, %v4207
        %v4209 = vpop.f32.mrb[0].mxu0
        %v4210 = vpop.f32.mrb[0].mxu0
        %v4211 = vadd.f32 %v4050, %v4210
        %v4212 = vpop.f32.mrb[0].mxu0
        %4213 = vmatprep.mubr.bf16.mxu0 0
        %4214 = vmatmul.mubr.bf16.gmra.mrb[0].mxu0 %v3767
        %v4215 = vpop.f32.mrb[0].mxu0
        %v4216 = vadd.f32 %v4055, %v4215
        %v4217 = vpop.f32.mrb[0].mxu0
        %v4218 = vpop.f32.mrb[0].mxu0
        %v4219 = vadd.f32 %v4058, %v4218
        %v4220 = vpop.f32.mrb[0].mxu0
        %4221 = vmatprep.mubr.bf16.mxu0 0
        %4222 = vmatmul.mubr.bf16.gmra.mrb[0].mxu0 %v3770
        %v4223 = vpop.f32.mrb[0].mxu0
        %v4224 = vadd.f32 %v4063, %v4223
        %v4225 = vpop.f32.mrb[0].mxu0
        %v4226 = vpop.f32.mrb[0].mxu0
        %v4227 = vadd.f32 %v4066, %v4226
        %v4228 = vpop.f32.mrb[0].mxu0
        %4229 = vmatprep.mubr.bf16.mxu0 0
        %4230 = vmatmul.mubr.bf16.gmra.mrb[0].mxu0 %v3773
        %v4231 = vpop.f32.mrb[0].mxu0
        %v4232 = vadd.f32 %v4071, %v4231
        %v4233 = vpop.f32.mrb[0].mxu0
        %v4234 = vpop.f32.mrb[0].mxu0
        %v4235 = vadd.f32 %v4074, %v4234
        %v4236 = vpop.f32.mrb[0].mxu0
        %4237 = vmatprep.mubr.bf16.mxu0 0
        %4238 = vmatmul.mubr.bf16.gmra.mrb[0].mxu0 %v3776
        %v4239 = vpop.f32.mrb[0].mxu0
        %v4240 = vadd.f32 %v4079, %v4239
        %v4241 = vpop.f32.mrb[0].mxu0
        %v4242 = vpop.f32.mrb[0].mxu0
        %v4243 = vadd.f32 %v4082, %v4242
        %v4244 = vpop.f32.mrb[0].mxu0
        %4245 = vmatprep.mubr.bf16.mxu0 0
        %4246 = vmatmul.mubr.bf16.gmra.mrb[0].mxu0 %v3779
        %v4247 = vpop.f32.mrb[0].mxu0
        %v4248 = vadd.f32 %v4087, %v4247
        %v4249 = vpop.f32.mrb[0].mxu0
        %v4250 = vpop.f32.mrb[0].mxu0
        %v4251 = vadd.f32 %v4090, %v4250
        %v4252 = vpop.f32.mrb[0].mxu0
        %4253 = vmatprep.mubr.bf16.mxu0 0
        %4254 = vmatmul.mubr.bf16.gmra.mrb[0].mxu0 %v3782
        %v4255 = vpop.f32.mrb[0].mxu0
        %v4256 = vadd.f32 %v4095, %v4255
        %v4257 = vpop.f32.mrb[0].mxu0
        %v4258 = vpop.f32.mrb[0].mxu0
        %v4259 = vadd.f32 %v4098, %v4258
        %v4260 = vpop.f32.mrb[0].mxu0
        %4261 = vmatprep.mubr.bf16.mxu0 0
        %4262 = vmatmul.mubr.bf16.gmra.mrb[0].mxu0 %v3785
        %v4263 = vpop.f32.mrb[0].mxu0
        %v4264 = vadd.f32 %v4103, %v4263
        %v4265 = vpop.f32.mrb[0].mxu0
        %v4266 = vpop.f32.mrb[0].mxu0
        %v4267 = vadd.f32 %v4106, %v4266
        %v4268 = vpop.f32.mrb[0].mxu0
        %4269 = vdwg.mxu0
        %v4270 = vld [vmem:[%s377] sm:$0xff]
        %v4271 = vld [vmem:[%s377 + $0x8] sm:$0xff]
        %v4272 = vld [vmem:[%s377 + $0x10] sm:$0xff]
        %v4273 = vld [vmem:[%s377 + $0x18] sm:$0xff]
        %v4274 = vld [vmem:[%s377 + $0x20] sm:$0xff]
        %v4275 = vld [vmem:[%s377 + $0x28] sm:$0xff]
        %v4276 = vld [vmem:[%s377 + $0x30] sm:$0xff]
        %v4277 = vld [vmem:[%s377 + $0x38] sm:$0xff]
        %v4278 = vld [vmem:[%s377 + $0x40] sm:$0xff]
        %v4279 = vld [vmem:[%s377 + $0x48] sm:$0xff]
        %v4280 = vld [vmem:[%s377 + $0x50] sm:$0xff]
        %v4281 = vld [vmem:[%s377 + $0x58] sm:$0xff]
        %v4282 = vld [vmem:[%s377 + $0x60] sm:$0xff]
        %v4283 = vld [vmem:[%s377 + $0x68] sm:$0xff]
        %v4284 = vld [vmem:[%s377 + $0x70] sm:$0xff]
        %v4285 = vld [vmem:[%s377 + $0x78] sm:$0xff]
        %v4286 = vld [vmem:[%s377 + $0x80] sm:$0xff]
        %v4287 = vld [vmem:[%s377 + $0x88] sm:$0xff]
        %v4288 = vld [vmem:[%s377 + $0x90] sm:$0xff]
        %v4289 = vld [vmem:[%s377 + $0x98] sm:$0xff]
        %v4290 = vld [vmem:[%s377 + $0xa0] sm:$0xff]
        %v4291 = vld [vmem:[%s377 + $0xa8] sm:$0xff]
        %v4292 = vld [vmem:[%s377 + $0xb0] sm:$0xff]
        %v4293 = vld [vmem:[%s377 + $0xb8] sm:$0xff]
        %v4294 = vld [vmem:[%s377 + $0xc0] sm:$0xff]
        %v4295 = vld [vmem:[%s377 + $0xc8] sm:$0xff]
        %v4296 = vld [vmem:[%s377 + $0xd0] sm:$0xff]
        %v4297 = vld [vmem:[%s377 + $0xd8] sm:$0xff]
        %v4298 = vld [vmem:[%s377 + $0xe0] sm:$0xff]
        %v4299 = vld [vmem:[%s377 + $0xe8] sm:$0xff]
        %v4300 = vld [vmem:[%s377 + $0xf0] sm:$0xff]
        %v4301 = vld [vmem:[%s377 + $0xf8] sm:$0xff]
        %v4302 = vpack.c.bf16 %v4271, %v4270
        %v4303 = vpack.c.bf16 %v4273, %v4272
        %v4304 = vpack.c.bf16 %v4275, %v4274
        %v4305 = vpack.c.bf16 %v4277, %v4276
        %v4306 = vpack.c.bf16 %v4279, %v4278
        %v4307 = vpack.c.bf16 %v4281, %v4280
        %v4308 = vpack.c.bf16 %v4283, %v4282
        %v4309 = vpack.c.bf16 %v4285, %v4284
        %v4310 = vpack.c.bf16 %v4287, %v4286
        %v4311 = vpack.c.bf16 %v4289, %v4288
        %v4312 = vpack.c.bf16 %v4291, %v4290
        %v4313 = vpack.c.bf16 %v4293, %v4292
        %v4314 = vpack.c.bf16 %v4295, %v4294
        %v4315 = vpack.c.bf16 %v4297, %v4296
        %v4316 = vpack.c.bf16 %v4299, %v4298
        %v4317 = vpack.c.bf16 %v4301, %v4300
        %v4318 = vld [vmem:[%s8] sm:$0xf]
        %v4319 = vld [vmem:[%s8 + $0x4] sm:$0xf]
        %v4320 = vld [vmem:[%s8 + $0x8] sm:$0xf]
        %v4321 = vld [vmem:[%s8 + $0xc] sm:$0xf]
        %v4326 = vunpack.c.l.b16 %v4318
        %v4327 = vunpack.c.l.b16 %v4319
        %v4328 = vunpack.c.l.b16 %v4320
        %v4329 = vunpack.c.l.b16 %v4321
        %v4330 = vpack.c.b16 %v4327, %v4326
        %v4331 = vpack.c.b16 %v4329, %v4328
        %v4335 = vsel %vm596, %v4302, 0
        %v4338 = vsel %vm596, %v4303, 0
        %v4341 = vsel %vm596, %v4304, 0
        %v4344 = vsel %vm596, %v4305, 0
        %v4347 = vsel %vm596, %v4306, 0
        %v4350 = vsel %vm596, %v4307, 0
        %v4353 = vsel %vm596, %v4308, 0
        %v4356 = vsel %vm596, %v4309, 0
        %v4359 = vsel %vm596, %v4310, 0
        %v4362 = vsel %vm596, %v4311, 0
        %v4365 = vsel %vm596, %v4312, 0
        %v4368 = vsel %vm596, %v4313, 0
        %v4371 = vsel %vm596, %v4314, 0
        %v4374 = vsel %vm596, %v4315, 0
        %v4377 = vsel %vm596, %v4316, 0
        %v4380 = vsel %vm596, %v4317, 0
        %4382 = vmatprep.subr.bf16.mxu0 0
        %4383 = vmatpush1.bf16.msra.mxu0 %v4330
        %4384 = vmatprep.subr.bf16.mxu0 0
        %4385 = vmatpush1.bf16.msra.mxu0 %v4331
        %4386 = vmatprep.subr.bf16.mxu0 0
        %4387 = vmatpush1.bf16.msra.mxu0 0
        %4388 = vmatprep.subr.bf16.mxu0 0
        %4389 = vmatpush1.bf16.msra.mxu0 0
        %4390 = vmatprep.subr.bf16.mxu0 0
        %4391 = vmatpush1.bf16.msra.mxu0 0
        %4392 = vmatprep.subr.bf16.mxu0 0
        %4393 = vmatpush1.bf16.msra.mxu0 0
        %4394 = vmatprep.subr.bf16.mxu0 0
        %4395 = vmatpush1.bf16.msra.mxu0 0
        %4396 = vmatprep.subr.bf16.mxu0 0
        %4397 = vmatpush1.bf16.msra.mxu0 0
        %4398 = vmatprep.subr.bf16.mxu0 0
        %4399 = vmatpush1.bf16.msra.mxu0 0
        %4400 = vmatprep.subr.bf16.mxu0 0
        %4401 = vmatpush1.bf16.msra.mxu0 0
        %4402 = vmatprep.subr.bf16.mxu0 0
        %4403 = vmatpush1.bf16.msra.mxu0 0
        %4404 = vmatprep.subr.bf16.mxu0 0
        %4405 = vmatpush1.bf16.msra.mxu0 0
        %4406 = vmatprep.subr.bf16.mxu0 0
        %4407 = vmatpush1.bf16.msra.mxu0 0
        %4408 = vmatprep.subr.bf16.mxu0 0
        %4409 = vmatpush1.bf16.msra.mxu0 0
        %4410 = vmatprep.subr.bf16.mxu0 0
        %4411 = vmatpush1.bf16.msra.mxu0 0
        %4412 = vmatprep.subr.bf16.mxu0 0
        %4413 = vmatpush1.bf16.msra.mxu0 0
        %4414 = vmatprep.mubr.bf16.mxu0 0
        %4415 = vmatmul.mubr.bf16.gmra.mrb[0].mxu0 %v4335
        %v4416 = vpop.f32.mrb[0].mxu0
        %v4417 = vadd.f32 0.0, %v4416
        %v4418 = vpop.f32.mrb[0].mxu0
        %v4419 = vpop.f32.mrb[0].mxu0
        %v4420 = vadd.f32 0.0, %v4419
        %v4421 = vpop.f32.mrb[0].mxu0
        %4422 = vmatprep.mubr.bf16.mxu0 0
        %4423 = vmatmul.mubr.bf16.gmra.mrb[0].mxu0 %v4338
        %v4424 = vpop.f32.mrb[0].mxu0
        %v4425 = vadd.f32 0.0, %v4424
        %v4426 = vpop.f32.mrb[0].mxu0
        %v4427 = vpop.f32.mrb[0].mxu0
        %v4428 = vadd.f32 0.0, %v4427
        %v4429 = vpop.f32.mrb[0].mxu0
        %4430 = vmatprep.mubr.bf16.mxu0 0
        %4431 = vmatmul.mubr.bf16.gmra.mrb[0].mxu0 %v4341
        %v4432 = vpop.f32.mrb[0].mxu0
        %v4433 = vadd.f32 0.0, %v4432
        %v4434 = vpop.f32.mrb[0].mxu0
        %v4435 = vpop.f32.mrb[0].mxu0
        %v4436 = vadd.f32 0.0, %v4435
        %v4437 = vpop.f32.mrb[0].mxu0
        %4438 = vmatprep.mubr.bf16.mxu0 0
        %4439 = vmatmul.mubr.bf16.gmra.mrb[0].mxu0 %v4344
        %v4440 = vpop.f32.mrb[0].mxu0
        %v4441 = vadd.f32 0.0, %v4440
        %v4442 = vpop.f32.mrb[0].mxu0
        %v4443 = vpop.f32.mrb[0].mxu0
        %v4444 = vadd.f32 0.0, %v4443
        %v4445 = vpop.f32.mrb[0].mxu0
        %4446 = vmatprep.mubr.bf16.mxu0 0
        %4447 = vmatmul.mubr.bf16.gmra.mrb[0].mxu0 %v4347
        %v4448 = vpop.f32.mrb[0].mxu0
        %v4449 = vadd.f32 0.0, %v4448
        %v4450 = vpop.f32.mrb[0].mxu0
        %v4451 = vpop.f32.mrb[0].mxu0
        %v4452 = vadd.f32 0.0, %v4451
        %v4453 = vpop.f32.mrb[0].mxu0
        %4454 = vmatprep.mubr.bf16.mxu0 0
        %4455 = vmatmul.mubr.bf16.gmra.mrb[0].mxu0 %v4350
        %v4456 = vpop.f32.mrb[0].mxu0
        %v4457 = vadd.f32 0.0, %v4456
        %v4458 = vpop.f32.mrb[0].mxu0
        %v4459 = vpop.f32.mrb[0].mxu0
        %v4460 = vadd.f32 0.0, %v4459
        %v4461 = vpop.f32.mrb[0].mxu0
        %4462 = vmatprep.mubr.bf16.mxu0 0
        %4463 = vmatmul.mubr.bf16.gmra.mrb[0].mxu0 %v4353
        %v4464 = vpop.f32.mrb[0].mxu0
        %v4465 = vadd.f32 0.0, %v4464
        %v4466 = vpop.f32.mrb[0].mxu0
        %v4467 = vpop.f32.mrb[0].mxu0
        %v4468 = vadd.f32 0.0, %v4467
        %v4469 = vpop.f32.mrb[0].mxu0
        %4470 = vmatprep.mubr.bf16.mxu0 0
        %4471 = vmatmul.mubr.bf16.gmra.mrb[0].mxu0 %v4356
        %v4472 = vpop.f32.mrb[0].mxu0
        %v4473 = vadd.f32 0.0, %v4472
        %v4474 = vpop.f32.mrb[0].mxu0
        %v4475 = vpop.f32.mrb[0].mxu0
        %v4476 = vadd.f32 0.0, %v4475
        %v4477 = vpop.f32.mrb[0].mxu0
        %4478 = vmatprep.mubr.bf16.mxu0 0
        %4479 = vmatmul.mubr.bf16.gmra.mrb[0].mxu0 %v4359
        %v4480 = vpop.f32.mrb[0].mxu0
        %v4481 = vadd.f32 0.0, %v4480
        %v4482 = vpop.f32.mrb[0].mxu0
        %v4483 = vpop.f32.mrb[0].mxu0
        %v4484 = vadd.f32 0.0, %v4483
        %v4485 = vpop.f32.mrb[0].mxu0
        %4486 = vmatprep.mubr.bf16.mxu0 0
        %4487 = vmatmul.mubr.bf16.gmra.mrb[0].mxu0 %v4362
        %v4488 = vpop.f32.mrb[0].mxu0
        %v4489 = vadd.f32 0.0, %v4488
        %v4490 = vpop.f32.mrb[0].mxu0
        %v4491 = vpop.f32.mrb[0].mxu0
        %v4492 = vadd.f32 0.0, %v4491
        %v4493 = vpop.f32.mrb[0].mxu0
        %4494 = vmatprep.mubr.bf16.mxu0 0
        %4495 = vmatmul.mubr.bf16.gmra.mrb[0].mxu0 %v4365
        %v4496 = vpop.f32.mrb[0].mxu0
        %v4497 = vadd.f32 0.0, %v4496
        %v4498 = vpop.f32.mrb[0].mxu0
        %v4499 = vpop.f32.mrb[0].mxu0
        %v4500 = vadd.f32 0.0, %v4499
        %v4501 = vpop.f32.mrb[0].mxu0
        %4502 = vmatprep.mubr.bf16.mxu0 0
        %4503 = vmatmul.mubr.bf16.gmra.mrb[0].mxu0 %v4368
        %v4504 = vpop.f32.mrb[0].mxu0
        %v4505 = vadd.f32 0.0, %v4504
        %v4506 = vpop.f32.mrb[0].mxu0
        %v4507 = vpop.f32.mrb[0].mxu0
        %v4508 = vadd.f32 0.0, %v4507
        %v4509 = vpop.f32.mrb[0].mxu0
        %4510 = vmatprep.mubr.bf16.mxu0 0
        %4511 = vmatmul.mubr.bf16.gmra.mrb[0].mxu0 %v4371
        %v4512 = vpop.f32.mrb[0].mxu0
        %v4513 = vadd.f32 0.0, %v4512
        %v4514 = vpop.f32.mrb[0].mxu0
        %v4515 = vpop.f32.mrb[0].mxu0
        %v4516 = vadd.f32 0.0, %v4515
        %v4517 = vpop.f32.mrb[0].mxu0
        %4518 = vmatprep.mubr.bf16.mxu0 0
        %4519 = vmatmul.mubr.bf16.gmra.mrb[0].mxu0 %v4374
        %v4520 = vpop.f32.mrb[0].mxu0
        %v4521 = vadd.f32 0.0, %v4520
        %v4522 = vpop.f32.mrb[0].mxu0
        %v4523 = vpop.f32.mrb[0].mxu0
        %v4524 = vadd.f32 0.0, %v4523
        %v4525 = vpop.f32.mrb[0].mxu0
        %4526 = vmatprep.mubr.bf16.mxu0 0
        %4527 = vmatmul.mubr.bf16.gmra.mrb[0].mxu0 %v4377
        %v4528 = vpop.f32.mrb[0].mxu0
        %v4529 = vadd.f32 0.0, %v4528
        %v4530 = vpop.f32.mrb[0].mxu0
        %v4531 = vpop.f32.mrb[0].mxu0
        %v4532 = vadd.f32 0.0, %v4531
        %v4533 = vpop.f32.mrb[0].mxu0
        %4534 = vmatprep.mubr.bf16.mxu0 0
        %4535 = vmatmul.mubr.bf16.gmra.mrb[0].mxu0 %v4380
        %v4536 = vpop.f32.mrb[0].mxu0
        %v4537 = vadd.f32 0.0, %v4536
        %v4538 = vpop.f32.mrb[0].mxu0
        %v4539 = vpop.f32.mrb[0].mxu0
        %v4540 = vadd.f32 0.0, %v4539
        %v4541 = vpop.f32.mrb[0].mxu0
        %4542 = vdwg.mxu0
        %v4543 = vadd.f32 %v4144, %v4417
        %v4544 = vadd.f32 %v4147, %v4420
        %v4545 = vadd.f32 %v4152, %v4425
        %v4546 = vadd.f32 %v4155, %v4428
        %v4547 = vadd.f32 %v4160, %v4433
        %v4548 = vadd.f32 %v4163, %v4436
        %v4549 = vadd.f32 %v4168, %v4441
        %v4550 = vadd.f32 %v4171, %v4444
        %v4551 = vadd.f32 %v4176, %v4449
        %v4552 = vadd.f32 %v4179, %v4452
        %v4553 = vadd.f32 %v4184, %v4457
        %v4554 = vadd.f32 %v4187, %v4460
        %v4555 = vadd.f32 %v4192, %v4465
        %v4556 = vadd.f32 %v4195, %v4468
        %v4557 = vadd.f32 %v4200, %v4473
        %v4558 = vadd.f32 %v4203, %v4476
        %v4559 = vadd.f32 %v4208, %v4481
        %v4560 = vadd.f32 %v4211, %v4484
        %v4561 = vadd.f32 %v4216, %v4489
        %v4562 = vadd.f32 %v4219, %v4492
        %v4563 = vadd.f32 %v4224, %v4497
        %v4564 = vadd.f32 %v4227, %v4500
        %v4565 = vadd.f32 %v4232, %v4505
        %v4566 = vadd.f32 %v4235, %v4508
        %v4567 = vadd.f32 %v4240, %v4513
        %v4568 = vadd.f32 %v4243, %v4516
        %v4569 = vadd.f32 %v4248, %v4521
        %v4570 = vadd.f32 %v4251, %v4524
        %v4571 = vadd.f32 %v4256, %v4529
        %v4572 = vadd.f32 %v4259, %v4532
        %v4573 = vadd.f32 %v4264, %v4537
        %v4574 = vadd.f32 %v4267, %v4540
        %v4575 = vld [vmem:[%s9] sm:$0x1]
        %v4577 = vlaneseq
        %v4578 = vshrl.u32 %v4577, 7
        %v4579 = vsub.s32 0, %v4578
        %v4580 = vrot.slane %v4575, %v4579
        %v4582 = vadd.f32 %v4543, %v4580
        %v4583 = vadd.f32 %v4544, %v4580
        %v4584 = vadd.f32 %v4545, %v4580
        %v4585 = vadd.f32 %v4546, %v4580
        %v4586 = vadd.f32 %v4547, %v4580
        %v4587 = vadd.f32 %v4548, %v4580
        %v4588 = vadd.f32 %v4549, %v4580
        %v4589 = vadd.f32 %v4550, %v4580
        %v4590 = vadd.f32 %v4551, %v4580
        %v4591 = vadd.f32 %v4552, %v4580
        %v4592 = vadd.f32 %v4553, %v4580
        %v4593 = vadd.f32 %v4554, %v4580
        %v4594 = vadd.f32 %v4555, %v4580
        %v4595 = vadd.f32 %v4556, %v4580
        %v4596 = vadd.f32 %v4557, %v4580
        %v4597 = vadd.f32 %v4558, %v4580
        %v4598 = vadd.f32 %v4559, %v4580
        %v4599 = vadd.f32 %v4560, %v4580
        %v4600 = vadd.f32 %v4561, %v4580
        %v4601 = vadd.f32 %v4562, %v4580
        %v4602 = vadd.f32 %v4563, %v4580
        %v4603 = vadd.f32 %v4564, %v4580
        %v4604 = vadd.f32 %v4565, %v4580
        %v4605 = vadd.f32 %v4566, %v4580
        %v4606 = vadd.f32 %v4567, %v4580
        %v4607 = vadd.f32 %v4568, %v4580
        %v4608 = vadd.f32 %v4569, %v4580
        %v4609 = vadd.f32 %v4570, %v4580
        %v4610 = vadd.f32 %v4571, %v4580
        %v4611 = vadd.f32 %v4572, %v4580
        %v4612 = vadd.f32 %v4573, %v4580
        %v4613 = vadd.f32 %v4574, %v4580
        %4614 = vst.msk [vmem:[%s367] sm:$0xff] %vm451, %v4582
        %4615 = vst.msk [vmem:[%s367 + $0x8] sm:$0xff] %vm451, %v4583
        %4616 = vst.msk [vmem:[%s367 + $0x10] sm:$0xff] %vm451, %v4584
        %4617 = vst.msk [vmem:[%s367 + $0x18] sm:$0xff] %vm451, %v4585
        %4618 = vst.msk [vmem:[%s367 + $0x20] sm:$0xff] %vm451, %v4586
        %4619 = vst.msk [vmem:[%s367 + $0x28] sm:$0xff] %vm451, %v4587
        %4620 = vst.msk [vmem:[%s367 + $0x30] sm:$0xff] %vm451, %v4588
        %4621 = vst.msk [vmem:[%s367 + $0x38] sm:$0xff] %vm451, %v4589
        %4622 = vst.msk [vmem:[%s367 + $0x40] sm:$0xff] %vm451, %v4590
        %4623 = vst.msk [vmem:[%s367 + $0x48] sm:$0xff] %vm451, %v4591
        %4624 = vst.msk [vmem:[%s367 + $0x50] sm:$0xff] %vm451, %v4592
        %4625 = vst.msk [vmem:[%s367 + $0x58] sm:$0xff] %vm451, %v4593
        %4626 = vst.msk [vmem:[%s367 + $0x60] sm:$0xff] %vm451, %v4594
        %4627 = vst.msk [vmem:[%s367 + $0x68] sm:$0xff] %vm451, %v4595
        %4628 = vst.msk [vmem:[%s367 + $0x70] sm:$0xff] %vm451, %v4596
        %4629 = vst.msk [vmem:[%s367 + $0x78] sm:$0xff] %vm451, %v4597
        %4630 = vst.msk [vmem:[%s367 + $0x80] sm:$0xff] %vm451, %v4598
        %4631 = vst.msk [vmem:[%s367 + $0x88] sm:$0xff] %vm451, %v4599
        %4632 = vst.msk [vmem:[%s367 + $0x90] sm:$0xff] %vm451, %v4600
        %4633 = vst.msk [vmem:[%s367 + $0x98] sm:$0xff] %vm451, %v4601
        %4634 = vst.msk [vmem:[%s367 + $0xa0] sm:$0xff] %vm451, %v4602
        %4635 = vst.msk [vmem:[%s367 + $0xa8] sm:$0xff] %vm451, %v4603
        %4636 = vst.msk [vmem:[%s367 + $0xb0] sm:$0xff] %vm451, %v4604
        %4637 = vst.msk [vmem:[%s367 + $0xb8] sm:$0xff] %vm451, %v4605
        %4638 = vst.msk [vmem:[%s367 + $0xc0] sm:$0xff] %vm451, %v4606
        %4639 = vst.msk [vmem:[%s367 + $0xc8] sm:$0xff] %vm451, %v4607
        %4640 = vst.msk [vmem:[%s367 + $0xd0] sm:$0xff] %vm451, %v4608
        %4641 = vst.msk [vmem:[%s367 + $0xd8] sm:$0xff] %vm451, %v4609
        %4642 = vst.msk [vmem:[%s367 + $0xe0] sm:$0xff] %vm451, %v4610
        %4643 = vst.msk [vmem:[%s367 + $0xe8] sm:$0xff] %vm451, %v4611
        %4644 = vst.msk [vmem:[%s367 + $0xf0] sm:$0xff] %vm451, %v4612
        %4645 = vst.msk [vmem:[%s367 + $0xf8] sm:$0xff] %vm451, %v4613
        %s4646 = sand.u32 %s252, 1
        %s4647 = scalar_lea.sflag [#allocation3], %s4646
        %s4648 = sand.u32 %s252, 1
        %s4649 = smul.addr %s4648, 256
        %s4650 = scalar_lea.vmem [#allocation2], %s4649
        // Predicated region
        $region61: #{vae_residual_block.3} parent=59 // pred_check
          %p4651 = pneg %p262
        $region62: #{vae_residual_block.3} parent=59 // pred_check_branch
          %4653 = sbr.rel (%p4651) target = $region64
        $region63: #{vae_residual_block.3} parent=59 // pred_region
          %s4655 = ssub.s32 4096, 4096
          %4656 = vsyncadd %s4647, %s4655
          %s4657 = smul.addr %s24, 32
          %s4658 = smul.addr %s4657, 128
          %s4659 = scalar_lea.hbm %s10, %s4658
          %s4660 = sshll.u32 %s4650, 4
          %s4661 = int_to_ptr.vmem [resolvable:$true] %s4660
          %4666 = dma.vmem_to_hbm [thread:$0]  %s4661, 4096, %s4659, %s4647, 128, 128, 8
        $region64: #{vae_residual_block.3} parent=59 // pred_fallthru
          _
      $region60: #{vae_residual_block.3} parent=5 // pred_fallthru
        _
      %p4667 = scmp.le.s32.totalorder 2, %s19
      // Predicated region
      $region65: #{vae_residual_block.3} parent=5 // pred_check
        %p4668 = pneg %p4667
      $region66: #{vae_residual_block.3} parent=5 // pred_check_branch
        %4670 = sbr.rel (%p4668) target = $region68
      $region67: #{vae_residual_block.3} parent=5 // pred_region
        %s4671 = ssub.s32 %s19, 2
        // Predicated region
        $region69: #{vae_residual_block.3} parent=67 // pred_check
          %p4672 = pneg %p268
        $region70: #{vae_residual_block.3} parent=67 // pred_check_branch
          %4674 = sbr.rel (%p4672) target = $region72
        $region71: #{vae_residual_block.3} parent=67 // pred_region
          %s4675 = sand.u32 %s253, 1
          %s4676 = scalar_lea.sflag [#allocation3], %s4675
          %s4677 = sand.u32 %s253, 1
          %s4678 = smul.addr %s4677, 256
          %s4679 = scalar_lea.vmem [#allocation2], %s4678
          %4680 = dma.done %s4676, 4096
        $region72: #{vae_residual_block.3} parent=67 // pred_fallthru
          _
      $region68: #{vae_residual_block.3} parent=5 // pred_fallthru
        _
    $region6: #{vae_residual_block.3} parent=1 // loop_footer
      %s23 = sadd.s32 1, %s19
    $region7: #{vae_residual_block.3} parent=1 // loop_footer_branch
      %18 = sbr.rel target = $region3
    $region8: #{vae_residual_block.3} parent=1 // loop_exit
      _
    %4681 = vsyncpa [#allocation3], 1
    %s4682 = scalar_lea.sflag [#allocation3], 1
    %4683 = vsyncpa %s4682, 1

</llo_original>
